<compile_context>
chip_gen: v6e
topology: v6e:2x2x1
jax: 0.10.0
libtpu: 0.0.40
codegen_flags: <defaults>
</compile_context>

<pallas_src>
import math
from functools import partial

import jax
import jax.numpy as jnp
from jax.experimental import pallas as pl
from jax.experimental.pallas import tpu as pltpu


# ----------------------------------------------------------------------------------
# In-kernel helpers
# ----------------------------------------------------------------------------------
def _gn_lrelu(h, gamma, beta, agg, eps, slope):
    """GroupNorm (biased variance, contiguous channel groups) + LeakyReLU, f32.

    `agg` is a (C, C) block-diagonal matrix with value 1/(H*W*cpg) inside each
    group block: one tiny matmul turns per-channel sums into per-group means
    already broadcast back to channel granularity (no lane-dim reshapes).
    """
    s = jnp.sum(h, axis=0, keepdims=True)                              # (1, C) sum
    q = jnp.sum(h * h, axis=0, keepdims=True)                          # (1, C) sum sq
    mean = jnp.dot(s, agg, preferred_element_type=jnp.float32)         # (1, C) group mean
    ex2 = jnp.dot(q, agg, preferred_element_type=jnp.float32)          # (1, C) group E[x^2]
    var = jnp.maximum(ex2 - mean * mean, 0.0)   # clamp: f32 cancellation can go < 0
    inv = jax.lax.rsqrt(var + eps)                                     # EUP
    y = (h - mean) * (inv * gamma) + beta
    return jnp.where(y >= 0.0, y, slope * y)


def _zero_halo(ref, Hp, Wp, C):
    """Zero only the 4 border strips of a (Hp, Wp, C) padded VMEM scratch."""
    dt = ref.dtype
    ref[0:1, :, :] = jnp.zeros((1, Wp, C), dt)
    ref[Hp - 1:Hp, :, :] = jnp.zeros((1, Wp, C), dt)
    ref[:, 0:1, :] = jnp.zeros((Hp, 1, C), dt)
    ref[:, Wp - 1:Wp, :] = jnp.zeros((Hp, 1, C), dt)


def _bottleneck_kernel(x_ref, w1_ref, b1_ref, g1_ref, be1_ref, agg1_ref,
                       w2_ref, b2_ref, g2_ref, be2_ref, agg2_ref,
                       o_ref,
                       xp_ref, h1p_ref,
                       *, H, W, cin, c1, c2, eps, slope):
    """Fused BottleneckBlock forward for one batch element.

    x_ref    : (H, W, cin)        unpadded input (f32)
    w1_ref   : (9, cin, c1)       conv1 per-tap weights (bf16)
    w2_ref   : (9, c1, c2)        conv2 per-tap weights (bf16)
    b*/g*/be*: (1, C)             bias / GN gamma / GN beta (f32)
    agg*_ref : (C, C)             normalized group-aggregation matrices (f32)
    o_ref    : (H, W*(cin+c2))    lane-dense flattened concat([x, out]) (f32)
    xp_ref   : (H+2, W+2, cin)    bf16 padded conv1 input (VMEM scratch)
    h1p_ref  : (H+2, W+2, c1)     bf16 padded intermediate (VMEM scratch)
    """
    HW = H * W
    Hp, Wp = H + 2, W + 2
    mxu_dt = xp_ref.dtype

    # ---- build padded conv1 input in VMEM: halo strips + interior (no full memset,
    #      no wrapper-side jnp.pad) ----
    _zero_halo(xp_ref, Hp, Wp, cin)
    x = x_ref[...]                                             # (H, W, cin) f32, reused for concat
    xp_ref[1:H + 1, 1:W + 1, :] = x.astype(mxu_dt)

    # ---- conv1: 9 accumulated K=cin MXU matmuls on shifted windows (no im2col) ----
    acc1 = jnp.zeros((HW, c1), jnp.float32)
    for kh in range(3):
        for kw in range(3):
            tap = xp_ref[kh:kh + H, kw:kw + W, :].reshape(HW, cin)      # bf16
            acc1 = acc1 + jnp.dot(tap, w1_ref[kh * 3 + kw],
                                  preferred_element_type=jnp.float32)
    h = _gn_lrelu(acc1 + b1_ref[...], g1_ref[...], be1_ref[...], agg1_ref[...],
                  eps, slope)                                           # (HW, c1) f32

    # ---- padded bf16 intermediate (conv2 has padding=1): halo strips + interior ----
    _zero_halo(h1p_ref, Hp, Wp, c1)
    h1p_ref[1:H + 1, 1:W + 1, :] = h.astype(mxu_dt).reshape(H, W, c1)

    # ---- conv2: 9 accumulated K=c1 MXU matmuls on shifted windows (no col2) ----
    acc2 = jnp.zeros((HW, c2), jnp.float32)
    for kh in range(3):
        for kw in range(3):
            tap = h1p_ref[kh:kh + H, kw:kw + W, :].reshape(HW, c1)      # bf16
            acc2 = acc2 + jnp.dot(tap, w2_ref[kh * 3 + kw],
                                  preferred_element_type=jnp.float32)
    h2 = _gn_lrelu(acc2 + b2_ref[...], g2_ref[...], be2_ref[...], agg2_ref[...],
                   eps, slope)                                          # (HW, c2) f32

    # ---- out = concat([x, out], channel): build in registers, one lane-dense store ----
    cat = jnp.concatenate([x, h2.reshape(H, W, c2)], axis=-1)           # (H, W, cin+c2)
    o_ref[...] = cat.reshape(H, W * (cin + c2))


# ----------------------------------------------------------------------------------
# Wrapper
# ----------------------------------------------------------------------------------
def _group_agg(C, groups, hw):
    """Block-diagonal (C, C) matrix with 1/(hw*cpg) inside each group block."""
    cpg = C // groups
    ids = jnp.arange(C, dtype=jnp.int32) // cpg
    return (ids[:, None] == ids[None, :]).astype(jnp.float32) / float(hw * cpg)


@partial(jax.jit, static_argnames=("groups1", "groups2", "mxu_dtype"))
def _bottleneck_call(x, w1, b1, g1, be1, w2, b2, g2, be2, *,
                     groups1, groups2, mxu_dtype=jnp.bfloat16):
    N, H, W, cin = x.shape
    c1 = w1.shape[-1]
    c2 = w2.shape[-1]
    HW = H * W
    Hp, Wp = H + 2, W + 2
    cout = cin + c2

    # per-tap weight layout (t = kh*3 + kw); bf16 MXU operands, f32 accumulation
    w1m = w1.reshape(9, cin, c1).astype(mxu_dtype)
    w2m = w2.reshape(9, c1, c2).astype(mxu_dtype)
    agg1 = _group_agg(c1, groups1, HW)
    agg2 = _group_agg(c2, groups2, HW)

    kernel = partial(_bottleneck_kernel, H=H, W=W, cin=cin, c1=c1, c2=c2,
                     eps=1e-5, slope=0.2)

    flops = N * (2 * HW * 9 * cin * c1 + 2 * HW * 9 * c1 * c2)
    bytes_accessed = (4 * x.size + 2 * (w1m.size + w2m.size)
                      + 4 * (agg1.size + agg2.size) + 4 * N * H * W * cout)

    # NOTE: with very small N (e.g. 2) there is one grid step per v7x core and the
    # software pipeline has nothing to overlap; for large production N the
    # ("parallel",) batch grid sharding amortizes per-step overhead.
    out_flat = pl.pallas_call(
        kernel,
        out_shape=jax.ShapeDtypeStruct((N, H, W * cout), jnp.float32),
        grid=(N,),
        in_specs=[
            pl.BlockSpec((None, H, W, cin), lambda n: (n, 0, 0, 0)),   # unpadded x
            pl.BlockSpec((9, cin, c1), lambda n: (0, 0, 0)),           # w1 per-tap
            pl.BlockSpec((1, c1), lambda n: (0, 0)),                   # b1
            pl.BlockSpec((1, c1), lambda n: (0, 0)),                   # gamma1
            pl.BlockSpec((1, c1), lambda n: (0, 0)),                   # beta1
            pl.BlockSpec((c1, c1), lambda n: (0, 0)),                  # GN1 group agg
            pl.BlockSpec((9, c1, c2), lambda n: (0, 0, 0)),            # w2 per-tap
            pl.BlockSpec((1, c2), lambda n: (0, 0)),                   # b2
            pl.BlockSpec((1, c2), lambda n: (0, 0)),                   # gamma2
            pl.BlockSpec((1, c2), lambda n: (0, 0)),                   # beta2
            pl.BlockSpec((c2, c2), lambda n: (0, 0)),                  # GN2 group agg
        ],
        out_specs=pl.BlockSpec((None, H, W * cout), lambda n: (n, 0, 0)),
        scratch_shapes=[
            pltpu.VMEM((Hp, Wp, cin), mxu_dtype),   # bf16 padded conv1 input
            pltpu.VMEM((Hp, Wp, c1), mxu_dtype),    # bf16 padded intermediate
        ],
        compiler_params=pltpu.CompilerParams(
            dimension_semantics=("parallel",),      # batch axis -> megacore on v7x
            vmem_limit_bytes=32 * 1024 * 1024),
        cost_estimate=pl.CostEstimate(flops=int(flops),
                                      transcendentals=int(N * (c1 + c2)),
                                      bytes_accessed=int(bytes_accessed)),
    )(x, w1m, b1.reshape(1, c1), g1.reshape(1, c1), be1.reshape(1, c1), agg1,
      w2m, b2.reshape(1, c2), g2.reshape(1, c2), be2.reshape(1, c2), agg2)

    # free metadata reshape back to NHWC (row-major contiguous)
    return out_flat.reshape(N, H, W, cout)


def bottleneck_block(params, x):
    """Pallas forward: concat([x, lrelu(GN2(conv2(lrelu(GN1(conv1(x))))))], channel)."""
    return _bottleneck_call(
        x,
        params["conv1"]["w"], params["conv1"]["b"],
        params["gn1"]["gamma"], params["gn1"]["beta"],
        params["conv2"]["w"], params["conv2"]["b"],
        params["gn2"]["gamma"], params["gn2"]["beta"],
        groups1=params["gn1"]["groups"], groups2=params["gn2"]["groups"])


# ----------------------------------------------------------------------------------
# Parameters (shapes match BottleneckBlock(in_planes, out_planes))
# ----------------------------------------------------------------------------------
def init_bottleneck_params(key, in_planes, out_planes):
    inter = out_planes * 4
    mid = out_planes // 4
    k1, k2, k3, k4, k5, k6, k7, k8 = jax.random.split(key, 8)

    def conv(kw_, kb_, cin, cout):
        w = jax.random.normal(kw_, (3, 3, cin, cout), jnp.float32) / math.sqrt(9 * cin)
        b = 0.01 * jax.random.normal(kb_, (cout,), jnp.float32)
        return {"w": w, "b": b}

    return {
        "conv1": conv(k1, k2, in_planes, inter),
        "gn1": {"gamma": 1.0 + 0.1 * jax.random.normal(k3, (inter,), jnp.float32),
                "beta": 0.1 * jax.random.normal(k4, (inter,), jnp.float32),
                "groups": out_planes},
        "conv2": conv(k5, k6, inter, out_planes),
        "gn2": {"gamma": 1.0 + 0.1 * jax.random.normal(k7, (out_planes,), jnp.float32),
                "beta": 0.1 * jax.random.normal(k8, (out_planes,), jnp.float32),
                "groups": mid},
    }
    # TODO(synk): dropRate is unused in the reference forward (no dropout applied).


# ----------------------------------------------------------------------------------
# Pure-JAX reference (lax.conv + explicit GroupNorm) for validation
# ----------------------------------------------------------------------------------
def bottleneck_reference(params, x, eps=1e-5, slope=0.2):
    def conv(v, w, b):
        y = jax.lax.conv_general_dilated(
            v, w, window_strides=(1, 1), padding=((1, 1), (1, 1)),
            dimension_numbers=("NHWC", "HWIO", "NHWC"),
            precision=jax.lax.Precision.HIGHEST)
        return y + b

    def gn(v, gamma, beta, groups):
        N, H, W, C = v.shape
        vg = v.reshape(N, H * W, groups, C // groups)
        mean = vg.mean(axis=(1, 3), keepdims=True)
        var = ((vg - mean) ** 2).mean(axis=(1, 3), keepdims=True)
        vn = ((vg - mean) / jnp.sqrt(var + eps)).reshape(N, H, W, C)
        return vn * gamma + beta

    lrelu = lambda v: jnp.where(v >= 0, v, slope * v)
    h = lrelu(gn(conv(x, params["conv1"]["w"], params["conv1"]["b"]),
                 params["gn1"]["gamma"], params["gn1"]["beta"], params["gn1"]["groups"]))
    h = lrelu(gn(conv(h, params["conv2"]["w"], params["conv2"]["b"]),
                 params["gn2"]["gamma"], params["gn2"]["beta"], params["gn2"]["groups"]))
    return jnp.concatenate([x, h], axis=-1)


# ----------------------------------------------------------------------------------
if __name__ == "__main__":
    key = jax.random.PRNGKey(0)
    kp, kx = jax.random.split(key)

    in_planes, out_planes = 32, 32      # inter = 128 channels (GN1: 32 groups), GN2: 8 groups
    B, H, W = 2, 16, 16

    params = init_bottleneck_params(kp, in_planes, out_planes)
    x = jax.random.normal(kx, (B, H, W, in_planes), jnp.float32)

    out = bottleneck_block(params, x)
    out = jax.block_until_ready(out)

    assert out.shape == (B, H, W, in_planes + out_planes), out.shape
    assert bool(jnp.all(jnp.isfinite(out)))

    # validate against a pure-JAX reference (tolerance covers bf16 MXU operands)
    ref = bottleneck_reference(params, x)
    rel = float(jnp.linalg.norm(out - ref) / (jnp.linalg.norm(ref) + 1e-12))
    assert rel < 3e-2, f"relative L2 error too large: {rel}"

    print("KERNEL_OK")
</pallas_src>

<mosaic_0001>
module attributes {stable_mosaic.version = 11 : i64} {
  func.func @_bottleneck_kernel(%arg0: i32, %arg1: memref<1x16x16x32xf32, #tpu.memory_space<vmem>>, %arg2: memref<9x32x128xbf16, #tpu.memory_space<vmem>>, %arg3: memref<1x128xf32, #tpu.memory_space<vmem>>, %arg4: memref<1x128xf32, #tpu.memory_space<vmem>>, %arg5: memref<1x128xf32, #tpu.memory_space<vmem>>, %arg6: memref<128x128xf32, #tpu.memory_space<vmem>>, %arg7: memref<9x128x32xbf16, #tpu.memory_space<vmem>>, %arg8: memref<1x32xf32, #tpu.memory_space<vmem>>, %arg9: memref<1x32xf32, #tpu.memory_space<vmem>>, %arg10: memref<1x32xf32, #tpu.memory_space<vmem>>, %arg11: memref<32x32xf32, #tpu.memory_space<vmem>>, %arg12: memref<1x16x1024xf32, #tpu.memory_space<vmem>>, %arg13: memref<18x18x32xbf16, #tpu.memory_space<vmem>>, %arg14: memref<18x18x128xbf16, #tpu.memory_space<vmem>>) attributes {dimension_semantics = [#tpu.dimension_semantics<parallel>], iteration_bounds = array<i64: 2>, scalar_prefetch = 0 : i64, scratch_operands = 2 : i64, tpu.core_type = #tpu.core_type<tc>, window_params = [{transform_indices = @transform_0, window_bounds = array<i64: 1, 16, 16, 32>}, {pipeline_mode = #tpu.pipeline_mode<synchronous>, transform_indices = @transform_1, window_bounds = array<i64: 9, 32, 128>}, {pipeline_mode = #tpu.pipeline_mode<synchronous>, transform_indices = @transform_2, window_bounds = array<i64: 1, 128>}, {pipeline_mode = #tpu.pipeline_mode<synchronous>, transform_indices = @transform_3, window_bounds = array<i64: 1, 128>}, {pipeline_mode = #tpu.pipeline_mode<synchronous>, transform_indices = @transform_4, window_bounds = array<i64: 1, 128>}, {pipeline_mode = #tpu.pipeline_mode<synchronous>, transform_indices = @transform_5, window_bounds = array<i64: 128, 128>}, {pipeline_mode = #tpu.pipeline_mode<synchronous>, transform_indices = @transform_6, window_bounds = array<i64: 9, 128, 32>}, {pipeline_mode = #tpu.pipeline_mode<synchronous>, transform_indices = @transform_7, window_bounds = array<i64: 1, 32>}, {pipeline_mode = #tpu.pipeline_mode<synchronous>, transform_indices = @transform_8, window_bounds = array<i64: 1, 32>}, {pipeline_mode = #tpu.pipeline_mode<synchronous>, transform_indices = @transform_9, window_bounds = array<i64: 1, 32>}, {pipeline_mode = #tpu.pipeline_mode<synchronous>, transform_indices = @transform_10, window_bounds = array<i64: 32, 32>}, {transform_indices = @transform_11, window_bounds = array<i64: 1, 16, 1024>}]} {
    %cst = arith.constant 0.000000e+00 : bf16
    %0 = vector.broadcast %cst : bf16 to vector<1x18x32xbf16>
    %c0 = arith.constant 0 : index
    %c0_0 = arith.constant 0 : index
    %c0_1 = arith.constant 0 : index
    %1 = vector.load %arg13[%c0, %c0_0, %c0_1] : memref<18x18x32xbf16, #tpu.memory_space<vmem>>, vector<1x18x32xbf16>
    tpu.vector_store %arg13[%c0, %c0_0, %c0_1], %0 {strides = array<i32>} : memref<18x18x32xbf16, #tpu.memory_space<vmem>>, vector<1x18x32xbf16>,
    %cst_2 = arith.constant 0.000000e+00 : bf16
    %2 = vector.broadcast %cst_2 : bf16 to vector<1x18x32xbf16>
    %c17 = arith.constant 17 : index
    %c0_3 = arith.constant 0 : index
    %c0_4 = arith.constant 0 : index
    %3 = vector.load %arg13[%c17, %c0_3, %c0_4] : memref<18x18x32xbf16, #tpu.memory_space<vmem>>, vector<1x18x32xbf16>
    tpu.vector_store %arg13[%c17, %c0_3, %c0_4], %2 {strides = array<i32>} : memref<18x18x32xbf16, #tpu.memory_space<vmem>>, vector<1x18x32xbf16>,
    %cst_5 = arith.constant 0.000000e+00 : bf16
    %4 = vector.broadcast %cst_5 : bf16 to vector<18x1x32xbf16>
    %c0_6 = arith.constant 0 : index
    %c0_7 = arith.constant 0 : index
    %c0_8 = arith.constant 0 : index
    %5 = vector.load %arg13[%c0_6, %c0_7, %c0_8] : memref<18x18x32xbf16, #tpu.memory_space<vmem>>, vector<18x1x32xbf16>
    tpu.vector_store %arg13[%c0_6, %c0_7, %c0_8], %4 {strides = array<i32>} : memref<18x18x32xbf16, #tpu.memory_space<vmem>>, vector<18x1x32xbf16>,
    %cst_9 = arith.constant 0.000000e+00 : bf16
    %6 = vector.broadcast %cst_9 : bf16 to vector<18x1x32xbf16>
    %c0_10 = arith.constant 0 : index
    %c17_11 = arith.constant 17 : index
    %c0_12 = arith.constant 0 : index
    %7 = vector.load %arg13[%c0_10, %c17_11, %c0_12] : memref<18x18x32xbf16, #tpu.memory_space<vmem>>, vector<18x1x32xbf16>
    tpu.vector_store %arg13[%c0_10, %c17_11, %c0_12], %6 {strides = array<i32>} : memref<18x18x32xbf16, #tpu.memory_space<vmem>>, vector<18x1x32xbf16>,
    %c0_13 = arith.constant 0 : index
    %c0_14 = arith.constant 0 : index
    %c0_15 = arith.constant 0 : index
    %c0_16 = arith.constant 0 : index
    %8 = vector.load %arg1[%c0_13, %c0_14, %c0_15, %c0_16] : memref<1x16x16x32xf32, #tpu.memory_space<vmem>>, vector<1x16x16x32xf32>
    %9 = vector.shape_cast %8 : vector<1x16x16x32xf32> to vector<16x16x32xf32>
    %10 = arith.truncf %9 : vector<16x16x32xf32> to vector<16x16x32xbf16>
    %c1 = arith.constant 1 : index
    %c1_17 = arith.constant 1 : index
    %c0_18 = arith.constant 0 : index
    %11 = vector.load %arg13[%c1, %c1_17, %c0_18] : memref<18x18x32xbf16, #tpu.memory_space<vmem>>, vector<16x16x32xbf16>
    tpu.vector_store %arg13[%c1, %c1_17, %c0_18], %10 {strides = array<i32>} : memref<18x18x32xbf16, #tpu.memory_space<vmem>>, vector<16x16x32xbf16>,
    %cst_19 = arith.constant 0.000000e+00 : f32
    %12 = vector.broadcast %cst_19 : f32 to vector<256x128xf32>
    %c0_20 = arith.constant 0 : index
    %c0_21 = arith.constant 0 : index
    %c0_22 = arith.constant 0 : index
    %13 = vector.load %arg13[%c0_20, %c0_21, %c0_22] : memref<18x18x32xbf16, #tpu.memory_space<vmem>>, vector<16x16x32xbf16>
    %14 = vector.shape_cast %13 : vector<16x16x32xbf16> to vector<256x32xbf16>
    %c0_23 = arith.constant 0 : index
    %c0_24 = arith.constant 0 : index
    %c0_25 = arith.constant 0 : index
    %15 = vector.load %arg2[%c0_23, %c0_24, %c0_25] : memref<9x32x128xbf16, #tpu.memory_space<vmem>>, vector<1x32x128xbf16>
    %16 = vector.shape_cast %15 : vector<1x32x128xbf16> to vector<32x128xbf16>
    %cst_26 = arith.constant dense<0.000000e+00> : vector<256x128xf32>
    %17 = tpu.matmul %14, %16, %cst_26 {dimension_numbers = #tpu.dot_dimension_numbers<[1], [0], [0], [1], [0, 0, 1, 1], [], []>} : vector<256x32xbf16>, vector<32x128xbf16>, vector<256x128xf32> -> vector<256x128xf32>
    %18 = arith.addf %12, %17 : vector<256x128xf32>
    %c0_27 = arith.constant 0 : index
    %c1_28 = arith.constant 1 : index
    %c0_29 = arith.constant 0 : index
    %19 = vector.load %arg13[%c0_27, %c1_28, %c0_29] : memref<18x18x32xbf16, #tpu.memory_space<vmem>>, vector<16x16x32xbf16>
    %20 = vector.shape_cast %19 : vector<16x16x32xbf16> to vector<256x32xbf16>
    %c1_30 = arith.constant 1 : index
    %c0_31 = arith.constant 0 : index
    %c0_32 = arith.constant 0 : index
    %21 = vector.load %arg2[%c1_30, %c0_31, %c0_32] : memref<9x32x128xbf16, #tpu.memory_space<vmem>>, vector<1x32x128xbf16>
    %22 = vector.shape_cast %21 : vector<1x32x128xbf16> to vector<32x128xbf16>
    %cst_33 = arith.constant dense<0.000000e+00> : vector<256x128xf32>
    %23 = tpu.matmul %20, %22, %cst_33 {dimension_numbers = #tpu.dot_dimension_numbers<[1], [0], [0], [1], [0, 0, 1, 1], [], []>} : vector<256x32xbf16>, vector<32x128xbf16>, vector<256x128xf32> -> vector<256x128xf32>
    %24 = arith.addf %18, %23 : vector<256x128xf32>
    %c0_34 = arith.constant 0 : index
    %c2 = arith.constant 2 : index
    %c0_35 = arith.constant 0 : index
    %25 = vector.load %arg13[%c0_34, %c2, %c0_35] : memref<18x18x32xbf16, #tpu.memory_space<vmem>>, vector<16x16x32xbf16>
    %26 = vector.shape_cast %25 : vector<16x16x32xbf16> to vector<256x32xbf16>
    %c2_36 = arith.constant 2 : index
    %c0_37 = arith.constant 0 : index
    %c0_38 = arith.constant 0 : index
    %27 = vector.load %arg2[%c2_36, %c0_37, %c0_38] : memref<9x32x128xbf16, #tpu.memory_space<vmem>>, vector<1x32x128xbf16>
    %28 = vector.shape_cast %27 : vector<1x32x128xbf16> to vector<32x128xbf16>
    %cst_39 = arith.constant dense<0.000000e+00> : vector<256x128xf32>
    %29 = tpu.matmul %26, %28, %cst_39 {dimension_numbers = #tpu.dot_dimension_numbers<[1], [0], [0], [1], [0, 0, 1, 1], [], []>} : vector<256x32xbf16>, vector<32x128xbf16>, vector<256x128xf32> -> vector<256x128xf32>
    %30 = arith.addf %24, %29 : vector<256x128xf32>
    %c1_40 = arith.constant 1 : index
    %c0_41 = arith.constant 0 : index
    %c0_42 = arith.constant 0 : index
    %31 = vector.load %arg13[%c1_40, %c0_41, %c0_42] : memref<18x18x32xbf16, #tpu.memory_space<vmem>>, vector<16x16x32xbf16>
    %32 = vector.shape_cast %31 : vector<16x16x32xbf16> to vector<256x32xbf16>
    %c3 = arith.constant 3 : index
    %c0_43 = arith.constant 0 : index
    %c0_44 = arith.constant 0 : index
    %33 = vector.load %arg2[%c3, %c0_43, %c0_44] : memref<9x32x128xbf16, #tpu.memory_space<vmem>>, vector<1x32x128xbf16>
    %34 = vector.shape_cast %33 : vector<1x32x128xbf16> to vector<32x128xbf16>
    %cst_45 = arith.constant dense<0.000000e+00> : vector<256x128xf32>
    %35 = tpu.matmul %32, %34, %cst_45 {dimension_numbers = #tpu.dot_dimension_numbers<[1], [0], [0], [1], [0, 0, 1, 1], [], []>} : vector<256x32xbf16>, vector<32x128xbf16>, vector<256x128xf32> -> vector<256x128xf32>
    %36 = arith.addf %30, %35 : vector<256x128xf32>
    %c1_46 = arith.constant 1 : index
    %c1_47 = arith.constant 1 : index
    %c0_48 = arith.constant 0 : index
    %37 = vector.load %arg13[%c1_46, %c1_47, %c0_48] : memref<18x18x32xbf16, #tpu.memory_space<vmem>>, vector<16x16x32xbf16>
    %38 = vector.shape_cast %37 : vector<16x16x32xbf16> to vector<256x32xbf16>
    %c4 = arith.constant 4 : index
    %c0_49 = arith.constant 0 : index
    %c0_50 = arith.constant 0 : index
    %39 = vector.load %arg2[%c4, %c0_49, %c0_50] : memref<9x32x128xbf16, #tpu.memory_space<vmem>>, vector<1x32x128xbf16>
    %40 = vector.shape_cast %39 : vector<1x32x128xbf16> to vector<32x128xbf16>
    %cst_51 = arith.constant dense<0.000000e+00> : vector<256x128xf32>
    %41 = tpu.matmul %38, %40, %cst_51 {dimension_numbers = #tpu.dot_dimension_numbers<[1], [0], [0], [1], [0, 0, 1, 1], [], []>} : vector<256x32xbf16>, vector<32x128xbf16>, vector<256x128xf32> -> vector<256x128xf32>
    %42 = arith.addf %36, %41 : vector<256x128xf32>
    %c1_52 = arith.constant 1 : index
    %c2_53 = arith.constant 2 : index
    %c0_54 = arith.constant 0 : index
    %43 = vector.load %arg13[%c1_52, %c2_53, %c0_54] : memref<18x18x32xbf16, #tpu.memory_space<vmem>>, vector<16x16x32xbf16>
    %44 = vector.shape_cast %43 : vector<16x16x32xbf16> to vector<256x32xbf16>
    %c5 = arith.constant 5 : index
    %c0_55 = arith.constant 0 : index
    %c0_56 = arith.constant 0 : index
    %45 = vector.load %arg2[%c5, %c0_55, %c0_56] : memref<9x32x128xbf16, #tpu.memory_space<vmem>>, vector<1x32x128xbf16>
    %46 = vector.shape_cast %45 : vector<1x32x128xbf16> to vector<32x128xbf16>
    %cst_57 = arith.constant dense<0.000000e+00> : vector<256x128xf32>
    %47 = tpu.matmul %44, %46, %cst_57 {dimension_numbers = #tpu.dot_dimension_numbers<[1], [0], [0], [1], [0, 0, 1, 1], [], []>} : vector<256x32xbf16>, vector<32x128xbf16>, vector<256x128xf32> -> vector<256x128xf32>
    %48 = arith.addf %42, %47 : vector<256x128xf32>
    %c2_58 = arith.constant 2 : index
    %c0_59 = arith.constant 0 : index
    %c0_60 = arith.constant 0 : index
    %49 = vector.load %arg13[%c2_58, %c0_59, %c0_60] : memref<18x18x32xbf16, #tpu.memory_space<vmem>>, vector<16x16x32xbf16>
    %50 = vector.shape_cast %49 : vector<16x16x32xbf16> to vector<256x32xbf16>
    %c6 = arith.constant 6 : index
    %c0_61 = arith.constant 0 : index
    %c0_62 = arith.constant 0 : index
    %51 = vector.load %arg2[%c6, %c0_61, %c0_62] : memref<9x32x128xbf16, #tpu.memory_space<vmem>>, vector<1x32x128xbf16>
    %52 = vector.shape_cast %51 : vector<1x32x128xbf16> to vector<32x128xbf16>
    %cst_63 = arith.constant dense<0.000000e+00> : vector<256x128xf32>
    %53 = tpu.matmul %50, %52, %cst_63 {dimension_numbers = #tpu.dot_dimension_numbers<[1], [0], [0], [1], [0, 0, 1, 1], [], []>} : vector<256x32xbf16>, vector<32x128xbf16>, vector<256x128xf32> -> vector<256x128xf32>
    %54 = arith.addf %48, %53 : vector<256x128xf32>
    %c2_64 = arith.constant 2 : index
    %c1_65 = arith.constant 1 : index
    %c0_66 = arith.constant 0 : index
    %55 = vector.load %arg13[%c2_64, %c1_65, %c0_66] : memref<18x18x32xbf16, #tpu.memory_space<vmem>>, vector<16x16x32xbf16>
    %56 = vector.shape_cast %55 : vector<16x16x32xbf16> to vector<256x32xbf16>
    %c7 = arith.constant 7 : index
    %c0_67 = arith.constant 0 : index
    %c0_68 = arith.constant 0 : index
    %57 = vector.load %arg2[%c7, %c0_67, %c0_68] : memref<9x32x128xbf16, #tpu.memory_space<vmem>>, vector<1x32x128xbf16>
    %58 = vector.shape_cast %57 : vector<1x32x128xbf16> to vector<32x128xbf16>
    %cst_69 = arith.constant dense<0.000000e+00> : vector<256x128xf32>
    %59 = tpu.matmul %56, %58, %cst_69 {dimension_numbers = #tpu.dot_dimension_numbers<[1], [0], [0], [1], [0, 0, 1, 1], [], []>} : vector<256x32xbf16>, vector<32x128xbf16>, vector<256x128xf32> -> vector<256x128xf32>
    %60 = arith.addf %54, %59 : vector<256x128xf32>
    %c2_70 = arith.constant 2 : index
    %c2_71 = arith.constant 2 : index
    %c0_72 = arith.constant 0 : index
    %61 = vector.load %arg13[%c2_70, %c2_71, %c0_72] : memref<18x18x32xbf16, #tpu.memory_space<vmem>>, vector<16x16x32xbf16>
    %62 = vector.shape_cast %61 : vector<16x16x32xbf16> to vector<256x32xbf16>
    %c8 = arith.constant 8 : index
    %c0_73 = arith.constant 0 : index
    %c0_74 = arith.constant 0 : index
    %63 = vector.load %arg2[%c8, %c0_73, %c0_74] : memref<9x32x128xbf16, #tpu.memory_space<vmem>>, vector<1x32x128xbf16>
    %64 = vector.shape_cast %63 : vector<1x32x128xbf16> to vector<32x128xbf16>
    %cst_75 = arith.constant dense<0.000000e+00> : vector<256x128xf32>
    %65 = tpu.matmul %62, %64, %cst_75 {dimension_numbers = #tpu.dot_dimension_numbers<[1], [0], [0], [1], [0, 0, 1, 1], [], []>} : vector<256x32xbf16>, vector<32x128xbf16>, vector<256x128xf32> -> vector<256x128xf32>
    %66 = arith.addf %60, %65 : vector<256x128xf32>
    %c0_76 = arith.constant 0 : index
    %c0_77 = arith.constant 0 : index
    %67 = vector.load %arg3[%c0_76, %c0_77] : memref<1x128xf32, #tpu.memory_space<vmem>>, vector<1x128xf32>
    %68 = vector.broadcast %67 : vector<1x128xf32> to vector<256x128xf32>
    %69 = arith.addf %66, %68 : vector<256x128xf32>
    %c0_78 = arith.constant 0 : index
    %c0_79 = arith.constant 0 : index
    %70 = vector.load %arg4[%c0_78, %c0_79] : memref<1x128xf32, #tpu.memory_space<vmem>>, vector<1x128xf32>
    %c0_80 = arith.constant 0 : index
    %c0_81 = arith.constant 0 : index
    %71 = vector.load %arg5[%c0_80, %c0_81] : memref<1x128xf32, #tpu.memory_space<vmem>>, vector<1x128xf32>
    %c0_82 = arith.constant 0 : index
    %c0_83 = arith.constant 0 : index
    %72 = vector.load %arg6[%c0_82, %c0_83] : memref<128x128xf32, #tpu.memory_space<vmem>>, vector<128x128xf32>
    %cst_84 = arith.constant dense<0.000000e+00> : vector<128xf32>
    %73 = vector.multi_reduction <add>, %69, %cst_84 [0] : vector<256x128xf32> to vector<128xf32>
    %74 = vector.shape_cast %73 : vector<128xf32> to vector<1x128xf32>
    %75 = arith.mulf %69, %69 : vector<256x128xf32>
    %cst_85 = arith.constant dense<0.000000e+00> : vector<128xf32>
    %76 = vector.multi_reduction <add>, %75, %cst_85 [0] : vector<256x128xf32> to vector<128xf32>
    %77 = vector.shape_cast %76 : vector<128xf32> to vector<1x128xf32>
    %cst_86 = arith.constant dense<0.000000e+00> : vector<1x128xf32>
    %78 = tpu.matmul %74, %72, %cst_86 {dimension_numbers = #tpu.dot_dimension_numbers<[1], [0], [0], [1], [0, 0, 1, 1], [], []>} : vector<1x128xf32>, vector<128x128xf32>, vector<1x128xf32> -> vector<1x128xf32>
    %cst_87 = arith.constant dense<0.000000e+00> : vector<1x128xf32>
    %79 = tpu.matmul %77, %72, %cst_87 {dimension_numbers = #tpu.dot_dimension_numbers<[1], [0], [0], [1], [0, 0, 1, 1], [], []>} : vector<1x128xf32>, vector<128x128xf32>, vector<1x128xf32> -> vector<1x128xf32>
    %80 = arith.mulf %78, %78 : vector<1x128xf32>
    %81 = arith.subf %79, %80 : vector<1x128xf32>
    %cst_88 = arith.constant 0.000000e+00 : f32
    %82 = vector.broadcast %cst_88 : f32 to vector<1x128xf32>
    %83 = arith.maximumf %81, %82 : vector<1x128xf32>
    %cst_89 = arith.constant 9.99999974E-6 : f32
    %84 = vector.broadcast %cst_89 : f32 to vector<1x128xf32>
    %85 = arith.addf %83, %84 : vector<1x128xf32>
    %86 = math.rsqrt %85 : vector<1x128xf32>
    %87 = vector.broadcast %78 : vector<1x128xf32> to vector<256x128xf32>
    %88 = arith.subf %69, %87 : vector<256x128xf32>
    %89 = arith.mulf %86, %70 : vector<1x128xf32>
    %90 = vector.broadcast %89 : vector<1x128xf32> to vector<256x128xf32>
    %91 = arith.mulf %88, %90 : vector<256x128xf32>
    %92 = vector.broadcast %71 : vector<1x128xf32> to vector<256x128xf32>
    %93 = arith.addf %91, %92 : vector<256x128xf32>
    %cst_90 = arith.constant 0.000000e+00 : f32
    %94 = vector.broadcast %cst_90 : f32 to vector<256x128xf32>
    %95 = arith.cmpf oge, %93, %94 : vector<256x128xf32>
    %cst_91 = arith.constant 2.000000e-01 : f32
    %96 = vector.broadcast %cst_91 : f32 to vector<256x128xf32>
    %97 = arith.mulf %96, %93 : vector<256x128xf32>
    %98 = arith.select %95, %93, %97 : vector<256x128xi1>, vector<256x128xf32>
    %cst_92 = arith.constant 0.000000e+00 : bf16
    %99 = vector.broadcast %cst_92 : bf16 to vector<1x18x128xbf16>
    %c0_93 = arith.constant 0 : index
    %c0_94 = arith.constant 0 : index
    %c0_95 = arith.constant 0 : index
    %100 = vector.load %arg14[%c0_93, %c0_94, %c0_95] : memref<18x18x128xbf16, #tpu.memory_space<vmem>>, vector<1x18x128xbf16>
    tpu.vector_store %arg14[%c0_93, %c0_94, %c0_95], %99 {strides = array<i32>} : memref<18x18x128xbf16, #tpu.memory_space<vmem>>, vector<1x18x128xbf16>,
    %cst_96 = arith.constant 0.000000e+00 : bf16
    %101 = vector.broadcast %cst_96 : bf16 to vector<1x18x128xbf16>
    %c17_97 = arith.constant 17 : index
    %c0_98 = arith.constant 0 : index
    %c0_99 = arith.constant 0 : index
    %102 = vector.load %arg14[%c17_97, %c0_98, %c0_99] : memref<18x18x128xbf16, #tpu.memory_space<vmem>>, vector<1x18x128xbf16>
    tpu.vector_store %arg14[%c17_97, %c0_98, %c0_99], %101 {strides = array<i32>} : memref<18x18x128xbf16, #tpu.memory_space<vmem>>, vector<1x18x128xbf16>,
    %cst_100 = arith.constant 0.000000e+00 : bf16
    %103 = vector.broadcast %cst_100 : bf16 to vector<18x1x128xbf16>
    %c0_101 = arith.constant 0 : index
    %c0_102 = arith.constant 0 : index
    %c0_103 = arith.constant 0 : index
    %104 = vector.load %arg14[%c0_101, %c0_102, %c0_103] : memref<18x18x128xbf16, #tpu.memory_space<vmem>>, vector<18x1x128xbf16>
    tpu.vector_store %arg14[%c0_101, %c0_102, %c0_103], %103 {strides = array<i32>} : memref<18x18x128xbf16, #tpu.memory_space<vmem>>, vector<18x1x128xbf16>,
    %cst_104 = arith.constant 0.000000e+00 : bf16
    %105 = vector.broadcast %cst_104 : bf16 to vector<18x1x128xbf16>
    %c0_105 = arith.constant 0 : index
    %c17_106 = arith.constant 17 : index
    %c0_107 = arith.constant 0 : index
    %106 = vector.load %arg14[%c0_105, %c17_106, %c0_107] : memref<18x18x128xbf16, #tpu.memory_space<vmem>>, vector<18x1x128xbf16>
    tpu.vector_store %arg14[%c0_105, %c17_106, %c0_107], %105 {strides = array<i32>} : memref<18x18x128xbf16, #tpu.memory_space<vmem>>, vector<18x1x128xbf16>,
    %107 = arith.truncf %98 : vector<256x128xf32> to vector<256x128xbf16>
    %108 = vector.shape_cast %107 : vector<256x128xbf16> to vector<16x16x128xbf16>
    %c1_108 = arith.constant 1 : index
    %c1_109 = arith.constant 1 : index
    %c0_110 = arith.constant 0 : index
    %109 = vector.load %arg14[%c1_108, %c1_109, %c0_110] : memref<18x18x128xbf16, #tpu.memory_space<vmem>>, vector<16x16x128xbf16>
    tpu.vector_store %arg14[%c1_108, %c1_109, %c0_110], %108 {strides = array<i32>} : memref<18x18x128xbf16, #tpu.memory_space<vmem>>, vector<16x16x128xbf16>,
    %cst_111 = arith.constant 0.000000e+00 : f32
    %110 = vector.broadcast %cst_111 : f32 to vector<256x32xf32>
    %c0_112 = arith.constant 0 : index
    %c0_113 = arith.constant 0 : index
    %c0_114 = arith.constant 0 : index
    %111 = vector.load %arg14[%c0_112, %c0_113, %c0_114] : memref<18x18x128xbf16, #tpu.memory_space<vmem>>, vector<16x16x128xbf16>
    %112 = vector.shape_cast %111 : vector<16x16x128xbf16> to vector<256x128xbf16>
    %c0_115 = arith.constant 0 : index
    %c0_116 = arith.constant 0 : index
    %c0_117 = arith.constant 0 : index
    %113 = vector.load %arg7[%c0_115, %c0_116, %c0_117] : memref<9x128x32xbf16, #tpu.memory_space<vmem>>, vector<1x128x32xbf16>
    %114 = vector.shape_cast %113 : vector<1x128x32xbf16> to vector<128x32xbf16>
    %cst_118 = arith.constant dense<0.000000e+00> : vector<256x32xf32>
    %115 = tpu.matmul %112, %114, %cst_118 {dimension_numbers = #tpu.dot_dimension_numbers<[1], [0], [0], [1], [0, 0, 1, 1], [], []>} : vector<256x128xbf16>, vector<128x32xbf16>, vector<256x32xf32> -> vector<256x32xf32>
    %116 = arith.addf %110, %115 : vector<256x32xf32>
    %c0_119 = arith.constant 0 : index
    %c1_120 = arith.constant 1 : index
    %c0_121 = arith.constant 0 : index
    %117 = vector.load %arg14[%c0_119, %c1_120, %c0_121] : memref<18x18x128xbf16, #tpu.memory_space<vmem>>, vector<16x16x128xbf16>
    %118 = vector.shape_cast %117 : vector<16x16x128xbf16> to vector<256x128xbf16>
    %c1_122 = arith.constant 1 : index
    %c0_123 = arith.constant 0 : index
    %c0_124 = arith.constant 0 : index
    %119 = vector.load %arg7[%c1_122, %c0_123, %c0_124] : memref<9x128x32xbf16, #tpu.memory_space<vmem>>, vector<1x128x32xbf16>
    %120 = vector.shape_cast %119 : vector<1x128x32xbf16> to vector<128x32xbf16>
    %cst_125 = arith.constant dense<0.000000e+00> : vector<256x32xf32>
    %121 = tpu.matmul %118, %120, %cst_125 {dimension_numbers = #tpu.dot_dimension_numbers<[1], [0], [0], [1], [0, 0, 1, 1], [], []>} : vector<256x128xbf16>, vector<128x32xbf16>, vector<256x32xf32> -> vector<256x32xf32>
    %122 = arith.addf %116, %121 : vector<256x32xf32>
    %c0_126 = arith.constant 0 : index
    %c2_127 = arith.constant 2 : index
    %c0_128 = arith.constant 0 : index
    %123 = vector.load %arg14[%c0_126, %c2_127, %c0_128] : memref<18x18x128xbf16, #tpu.memory_space<vmem>>, vector<16x16x128xbf16>
    %124 = vector.shape_cast %123 : vector<16x16x128xbf16> to vector<256x128xbf16>
    %c2_129 = arith.constant 2 : index
    %c0_130 = arith.constant 0 : index
    %c0_131 = arith.constant 0 : index
    %125 = vector.load %arg7[%c2_129, %c0_130, %c0_131] : memref<9x128x32xbf16, #tpu.memory_space<vmem>>, vector<1x128x32xbf16>
    %126 = vector.shape_cast %125 : vector<1x128x32xbf16> to vector<128x32xbf16>
    %cst_132 = arith.constant dense<0.000000e+00> : vector<256x32xf32>
    %127 = tpu.matmul %124, %126, %cst_132 {dimension_numbers = #tpu.dot_dimension_numbers<[1], [0], [0], [1], [0, 0, 1, 1], [], []>} : vector<256x128xbf16>, vector<128x32xbf16>, vector<256x32xf32> -> vector<256x32xf32>
    %128 = arith.addf %122, %127 : vector<256x32xf32>
    %c1_133 = arith.constant 1 : index
    %c0_134 = arith.constant 0 : index
    %c0_135 = arith.constant 0 : index
    %129 = vector.load %arg14[%c1_133, %c0_134, %c0_135] : memref<18x18x128xbf16, #tpu.memory_space<vmem>>, vector<16x16x128xbf16>
    %130 = vector.shape_cast %129 : vector<16x16x128xbf16> to vector<256x128xbf16>
    %c3_136 = arith.constant 3 : index
    %c0_137 = arith.constant 0 : index
    %c0_138 = arith.constant 0 : index
    %131 = vector.load %arg7[%c3_136, %c0_137, %c0_138] : memref<9x128x32xbf16, #tpu.memory_space<vmem>>, vector<1x128x32xbf16>
    %132 = vector.shape_cast %131 : vector<1x128x32xbf16> to vector<128x32xbf16>
    %cst_139 = arith.constant dense<0.000000e+00> : vector<256x32xf32>
    %133 = tpu.matmul %130, %132, %cst_139 {dimension_numbers = #tpu.dot_dimension_numbers<[1], [0], [0], [1], [0, 0, 1, 1], [], []>} : vector<256x128xbf16>, vector<128x32xbf16>, vector<256x32xf32> -> vector<256x32xf32>
    %134 = arith.addf %128, %133 : vector<256x32xf32>
    %c1_140 = arith.constant 1 : index
    %c1_141 = arith.constant 1 : index
    %c0_142 = arith.constant 0 : index
    %135 = vector.load %arg14[%c1_140, %c1_141, %c0_142] : memref<18x18x128xbf16, #tpu.memory_space<vmem>>, vector<16x16x128xbf16>
    %136 = vector.shape_cast %135 : vector<16x16x128xbf16> to vector<256x128xbf16>
    %c4_143 = arith.constant 4 : index
    %c0_144 = arith.constant 0 : index
    %c0_145 = arith.constant 0 : index
    %137 = vector.load %arg7[%c4_143, %c0_144, %c0_145] : memref<9x128x32xbf16, #tpu.memory_space<vmem>>, vector<1x128x32xbf16>
    %138 = vector.shape_cast %137 : vector<1x128x32xbf16> to vector<128x32xbf16>
    %cst_146 = arith.constant dense<0.000000e+00> : vector<256x32xf32>
    %139 = tpu.matmul %136, %138, %cst_146 {dimension_numbers = #tpu.dot_dimension_numbers<[1], [0], [0], [1], [0, 0, 1, 1], [], []>} : vector<256x128xbf16>, vector<128x32xbf16>, vector<256x32xf32> -> vector<256x32xf32>
    %140 = arith.addf %134, %139 : vector<256x32xf32>
    %c1_147 = arith.constant 1 : index
    %c2_148 = arith.constant 2 : index
    %c0_149 = arith.constant 0 : index
    %141 = vector.load %arg14[%c1_147, %c2_148, %c0_149] : memref<18x18x128xbf16, #tpu.memory_space<vmem>>, vector<16x16x128xbf16>
    %142 = vector.shape_cast %141 : vector<16x16x128xbf16> to vector<256x128xbf16>
    %c5_150 = arith.constant 5 : index
    %c0_151 = arith.constant 0 : index
    %c0_152 = arith.constant 0 : index
    %143 = vector.load %arg7[%c5_150, %c0_151, %c0_152] : memref<9x128x32xbf16, #tpu.memory_space<vmem>>, vector<1x128x32xbf16>
    %144 = vector.shape_cast %143 : vector<1x128x32xbf16> to vector<128x32xbf16>
    %cst_153 = arith.constant dense<0.000000e+00> : vector<256x32xf32>
    %145 = tpu.matmul %142, %144, %cst_153 {dimension_numbers = #tpu.dot_dimension_numbers<[1], [0], [0], [1], [0, 0, 1, 1], [], []>} : vector<256x128xbf16>, vector<128x32xbf16>, vector<256x32xf32> -> vector<256x32xf32>
    %146 = arith.addf %140, %145 : vector<256x32xf32>
    %c2_154 = arith.constant 2 : index
    %c0_155 = arith.constant 0 : index
    %c0_156 = arith.constant 0 : index
    %147 = vector.load %arg14[%c2_154, %c0_155, %c0_156] : memref<18x18x128xbf16, #tpu.memory_space<vmem>>, vector<16x16x128xbf16>
    %148 = vector.shape_cast %147 : vector<16x16x128xbf16> to vector<256x128xbf16>
    %c6_157 = arith.constant 6 : index
    %c0_158 = arith.constant 0 : index
    %c0_159 = arith.constant 0 : index
    %149 = vector.load %arg7[%c6_157, %c0_158, %c0_159] : memref<9x128x32xbf16, #tpu.memory_space<vmem>>, vector<1x128x32xbf16>
    %150 = vector.shape_cast %149 : vector<1x128x32xbf16> to vector<128x32xbf16>
    %cst_160 = arith.constant dense<0.000000e+00> : vector<256x32xf32>
    %151 = tpu.matmul %148, %150, %cst_160 {dimension_numbers = #tpu.dot_dimension_numbers<[1], [0], [0], [1], [0, 0, 1, 1], [], []>} : vector<256x128xbf16>, vector<128x32xbf16>, vector<256x32xf32> -> vector<256x32xf32>
    %152 = arith.addf %146, %151 : vector<256x32xf32>
    %c2_161 = arith.constant 2 : index
    %c1_162 = arith.constant 1 : index
    %c0_163 = arith.constant 0 : index
    %153 = vector.load %arg14[%c2_161, %c1_162, %c0_163] : memref<18x18x128xbf16, #tpu.memory_space<vmem>>, vector<16x16x128xbf16>
    %154 = vector.shape_cast %153 : vector<16x16x128xbf16> to vector<256x128xbf16>
    %c7_164 = arith.constant 7 : index
    %c0_165 = arith.constant 0 : index
    %c0_166 = arith.constant 0 : index
    %155 = vector.load %arg7[%c7_164, %c0_165, %c0_166] : memref<9x128x32xbf16, #tpu.memory_space<vmem>>, vector<1x128x32xbf16>
    %156 = vector.shape_cast %155 : vector<1x128x32xbf16> to vector<128x32xbf16>
    %cst_167 = arith.constant dense<0.000000e+00> : vector<256x32xf32>
    %157 = tpu.matmul %154, %156, %cst_167 {dimension_numbers = #tpu.dot_dimension_numbers<[1], [0], [0], [1], [0, 0, 1, 1], [], []>} : vector<256x128xbf16>, vector<128x32xbf16>, vector<256x32xf32> -> vector<256x32xf32>
    %158 = arith.addf %152, %157 : vector<256x32xf32>
    %c2_168 = arith.constant 2 : index
    %c2_169 = arith.constant 2 : index
    %c0_170 = arith.constant 0 : index
    %159 = vector.load %arg14[%c2_168, %c2_169, %c0_170] : memref<18x18x128xbf16, #tpu.memory_space<vmem>>, vector<16x16x128xbf16>
    %160 = vector.shape_cast %159 : vector<16x16x128xbf16> to vector<256x128xbf16>
    %c8_171 = arith.constant 8 : index
    %c0_172 = arith.constant 0 : index
    %c0_173 = arith.constant 0 : index
    %161 = vector.load %arg7[%c8_171, %c0_172, %c0_173] : memref<9x128x32xbf16, #tpu.memory_space<vmem>>, vector<1x128x32xbf16>
    %162 = vector.shape_cast %161 : vector<1x128x32xbf16> to vector<128x32xbf16>
    %cst_174 = arith.constant dense<0.000000e+00> : vector<256x32xf32>
    %163 = tpu.matmul %160, %162, %cst_174 {dimension_numbers = #tpu.dot_dimension_numbers<[1], [0], [0], [1], [0, 0, 1, 1], [], []>} : vector<256x128xbf16>, vector<128x32xbf16>, vector<256x32xf32> -> vector<256x32xf32>
    %164 = arith.addf %158, %163 : vector<256x32xf32>
    %c0_175 = arith.constant 0 : index
    %c0_176 = arith.constant 0 : index
    %165 = vector.load %arg8[%c0_175, %c0_176] : memref<1x32xf32, #tpu.memory_space<vmem>>, vector<1x32xf32>
    %166 = vector.broadcast %165 : vector<1x32xf32> to vector<256x32xf32>
    %167 = arith.addf %164, %166 : vector<256x32xf32>
    %c0_177 = arith.constant 0 : index
    %c0_178 = arith.constant 0 : index
    %168 = vector.load %arg9[%c0_177, %c0_178] : memref<1x32xf32, #tpu.memory_space<vmem>>, vector<1x32xf32>
    %c0_179 = arith.constant 0 : index
    %c0_180 = arith.constant 0 : index
    %169 = vector.load %arg10[%c0_179, %c0_180] : memref<1x32xf32, #tpu.memory_space<vmem>>, vector<1x32xf32>
    %c0_181 = arith.constant 0 : index
    %c0_182 = arith.constant 0 : index
    %170 = vector.load %arg11[%c0_181, %c0_182] : memref<32x32xf32, #tpu.memory_space<vmem>>, vector<32x32xf32>
    %cst_183 = arith.constant dense<0.000000e+00> : vector<32xf32>
    %171 = vector.multi_reduction <add>, %167, %cst_183 [0] : vector<256x32xf32> to vector<32xf32>
    %172 = vector.shape_cast %171 : vector<32xf32> to vector<1x32xf32>
    %173 = arith.mulf %167, %167 : vector<256x32xf32>
    %cst_184 = arith.constant dense<0.000000e+00> : vector<32xf32>
    %174 = vector.multi_reduction <add>, %173, %cst_184 [0] : vector<256x32xf32> to vector<32xf32>
    %175 = vector.shape_cast %174 : vector<32xf32> to vector<1x32xf32>
    %cst_185 = arith.constant dense<0.000000e+00> : vector<1x32xf32>
    %176 = tpu.matmul %172, %170, %cst_185 {dimension_numbers = #tpu.dot_dimension_numbers<[1], [0], [0], [1], [0, 0, 1, 1], [], []>} : vector<1x32xf32>, vector<32x32xf32>, vector<1x32xf32> -> vector<1x32xf32>
    %cst_186 = arith.constant dense<0.000000e+00> : vector<1x32xf32>
    %177 = tpu.matmul %175, %170, %cst_186 {dimension_numbers = #tpu.dot_dimension_numbers<[1], [0], [0], [1], [0, 0, 1, 1], [], []>} : vector<1x32xf32>, vector<32x32xf32>, vector<1x32xf32> -> vector<1x32xf32>
    %178 = arith.mulf %176, %176 : vector<1x32xf32>
    %179 = arith.subf %177, %178 : vector<1x32xf32>
    %cst_187 = arith.constant 0.000000e+00 : f32
    %180 = vector.broadcast %cst_187 : f32 to vector<1x32xf32>
    %181 = arith.maximumf %179, %180 : vector<1x32xf32>
    %cst_188 = arith.constant 9.99999974E-6 : f32
    %182 = vector.broadcast %cst_188 : f32 to vector<1x32xf32>
    %183 = arith.addf %181, %182 : vector<1x32xf32>
    %184 = math.rsqrt %183 : vector<1x32xf32>
    %185 = vector.broadcast %176 : vector<1x32xf32> to vector<256x32xf32>
    %186 = arith.subf %167, %185 : vector<256x32xf32>
    %187 = arith.mulf %184, %168 : vector<1x32xf32>
    %188 = vector.broadcast %187 : vector<1x32xf32> to vector<256x32xf32>
    %189 = arith.mulf %186, %188 : vector<256x32xf32>
    %190 = vector.broadcast %169 : vector<1x32xf32> to vector<256x32xf32>
    %191 = arith.addf %189, %190 : vector<256x32xf32>
    %cst_189 = arith.constant 0.000000e+00 : f32
    %192 = vector.broadcast %cst_189 : f32 to vector<256x32xf32>
    %193 = arith.cmpf oge, %191, %192 : vector<256x32xf32>
    %cst_190 = arith.constant 2.000000e-01 : f32
    %194 = vector.broadcast %cst_190 : f32 to vector<256x32xf32>
    %195 = arith.mulf %194, %191 : vector<256x32xf32>
    %196 = arith.select %193, %191, %195 : vector<256x32xi1>, vector<256x32xf32>
    %197 = vector.shape_cast %196 : vector<256x32xf32> to vector<16x16x32xf32>
    %198 = tpu.concatenate %9, %197 in 2 : vector<16x16x32xf32>, vector<16x16x32xf32> -> vector<16x16x64xf32>
    %199 = vector.shape_cast %198 : vector<16x16x64xf32> to vector<16x1024xf32>
    %c0_191 = arith.constant 0 : index
    %c0_192 = arith.constant 0 : index
    %c0_193 = arith.constant 0 : index
    %200 = vector.load %arg12[%c0_191, %c0_192, %c0_193] : memref<1x16x1024xf32, #tpu.memory_space<vmem>>, vector<1x16x1024xf32>
    %201 = vector.shape_cast %200 : vector<1x16x1024xf32> to vector<16x1024xf32>
    %202 = vector.shape_cast %199 : vector<16x1024xf32> to vector<1x16x1024xf32>
    tpu.vector_store %arg12[%c0_191, %c0_192, %c0_193], %202 {strides = array<i32>} : memref<1x16x1024xf32, #tpu.memory_space<vmem>>, vector<1x16x1024xf32>,
    return
  }
  func.func @transform_0(%arg0: i32) -> (i32, i32, i32, i32) {
    %c0_i32 = arith.constant 0 : i32
    %c0_i32_0 = arith.constant 0 : i32
    %c0_i32_1 = arith.constant 0 : i32
    %c0_i32_2 = arith.constant 0 : i32
    return %arg0, %c0_i32, %c0_i32_0, %c0_i32_1 : i32, i32, i32, i32
  }
  func.func @transform_1(%arg0: i32) -> (i32, i32, i32) {
    %c0_i32 = arith.constant 0 : i32
    %c0_i32_0 = arith.constant 0 : i32
    %c0_i32_1 = arith.constant 0 : i32
    %c0_i32_2 = arith.constant 0 : i32
    return %c0_i32, %c0_i32_0, %c0_i32_1 : i32, i32, i32
  }
  func.func @transform_2(%arg0: i32) -> (i32, i32) {
    %c0_i32 = arith.constant 0 : i32
    %c0_i32_0 = arith.constant 0 : i32
    %c0_i32_1 = arith.constant 0 : i32
    return %c0_i32, %c0_i32_0 : i32, i32
  }
  func.func @transform_3(%arg0: i32) -> (i32, i32) {
    %c0_i32 = arith.constant 0 : i32
    %c0_i32_0 = arith.constant 0 : i32
    %c0_i32_1 = arith.constant 0 : i32
    return %c0_i32, %c0_i32_0 : i32, i32
  }
  func.func @transform_4(%arg0: i32) -> (i32, i32) {
    %c0_i32 = arith.constant 0 : i32
    %c0_i32_0 = arith.constant 0 : i32
    %c0_i32_1 = arith.constant 0 : i32
    return %c0_i32, %c0_i32_0 : i32, i32
  }
  func.func @transform_5(%arg0: i32) -> (i32, i32) {
    %c0_i32 = arith.constant 0 : i32
    %c0_i32_0 = arith.constant 0 : i32
    %c0_i32_1 = arith.constant 0 : i32
    return %c0_i32, %c0_i32_0 : i32, i32
  }
  func.func @transform_6(%arg0: i32) -> (i32, i32, i32) {
    %c0_i32 = arith.constant 0 : i32
    %c0_i32_0 = arith.constant 0 : i32
    %c0_i32_1 = arith.constant 0 : i32
    %c0_i32_2 = arith.constant 0 : i32
    return %c0_i32, %c0_i32_0, %c0_i32_1 : i32, i32, i32
  }
  func.func @transform_7(%arg0: i32) -> (i32, i32) {
    %c0_i32 = arith.constant 0 : i32
    %c0_i32_0 = arith.constant 0 : i32
    %c0_i32_1 = arith.constant 0 : i32
    return %c0_i32, %c0_i32_0 : i32, i32
  }
  func.func @transform_8(%arg0: i32) -> (i32, i32) {
    %c0_i32 = arith.constant 0 : i32
    %c0_i32_0 = arith.constant 0 : i32
    %c0_i32_1 = arith.constant 0 : i32
    return %c0_i32, %c0_i32_0 : i32, i32
  }
  func.func @transform_9(%arg0: i32) -> (i32, i32) {
    %c0_i32 = arith.constant 0 : i32
    %c0_i32_0 = arith.constant 0 : i32
    %c0_i32_1 = arith.constant 0 : i32
    return %c0_i32, %c0_i32_0 : i32, i32
  }
  func.func @transform_10(%arg0: i32) -> (i32, i32) {
    %c0_i32 = arith.constant 0 : i32
    %c0_i32_0 = arith.constant 0 : i32
    %c0_i32_1 = arith.constant 0 : i32
    return %c0_i32, %c0_i32_0 : i32, i32
  }
  func.func @transform_11(%arg0: i32) -> (i32, i32, i32) {
    %c0_i32 = arith.constant 0 : i32
    %c0_i32_0 = arith.constant 0 : i32
    %c0_i32_1 = arith.constant 0 : i32
    return %arg0, %c0_i32, %c0_i32_0 : i32, i32, i32
  }
}

</mosaic_0001>

<llo_original>
// kernel: _bottleneck_call.1
$region0: #{_bottleneck_call.1}
  #allocation0 [shape = 'u32[]', space=smem, size = 0x4, offset = 0x4, fixed_abs, tag = 'smem constant byte address 0x4 - core index']
  #allocation1 [shape = 'u32[144,128]{1,0:T(1,128)}', space=vmem, size = 0x12000, scoped, tag = 'internal scratch']
  #allocation2 [shape = 'bf16[18,18,32]{2,1,0:T(8,128)(2,1)}', space=vmem, size = 0x1b000, scoped, tag = 'scratch operand']
  #allocation3 [shape = 'bf16[18,18,128]{2,1,0:T(8,128)(2,1)}', space=vmem, size = 0x1b000, scoped, tag = 'scratch operand']
  %s0 = inlined_call_operand.vmem [shape: f32[2,16,16,32], index: 0, kind: input, shape index: {}]
  %s1 = inlined_call_operand.vmem [shape: bf16[9,32,128], index: 1, kind: input, shape index: {}]
  %s2 = inlined_call_operand.vmem [shape: f32[1,128], index: 2, kind: input, shape index: {}]
  %s3 = inlined_call_operand.vmem [shape: f32[1,128], index: 3, kind: input, shape index: {}]
  %s4 = inlined_call_operand.vmem [shape: f32[1,128], index: 4, kind: input, shape index: {}]
  %s5 = inlined_call_operand.vmem [shape: f32[128,128], index: 5, kind: input, shape index: {}]
  %s6 = inlined_call_operand.vmem [shape: bf16[9,128,32], index: 6, kind: input, shape index: {}]
  %s7 = inlined_call_operand.vmem [shape: f32[1,32], index: 7, kind: input, shape index: {}]
  %s8 = inlined_call_operand.vmem [shape: f32[1,32], index: 8, kind: input, shape index: {}]
  %s9 = inlined_call_operand.vmem [shape: f32[1,32], index: 9, kind: input, shape index: {}]
  %s10 = inlined_call_operand.vmem [shape: f32[32,32], index: 10, kind: input, shape index: {}]
  %s11 = inlined_call_operand.vmem [shape: f32[2,16,1024], index: 11, kind: output, shape index: {}]
  %s12 = sld [smem:[#allocation0]]
  $region77: #{_bottleneck_call.1} parent=0
    _
  %s14 = ssub.s32 1, %s12
  %s15 = scalar_select 0, %s14, %s12
  loop: start=0, step=1, limit=4
  $region2: #{_bottleneck_call.1} parent=0 // loop_pre_header
    _
  $region3: #{_bottleneck_call.1} parent=0 // loop_header
    %s17 = sphi 0, %s21
    %p18 = scmp.ge.s32.totalorder %s17, 4
    %s27 = sphi 0, %s29
    %s30 = sphi 0, %s27
    %s31 = sphi 0, %s30
    %s47 = sphi 0, %s31
    %s51 = sphi 0, %s51
    %s53 = sphi 0, %s51
    %s54 = sphi 0, %s53
    %s68 = sphi 0, %s54
    %s72 = sphi 0, %s72
    %s74 = sphi 0, %s72
    %s75 = sphi 0, %s74
    %s89 = sphi 0, %s75
    %s93 = sphi 0, %s93
    %s95 = sphi 0, %s93
    %s96 = sphi 0, %s95
    %s110 = sphi 0, %s96
    %s114 = sphi 0, %s114
    %s116 = sphi 0, %s114
    %s117 = sphi 0, %s116
    %s131 = sphi 0, %s117
    %s135 = sphi 0, %s135
    %s137 = sphi 0, %s135
    %s138 = sphi 0, %s137
    %s152 = sphi 0, %s138
    %s156 = sphi 0, %s156
    %s158 = sphi 0, %s156
    %s159 = sphi 0, %s158
    %s173 = sphi 0, %s159
    %s177 = sphi 0, %s177
    %s179 = sphi 0, %s177
    %s180 = sphi 0, %s179
    %s194 = sphi 0, %s180
    %s198 = sphi 0, %s198
    %s200 = sphi 0, %s198
    %s201 = sphi 0, %s200
    %s215 = sphi 0, %s201
    %s219 = sphi 0, %s219
    %s221 = sphi 0, %s219
    %s222 = sphi 0, %s221
    %s236 = sphi 0, %s222
    %s240 = sphi 0, %s240
    %s242 = sphi 0, %s240
    %s243 = sphi 0, %s242
    %s257 = sphi 0, %s243
    %s263 = sphi 0, %s265
    %s266 = sphi 0, %s263
    %s267 = sphi 0, %s266
    %s283 = sphi 0, %s267
  $region4: #{_bottleneck_call.1} parent=0 // loop_header_branch
    %20 = sbr.rel (%p18) target = $region8
  $region5: #{_bottleneck_call.1} parent=0 // loop_body
    %s22 = ssub.s32 %s17, 1
    %s23 = ssub.s32 %s17, 2
    %s24 = sadd.s32 %s17, 1
    %s25 = ssub.s32 %s17, %s24
    %p26 = scmp.eq.s32.totalorder %s25, 0
    %s28 = sadd.s32 %s27, 1
    %s29 = scalar_select %p26, %s27, %s28
    %p32 = pneg %p26
    %p33 = scmp.eq.s32.totalorder %s17, 1
    %p34 = por %p32, %p33
    %p35 = scmp.ne.s32.totalorder %s27, %s30
    %p36 = scmp.eq.s32.totalorder %s17, 0
    %p37 = por %p35, %p36
    %p38 = scmp.ne.s32.totalorder %s27, %s30
    %p39 = scmp.eq.s32.totalorder %s22, 1
    %p40 = por %p38, %p39
    %p41 = scmp.ne.s32.totalorder %s30, %s31
    %p42 = scmp.eq.s32.totalorder %s22, 0
    %p43 = por %p41, %p42
    %p44 = scmp.ne.s32.totalorder %s30, %s31
    %p45 = scmp.eq.s32.totalorder %s23, 1
    %p46 = por %p44, %p45
    %p48 = scmp.ne.s32.totalorder %s31, %s47
    %p49 = scmp.eq.s32.totalorder %s23, 0
    %p50 = por %p48, %p49
    %s52 = sadd.s32 %s51, 1
    %p55 = scmp.eq.s32.totalorder %s17, 1
    %p56 = scmp.ne.s32.totalorder %s51, %s53
    %p57 = scmp.eq.s32.totalorder %s17, 0
    %p58 = por %p56, %p57
    %p59 = scmp.ne.s32.totalorder %s51, %s53
    %p60 = scmp.eq.s32.totalorder %s22, 1
    %p61 = por %p59, %p60
    %p62 = scmp.ne.s32.totalorder %s53, %s54
    %p63 = scmp.eq.s32.totalorder %s22, 0
    %p64 = por %p62, %p63
    %p65 = scmp.ne.s32.totalorder %s53, %s54
    %p66 = scmp.eq.s32.totalorder %s23, 1
    %p67 = por %p65, %p66
    %p69 = scmp.ne.s32.totalorder %s54, %s68
    %p70 = scmp.eq.s32.totalorder %s23, 0
    %p71 = por %p69, %p70
    %s73 = sadd.s32 %s72, 1
    %p76 = scmp.eq.s32.totalorder %s17, 1
    %p77 = scmp.ne.s32.totalorder %s72, %s74
    %p78 = scmp.eq.s32.totalorder %s17, 0
    %p79 = por %p77, %p78
    %p80 = scmp.ne.s32.totalorder %s72, %s74
    %p81 = scmp.eq.s32.totalorder %s22, 1
    %p82 = por %p80, %p81
    %p83 = scmp.ne.s32.totalorder %s74, %s75
    %p84 = scmp.eq.s32.totalorder %s22, 0
    %p85 = por %p83, %p84
    %p86 = scmp.ne.s32.totalorder %s74, %s75
    %p87 = scmp.eq.s32.totalorder %s23, 1
    %p88 = por %p86, %p87
    %p90 = scmp.ne.s32.totalorder %s75, %s89
    %p91 = scmp.eq.s32.totalorder %s23, 0
    %p92 = por %p90, %p91
    %s94 = sadd.s32 %s93, 1
    %p97 = scmp.eq.s32.totalorder %s17, 1
    %p98 = scmp.ne.s32.totalorder %s93, %s95
    %p99 = scmp.eq.s32.totalorder %s17, 0
    %p100 = por %p98, %p99
    %p101 = scmp.ne.s32.totalorder %s93, %s95
    %p102 = scmp.eq.s32.totalorder %s22, 1
    %p103 = por %p101, %p102
    %p104 = scmp.ne.s32.totalorder %s95, %s96
    %p105 = scmp.eq.s32.totalorder %s22, 0
    %p106 = por %p104, %p105
    %p107 = scmp.ne.s32.totalorder %s95, %s96
    %p108 = scmp.eq.s32.totalorder %s23, 1
    %p109 = por %p107, %p108
    %p111 = scmp.ne.s32.totalorder %s96, %s110
    %p112 = scmp.eq.s32.totalorder %s23, 0
    %p113 = por %p111, %p112
    %s115 = sadd.s32 %s114, 1
    %p118 = scmp.eq.s32.totalorder %s17, 1
    %p119 = scmp.ne.s32.totalorder %s114, %s116
    %p120 = scmp.eq.s32.totalorder %s17, 0
    %p121 = por %p119, %p120
    %p122 = scmp.ne.s32.totalorder %s114, %s116
    %p123 = scmp.eq.s32.totalorder %s22, 1
    %p124 = por %p122, %p123
    %p125 = scmp.ne.s32.totalorder %s116, %s117
    %p126 = scmp.eq.s32.totalorder %s22, 0
    %p127 = por %p125, %p126
    %p128 = scmp.ne.s32.totalorder %s116, %s117
    %p129 = scmp.eq.s32.totalorder %s23, 1
    %p130 = por %p128, %p129
    %p132 = scmp.ne.s32.totalorder %s117, %s131
    %p133 = scmp.eq.s32.totalorder %s23, 0
    %p134 = por %p132, %p133
    %s136 = sadd.s32 %s135, 1
    %p139 = scmp.eq.s32.totalorder %s17, 1
    %p140 = scmp.ne.s32.totalorder %s135, %s137
    %p141 = scmp.eq.s32.totalorder %s17, 0
    %p142 = por %p140, %p141
    %p143 = scmp.ne.s32.totalorder %s135, %s137
    %p144 = scmp.eq.s32.totalorder %s22, 1
    %p145 = por %p143, %p144
    %p146 = scmp.ne.s32.totalorder %s137, %s138
    %p147 = scmp.eq.s32.totalorder %s22, 0
    %p148 = por %p146, %p147
    %p149 = scmp.ne.s32.totalorder %s137, %s138
    %p150 = scmp.eq.s32.totalorder %s23, 1
    %p151 = por %p149, %p150
    %p153 = scmp.ne.s32.totalorder %s138, %s152
    %p154 = scmp.eq.s32.totalorder %s23, 0
    %p155 = por %p153, %p154
    %s157 = sadd.s32 %s156, 1
    %p160 = scmp.eq.s32.totalorder %s17, 1
    %p161 = scmp.ne.s32.totalorder %s156, %s158
    %p162 = scmp.eq.s32.totalorder %s17, 0
    %p163 = por %p161, %p162
    %p164 = scmp.ne.s32.totalorder %s156, %s158
    %p165 = scmp.eq.s32.totalorder %s22, 1
    %p166 = por %p164, %p165
    %p167 = scmp.ne.s32.totalorder %s158, %s159
    %p168 = scmp.eq.s32.totalorder %s22, 0
    %p169 = por %p167, %p168
    %p170 = scmp.ne.s32.totalorder %s158, %s159
    %p171 = scmp.eq.s32.totalorder %s23, 1
    %p172 = por %p170, %p171
    %p174 = scmp.ne.s32.totalorder %s159, %s173
    %p175 = scmp.eq.s32.totalorder %s23, 0
    %p176 = por %p174, %p175
    %s178 = sadd.s32 %s177, 1
    %p181 = scmp.eq.s32.totalorder %s17, 1
    %p182 = scmp.ne.s32.totalorder %s177, %s179
    %p183 = scmp.eq.s32.totalorder %s17, 0
    %p184 = por %p182, %p183
    %p185 = scmp.ne.s32.totalorder %s177, %s179
    %p186 = scmp.eq.s32.totalorder %s22, 1
    %p187 = por %p185, %p186
    %p188 = scmp.ne.s32.totalorder %s179, %s180
    %p189 = scmp.eq.s32.totalorder %s22, 0
    %p190 = por %p188, %p189
    %p191 = scmp.ne.s32.totalorder %s179, %s180
    %p192 = scmp.eq.s32.totalorder %s23, 1
    %p193 = por %p191, %p192
    %p195 = scmp.ne.s32.totalorder %s180, %s194
    %p196 = scmp.eq.s32.totalorder %s23, 0
    %p197 = por %p195, %p196
    %s199 = sadd.s32 %s198, 1
    %p202 = scmp.eq.s32.totalorder %s17, 1
    %p203 = scmp.ne.s32.totalorder %s198, %s200
    %p204 = scmp.eq.s32.totalorder %s17, 0
    %p205 = por %p203, %p204
    %p206 = scmp.ne.s32.totalorder %s198, %s200
    %p207 = scmp.eq.s32.totalorder %s22, 1
    %p208 = por %p206, %p207
    %p209 = scmp.ne.s32.totalorder %s200, %s201
    %p210 = scmp.eq.s32.totalorder %s22, 0
    %p211 = por %p209, %p210
    %p212 = scmp.ne.s32.totalorder %s200, %s201
    %p213 = scmp.eq.s32.totalorder %s23, 1
    %p214 = por %p212, %p213
    %p216 = scmp.ne.s32.totalorder %s201, %s215
    %p217 = scmp.eq.s32.totalorder %s23, 0
    %p218 = por %p216, %p217
    %s220 = sadd.s32 %s219, 1
    %p223 = scmp.eq.s32.totalorder %s17, 1
    %p224 = scmp.ne.s32.totalorder %s219, %s221
    %p225 = scmp.eq.s32.totalorder %s17, 0
    %p226 = por %p224, %p225
    %p227 = scmp.ne.s32.totalorder %s219, %s221
    %p228 = scmp.eq.s32.totalorder %s22, 1
    %p229 = por %p227, %p228
    %p230 = scmp.ne.s32.totalorder %s221, %s222
    %p231 = scmp.eq.s32.totalorder %s22, 0
    %p232 = por %p230, %p231
    %p233 = scmp.ne.s32.totalorder %s221, %s222
    %p234 = scmp.eq.s32.totalorder %s23, 1
    %p235 = por %p233, %p234
    %p237 = scmp.ne.s32.totalorder %s222, %s236
    %p238 = scmp.eq.s32.totalorder %s23, 0
    %p239 = por %p237, %p238
    %s241 = sadd.s32 %s240, 1
    %p244 = scmp.eq.s32.totalorder %s17, 1
    %p245 = scmp.ne.s32.totalorder %s240, %s242
    %p246 = scmp.eq.s32.totalorder %s17, 0
    %p247 = por %p245, %p246
    %p248 = scmp.ne.s32.totalorder %s240, %s242
    %p249 = scmp.eq.s32.totalorder %s22, 1
    %p250 = por %p248, %p249
    %p251 = scmp.ne.s32.totalorder %s242, %s243
    %p252 = scmp.eq.s32.totalorder %s22, 0
    %p253 = por %p251, %p252
    %p254 = scmp.ne.s32.totalorder %s242, %s243
    %p255 = scmp.eq.s32.totalorder %s23, 1
    %p256 = por %p254, %p255
    %p258 = scmp.ne.s32.totalorder %s243, %s257
    %p259 = scmp.eq.s32.totalorder %s23, 0
    %p260 = por %p258, %p259
    %s261 = ssub.s32 %s17, %s24
    %p262 = scmp.eq.s32.totalorder %s261, 0
    %s264 = sadd.s32 %s263, 1
    %s265 = scalar_select %p262, %s263, %s264
    %p268 = pneg %p262
    %p269 = scmp.eq.s32.totalorder %s17, 1
    %p270 = por %p268, %p269
    %p271 = scmp.ne.s32.totalorder %s263, %s266
    %p272 = scmp.eq.s32.totalorder %s17, 0
    %p273 = por %p271, %p272
    %p274 = scmp.ne.s32.totalorder %s263, %s266
    %p275 = scmp.eq.s32.totalorder %s22, 1
    %p276 = por %p274, %p275
    %p277 = scmp.ne.s32.totalorder %s266, %s267
    %p278 = scmp.eq.s32.totalorder %s22, 0
    %p279 = por %p277, %p278
    %p280 = scmp.ne.s32.totalorder %s266, %s267
    %p281 = scmp.eq.s32.totalorder %s23, 1
    %p282 = por %p280, %p281
    %p284 = scmp.ne.s32.totalorder %s267, %s283
    %p285 = scmp.eq.s32.totalorder %s23, 0
    %p286 = por %p284, %p285
    %p287 = scmp.le.s32.totalorder 1, %s17
    %p288 = scmp.lt.s32.totalorder %s17, 3
    %p289 = pnand %p287, %p288
    %p290 = pneg %p289
    // Predicated region
    $region9: #{_bottleneck_call.1} parent=5 // pred_check
      _
    $region10: #{_bottleneck_call.1} parent=5 // pred_check_branch
      %292 = sbr.rel (%p289) target = $region12
    $region11: #{_bottleneck_call.1} parent=5 // pred_region
      %s293 = ssub.s32 %s17, 1
      // Predicated region
      $region13: #{_bottleneck_call.1} parent=11 // pred_check
        %p294 = pneg %p64
      $region14: #{_bottleneck_call.1} parent=11 // pred_check_branch
        %296 = sbr.rel (%p294) target = $region16
      $region15: #{_bottleneck_call.1} parent=11 // pred_region
        _
      $region16: #{_bottleneck_call.1} parent=11 // pred_fallthru
        _
      // Predicated region
      $region17: #{_bottleneck_call.1} parent=11 // pred_check
        %p297 = pneg %p85
      $region18: #{_bottleneck_call.1} parent=11 // pred_check_branch
        %299 = sbr.rel (%p297) target = $region20
      $region19: #{_bottleneck_call.1} parent=11 // pred_region
        _
      $region20: #{_bottleneck_call.1} parent=11 // pred_fallthru
        _
      // Predicated region
      $region21: #{_bottleneck_call.1} parent=11 // pred_check
        %p300 = pneg %p106
      $region22: #{_bottleneck_call.1} parent=11 // pred_check_branch
        %302 = sbr.rel (%p300) target = $region24
      $region23: #{_bottleneck_call.1} parent=11 // pred_region
        _
      $region24: #{_bottleneck_call.1} parent=11 // pred_fallthru
        _
      // Predicated region
      $region25: #{_bottleneck_call.1} parent=11 // pred_check
        %p303 = pneg %p127
      $region26: #{_bottleneck_call.1} parent=11 // pred_check_branch
        %305 = sbr.rel (%p303) target = $region28
      $region27: #{_bottleneck_call.1} parent=11 // pred_region
        _
      $region28: #{_bottleneck_call.1} parent=11 // pred_fallthru
        _
      // Predicated region
      $region29: #{_bottleneck_call.1} parent=11 // pred_check
        %p306 = pneg %p148
      $region30: #{_bottleneck_call.1} parent=11 // pred_check_branch
        %308 = sbr.rel (%p306) target = $region32
      $region31: #{_bottleneck_call.1} parent=11 // pred_region
        _
      $region32: #{_bottleneck_call.1} parent=11 // pred_fallthru
        _
      // Predicated region
      $region33: #{_bottleneck_call.1} parent=11 // pred_check
        %p309 = pneg %p169
      $region34: #{_bottleneck_call.1} parent=11 // pred_check_branch
        %311 = sbr.rel (%p309) target = $region36
      $region35: #{_bottleneck_call.1} parent=11 // pred_region
        _
      $region36: #{_bottleneck_call.1} parent=11 // pred_fallthru
        _
      // Predicated region
      $region37: #{_bottleneck_call.1} parent=11 // pred_check
        %p312 = pneg %p190
      $region38: #{_bottleneck_call.1} parent=11 // pred_check_branch
        %314 = sbr.rel (%p312) target = $region40
      $region39: #{_bottleneck_call.1} parent=11 // pred_region
        _
      $region40: #{_bottleneck_call.1} parent=11 // pred_fallthru
        _
      // Predicated region
      $region41: #{_bottleneck_call.1} parent=11 // pred_check
        %p315 = pneg %p211
      $region42: #{_bottleneck_call.1} parent=11 // pred_check_branch
        %317 = sbr.rel (%p315) target = $region44
      $region43: #{_bottleneck_call.1} parent=11 // pred_region
        _
      $region44: #{_bottleneck_call.1} parent=11 // pred_fallthru
        _
      // Predicated region
      $region45: #{_bottleneck_call.1} parent=11 // pred_check
        %p318 = pneg %p232
      $region46: #{_bottleneck_call.1} parent=11 // pred_check_branch
        %320 = sbr.rel (%p318) target = $region48
      $region47: #{_bottleneck_call.1} parent=11 // pred_region
        _
      $region48: #{_bottleneck_call.1} parent=11 // pred_fallthru
        _
      // Predicated region
      $region49: #{_bottleneck_call.1} parent=11 // pred_check
        %p321 = pneg %p253
      $region50: #{_bottleneck_call.1} parent=11 // pred_check_branch
        %323 = sbr.rel (%p321) target = $region52
      $region51: #{_bottleneck_call.1} parent=11 // pred_region
        _
      $region52: #{_bottleneck_call.1} parent=11 // pred_fallthru
        _
    $region12: #{_bottleneck_call.1} parent=5 // pred_fallthru
      _
    %p324 = scmp.lt.s32.totalorder %s17, 2
    // Predicated region
    $region53: #{_bottleneck_call.1} parent=5 // pred_check
      %p325 = pneg %p324
    $region54: #{_bottleneck_call.1} parent=5 // pred_check_branch
      %327 = sbr.rel (%p325) target = $region56
    $region55: #{_bottleneck_call.1} parent=5 // pred_region
      // Predicated region
      $region57: #{_bottleneck_call.1} parent=55 // pred_check
        %p328 = pneg %p37
      $region58: #{_bottleneck_call.1} parent=55 // pred_check_branch
        %330 = sbr.rel (%p328) target = $region60
      $region59: #{_bottleneck_call.1} parent=55 // pred_region
        %p331 = scmp.lt.s32.totalorder %s17, 1
        %s332 = scalar_select %p331, %s17, 1
        %s333 = smul.addr %s332, 32
        %s334 = smul.addr %s333, 8
        %s335 = scalar_lea.vmem %s0, %s334
      $region60: #{_bottleneck_call.1} parent=55 // pred_fallthru
        _
    $region56: #{_bottleneck_call.1} parent=5 // pred_fallthru
      _
    %p336 = scmp.le.s32.totalorder 1, %s17
    %p337 = scmp.lt.s32.totalorder %s17, 3
    %p338 = pnand %p336, %p337
    %p339 = pneg %p338
    // Predicated region
    $region61: #{_bottleneck_call.1} parent=5 // pred_check
      _
    $region62: #{_bottleneck_call.1} parent=5 // pred_check_branch
      %341 = sbr.rel (%p338) target = $region64
    $region63: #{_bottleneck_call.1} parent=5 // pred_region
      %s342 = ssub.s32 %s17, 1
      %p343 = scmp.lt.s32.totalorder %s22, 1
      %s344 = scalar_select %p343, %s22, 1
      %s345 = smul.addr %s344, 32
      %s346 = smul.addr %s345, 8
      %s347 = scalar_lea.vmem %s0, %s346
      %p348 = pneg %p43
      %p349 = pneg %p40
      %p350 = pneg %p64
      %p351 = pneg %p61
      %p352 = pneg %p85
      %p353 = pneg %p82
      %p354 = pneg %p106
      %p355 = pneg %p103
      %p356 = pneg %p127
      %p357 = pneg %p124
      %p358 = pneg %p148
      %p359 = pneg %p145
      %p360 = pneg %p169
      %p361 = pneg %p166
      %p362 = pneg %p190
      %p363 = pneg %p187
      %p364 = pneg %p211
      %p365 = pneg %p208
      %p366 = pneg %p232
      %p367 = pneg %p229
      %p368 = pneg %p253
      %p369 = pneg %p250
      %p370 = pneg %p279
      %p371 = pneg %p276
      %p372 = scmp.lt.s32.totalorder %s22, 1
      %s373 = scalar_select %p372, %s22, 1
      %s374 = smul.addr %s373, 16
      %s375 = smul.addr %s374, 8
      %s376 = scalar_lea.vmem %s11, %s375
      %p377 = scmp.lt.s32.totalorder %s22, 1
      %s378 = scalar_select %p377, %s22, 1
      %s379 = smul.addr %s378, 32
      %s380 = smul.addr %s379, 8
      %s381 = scalar_lea.vmem %s0, %s380
      %p382 = scmp.lt.s32.totalorder %s22, 1
      %s383 = scalar_select %p382, %s22, 1
      %s384 = smul.addr %s383, 16
      %s385 = smul.addr %s384, 8
      %s386 = scalar_lea.vmem %s11, %s385
      %vm388 = vcmask 257024
      %389 = vst.msk [vmem:[#allocation2] sm:$0xf] %vm388, 0
      %390 = vst.msk [vmem:[#allocation2 + $0x4] sm:$0xf] %vm388, 0
      %vm391 = vcmask 253952
      %392 = vst.msk [vmem:[#allocation2 + $0x8] sm:$0x1] %vm391, 0
      %s393 = scalar_lea.vmem [#allocation2], 204
      %394 = vst.msk [vmem:[%s393] sm:$0xf] %vm388, 0
      %395 = vst.msk [vmem:[%s393 + $0x4] sm:$0xf] %vm388, 0
      %396 = vst.msk [vmem:[%s393 + $0x8] sm:$0x1] %vm391, 0
      %vm397 = vcmask 253952
      %vm398 = vsmask.f32 256
      %vm399 = vmand %vm397, %vm398
      %v400 = vld [vmem:[#allocation2] sm:$0x1]
      %v401 = vsel %vm399, 0, %v400
      %402 = vst [vmem:[#allocation2] sm:$0x1] %v401
      %v403 = vld [vmem:[#allocation2 + $0xc] sm:$0x1]
      %v404 = vsel %vm399, 0, %v403
      %405 = vst [vmem:[#allocation2 + $0xc] sm:$0x1] %v404
      %v406 = vld [vmem:[#allocation2 + $0x18] sm:$0x1]
      %v407 = vsel %vm399, 0, %v406
      %408 = vst [vmem:[#allocation2 + $0x18] sm:$0x1] %v407
      %v409 = vld [vmem:[#allocation2 + $0x24] sm:$0x1]
      %v410 = vsel %vm399, 0, %v409
      %411 = vst [vmem:[#allocation2 + $0x24] sm:$0x1] %v410
      %v412 = vld [vmem:[#allocation2 + $0x30] sm:$0x1]
      %v413 = vsel %vm399, 0, %v412
      %414 = vst [vmem:[#allocation2 + $0x30] sm:$0x1] %v413
      %v415 = vld [vmem:[#allocation2 + $0x3c] sm:$0x1]
      %v416 = vsel %vm399, 0, %v415
      %417 = vst [vmem:[#allocation2 + $0x3c] sm:$0x1] %v416
      %v418 = vld [vmem:[#allocation2 + $0x48] sm:$0x1]
      %v419 = vsel %vm399, 0, %v418
      %420 = vst [vmem:[#allocation2 + $0x48] sm:$0x1] %v419
      %v421 = vld [vmem:[#allocation2 + $0x54] sm:$0x1]
      %v422 = vsel %vm399, 0, %v421
      %423 = vst [vmem:[#allocation2 + $0x54] sm:$0x1] %v422
      %v424 = vld [vmem:[#allocation2 + $0x60] sm:$0x1]
      %v425 = vsel %vm399, 0, %v424
      %426 = vst [vmem:[#allocation2 + $0x60] sm:$0x1] %v425
      %v427 = vld [vmem:[#allocation2 + $0x6c] sm:$0x1]
      %v428 = vsel %vm399, 0, %v427
      %429 = vst [vmem:[#allocation2 + $0x6c] sm:$0x1] %v428
      %v430 = vld [vmem:[#allocation2 + $0x78] sm:$0x1]
      %v431 = vsel %vm399, 0, %v430
      %432 = vst [vmem:[#allocation2 + $0x78] sm:$0x1] %v431
      %v433 = vld [vmem:[#allocation2 + $0x84] sm:$0x1]
      %v434 = vsel %vm399, 0, %v433
      %435 = vst [vmem:[#allocation2 + $0x84] sm:$0x1] %v434
      %v436 = vld [vmem:[#allocation2 + $0x90] sm:$0x1]
      %v437 = vsel %vm399, 0, %v436
      %438 = vst [vmem:[#allocation2 + $0x90] sm:$0x1] %v437
      %v439 = vld [vmem:[#allocation2 + $0x9c] sm:$0x1]
      %v440 = vsel %vm399, 0, %v439
      %441 = vst [vmem:[#allocation2 + $0x9c] sm:$0x1] %v440
      %v442 = vld [vmem:[#allocation2 + $0xa8] sm:$0x1]
      %v443 = vsel %vm399, 0, %v442
      %444 = vst [vmem:[#allocation2 + $0xa8] sm:$0x1] %v443
      %v445 = vld [vmem:[#allocation2 + $0xb4] sm:$0x1]
      %v446 = vsel %vm399, 0, %v445
      %447 = vst [vmem:[#allocation2 + $0xb4] sm:$0x1] %v446
      %v448 = vld [vmem:[#allocation2 + $0xc0] sm:$0x1]
      %v449 = vsel %vm399, 0, %v448
      %450 = vst [vmem:[#allocation2 + $0xc0] sm:$0x1] %v449
      %v451 = vld [vmem:[#allocation2 + $0xcc] sm:$0x1]
      %v452 = vsel %vm399, 0, %v451
      %453 = vst [vmem:[#allocation2 + $0xcc] sm:$0x1] %v452
      %vm454 = vsmask.f32 7938
      %vm455 = vmand %vm397, %vm454
      %v456 = vld [vmem:[#allocation2 + $0x8] sm:$0x1]
      %v457 = vsel %vm455, 0, %v456
      %458 = vst [vmem:[#allocation2 + $0x8] sm:$0x1] %v457
      %v459 = vld [vmem:[#allocation2 + $0x14] sm:$0x1]
      %v460 = vsel %vm455, 0, %v459
      %461 = vst [vmem:[#allocation2 + $0x14] sm:$0x1] %v460
      %v462 = vld [vmem:[#allocation2 + $0x20] sm:$0x1]
      %v463 = vsel %vm455, 0, %v462
      %464 = vst [vmem:[#allocation2 + $0x20] sm:$0x1] %v463
      %v465 = vld [vmem:[#allocation2 + $0x2c] sm:$0x1]
      %v466 = vsel %vm455, 0, %v465
      %467 = vst [vmem:[#allocation2 + $0x2c] sm:$0x1] %v466
      %v468 = vld [vmem:[#allocation2 + $0x38] sm:$0x1]
      %v469 = vsel %vm455, 0, %v468
      %470 = vst [vmem:[#allocation2 + $0x38] sm:$0x1] %v469
      %v471 = vld [vmem:[#allocation2 + $0x44] sm:$0x1]
      %v472 = vsel %vm455, 0, %v471
      %473 = vst [vmem:[#allocation2 + $0x44] sm:$0x1] %v472
      %v474 = vld [vmem:[#allocation2 + $0x50] sm:$0x1]
      %v475 = vsel %vm455, 0, %v474
      %476 = vst [vmem:[#allocation2 + $0x50] sm:$0x1] %v475
      %v477 = vld [vmem:[#allocation2 + $0x5c] sm:$0x1]
      %v478 = vsel %vm455, 0, %v477
      %479 = vst [vmem:[#allocation2 + $0x5c] sm:$0x1] %v478
      %v480 = vld [vmem:[#allocation2 + $0x68] sm:$0x1]
      %v481 = vsel %vm455, 0, %v480
      %482 = vst [vmem:[#allocation2 + $0x68] sm:$0x1] %v481
      %v483 = vld [vmem:[#allocation2 + $0x74] sm:$0x1]
      %v484 = vsel %vm455, 0, %v483
      %485 = vst [vmem:[#allocation2 + $0x74] sm:$0x1] %v484
      %v486 = vld [vmem:[#allocation2 + $0x80] sm:$0x1]
      %v487 = vsel %vm455, 0, %v486
      %488 = vst [vmem:[#allocation2 + $0x80] sm:$0x1] %v487
      %v489 = vld [vmem:[#allocation2 + $0x8c] sm:$0x1]
      %v490 = vsel %vm455, 0, %v489
      %491 = vst [vmem:[#allocation2 + $0x8c] sm:$0x1] %v490
      %v492 = vld [vmem:[#allocation2 + $0x98] sm:$0x1]
      %v493 = vsel %vm455, 0, %v492
      %494 = vst [vmem:[#allocation2 + $0x98] sm:$0x1] %v493
      %v495 = vld [vmem:[#allocation2 + $0xa4] sm:$0x1]
      %v496 = vsel %vm455, 0, %v495
      %497 = vst [vmem:[#allocation2 + $0xa4] sm:$0x1] %v496
      %v498 = vld [vmem:[#allocation2 + $0xb0] sm:$0x1]
      %v499 = vsel %vm455, 0, %v498
      %500 = vst [vmem:[#allocation2 + $0xb0] sm:$0x1] %v499
      %v501 = vld [vmem:[#allocation2 + $0xbc] sm:$0x1]
      %v502 = vsel %vm455, 0, %v501
      %503 = vst [vmem:[#allocation2 + $0xbc] sm:$0x1] %v502
      %v504 = vld [vmem:[#allocation2 + $0xc8] sm:$0x1]
      %v505 = vsel %vm455, 0, %v504
      %506 = vst [vmem:[#allocation2 + $0xc8] sm:$0x1] %v505
      %v507 = vld [vmem:[#allocation2 + $0xd4] sm:$0x1]
      %v508 = vsel %vm455, 0, %v507
      %509 = vst [vmem:[#allocation2 + $0xd4] sm:$0x1] %v508
      %v510 = vld [vmem:[%s381] sm:$0xff]
      %v511 = vld [vmem:[%s381 + $0x8] sm:$0xff]
      %v512 = vld [vmem:[%s381 + $0x10] sm:$0xff]
      %v513 = vld [vmem:[%s381 + $0x18] sm:$0xff]
      %v514 = vld [vmem:[%s381 + $0x20] sm:$0xff]
      %v515 = vld [vmem:[%s381 + $0x28] sm:$0xff]
      %v516 = vld [vmem:[%s381 + $0x30] sm:$0xff]
      %v517 = vld [vmem:[%s381 + $0x38] sm:$0xff]
      %v518 = vld [vmem:[%s381 + $0x40] sm:$0xff]
      %v519 = vld [vmem:[%s381 + $0x48] sm:$0xff]
      %v520 = vld [vmem:[%s381 + $0x50] sm:$0xff]
      %v521 = vld [vmem:[%s381 + $0x58] sm:$0xff]
      %v522 = vld [vmem:[%s381 + $0x60] sm:$0xff]
      %v523 = vld [vmem:[%s381 + $0x68] sm:$0xff]
      %v524 = vld [vmem:[%s381 + $0x70] sm:$0xff]
      %v525 = vld [vmem:[%s381 + $0x78] sm:$0xff]
      %v526 = vld [vmem:[%s381 + $0x80] sm:$0xff]
      %v527 = vld [vmem:[%s381 + $0x88] sm:$0xff]
      %v528 = vld [vmem:[%s381 + $0x90] sm:$0xff]
      %v529 = vld [vmem:[%s381 + $0x98] sm:$0xff]
      %v530 = vld [vmem:[%s381 + $0xa0] sm:$0xff]
      %v531 = vld [vmem:[%s381 + $0xa8] sm:$0xff]
      %v532 = vld [vmem:[%s381 + $0xb0] sm:$0xff]
      %v533 = vld [vmem:[%s381 + $0xb8] sm:$0xff]
      %v534 = vld [vmem:[%s381 + $0xc0] sm:$0xff]
      %v535 = vld [vmem:[%s381 + $0xc8] sm:$0xff]
      %v536 = vld [vmem:[%s381 + $0xd0] sm:$0xff]
      %v537 = vld [vmem:[%s381 + $0xd8] sm:$0xff]
      %v538 = vld [vmem:[%s381 + $0xe0] sm:$0xff]
      %v539 = vld [vmem:[%s381 + $0xe8] sm:$0xff]
      %v540 = vld [vmem:[%s381 + $0xf0] sm:$0xff]
      %v541 = vld [vmem:[%s381 + $0xf8] sm:$0xff]
      %v542 = vpack.c.bf16 %v511, %v510
      %v543 = vpack.c.bf16 %v513, %v512
      %v544 = vpack.c.bf16 %v515, %v514
      %v545 = vpack.c.bf16 %v517, %v516
      %v546 = vpack.c.bf16 %v519, %v518
      %v547 = vpack.c.bf16 %v521, %v520
      %v548 = vpack.c.bf16 %v523, %v522
      %v549 = vpack.c.bf16 %v525, %v524
      %v550 = vpack.c.bf16 %v527, %v526
      %v551 = vpack.c.bf16 %v529, %v528
      %v552 = vpack.c.bf16 %v531, %v530
      %v553 = vpack.c.bf16 %v533, %v532
      %v554 = vpack.c.bf16 %v535, %v534
      %v555 = vpack.c.bf16 %v537, %v536
      %v556 = vpack.c.bf16 %v539, %v538
      %v557 = vpack.c.bf16 %v541, %v540
      %v574 = vunpack.c.l.b16 %v542
      %v575 = vunpack.c.h.b16 %v542
      %v576 = vunpack.c.l.b16 %v543
      %v577 = vunpack.c.h.b16 %v543
      %v578 = vunpack.c.l.b16 %v544
      %v579 = vunpack.c.h.b16 %v544
      %v580 = vunpack.c.l.b16 %v545
      %v581 = vunpack.c.h.b16 %v545
      %v582 = vunpack.c.l.b16 %v546
      %v583 = vunpack.c.h.b16 %v546
      %v584 = vunpack.c.l.b16 %v547
      %v585 = vunpack.c.h.b16 %v547
      %v586 = vunpack.c.l.b16 %v548
      %v587 = vunpack.c.h.b16 %v548
      %v588 = vunpack.c.l.b16 %v549
      %v589 = vunpack.c.h.b16 %v549
      %v590 = vunpack.c.l.b16 %v550
      %v591 = vunpack.c.h.b16 %v550
      %v592 = vunpack.c.l.b16 %v551
      %v593 = vunpack.c.h.b16 %v551
      %v594 = vunpack.c.l.b16 %v552
      %v595 = vunpack.c.h.b16 %v552
      %v596 = vunpack.c.l.b16 %v553
      %v597 = vunpack.c.h.b16 %v553
      %v598 = vunpack.c.l.b16 %v554
      %v599 = vunpack.c.h.b16 %v554
      %v600 = vunpack.c.l.b16 %v555
      %v601 = vunpack.c.h.b16 %v555
      %v602 = vunpack.c.l.b16 %v556
      %v603 = vunpack.c.h.b16 %v556
      %v604 = vunpack.c.l.b16 %v557
      %v605 = vunpack.c.h.b16 %v557
      %v606 = vpack.c.b16 %v574, %v574
      %v607 = vpack.c.b16 %v575, %v575
      %v608 = vpack.c.b16 %v576, %v576
      %v609 = vpack.c.b16 %v577, %v577
      %v610 = vpack.c.b16 %v578, %v578
      %v611 = vpack.c.b16 %v579, %v579
      %v612 = vpack.c.b16 %v580, %v580
      %v613 = vpack.c.b16 %v581, %v581
      %v614 = vpack.c.b16 %v582, %v582
      %v615 = vpack.c.b16 %v583, %v583
      %v616 = vpack.c.b16 %v584, %v584
      %v617 = vpack.c.b16 %v585, %v585
      %v618 = vpack.c.b16 %v586, %v586
      %v619 = vpack.c.b16 %v587, %v587
      %v620 = vpack.c.b16 %v588, %v588
      %v621 = vpack.c.b16 %v589, %v589
      %v622 = vpack.c.b16 %v590, %v590
      %v623 = vpack.c.b16 %v591, %v591
      %v624 = vpack.c.b16 %v592, %v592
      %v625 = vpack.c.b16 %v593, %v593
      %v626 = vpack.c.b16 %v594, %v594
      %v627 = vpack.c.b16 %v595, %v595
      %v628 = vpack.c.b16 %v596, %v596
      %v629 = vpack.c.b16 %v597, %v597
      %v630 = vpack.c.b16 %v598, %v598
      %v631 = vpack.c.b16 %v599, %v599
      %v632 = vpack.c.b16 %v600, %v600
      %v633 = vpack.c.b16 %v601, %v601
      %v634 = vpack.c.b16 %v602, %v602
      %v635 = vpack.c.b16 %v603, %v603
      %v636 = vpack.c.b16 %v604, %v604
      %v637 = vpack.c.b16 %v605, %v605
      %vm638 = vsmask.f32 4368
      %vm639 = vmor %vm398, %vm638
      %v641 = vshrl.u32 %v606, 16
      %v643 = vrot.slane %v641, 7
      %v644 = vshll.u32 %v606, 16
      %v646 = vor.u32 %v643, %v644
      %v647 = vrot.slane %v643, 4
      %v649 = vshrl.u32 %v607, 16
      %v651 = vrot.slane %v649, 7
      %v652 = vshll.u32 %v607, 16
      %v654 = vor.u32 %v651, %v652
      %v655 = vsel %vm639, %v647, %v654
      %v656 = vrot.slane %v651, 4
      %v658 = vshrl.u32 %v608, 16
      %v660 = vrot.slane %v658, 7
      %v661 = vshll.u32 %v608, 16
      %v663 = vor.u32 %v660, %v661
      %v664 = vrot.slane %v660, 4
      %v666 = vshrl.u32 %v609, 16
      %v668 = vrot.slane %v666, 7
      %v669 = vshll.u32 %v609, 16
      %v671 = vor.u32 %v668, %v669
      %v672 = vsel %vm639, %v664, %v671
      %v673 = vrot.slane %v668, 4
      %v675 = vshrl.u32 %v610, 16
      %v677 = vrot.slane %v675, 7
      %v678 = vshll.u32 %v610, 16
      %v680 = vor.u32 %v677, %v678
      %v681 = vrot.slane %v677, 4
      %v683 = vshrl.u32 %v611, 16
      %v685 = vrot.slane %v683, 7
      %v686 = vshll.u32 %v611, 16
      %v688 = vor.u32 %v685, %v686
      %v689 = vsel %vm639, %v681, %v688
      %v690 = vrot.slane %v685, 4
      %v692 = vshrl.u32 %v612, 16
      %v694 = vrot.slane %v692, 7
      %v695 = vshll.u32 %v612, 16
      %v697 = vor.u32 %v694, %v695
      %v698 = vrot.slane %v694, 4
      %v700 = vshrl.u32 %v613, 16
      %v702 = vrot.slane %v700, 7
      %v703 = vshll.u32 %v613, 16
      %v705 = vor.u32 %v702, %v703
      %v706 = vsel %vm639, %v698, %v705
      %v707 = vrot.slane %v702, 4
      %v709 = vshrl.u32 %v614, 16
      %v711 = vrot.slane %v709, 7
      %v712 = vshll.u32 %v614, 16
      %v714 = vor.u32 %v711, %v712
      %v715 = vrot.slane %v711, 4
      %v717 = vshrl.u32 %v615, 16
      %v719 = vrot.slane %v717, 7
      %v720 = vshll.u32 %v615, 16
      %v722 = vor.u32 %v719, %v720
      %v723 = vsel %vm639, %v715, %v722
      %v724 = vrot.slane %v719, 4
      %v726 = vshrl.u32 %v616, 16
      %v728 = vrot.slane %v726, 7
      %v729 = vshll.u32 %v616, 16
      %v731 = vor.u32 %v728, %v729
      %v732 = vrot.slane %v728, 4
      %v734 = vshrl.u32 %v617, 16
      %v736 = vrot.slane %v734, 7
      %v737 = vshll.u32 %v617, 16
      %v739 = vor.u32 %v736, %v737
      %v740 = vsel %vm639, %v732, %v739
      %v741 = vrot.slane %v736, 4
      %v743 = vshrl.u32 %v618, 16
      %v745 = vrot.slane %v743, 7
      %v746 = vshll.u32 %v618, 16
      %v748 = vor.u32 %v745, %v746
      %v749 = vrot.slane %v745, 4
      %v751 = vshrl.u32 %v619, 16
      %v753 = vrot.slane %v751, 7
      %v754 = vshll.u32 %v619, 16
      %v756 = vor.u32 %v753, %v754
      %v757 = vsel %vm639, %v749, %v756
      %v758 = vrot.slane %v753, 4
      %v760 = vshrl.u32 %v620, 16
      %v762 = vrot.slane %v760, 7
      %v763 = vshll.u32 %v620, 16
      %v765 = vor.u32 %v762, %v763
      %v766 = vrot.slane %v762, 4
      %v768 = vshrl.u32 %v621, 16
      %v770 = vrot.slane %v768, 7
      %v771 = vshll.u32 %v621, 16
      %v773 = vor.u32 %v770, %v771
      %v774 = vsel %vm639, %v766, %v773
      %v775 = vrot.slane %v770, 4
      %v777 = vshrl.u32 %v622, 16
      %v779 = vrot.slane %v777, 7
      %v780 = vshll.u32 %v622, 16
      %v782 = vor.u32 %v779, %v780
      %v783 = vrot.slane %v779, 4
      %v785 = vshrl.u32 %v623, 16
      %v787 = vrot.slane %v785, 7
      %v788 = vshll.u32 %v623, 16
      %v790 = vor.u32 %v787, %v788
      %v791 = vsel %vm639, %v783, %v790
      %v792 = vrot.slane %v787, 4
      %v794 = vshrl.u32 %v624, 16
      %v796 = vrot.slane %v794, 7
      %v797 = vshll.u32 %v624, 16
      %v799 = vor.u32 %v796, %v797
      %v800 = vrot.slane %v796, 4
      %v802 = vshrl.u32 %v625, 16
      %v804 = vrot.slane %v802, 7
      %v805 = vshll.u32 %v625, 16
      %v807 = vor.u32 %v804, %v805
      %v808 = vsel %vm639, %v800, %v807
      %v809 = vrot.slane %v804, 4
      %v811 = vshrl.u32 %v626, 16
      %v813 = vrot.slane %v811, 7
      %v814 = vshll.u32 %v626, 16
      %v816 = vor.u32 %v813, %v814
      %v817 = vrot.slane %v813, 4
      %v819 = vshrl.u32 %v627, 16
      %v821 = vrot.slane %v819, 7
      %v822 = vshll.u32 %v627, 16
      %v824 = vor.u32 %v821, %v822
      %v825 = vsel %vm639, %v817, %v824
      %v826 = vrot.slane %v821, 4
      %v828 = vshrl.u32 %v628, 16
      %v830 = vrot.slane %v828, 7
      %v831 = vshll.u32 %v628, 16
      %v833 = vor.u32 %v830, %v831
      %v834 = vrot.slane %v830, 4
      %v836 = vshrl.u32 %v629, 16
      %v838 = vrot.slane %v836, 7
      %v839 = vshll.u32 %v629, 16
      %v841 = vor.u32 %v838, %v839
      %v842 = vsel %vm639, %v834, %v841
      %v843 = vrot.slane %v838, 4
      %v845 = vshrl.u32 %v630, 16
      %v847 = vrot.slane %v845, 7
      %v848 = vshll.u32 %v630, 16
      %v850 = vor.u32 %v847, %v848
      %v851 = vrot.slane %v847, 4
      %v853 = vshrl.u32 %v631, 16
      %v855 = vrot.slane %v853, 7
      %v856 = vshll.u32 %v631, 16
      %v858 = vor.u32 %v855, %v856
      %v859 = vsel %vm639, %v851, %v858
      %v860 = vrot.slane %v855, 4
      %v862 = vshrl.u32 %v632, 16
      %v864 = vrot.slane %v862, 7
      %v865 = vshll.u32 %v632, 16
      %v867 = vor.u32 %v864, %v865
      %v868 = vrot.slane %v864, 4
      %v870 = vshrl.u32 %v633, 16
      %v872 = vrot.slane %v870, 7
      %v873 = vshll.u32 %v633, 16
      %v875 = vor.u32 %v872, %v873
      %v876 = vsel %vm639, %v868, %v875
      %v877 = vrot.slane %v872, 4
      %v879 = vshrl.u32 %v634, 16
      %v881 = vrot.slane %v879, 7
      %v882 = vshll.u32 %v634, 16
      %v884 = vor.u32 %v881, %v882
      %v885 = vrot.slane %v881, 4
      %v887 = vshrl.u32 %v635, 16
      %v889 = vrot.slane %v887, 7
      %v890 = vshll.u32 %v635, 16
      %v892 = vor.u32 %v889, %v890
      %v893 = vsel %vm639, %v885, %v892
      %v894 = vrot.slane %v889, 4
      %v896 = vshrl.u32 %v636, 16
      %v898 = vrot.slane %v896, 7
      %v899 = vshll.u32 %v636, 16
      %v901 = vor.u32 %v898, %v899
      %v902 = vrot.slane %v898, 4
      %v904 = vshrl.u32 %v637, 16
      %v906 = vrot.slane %v904, 7
      %v907 = vshll.u32 %v637, 16
      %v909 = vor.u32 %v906, %v907
      %v910 = vsel %vm639, %v902, %v909
      %v911 = vrot.slane %v906, 4
      %s960 = scalar_lea.vmem [#allocation2], 12
      %vm961 = vcmask 257024
      %vm962 = vmand %vm961, %vm454
      %v963 = vld [vmem:[%s960] sm:$0xf]
      %v964 = vsel %vm962, %v646, %v963
      %965 = vst [vmem:[%s960] sm:$0xf] %v964
      %966 = vst.msk [vmem:[%s960 + $0x4] sm:$0xf] %vm388, %v655
      %v967 = vld [vmem:[%s960 + $0x8] sm:$0x1]
      %v968 = vsel %vm399, %v656, %v967
      %969 = vst [vmem:[%s960 + $0x8] sm:$0x1] %v968
      %v970 = vld [vmem:[%s960 + $0xc] sm:$0xf]
      %v971 = vsel %vm962, %v663, %v970
      %972 = vst [vmem:[%s960 + $0xc] sm:$0xf] %v971
      %973 = vst.msk [vmem:[%s960 + $0x10] sm:$0xf] %vm388, %v672
      %v974 = vld [vmem:[%s960 + $0x14] sm:$0x1]
      %v975 = vsel %vm399, %v673, %v974
      %976 = vst [vmem:[%s960 + $0x14] sm:$0x1] %v975
      %v977 = vld [vmem:[%s960 + $0x18] sm:$0xf]
      %v978 = vsel %vm962, %v680, %v977
      %979 = vst [vmem:[%s960 + $0x18] sm:$0xf] %v978
      %980 = vst.msk [vmem:[%s960 + $0x1c] sm:$0xf] %vm388, %v689
      %v981 = vld [vmem:[%s960 + $0x20] sm:$0x1]
      %v982 = vsel %vm399, %v690, %v981
      %983 = vst [vmem:[%s960 + $0x20] sm:$0x1] %v982
      %v984 = vld [vmem:[%s960 + $0x24] sm:$0xf]
      %v985 = vsel %vm962, %v697, %v984
      %986 = vst [vmem:[%s960 + $0x24] sm:$0xf] %v985
      %987 = vst.msk [vmem:[%s960 + $0x28] sm:$0xf] %vm388, %v706
      %v988 = vld [vmem:[%s960 + $0x2c] sm:$0x1]
      %v989 = vsel %vm399, %v707, %v988
      %990 = vst [vmem:[%s960 + $0x2c] sm:$0x1] %v989
      %v991 = vld [vmem:[%s960 + $0x30] sm:$0xf]
      %v992 = vsel %vm962, %v714, %v991
      %993 = vst [vmem:[%s960 + $0x30] sm:$0xf] %v992
      %994 = vst.msk [vmem:[%s960 + $0x34] sm:$0xf] %vm388, %v723
      %v995 = vld [vmem:[%s960 + $0x38] sm:$0x1]
      %v996 = vsel %vm399, %v724, %v995
      %997 = vst [vmem:[%s960 + $0x38] sm:$0x1] %v996
      %v998 = vld [vmem:[%s960 + $0x3c] sm:$0xf]
      %v999 = vsel %vm962, %v731, %v998
      %1000 = vst [vmem:[%s960 + $0x3c] sm:$0xf] %v999
      %1001 = vst.msk [vmem:[%s960 + $0x40] sm:$0xf] %vm388, %v740
      %v1002 = vld [vmem:[%s960 + $0x44] sm:$0x1]
      %v1003 = vsel %vm399, %v741, %v1002
      %1004 = vst [vmem:[%s960 + $0x44] sm:$0x1] %v1003
      %v1005 = vld [vmem:[%s960 + $0x48] sm:$0xf]
      %v1006 = vsel %vm962, %v748, %v1005
      %1007 = vst [vmem:[%s960 + $0x48] sm:$0xf] %v1006
      %1008 = vst.msk [vmem:[%s960 + $0x4c] sm:$0xf] %vm388, %v757
      %v1009 = vld [vmem:[%s960 + $0x50] sm:$0x1]
      %v1010 = vsel %vm399, %v758, %v1009
      %1011 = vst [vmem:[%s960 + $0x50] sm:$0x1] %v1010
      %v1012 = vld [vmem:[%s960 + $0x54] sm:$0xf]
      %v1013 = vsel %vm962, %v765, %v1012
      %1014 = vst [vmem:[%s960 + $0x54] sm:$0xf] %v1013
      %1015 = vst.msk [vmem:[%s960 + $0x58] sm:$0xf] %vm388, %v774
      %v1016 = vld [vmem:[%s960 + $0x5c] sm:$0x1]
      %v1017 = vsel %vm399, %v775, %v1016
      %1018 = vst [vmem:[%s960 + $0x5c] sm:$0x1] %v1017
      %v1019 = vld [vmem:[%s960 + $0x60] sm:$0xf]
      %v1020 = vsel %vm962, %v782, %v1019
      %1021 = vst [vmem:[%s960 + $0x60] sm:$0xf] %v1020
      %1022 = vst.msk [vmem:[%s960 + $0x64] sm:$0xf] %vm388, %v791
      %v1023 = vld [vmem:[%s960 + $0x68] sm:$0x1]
      %v1024 = vsel %vm399, %v792, %v1023
      %1025 = vst [vmem:[%s960 + $0x68] sm:$0x1] %v1024
      %v1026 = vld [vmem:[%s960 + $0x6c] sm:$0xf]
      %v1027 = vsel %vm962, %v799, %v1026
      %1028 = vst [vmem:[%s960 + $0x6c] sm:$0xf] %v1027
      %1029 = vst.msk [vmem:[%s960 + $0x70] sm:$0xf] %vm388, %v808
      %v1030 = vld [vmem:[%s960 + $0x74] sm:$0x1]
      %v1031 = vsel %vm399, %v809, %v1030
      %1032 = vst [vmem:[%s960 + $0x74] sm:$0x1] %v1031
      %v1033 = vld [vmem:[%s960 + $0x78] sm:$0xf]
      %v1034 = vsel %vm962, %v816, %v1033
      %1035 = vst [vmem:[%s960 + $0x78] sm:$0xf] %v1034
      %1036 = vst.msk [vmem:[%s960 + $0x7c] sm:$0xf] %vm388, %v825
      %v1037 = vld [vmem:[%s960 + $0x80] sm:$0x1]
      %v1038 = vsel %vm399, %v826, %v1037
      %1039 = vst [vmem:[%s960 + $0x80] sm:$0x1] %v1038
      %v1040 = vld [vmem:[%s960 + $0x84] sm:$0xf]
      %v1041 = vsel %vm962, %v833, %v1040
      %1042 = vst [vmem:[%s960 + $0x84] sm:$0xf] %v1041
      %1043 = vst.msk [vmem:[%s960 + $0x88] sm:$0xf] %vm388, %v842
      %v1044 = vld [vmem:[%s960 + $0x8c] sm:$0x1]
      %v1045 = vsel %vm399, %v843, %v1044
      %1046 = vst [vmem:[%s960 + $0x8c] sm:$0x1] %v1045
      %v1047 = vld [vmem:[%s960 + $0x90] sm:$0xf]
      %v1048 = vsel %vm962, %v850, %v1047
      %1049 = vst [vmem:[%s960 + $0x90] sm:$0xf] %v1048
      %1050 = vst.msk [vmem:[%s960 + $0x94] sm:$0xf] %vm388, %v859
      %v1051 = vld [vmem:[%s960 + $0x98] sm:$0x1]
      %v1052 = vsel %vm399, %v860, %v1051
      %1053 = vst [vmem:[%s960 + $0x98] sm:$0x1] %v1052
      %v1054 = vld [vmem:[%s960 + $0x9c] sm:$0xf]
      %v1055 = vsel %vm962, %v867, %v1054
      %1056 = vst [vmem:[%s960 + $0x9c] sm:$0xf] %v1055
      %1057 = vst.msk [vmem:[%s960 + $0xa0] sm:$0xf] %vm388, %v876
      %v1058 = vld [vmem:[%s960 + $0xa4] sm:$0x1]
      %v1059 = vsel %vm399, %v877, %v1058
      %1060 = vst [vmem:[%s960 + $0xa4] sm:$0x1] %v1059
      %v1061 = vld [vmem:[%s960 + $0xa8] sm:$0xf]
      %v1062 = vsel %vm962, %v884, %v1061
      %1063 = vst [vmem:[%s960 + $0xa8] sm:$0xf] %v1062
      %1064 = vst.msk [vmem:[%s960 + $0xac] sm:$0xf] %vm388, %v893
      %v1065 = vld [vmem:[%s960 + $0xb0] sm:$0x1]
      %v1066 = vsel %vm399, %v894, %v1065
      %1067 = vst [vmem:[%s960 + $0xb0] sm:$0x1] %v1066
      %v1068 = vld [vmem:[%s960 + $0xb4] sm:$0xf]
      %v1069 = vsel %vm962, %v901, %v1068
      %1070 = vst [vmem:[%s960 + $0xb4] sm:$0xf] %v1069
      %1071 = vst.msk [vmem:[%s960 + $0xb8] sm:$0xf] %vm388, %v910
      %v1072 = vld [vmem:[%s960 + $0xbc] sm:$0x1]
      %v1073 = vsel %vm399, %v911, %v1072
      %1074 = vst [vmem:[%s960 + $0xbc] sm:$0x1] %v1073
      %v1075 = vld [vmem:[#allocation2] sm:$0xf]
      %v1076 = vld [vmem:[#allocation2 + $0x4] sm:$0xf]
      %v1077 = vld [vmem:[#allocation2 + $0xc] sm:$0xf]
      %v1078 = vld [vmem:[#allocation2 + $0x10] sm:$0xf]
      %v1079 = vld [vmem:[#allocation2 + $0x18] sm:$0xf]
      %v1080 = vld [vmem:[#allocation2 + $0x1c] sm:$0xf]
      %v1081 = vld [vmem:[#allocation2 + $0x24] sm:$0xf]
      %v1082 = vld [vmem:[#allocation2 + $0x28] sm:$0xf]
      %v1083 = vld [vmem:[#allocation2 + $0x30] sm:$0xf]
      %v1084 = vld [vmem:[#allocation2 + $0x34] sm:$0xf]
      %v1085 = vld [vmem:[#allocation2 + $0x3c] sm:$0xf]
      %v1086 = vld [vmem:[#allocation2 + $0x40] sm:$0xf]
      %v1087 = vld [vmem:[#allocation2 + $0x48] sm:$0xf]
      %v1088 = vld [vmem:[#allocation2 + $0x4c] sm:$0xf]
      %v1089 = vld [vmem:[#allocation2 + $0x54] sm:$0xf]
      %v1090 = vld [vmem:[#allocation2 + $0x58] sm:$0xf]
      %v1091 = vld [vmem:[#allocation2 + $0x60] sm:$0xf]
      %v1092 = vld [vmem:[#allocation2 + $0x64] sm:$0xf]
      %v1093 = vld [vmem:[#allocation2 + $0x6c] sm:$0xf]
      %v1094 = vld [vmem:[#allocation2 + $0x70] sm:$0xf]
      %v1095 = vld [vmem:[#allocation2 + $0x78] sm:$0xf]
      %v1096 = vld [vmem:[#allocation2 + $0x7c] sm:$0xf]
      %v1097 = vld [vmem:[#allocation2 + $0x84] sm:$0xf]
      %v1098 = vld [vmem:[#allocation2 + $0x88] sm:$0xf]
      %v1099 = vld [vmem:[#allocation2 + $0x90] sm:$0xf]
      %v1100 = vld [vmem:[#allocation2 + $0x94] sm:$0xf]
      %v1101 = vld [vmem:[#allocation2 + $0x9c] sm:$0xf]
      %v1102 = vld [vmem:[#allocation2 + $0xa0] sm:$0xf]
      %v1103 = vld [vmem:[#allocation2 + $0xa8] sm:$0xf]
      %v1104 = vld [vmem:[#allocation2 + $0xac] sm:$0xf]
      %v1105 = vld [vmem:[#allocation2 + $0xb4] sm:$0xf]
      %v1106 = vld [vmem:[#allocation2 + $0xb8] sm:$0xf]
      %v1107 = vld [vmem:[%s1] sm:$0xf]
      %v1108 = vld [vmem:[%s1 + $0x4] sm:$0xf]
      %v1109 = vld [vmem:[%s1 + $0x8] sm:$0xf]
      %v1110 = vld [vmem:[%s1 + $0xc] sm:$0xf]
      %v1111 = vld [vmem:[#allocation2 + $0x8] sm:$0x1]
      %v1112 = vld [vmem:[#allocation2 + $0x14] sm:$0x1]
      %v1113 = vld [vmem:[#allocation2 + $0x20] sm:$0x1]
      %v1114 = vld [vmem:[#allocation2 + $0x2c] sm:$0x1]
      %v1115 = vld [vmem:[#allocation2 + $0x38] sm:$0x1]
      %v1116 = vld [vmem:[#allocation2 + $0x44] sm:$0x1]
      %v1117 = vld [vmem:[#allocation2 + $0x50] sm:$0x1]
      %v1118 = vld [vmem:[#allocation2 + $0x5c] sm:$0x1]
      %v1119 = vld [vmem:[#allocation2 + $0x68] sm:$0x1]
      %v1120 = vld [vmem:[#allocation2 + $0x74] sm:$0x1]
      %v1121 = vld [vmem:[#allocation2 + $0x80] sm:$0x1]
      %v1122 = vld [vmem:[#allocation2 + $0x8c] sm:$0x1]
      %v1123 = vld [vmem:[#allocation2 + $0x98] sm:$0x1]
      %v1124 = vld [vmem:[#allocation2 + $0xa4] sm:$0x1]
      %v1125 = vld [vmem:[#allocation2 + $0xb0] sm:$0x1]
      %v1126 = vld [vmem:[#allocation2 + $0xbc] sm:$0x1]
      %vm1127 = vsmask.f32 3328
      %vm1128 = vsmask.f32 7440
      %vm1129 = vmor %vm1127, %vm1128
      %v1131 = vshrl.u32 %v1075, 16
      %v1133 = vrot.slane %v1131, 4
      %v1134 = vshll.u32 %v1075, 16
      %v1136 = vrot.slane %v1134, 5
      %v1137 = vor.u32 %v1133, %v1136
      %v1138 = vrot.slane %v1137, 4
      %v1140 = vshll.u32 %v1076, 16
      %v1142 = vrot.slane %v1140, 5
      %v1143 = vsel %vm1129, %v1138, %v1142
      %v1144 = vshrl.u32 %v1076, 16
      %v1146 = vrot.slane %v1144, 4
      %v1147 = vor.u32 %v1146, %v1142
      %v1148 = vrot.slane %v1147, 4
      %v1150 = vshll.u32 %v1111, 16
      %v1152 = vrot.slane %v1150, 5
      %v1153 = vsel %vm1129, %v1148, %v1152
      %v1155 = vshrl.u32 %v1077, 16
      %v1157 = vrot.slane %v1155, 4
      %v1158 = vshll.u32 %v1077, 16
      %v1160 = vrot.slane %v1158, 5
      %v1161 = vor.u32 %v1157, %v1160
      %v1162 = vrot.slane %v1161, 4
      %v1164 = vshll.u32 %v1078, 16
      %v1166 = vrot.slane %v1164, 5
      %v1167 = vsel %vm1129, %v1162, %v1166
      %v1168 = vshrl.u32 %v1078, 16
      %v1170 = vrot.slane %v1168, 4
      %v1171 = vor.u32 %v1170, %v1166
      %v1172 = vrot.slane %v1171, 4
      %v1174 = vshll.u32 %v1112, 16
      %v1176 = vrot.slane %v1174, 5
      %v1177 = vsel %vm1129, %v1172, %v1176
      %v1179 = vshrl.u32 %v1079, 16
      %v1181 = vrot.slane %v1179, 4
      %v1182 = vshll.u32 %v1079, 16
      %v1184 = vrot.slane %v1182, 5
      %v1185 = vor.u32 %v1181, %v1184
      %v1186 = vrot.slane %v1185, 4
      %v1188 = vshll.u32 %v1080, 16
      %v1190 = vrot.slane %v1188, 5
      %v1191 = vsel %vm1129, %v1186, %v1190
      %v1192 = vshrl.u32 %v1080, 16
      %v1194 = vrot.slane %v1192, 4
      %v1195 = vor.u32 %v1194, %v1190
      %v1196 = vrot.slane %v1195, 4
      %v1198 = vshll.u32 %v1113, 16
      %v1200 = vrot.slane %v1198, 5
      %v1201 = vsel %vm1129, %v1196, %v1200
      %v1203 = vshrl.u32 %v1081, 16
      %v1205 = vrot.slane %v1203, 4
      %v1206 = vshll.u32 %v1081, 16
      %v1208 = vrot.slane %v1206, 5
      %v1209 = vor.u32 %v1205, %v1208
      %v1210 = vrot.slane %v1209, 4
      %v1212 = vshll.u32 %v1082, 16
      %v1214 = vrot.slane %v1212, 5
      %v1215 = vsel %vm1129, %v1210, %v1214
      %v1216 = vshrl.u32 %v1082, 16
      %v1218 = vrot.slane %v1216, 4
      %v1219 = vor.u32 %v1218, %v1214
      %v1220 = vrot.slane %v1219, 4
      %v1222 = vshll.u32 %v1114, 16
      %v1224 = vrot.slane %v1222, 5
      %v1225 = vsel %vm1129, %v1220, %v1224
      %v1227 = vshrl.u32 %v1083, 16
      %v1229 = vrot.slane %v1227, 4
      %v1230 = vshll.u32 %v1083, 16
      %v1232 = vrot.slane %v1230, 5
      %v1233 = vor.u32 %v1229, %v1232
      %v1234 = vrot.slane %v1233, 4
      %v1236 = vshll.u32 %v1084, 16
      %v1238 = vrot.slane %v1236, 5
      %v1239 = vsel %vm1129, %v1234, %v1238
      %v1240 = vshrl.u32 %v1084, 16
      %v1242 = vrot.slane %v1240, 4
      %v1243 = vor.u32 %v1242, %v1238
      %v1244 = vrot.slane %v1243, 4
      %v1246 = vshll.u32 %v1115, 16
      %v1248 = vrot.slane %v1246, 5
      %v1249 = vsel %vm1129, %v1244, %v1248
      %v1251 = vshrl.u32 %v1085, 16
      %v1253 = vrot.slane %v1251, 4
      %v1254 = vshll.u32 %v1085, 16
      %v1256 = vrot.slane %v1254, 5
      %v1257 = vor.u32 %v1253, %v1256
      %v1258 = vrot.slane %v1257, 4
      %v1260 = vshll.u32 %v1086, 16
      %v1262 = vrot.slane %v1260, 5
      %v1263 = vsel %vm1129, %v1258, %v1262
      %v1264 = vshrl.u32 %v1086, 16
      %v1266 = vrot.slane %v1264, 4
      %v1267 = vor.u32 %v1266, %v1262
      %v1268 = vrot.slane %v1267, 4
      %v1270 = vshll.u32 %v1116, 16
      %v1272 = vrot.slane %v1270, 5
      %v1273 = vsel %vm1129, %v1268, %v1272
      %v1275 = vshrl.u32 %v1087, 16
      %v1277 = vrot.slane %v1275, 4
      %v1278 = vshll.u32 %v1087, 16
      %v1280 = vrot.slane %v1278, 5
      %v1281 = vor.u32 %v1277, %v1280
      %v1282 = vrot.slane %v1281, 4
      %v1284 = vshll.u32 %v1088, 16
      %v1286 = vrot.slane %v1284, 5
      %v1287 = vsel %vm1129, %v1282, %v1286
      %v1288 = vshrl.u32 %v1088, 16
      %v1290 = vrot.slane %v1288, 4
      %v1291 = vor.u32 %v1290, %v1286
      %v1292 = vrot.slane %v1291, 4
      %v1294 = vshll.u32 %v1117, 16
      %v1296 = vrot.slane %v1294, 5
      %v1297 = vsel %vm1129, %v1292, %v1296
      %v1299 = vshrl.u32 %v1089, 16
      %v1301 = vrot.slane %v1299, 4
      %v1302 = vshll.u32 %v1089, 16
      %v1304 = vrot.slane %v1302, 5
      %v1305 = vor.u32 %v1301, %v1304
      %v1306 = vrot.slane %v1305, 4
      %v1308 = vshll.u32 %v1090, 16
      %v1310 = vrot.slane %v1308, 5
      %v1311 = vsel %vm1129, %v1306, %v1310
      %v1312 = vshrl.u32 %v1090, 16
      %v1314 = vrot.slane %v1312, 4
      %v1315 = vor.u32 %v1314, %v1310
      %v1316 = vrot.slane %v1315, 4
      %v1318 = vshll.u32 %v1118, 16
      %v1320 = vrot.slane %v1318, 5
      %v1321 = vsel %vm1129, %v1316, %v1320
      %v1323 = vshrl.u32 %v1091, 16
      %v1325 = vrot.slane %v1323, 4
      %v1326 = vshll.u32 %v1091, 16
      %v1328 = vrot.slane %v1326, 5
      %v1329 = vor.u32 %v1325, %v1328
      %v1330 = vrot.slane %v1329, 4
      %v1332 = vshll.u32 %v1092, 16
      %v1334 = vrot.slane %v1332, 5
      %v1335 = vsel %vm1129, %v1330, %v1334
      %v1336 = vshrl.u32 %v1092, 16
      %v1338 = vrot.slane %v1336, 4
      %v1339 = vor.u32 %v1338, %v1334
      %v1340 = vrot.slane %v1339, 4
      %v1342 = vshll.u32 %v1119, 16
      %v1344 = vrot.slane %v1342, 5
      %v1345 = vsel %vm1129, %v1340, %v1344
      %v1347 = vshrl.u32 %v1093, 16
      %v1349 = vrot.slane %v1347, 4
      %v1350 = vshll.u32 %v1093, 16
      %v1352 = vrot.slane %v1350, 5
      %v1353 = vor.u32 %v1349, %v1352
      %v1354 = vrot.slane %v1353, 4
      %v1356 = vshll.u32 %v1094, 16
      %v1358 = vrot.slane %v1356, 5
      %v1359 = vsel %vm1129, %v1354, %v1358
      %v1360 = vshrl.u32 %v1094, 16
      %v1362 = vrot.slane %v1360, 4
      %v1363 = vor.u32 %v1362, %v1358
      %v1364 = vrot.slane %v1363, 4
      %v1366 = vshll.u32 %v1120, 16
      %v1368 = vrot.slane %v1366, 5
      %v1369 = vsel %vm1129, %v1364, %v1368
      %v1371 = vshrl.u32 %v1095, 16
      %v1373 = vrot.slane %v1371, 4
      %v1374 = vshll.u32 %v1095, 16
      %v1376 = vrot.slane %v1374, 5
      %v1377 = vor.u32 %v1373, %v1376
      %v1378 = vrot.slane %v1377, 4
      %v1380 = vshll.u32 %v1096, 16
      %v1382 = vrot.slane %v1380, 5
      %v1383 = vsel %vm1129, %v1378, %v1382
      %v1384 = vshrl.u32 %v1096, 16
      %v1386 = vrot.slane %v1384, 4
      %v1387 = vor.u32 %v1386, %v1382
      %v1388 = vrot.slane %v1387, 4
      %v1390 = vshll.u32 %v1121, 16
      %v1392 = vrot.slane %v1390, 5
      %v1393 = vsel %vm1129, %v1388, %v1392
      %v1395 = vshrl.u32 %v1097, 16
      %v1397 = vrot.slane %v1395, 4
      %v1398 = vshll.u32 %v1097, 16
      %v1400 = vrot.slane %v1398, 5
      %v1401 = vor.u32 %v1397, %v1400
      %v1402 = vrot.slane %v1401, 4
      %v1404 = vshll.u32 %v1098, 16
      %v1406 = vrot.slane %v1404, 5
      %v1407 = vsel %vm1129, %v1402, %v1406
      %v1408 = vshrl.u32 %v1098, 16
      %v1410 = vrot.slane %v1408, 4
      %v1411 = vor.u32 %v1410, %v1406
      %v1412 = vrot.slane %v1411, 4
      %v1414 = vshll.u32 %v1122, 16
      %v1416 = vrot.slane %v1414, 5
      %v1417 = vsel %vm1129, %v1412, %v1416
      %v1419 = vshrl.u32 %v1099, 16
      %v1421 = vrot.slane %v1419, 4
      %v1422 = vshll.u32 %v1099, 16
      %v1424 = vrot.slane %v1422, 5
      %v1425 = vor.u32 %v1421, %v1424
      %v1426 = vrot.slane %v1425, 4
      %v1428 = vshll.u32 %v1100, 16
      %v1430 = vrot.slane %v1428, 5
      %v1431 = vsel %vm1129, %v1426, %v1430
      %v1432 = vshrl.u32 %v1100, 16
      %v1434 = vrot.slane %v1432, 4
      %v1435 = vor.u32 %v1434, %v1430
      %v1436 = vrot.slane %v1435, 4
      %v1438 = vshll.u32 %v1123, 16
      %v1440 = vrot.slane %v1438, 5
      %v1441 = vsel %vm1129, %v1436, %v1440
      %v1443 = vshrl.u32 %v1101, 16
      %v1445 = vrot.slane %v1443, 4
      %v1446 = vshll.u32 %v1101, 16
      %v1448 = vrot.slane %v1446, 5
      %v1449 = vor.u32 %v1445, %v1448
      %v1450 = vrot.slane %v1449, 4
      %v1452 = vshll.u32 %v1102, 16
      %v1454 = vrot.slane %v1452, 5
      %v1455 = vsel %vm1129, %v1450, %v1454
      %v1456 = vshrl.u32 %v1102, 16
      %v1458 = vrot.slane %v1456, 4
      %v1459 = vor.u32 %v1458, %v1454
      %v1460 = vrot.slane %v1459, 4
      %v1462 = vshll.u32 %v1124, 16
      %v1464 = vrot.slane %v1462, 5
      %v1465 = vsel %vm1129, %v1460, %v1464
      %v1467 = vshrl.u32 %v1103, 16
      %v1469 = vrot.slane %v1467, 4
      %v1470 = vshll.u32 %v1103, 16
      %v1472 = vrot.slane %v1470, 5
      %v1473 = vor.u32 %v1469, %v1472
      %v1474 = vrot.slane %v1473, 4
      %v1476 = vshll.u32 %v1104, 16
      %v1478 = vrot.slane %v1476, 5
      %v1479 = vsel %vm1129, %v1474, %v1478
      %v1480 = vshrl.u32 %v1104, 16
      %v1482 = vrot.slane %v1480, 4
      %v1483 = vor.u32 %v1482, %v1478
      %v1484 = vrot.slane %v1483, 4
      %v1486 = vshll.u32 %v1125, 16
      %v1488 = vrot.slane %v1486, 5
      %v1489 = vsel %vm1129, %v1484, %v1488
      %v1491 = vshrl.u32 %v1105, 16
      %v1493 = vrot.slane %v1491, 4
      %v1494 = vshll.u32 %v1105, 16
      %v1496 = vrot.slane %v1494, 5
      %v1497 = vor.u32 %v1493, %v1496
      %v1498 = vrot.slane %v1497, 4
      %v1500 = vshll.u32 %v1106, 16
      %v1502 = vrot.slane %v1500, 5
      %v1503 = vsel %vm1129, %v1498, %v1502
      %v1504 = vshrl.u32 %v1106, 16
      %v1506 = vrot.slane %v1504, 4
      %v1507 = vor.u32 %v1506, %v1502
      %v1508 = vrot.slane %v1507, 4
      %v1510 = vshll.u32 %v1126, 16
      %v1512 = vrot.slane %v1510, 5
      %v1513 = vsel %vm1129, %v1508, %v1512
      %s1514 = scalar_lea.vmem %s1, 16
      %v1515 = vld [vmem:[%s1514] sm:$0xf]
      %v1516 = vld [vmem:[%s1514 + $0x4] sm:$0xf]
      %v1517 = vld [vmem:[%s1514 + $0x8] sm:$0xf]
      %v1518 = vld [vmem:[%s1514 + $0xc] sm:$0xf]
      %v1519 = vunpack.c.l.b16 %v1143
      %v1520 = vunpack.c.l.b16 %v1153
      %v1521 = vunpack.c.l.b16 %v1167
      %v1522 = vunpack.c.l.b16 %v1177
      %v1523 = vunpack.c.l.b16 %v1191
      %v1524 = vunpack.c.l.b16 %v1201
      %v1525 = vunpack.c.l.b16 %v1215
      %v1526 = vunpack.c.l.b16 %v1225
      %v1527 = vunpack.c.l.b16 %v1239
      %v1528 = vunpack.c.l.b16 %v1249
      %v1529 = vunpack.c.l.b16 %v1263
      %v1530 = vunpack.c.l.b16 %v1273
      %v1531 = vunpack.c.l.b16 %v1287
      %v1532 = vunpack.c.l.b16 %v1297
      %v1533 = vunpack.c.l.b16 %v1311
      %v1534 = vunpack.c.l.b16 %v1321
      %v1535 = vunpack.c.l.b16 %v1335
      %v1536 = vunpack.c.l.b16 %v1345
      %v1537 = vunpack.c.l.b16 %v1359
      %v1538 = vunpack.c.l.b16 %v1369
      %v1539 = vunpack.c.l.b16 %v1383
      %v1540 = vunpack.c.l.b16 %v1393
      %v1541 = vunpack.c.l.b16 %v1407
      %v1542 = vunpack.c.l.b16 %v1417
      %v1543 = vunpack.c.l.b16 %v1431
      %v1544 = vunpack.c.l.b16 %v1441
      %v1545 = vunpack.c.l.b16 %v1455
      %v1546 = vunpack.c.l.b16 %v1465
      %v1547 = vunpack.c.l.b16 %v1479
      %v1548 = vunpack.c.l.b16 %v1489
      %v1549 = vunpack.c.l.b16 %v1503
      %v1550 = vunpack.c.l.b16 %v1513
      %v1551 = vpack.c.b16 %v1520, %v1519
      %v1552 = vpack.c.b16 %v1522, %v1521
      %v1553 = vpack.c.b16 %v1524, %v1523
      %v1554 = vpack.c.b16 %v1526, %v1525
      %v1555 = vpack.c.b16 %v1528, %v1527
      %v1556 = vpack.c.b16 %v1530, %v1529
      %v1557 = vpack.c.b16 %v1532, %v1531
      %v1558 = vpack.c.b16 %v1534, %v1533
      %v1559 = vpack.c.b16 %v1536, %v1535
      %v1560 = vpack.c.b16 %v1538, %v1537
      %v1561 = vpack.c.b16 %v1540, %v1539
      %v1562 = vpack.c.b16 %v1542, %v1541
      %v1563 = vpack.c.b16 %v1544, %v1543
      %v1564 = vpack.c.b16 %v1546, %v1545
      %v1565 = vpack.c.b16 %v1548, %v1547
      %v1566 = vpack.c.b16 %v1550, %v1549
      %v1571 = vunpack.c.l.b16 %v1515
      %v1572 = vunpack.c.l.b16 %v1516
      %v1573 = vunpack.c.l.b16 %v1517
      %v1574 = vunpack.c.l.b16 %v1518
      %v1575 = vpack.c.b16 %v1572, %v1571
      %v1576 = vpack.c.b16 %v1574, %v1573
      %vm1579 = vcmask 261120
      %v1581 = vsel %vm1579, %v1551, 0
      %v1584 = vsel %vm1579, %v1552, 0
      %v1587 = vsel %vm1579, %v1553, 0
      %v1590 = vsel %vm1579, %v1554, 0
      %v1593 = vsel %vm1579, %v1555, 0
      %v1596 = vsel %vm1579, %v1556, 0
      %v1599 = vsel %vm1579, %v1557, 0
      %v1602 = vsel %vm1579, %v1558, 0
      %v1605 = vsel %vm1579, %v1559, 0
      %v1608 = vsel %vm1579, %v1560, 0
      %v1611 = vsel %vm1579, %v1561, 0
      %v1614 = vsel %vm1579, %v1562, 0
      %v1617 = vsel %vm1579, %v1563, 0
      %v1620 = vsel %vm1579, %v1564, 0
      %v1623 = vsel %vm1579, %v1565, 0
      %v1626 = vsel %vm1579, %v1566, 0
      %1628 = vmatprep.subr.bf16.mxu0 0
      %1629 = vmatpush1.bf16.msra.mxu0 0
      %1630 = vmatprep.subr.bf16.mxu0 0
      %1631 = vmatpush1.bf16.msra.mxu0 0
      %1632 = vmatprep.subr.bf16.mxu0 0
      %1633 = vmatpush1.bf16.msra.mxu0 0
      %1634 = vmatprep.subr.bf16.mxu0 0
      %1635 = vmatpush1.bf16.msra.mxu0 0
      %1636 = vmatprep.subr.bf16.mxu0 0
      %1637 = vmatpush1.bf16.msra.mxu0 0
      %1638 = vmatprep.subr.bf16.mxu0 0
      %1639 = vmatpush1.bf16.msra.mxu0 0
      %1640 = vmatprep.subr.bf16.mxu0 0
      %1641 = vmatpush1.bf16.msra.mxu0 %v1576
      %1642 = vmatprep.subr.bf16.mxu0 0
      %1643 = vmatpush1.bf16.msra.mxu0 %v1575
      %1644 = vmatprep.subr.bf16.mxu0 0
      %1645 = vmatpush2.bf16.msra.mxu0 0
      %1646 = vmatprep.subr.bf16.mxu0 0
      %1647 = vmatpush2.bf16.msra.mxu0 0
      %1648 = vmatprep.subr.bf16.mxu0 0
      %1649 = vmatpush2.bf16.msra.mxu0 0
      %1650 = vmatprep.subr.bf16.mxu0 0
      %1651 = vmatpush2.bf16.msra.mxu0 0
      %1652 = vmatprep.subr.bf16.mxu0 0
      %1653 = vmatpush2.bf16.msra.mxu0 0
      %1654 = vmatprep.subr.bf16.mxu0 0
      %1655 = vmatpush2.bf16.msra.mxu0 0
      %1656 = vmatprep.subr.bf16.mxu0 0
      %1657 = vmatpush2.bf16.msra.mxu0 0
      %1658 = vmatprep.subr.bf16.mxu0 0
      %1659 = vmatpush2.bf16.msra.mxu0 0
      %1660 = vmatprep.mubr.bf16.mxu0 0
      %1661 = vmatmul.mubr.bf16.gmra.mxu0 %v1581
      %v1662 = vpop.f32.mrf.mxu0
      %v1663 = vadd.f32 0.0, %v1662
      %v1664 = vpop.f32.mrf.mxu0
      %v1665 = vpop.f32.mrf.mxu0
      %v1666 = vadd.f32 0.0, %v1665
      %v1667 = vpop.f32.mrf.mxu0
      %1668 = vmatprep.mubr.bf16.mxu0 0
      %1669 = vmatmul.mubr.bf16.gmra.mxu0 %v1584
      %v1670 = vpop.f32.mrf.mxu0
      %v1671 = vadd.f32 0.0, %v1670
      %v1672 = vpop.f32.mrf.mxu0
      %v1673 = vpop.f32.mrf.mxu0
      %v1674 = vadd.f32 0.0, %v1673
      %v1675 = vpop.f32.mrf.mxu0
      %1676 = vmatprep.mubr.bf16.mxu0 0
      %1677 = vmatmul.mubr.bf16.gmra.mxu0 %v1587
      %v1678 = vpop.f32.mrf.mxu0
      %v1679 = vadd.f32 0.0, %v1678
      %v1680 = vpop.f32.mrf.mxu0
      %v1681 = vpop.f32.mrf.mxu0
      %v1682 = vadd.f32 0.0, %v1681
      %v1683 = vpop.f32.mrf.mxu0
      %1684 = vmatprep.mubr.bf16.mxu0 0
      %1685 = vmatmul.mubr.bf16.gmra.mxu0 %v1590
      %v1686 = vpop.f32.mrf.mxu0
      %v1687 = vadd.f32 0.0, %v1686
      %v1688 = vpop.f32.mrf.mxu0
      %v1689 = vpop.f32.mrf.mxu0
      %v1690 = vadd.f32 0.0, %v1689
      %v1691 = vpop.f32.mrf.mxu0
      %1692 = vmatprep.mubr.bf16.mxu0 0
      %1693 = vmatmul.mubr.bf16.gmra.mxu0 %v1593
      %v1694 = vpop.f32.mrf.mxu0
      %v1695 = vadd.f32 0.0, %v1694
      %v1696 = vpop.f32.mrf.mxu0
      %v1697 = vpop.f32.mrf.mxu0
      %v1698 = vadd.f32 0.0, %v1697
      %v1699 = vpop.f32.mrf.mxu0
      %1700 = vmatprep.mubr.bf16.mxu0 0
      %1701 = vmatmul.mubr.bf16.gmra.mxu0 %v1596
      %v1702 = vpop.f32.mrf.mxu0
      %v1703 = vadd.f32 0.0, %v1702
      %v1704 = vpop.f32.mrf.mxu0
      %v1705 = vpop.f32.mrf.mxu0
      %v1706 = vadd.f32 0.0, %v1705
      %v1707 = vpop.f32.mrf.mxu0
      %1708 = vmatprep.mubr.bf16.mxu0 0
      %1709 = vmatmul.mubr.bf16.gmra.mxu0 %v1599
      %v1710 = vpop.f32.mrf.mxu0
      %v1711 = vadd.f32 0.0, %v1710
      %v1712 = vpop.f32.mrf.mxu0
      %v1713 = vpop.f32.mrf.mxu0
      %v1714 = vadd.f32 0.0, %v1713
      %v1715 = vpop.f32.mrf.mxu0
      %1716 = vmatprep.mubr.bf16.mxu0 0
      %1717 = vmatmul.mubr.bf16.gmra.mxu0 %v1602
      %v1718 = vpop.f32.mrf.mxu0
      %v1719 = vadd.f32 0.0, %v1718
      %v1720 = vpop.f32.mrf.mxu0
      %v1721 = vpop.f32.mrf.mxu0
      %v1722 = vadd.f32 0.0, %v1721
      %v1723 = vpop.f32.mrf.mxu0
      %1724 = vmatprep.mubr.bf16.mxu0 0
      %1725 = vmatmul.mubr.bf16.gmra.mxu0 %v1605
      %v1726 = vpop.f32.mrf.mxu0
      %v1727 = vadd.f32 0.0, %v1726
      %v1728 = vpop.f32.mrf.mxu0
      %v1729 = vpop.f32.mrf.mxu0
      %v1730 = vadd.f32 0.0, %v1729
      %v1731 = vpop.f32.mrf.mxu0
      %1732 = vmatprep.mubr.bf16.mxu0 0
      %1733 = vmatmul.mubr.bf16.gmra.mxu0 %v1608
      %v1734 = vpop.f32.mrf.mxu0
      %v1735 = vadd.f32 0.0, %v1734
      %v1736 = vpop.f32.mrf.mxu0
      %v1737 = vpop.f32.mrf.mxu0
      %v1738 = vadd.f32 0.0, %v1737
      %v1739 = vpop.f32.mrf.mxu0
      %1740 = vmatprep.mubr.bf16.mxu0 0
      %1741 = vmatmul.mubr.bf16.gmra.mxu0 %v1611
      %v1742 = vpop.f32.mrf.mxu0
      %v1743 = vadd.f32 0.0, %v1742
      %v1744 = vpop.f32.mrf.mxu0
      %v1745 = vpop.f32.mrf.mxu0
      %v1746 = vadd.f32 0.0, %v1745
      %v1747 = vpop.f32.mrf.mxu0
      %1748 = vmatprep.mubr.bf16.mxu0 0
      %1749 = vmatmul.mubr.bf16.gmra.mxu0 %v1614
      %v1750 = vpop.f32.mrf.mxu0
      %v1751 = vadd.f32 0.0, %v1750
      %v1752 = vpop.f32.mrf.mxu0
      %v1753 = vpop.f32.mrf.mxu0
      %v1754 = vadd.f32 0.0, %v1753
      %v1755 = vpop.f32.mrf.mxu0
      %1756 = vmatprep.mubr.bf16.mxu0 0
      %1757 = vmatmul.mubr.bf16.gmra.mxu0 %v1617
      %v1758 = vpop.f32.mrf.mxu0
      %v1759 = vadd.f32 0.0, %v1758
      %v1760 = vpop.f32.mrf.mxu0
      %v1761 = vpop.f32.mrf.mxu0
      %v1762 = vadd.f32 0.0, %v1761
      %v1763 = vpop.f32.mrf.mxu0
      %1764 = vmatprep.mubr.bf16.mxu0 0
      %1765 = vmatmul.mubr.bf16.gmra.mxu0 %v1620
      %v1766 = vpop.f32.mrf.mxu0
      %v1767 = vadd.f32 0.0, %v1766
      %v1768 = vpop.f32.mrf.mxu0
      %v1769 = vpop.f32.mrf.mxu0
      %v1770 = vadd.f32 0.0, %v1769
      %v1771 = vpop.f32.mrf.mxu0
      %1772 = vmatprep.mubr.bf16.mxu0 0
      %1773 = vmatmul.mubr.bf16.gmra.mxu0 %v1623
      %v1774 = vpop.f32.mrf.mxu0
      %v1775 = vadd.f32 0.0, %v1774
      %v1776 = vpop.f32.mrf.mxu0
      %v1777 = vpop.f32.mrf.mxu0
      %v1778 = vadd.f32 0.0, %v1777
      %v1779 = vpop.f32.mrf.mxu0
      %1780 = vmatprep.mubr.bf16.mxu0 0
      %1781 = vmatmul.mubr.bf16.gmra.mxu0 %v1626
      %v1782 = vpop.f32.mrf.mxu0
      %v1783 = vadd.f32 0.0, %v1782
      %v1784 = vpop.f32.mrf.mxu0
      %v1785 = vpop.f32.mrf.mxu0
      %v1786 = vadd.f32 0.0, %v1785
      %v1787 = vpop.f32.mrf.mxu0
      %1788 = vdwg.mxu0
      %v1821 = vunpack.c.l.b16 %v1075
      %v1822 = vunpack.c.l.b16 %v1076
      %v1823 = vunpack.c.l.b16 %v1077
      %v1824 = vunpack.c.l.b16 %v1078
      %v1825 = vunpack.c.l.b16 %v1079
      %v1826 = vunpack.c.l.b16 %v1080
      %v1827 = vunpack.c.l.b16 %v1081
      %v1828 = vunpack.c.l.b16 %v1082
      %v1829 = vunpack.c.l.b16 %v1083
      %v1830 = vunpack.c.l.b16 %v1084
      %v1831 = vunpack.c.l.b16 %v1085
      %v1832 = vunpack.c.l.b16 %v1086
      %v1833 = vunpack.c.l.b16 %v1087
      %v1834 = vunpack.c.l.b16 %v1088
      %v1835 = vunpack.c.l.b16 %v1089
      %v1836 = vunpack.c.l.b16 %v1090
      %v1837 = vunpack.c.l.b16 %v1091
      %v1838 = vunpack.c.l.b16 %v1092
      %v1839 = vunpack.c.l.b16 %v1093
      %v1840 = vunpack.c.l.b16 %v1094
      %v1841 = vunpack.c.l.b16 %v1095
      %v1842 = vunpack.c.l.b16 %v1096
      %v1843 = vunpack.c.l.b16 %v1097
      %v1844 = vunpack.c.l.b16 %v1098
      %v1845 = vunpack.c.l.b16 %v1099
      %v1846 = vunpack.c.l.b16 %v1100
      %v1847 = vunpack.c.l.b16 %v1101
      %v1848 = vunpack.c.l.b16 %v1102
      %v1849 = vunpack.c.l.b16 %v1103
      %v1850 = vunpack.c.l.b16 %v1104
      %v1851 = vunpack.c.l.b16 %v1105
      %v1852 = vunpack.c.l.b16 %v1106
      %v1853 = vpack.c.b16 %v1822, %v1821
      %v1854 = vpack.c.b16 %v1824, %v1823
      %v1855 = vpack.c.b16 %v1826, %v1825
      %v1856 = vpack.c.b16 %v1828, %v1827
      %v1857 = vpack.c.b16 %v1830, %v1829
      %v1858 = vpack.c.b16 %v1832, %v1831
      %v1859 = vpack.c.b16 %v1834, %v1833
      %v1860 = vpack.c.b16 %v1836, %v1835
      %v1861 = vpack.c.b16 %v1838, %v1837
      %v1862 = vpack.c.b16 %v1840, %v1839
      %v1863 = vpack.c.b16 %v1842, %v1841
      %v1864 = vpack.c.b16 %v1844, %v1843
      %v1865 = vpack.c.b16 %v1846, %v1845
      %v1866 = vpack.c.b16 %v1848, %v1847
      %v1867 = vpack.c.b16 %v1850, %v1849
      %v1868 = vpack.c.b16 %v1852, %v1851
      %v1873 = vunpack.c.l.b16 %v1107
      %v1874 = vunpack.c.l.b16 %v1108
      %v1875 = vunpack.c.l.b16 %v1109
      %v1876 = vunpack.c.l.b16 %v1110
      %v1877 = vpack.c.b16 %v1874, %v1873
      %v1878 = vpack.c.b16 %v1876, %v1875
      %v1882 = vsel %vm1579, %v1853, 0
      %v1885 = vsel %vm1579, %v1854, 0
      %v1888 = vsel %vm1579, %v1855, 0
      %v1891 = vsel %vm1579, %v1856, 0
      %v1894 = vsel %vm1579, %v1857, 0
      %v1897 = vsel %vm1579, %v1858, 0
      %v1900 = vsel %vm1579, %v1859, 0
      %v1903 = vsel %vm1579, %v1860, 0
      %v1906 = vsel %vm1579, %v1861, 0
      %v1909 = vsel %vm1579, %v1862, 0
      %v1912 = vsel %vm1579, %v1863, 0
      %v1915 = vsel %vm1579, %v1864, 0
      %v1918 = vsel %vm1579, %v1865, 0
      %v1921 = vsel %vm1579, %v1866, 0
      %v1924 = vsel %vm1579, %v1867, 0
      %v1927 = vsel %vm1579, %v1868, 0
      %1929 = vmatprep.subr.bf16.mxu0 0
      %1930 = vmatpush1.bf16.msra.mxu0 0
      %1931 = vmatprep.subr.bf16.mxu0 0
      %1932 = vmatpush1.bf16.msra.mxu0 0
      %1933 = vmatprep.subr.bf16.mxu0 0
      %1934 = vmatpush1.bf16.msra.mxu0 0
      %1935 = vmatprep.subr.bf16.mxu0 0
      %1936 = vmatpush1.bf16.msra.mxu0 0
      %1937 = vmatprep.subr.bf16.mxu0 0
      %1938 = vmatpush1.bf16.msra.mxu0 0
      %1939 = vmatprep.subr.bf16.mxu0 0
      %1940 = vmatpush1.bf16.msra.mxu0 0
      %1941 = vmatprep.subr.bf16.mxu0 0
      %1942 = vmatpush1.bf16.msra.mxu0 %v1878
      %1943 = vmatprep.subr.bf16.mxu0 0
      %1944 = vmatpush1.bf16.msra.mxu0 %v1877
      %1945 = vmatprep.subr.bf16.mxu0 0
      %1946 = vmatpush2.bf16.msra.mxu0 0
      %1947 = vmatprep.subr.bf16.mxu0 0
      %1948 = vmatpush2.bf16.msra.mxu0 0
      %1949 = vmatprep.subr.bf16.mxu0 0
      %1950 = vmatpush2.bf16.msra.mxu0 0
      %1951 = vmatprep.subr.bf16.mxu0 0
      %1952 = vmatpush2.bf16.msra.mxu0 0
      %1953 = vmatprep.subr.bf16.mxu0 0
      %1954 = vmatpush2.bf16.msra.mxu0 0
      %1955 = vmatprep.subr.bf16.mxu0 0
      %1956 = vmatpush2.bf16.msra.mxu0 0
      %1957 = vmatprep.subr.bf16.mxu0 0
      %1958 = vmatpush2.bf16.msra.mxu0 0
      %1959 = vmatprep.subr.bf16.mxu0 0
      %1960 = vmatpush2.bf16.msra.mxu0 0
      %1961 = vmatprep.mubr.bf16.mxu0 0
      %1962 = vmatmul.mubr.bf16.gmra.mxu0 %v1882
      %v1963 = vpop.f32.mrf.mxu0
      %v1964 = vadd.f32 %v1663, %v1963
      %v1965 = vpop.f32.mrf.mxu0
      %v1966 = vpop.f32.mrf.mxu0
      %v1967 = vadd.f32 %v1666, %v1966
      %v1968 = vpop.f32.mrf.mxu0
      %1969 = vmatprep.mubr.bf16.mxu0 0
      %1970 = vmatmul.mubr.bf16.gmra.mxu0 %v1885
      %v1971 = vpop.f32.mrf.mxu0
      %v1972 = vadd.f32 %v1671, %v1971
      %v1973 = vpop.f32.mrf.mxu0
      %v1974 = vpop.f32.mrf.mxu0
      %v1975 = vadd.f32 %v1674, %v1974
      %v1976 = vpop.f32.mrf.mxu0
      %1977 = vmatprep.mubr.bf16.mxu0 0
      %1978 = vmatmul.mubr.bf16.gmra.mxu0 %v1888
      %v1979 = vpop.f32.mrf.mxu0
      %v1980 = vadd.f32 %v1679, %v1979
      %v1981 = vpop.f32.mrf.mxu0
      %v1982 = vpop.f32.mrf.mxu0
      %v1983 = vadd.f32 %v1682, %v1982
      %v1984 = vpop.f32.mrf.mxu0
      %1985 = vmatprep.mubr.bf16.mxu0 0
      %1986 = vmatmul.mubr.bf16.gmra.mxu0 %v1891
      %v1987 = vpop.f32.mrf.mxu0
      %v1988 = vadd.f32 %v1687, %v1987
      %v1989 = vpop.f32.mrf.mxu0
      %v1990 = vpop.f32.mrf.mxu0
      %v1991 = vadd.f32 %v1690, %v1990
      %v1992 = vpop.f32.mrf.mxu0
      %1993 = vmatprep.mubr.bf16.mxu0 0
      %1994 = vmatmul.mubr.bf16.gmra.mxu0 %v1894
      %v1995 = vpop.f32.mrf.mxu0
      %v1996 = vadd.f32 %v1695, %v1995
      %v1997 = vpop.f32.mrf.mxu0
      %v1998 = vpop.f32.mrf.mxu0
      %v1999 = vadd.f32 %v1698, %v1998
      %v2000 = vpop.f32.mrf.mxu0
      %2001 = vmatprep.mubr.bf16.mxu0 0
      %2002 = vmatmul.mubr.bf16.gmra.mxu0 %v1897
      %v2003 = vpop.f32.mrf.mxu0
      %v2004 = vadd.f32 %v1703, %v2003
      %v2005 = vpop.f32.mrf.mxu0
      %v2006 = vpop.f32.mrf.mxu0
      %v2007 = vadd.f32 %v1706, %v2006
      %v2008 = vpop.f32.mrf.mxu0
      %2009 = vmatprep.mubr.bf16.mxu0 0
      %2010 = vmatmul.mubr.bf16.gmra.mxu0 %v1900
      %v2011 = vpop.f32.mrf.mxu0
      %v2012 = vadd.f32 %v1711, %v2011
      %v2013 = vpop.f32.mrf.mxu0
      %v2014 = vpop.f32.mrf.mxu0
      %v2015 = vadd.f32 %v1714, %v2014
      %v2016 = vpop.f32.mrf.mxu0
      %2017 = vmatprep.mubr.bf16.mxu0 0
      %2018 = vmatmul.mubr.bf16.gmra.mxu0 %v1903
      %v2019 = vpop.f32.mrf.mxu0
      %v2020 = vadd.f32 %v1719, %v2019
      %v2021 = vpop.f32.mrf.mxu0
      %v2022 = vpop.f32.mrf.mxu0
      %v2023 = vadd.f32 %v1722, %v2022
      %v2024 = vpop.f32.mrf.mxu0
      %2025 = vmatprep.mubr.bf16.mxu0 0
      %2026 = vmatmul.mubr.bf16.gmra.mxu0 %v1906
      %v2027 = vpop.f32.mrf.mxu0
      %v2028 = vadd.f32 %v1727, %v2027
      %v2029 = vpop.f32.mrf.mxu0
      %v2030 = vpop.f32.mrf.mxu0
      %v2031 = vadd.f32 %v1730, %v2030
      %v2032 = vpop.f32.mrf.mxu0
      %2033 = vmatprep.mubr.bf16.mxu0 0
      %2034 = vmatmul.mubr.bf16.gmra.mxu0 %v1909
      %v2035 = vpop.f32.mrf.mxu0
      %v2036 = vadd.f32 %v1735, %v2035
      %v2037 = vpop.f32.mrf.mxu0
      %v2038 = vpop.f32.mrf.mxu0
      %v2039 = vadd.f32 %v1738, %v2038
      %v2040 = vpop.f32.mrf.mxu0
      %2041 = vmatprep.mubr.bf16.mxu0 0
      %2042 = vmatmul.mubr.bf16.gmra.mxu0 %v1912
      %v2043 = vpop.f32.mrf.mxu0
      %v2044 = vadd.f32 %v1743, %v2043
      %v2045 = vpop.f32.mrf.mxu0
      %v2046 = vpop.f32.mrf.mxu0
      %v2047 = vadd.f32 %v1746, %v2046
      %v2048 = vpop.f32.mrf.mxu0
      %2049 = vmatprep.mubr.bf16.mxu0 0
      %2050 = vmatmul.mubr.bf16.gmra.mxu0 %v1915
      %v2051 = vpop.f32.mrf.mxu0
      %v2052 = vadd.f32 %v1751, %v2051
      %v2053 = vpop.f32.mrf.mxu0
      %v2054 = vpop.f32.mrf.mxu0
      %v2055 = vadd.f32 %v1754, %v2054
      %v2056 = vpop.f32.mrf.mxu0
      %2057 = vmatprep.mubr.bf16.mxu0 0
      %2058 = vmatmul.mubr.bf16.gmra.mxu0 %v1918
      %v2059 = vpop.f32.mrf.mxu0
      %v2060 = vadd.f32 %v1759, %v2059
      %v2061 = vpop.f32.mrf.mxu0
      %v2062 = vpop.f32.mrf.mxu0
      %v2063 = vadd.f32 %v1762, %v2062
      %v2064 = vpop.f32.mrf.mxu0
      %2065 = vmatprep.mubr.bf16.mxu0 0
      %2066 = vmatmul.mubr.bf16.gmra.mxu0 %v1921
      %v2067 = vpop.f32.mrf.mxu0
      %v2068 = vadd.f32 %v1767, %v2067
      %v2069 = vpop.f32.mrf.mxu0
      %v2070 = vpop.f32.mrf.mxu0
      %v2071 = vadd.f32 %v1770, %v2070
      %v2072 = vpop.f32.mrf.mxu0
      %2073 = vmatprep.mubr.bf16.mxu0 0
      %2074 = vmatmul.mubr.bf16.gmra.mxu0 %v1924
      %v2075 = vpop.f32.mrf.mxu0
      %v2076 = vadd.f32 %v1775, %v2075
      %v2077 = vpop.f32.mrf.mxu0
      %v2078 = vpop.f32.mrf.mxu0
      %v2079 = vadd.f32 %v1778, %v2078
      %v2080 = vpop.f32.mrf.mxu0
      %2081 = vmatprep.mubr.bf16.mxu0 0
      %2082 = vmatmul.mubr.bf16.gmra.mxu0 %v1927
      %v2083 = vpop.f32.mrf.mxu0
      %v2084 = vadd.f32 %v1783, %v2083
      %v2085 = vpop.f32.mrf.mxu0
      %v2086 = vpop.f32.mrf.mxu0
      %v2087 = vadd.f32 %v1786, %v2086
      %v2088 = vpop.f32.mrf.mxu0
      %2089 = vdwg.mxu0
      %v2090 = vld [vmem:[#allocation2] sm:$0xe]
      %v2091 = vld [vmem:[#allocation2 + $0xc] sm:$0xe]
      %v2092 = vld [vmem:[#allocation2 + $0x18] sm:$0xe]
      %v2093 = vld [vmem:[#allocation2 + $0x24] sm:$0xe]
      %v2094 = vld [vmem:[#allocation2 + $0x30] sm:$0xe]
      %v2095 = vld [vmem:[#allocation2 + $0x3c] sm:$0xe]
      %v2096 = vld [vmem:[#allocation2 + $0x48] sm:$0xe]
      %v2097 = vld [vmem:[#allocation2 + $0x54] sm:$0xe]
      %v2098 = vld [vmem:[#allocation2 + $0x60] sm:$0xe]
      %v2099 = vld [vmem:[#allocation2 + $0x6c] sm:$0xe]
      %v2100 = vld [vmem:[#allocation2 + $0x78] sm:$0xe]
      %v2101 = vld [vmem:[#allocation2 + $0x84] sm:$0xe]
      %v2102 = vld [vmem:[#allocation2 + $0x90] sm:$0xe]
      %v2103 = vld [vmem:[#allocation2 + $0x9c] sm:$0xe]
      %v2104 = vld [vmem:[#allocation2 + $0xa8] sm:$0xe]
      %v2105 = vld [vmem:[#allocation2 + $0xb4] sm:$0xe]
      %vm2138 = vcmask 1042432
      %vm2139 = vcmask 1046532
      %vm2140 = vmor %vm2138, %vm2139
      %v2141 = vrot.slane %v2090, 5
      %v2142 = vrot.slane %v2141, 4
      %v2143 = vrot.slane %v1076, 5
      %v2144 = vsel %vm2140, %v2142, %v2143
      %v2145 = vrot.slane %v2143, 4
      %v2146 = vrot.slane %v1111, 5
      %v2147 = vsel %vm2140, %v2145, %v2146
      %v2148 = vrot.slane %v2091, 5
      %v2149 = vrot.slane %v2148, 4
      %v2150 = vrot.slane %v1078, 5
      %v2151 = vsel %vm2140, %v2149, %v2150
      %v2152 = vrot.slane %v2150, 4
      %v2153 = vrot.slane %v1112, 5
      %v2154 = vsel %vm2140, %v2152, %v2153
      %v2155 = vrot.slane %v2092, 5
      %v2156 = vrot.slane %v2155, 4
      %v2157 = vrot.slane %v1080, 5
      %v2158 = vsel %vm2140, %v2156, %v2157
      %v2159 = vrot.slane %v2157, 4
      %v2160 = vrot.slane %v1113, 5
      %v2161 = vsel %vm2140, %v2159, %v2160
      %v2162 = vrot.slane %v2093, 5
      %v2163 = vrot.slane %v2162, 4
      %v2164 = vrot.slane %v1082, 5
      %v2165 = vsel %vm2140, %v2163, %v2164
      %v2166 = vrot.slane %v2164, 4
      %v2167 = vrot.slane %v1114, 5
      %v2168 = vsel %vm2140, %v2166, %v2167
      %v2169 = vrot.slane %v2094, 5
      %v2170 = vrot.slane %v2169, 4
      %v2171 = vrot.slane %v1084, 5
      %v2172 = vsel %vm2140, %v2170, %v2171
      %v2173 = vrot.slane %v2171, 4
      %v2174 = vrot.slane %v1115, 5
      %v2175 = vsel %vm2140, %v2173, %v2174
      %v2176 = vrot.slane %v2095, 5
      %v2177 = vrot.slane %v2176, 4
      %v2178 = vrot.slane %v1086, 5
      %v2179 = vsel %vm2140, %v2177, %v2178
      %v2180 = vrot.slane %v2178, 4
      %v2181 = vrot.slane %v1116, 5
      %v2182 = vsel %vm2140, %v2180, %v2181
      %v2183 = vrot.slane %v2096, 5
      %v2184 = vrot.slane %v2183, 4
      %v2185 = vrot.slane %v1088, 5
      %v2186 = vsel %vm2140, %v2184, %v2185
      %v2187 = vrot.slane %v2185, 4
      %v2188 = vrot.slane %v1117, 5
      %v2189 = vsel %vm2140, %v2187, %v2188
      %v2190 = vrot.slane %v2097, 5
      %v2191 = vrot.slane %v2190, 4
      %v2192 = vrot.slane %v1090, 5
      %v2193 = vsel %vm2140, %v2191, %v2192
      %v2194 = vrot.slane %v2192, 4
      %v2195 = vrot.slane %v1118, 5
      %v2196 = vsel %vm2140, %v2194, %v2195
      %v2197 = vrot.slane %v2098, 5
      %v2198 = vrot.slane %v2197, 4
      %v2199 = vrot.slane %v1092, 5
      %v2200 = vsel %vm2140, %v2198, %v2199
      %v2201 = vrot.slane %v2199, 4
      %v2202 = vrot.slane %v1119, 5
      %v2203 = vsel %vm2140, %v2201, %v2202
      %v2204 = vrot.slane %v2099, 5
      %v2205 = vrot.slane %v2204, 4
      %v2206 = vrot.slane %v1094, 5
      %v2207 = vsel %vm2140, %v2205, %v2206
      %v2208 = vrot.slane %v2206, 4
      %v2209 = vrot.slane %v1120, 5
      %v2210 = vsel %vm2140, %v2208, %v2209
      %v2211 = vrot.slane %v2100, 5
      %v2212 = vrot.slane %v2211, 4
      %v2213 = vrot.slane %v1096, 5
      %v2214 = vsel %vm2140, %v2212, %v2213
      %v2215 = vrot.slane %v2213, 4
      %v2216 = vrot.slane %v1121, 5
      %v2217 = vsel %vm2140, %v2215, %v2216
      %v2218 = vrot.slane %v2101, 5
      %v2219 = vrot.slane %v2218, 4
      %v2220 = vrot.slane %v1098, 5
      %v2221 = vsel %vm2140, %v2219, %v2220
      %v2222 = vrot.slane %v2220, 4
      %v2223 = vrot.slane %v1122, 5
      %v2224 = vsel %vm2140, %v2222, %v2223
      %v2225 = vrot.slane %v2102, 5
      %v2226 = vrot.slane %v2225, 4
      %v2227 = vrot.slane %v1100, 5
      %v2228 = vsel %vm2140, %v2226, %v2227
      %v2229 = vrot.slane %v2227, 4
      %v2230 = vrot.slane %v1123, 5
      %v2231 = vsel %vm2140, %v2229, %v2230
      %v2232 = vrot.slane %v2103, 5
      %v2233 = vrot.slane %v2232, 4
      %v2234 = vrot.slane %v1102, 5
      %v2235 = vsel %vm2140, %v2233, %v2234
      %v2236 = vrot.slane %v2234, 4
      %v2237 = vrot.slane %v1124, 5
      %v2238 = vsel %vm2140, %v2236, %v2237
      %v2239 = vrot.slane %v2104, 5
      %v2240 = vrot.slane %v2239, 4
      %v2241 = vrot.slane %v1104, 5
      %v2242 = vsel %vm2140, %v2240, %v2241
      %v2243 = vrot.slane %v2241, 4
      %v2244 = vrot.slane %v1125, 5
      %v2245 = vsel %vm2140, %v2243, %v2244
      %v2246 = vrot.slane %v2105, 5
      %v2247 = vrot.slane %v2246, 4
      %v2248 = vrot.slane %v1106, 5
      %v2249 = vsel %vm2140, %v2247, %v2248
      %v2250 = vrot.slane %v2248, 4
      %v2251 = vrot.slane %v1126, 5
      %v2252 = vsel %vm2140, %v2250, %v2251
      %s2253 = scalar_lea.vmem %s1, 32
      %v2254 = vld [vmem:[%s2253] sm:$0xf]
      %v2255 = vld [vmem:[%s2253 + $0x4] sm:$0xf]
      %v2256 = vld [vmem:[%s2253 + $0x8] sm:$0xf]
      %v2257 = vld [vmem:[%s2253 + $0xc] sm:$0xf]
      %v2258 = vunpack.c.l.b16 %v2144
      %v2259 = vunpack.c.l.b16 %v2147
      %v2260 = vunpack.c.l.b16 %v2151
      %v2261 = vunpack.c.l.b16 %v2154
      %v2262 = vunpack.c.l.b16 %v2158
      %v2263 = vunpack.c.l.b16 %v2161
      %v2264 = vunpack.c.l.b16 %v2165
      %v2265 = vunpack.c.l.b16 %v2168
      %v2266 = vunpack.c.l.b16 %v2172
      %v2267 = vunpack.c.l.b16 %v2175
      %v2268 = vunpack.c.l.b16 %v2179
      %v2269 = vunpack.c.l.b16 %v2182
      %v2270 = vunpack.c.l.b16 %v2186
      %v2271 = vunpack.c.l.b16 %v2189
      %v2272 = vunpack.c.l.b16 %v2193
      %v2273 = vunpack.c.l.b16 %v2196
      %v2274 = vunpack.c.l.b16 %v2200
      %v2275 = vunpack.c.l.b16 %v2203
      %v2276 = vunpack.c.l.b16 %v2207
      %v2277 = vunpack.c.l.b16 %v2210
      %v2278 = vunpack.c.l.b16 %v2214
      %v2279 = vunpack.c.l.b16 %v2217
      %v2280 = vunpack.c.l.b16 %v2221
      %v2281 = vunpack.c.l.b16 %v2224
      %v2282 = vunpack.c.l.b16 %v2228
      %v2283 = vunpack.c.l.b16 %v2231
      %v2284 = vunpack.c.l.b16 %v2235
      %v2285 = vunpack.c.l.b16 %v2238
      %v2286 = vunpack.c.l.b16 %v2242
      %v2287 = vunpack.c.l.b16 %v2245
      %v2288 = vunpack.c.l.b16 %v2249
      %v2289 = vunpack.c.l.b16 %v2252
      %v2290 = vpack.c.b16 %v2259, %v2258
      %v2291 = vpack.c.b16 %v2261, %v2260
      %v2292 = vpack.c.b16 %v2263, %v2262
      %v2293 = vpack.c.b16 %v2265, %v2264
      %v2294 = vpack.c.b16 %v2267, %v2266
      %v2295 = vpack.c.b16 %v2269, %v2268
      %v2296 = vpack.c.b16 %v2271, %v2270
      %v2297 = vpack.c.b16 %v2273, %v2272
      %v2298 = vpack.c.b16 %v2275, %v2274
      %v2299 = vpack.c.b16 %v2277, %v2276
      %v2300 = vpack.c.b16 %v2279, %v2278
      %v2301 = vpack.c.b16 %v2281, %v2280
      %v2302 = vpack.c.b16 %v2283, %v2282
      %v2303 = vpack.c.b16 %v2285, %v2284
      %v2304 = vpack.c.b16 %v2287, %v2286
      %v2305 = vpack.c.b16 %v2289, %v2288
      %v2310 = vunpack.c.l.b16 %v2254
      %v2311 = vunpack.c.l.b16 %v2255
      %v2312 = vunpack.c.l.b16 %v2256
      %v2313 = vunpack.c.l.b16 %v2257
      %v2314 = vpack.c.b16 %v2311, %v2310
      %v2315 = vpack.c.b16 %v2313, %v2312
      %v2319 = vsel %vm1579, %v2290, 0
      %v2322 = vsel %vm1579, %v2291, 0
      %v2325 = vsel %vm1579, %v2292, 0
      %v2328 = vsel %vm1579, %v2293, 0
      %v2331 = vsel %vm1579, %v2294, 0
      %v2334 = vsel %vm1579, %v2295, 0
      %v2337 = vsel %vm1579, %v2296, 0
      %v2340 = vsel %vm1579, %v2297, 0
      %v2343 = vsel %vm1579, %v2298, 0
      %v2346 = vsel %vm1579, %v2299, 0
      %v2349 = vsel %vm1579, %v2300, 0
      %v2352 = vsel %vm1579, %v2301, 0
      %v2355 = vsel %vm1579, %v2302, 0
      %v2358 = vsel %vm1579, %v2303, 0
      %v2361 = vsel %vm1579, %v2304, 0
      %v2364 = vsel %vm1579, %v2305, 0
      %2366 = vmatprep.subr.bf16.mxu0 0
      %2367 = vmatpush1.bf16.msra.mxu0 0
      %2368 = vmatprep.subr.bf16.mxu0 0
      %2369 = vmatpush1.bf16.msra.mxu0 0
      %2370 = vmatprep.subr.bf16.mxu0 0
      %2371 = vmatpush1.bf16.msra.mxu0 0
      %2372 = vmatprep.subr.bf16.mxu0 0
      %2373 = vmatpush1.bf16.msra.mxu0 0
      %2374 = vmatprep.subr.bf16.mxu0 0
      %2375 = vmatpush1.bf16.msra.mxu0 0
      %2376 = vmatprep.subr.bf16.mxu0 0
      %2377 = vmatpush1.bf16.msra.mxu0 0
      %2378 = vmatprep.subr.bf16.mxu0 0
      %2379 = vmatpush1.bf16.msra.mxu0 %v2315
      %2380 = vmatprep.subr.bf16.mxu0 0
      %2381 = vmatpush1.bf16.msra.mxu0 %v2314
      %2382 = vmatprep.subr.bf16.mxu0 0
      %2383 = vmatpush2.bf16.msra.mxu0 0
      %2384 = vmatprep.subr.bf16.mxu0 0
      %2385 = vmatpush2.bf16.msra.mxu0 0
      %2386 = vmatprep.subr.bf16.mxu0 0
      %2387 = vmatpush2.bf16.msra.mxu0 0
      %2388 = vmatprep.subr.bf16.mxu0 0
      %2389 = vmatpush2.bf16.msra.mxu0 0
      %2390 = vmatprep.subr.bf16.mxu0 0
      %2391 = vmatpush2.bf16.msra.mxu0 0
      %2392 = vmatprep.subr.bf16.mxu0 0
      %2393 = vmatpush2.bf16.msra.mxu0 0
      %2394 = vmatprep.subr.bf16.mxu0 0
      %2395 = vmatpush2.bf16.msra.mxu0 0
      %2396 = vmatprep.subr.bf16.mxu0 0
      %2397 = vmatpush2.bf16.msra.mxu0 0
      %2398 = vmatprep.mubr.bf16.mxu0 0
      %2399 = vmatmul.mubr.bf16.gmra.mxu0 %v2319
      %v2400 = vpop.f32.mrf.mxu0
      %v2401 = vadd.f32 0.0, %v2400
      %v2402 = vpop.f32.mrf.mxu0
      %v2403 = vpop.f32.mrf.mxu0
      %v2404 = vadd.f32 0.0, %v2403
      %v2405 = vpop.f32.mrf.mxu0
      %2406 = vmatprep.mubr.bf16.mxu0 0
      %2407 = vmatmul.mubr.bf16.gmra.mxu0 %v2322
      %v2408 = vpop.f32.mrf.mxu0
      %v2409 = vadd.f32 0.0, %v2408
      %v2410 = vpop.f32.mrf.mxu0
      %v2411 = vpop.f32.mrf.mxu0
      %v2412 = vadd.f32 0.0, %v2411
      %v2413 = vpop.f32.mrf.mxu0
      %2414 = vmatprep.mubr.bf16.mxu0 0
      %2415 = vmatmul.mubr.bf16.gmra.mxu0 %v2325
      %v2416 = vpop.f32.mrf.mxu0
      %v2417 = vadd.f32 0.0, %v2416
      %v2418 = vpop.f32.mrf.mxu0
      %v2419 = vpop.f32.mrf.mxu0
      %v2420 = vadd.f32 0.0, %v2419
      %v2421 = vpop.f32.mrf.mxu0
      %2422 = vmatprep.mubr.bf16.mxu0 0
      %2423 = vmatmul.mubr.bf16.gmra.mxu0 %v2328
      %v2424 = vpop.f32.mrf.mxu0
      %v2425 = vadd.f32 0.0, %v2424
      %v2426 = vpop.f32.mrf.mxu0
      %v2427 = vpop.f32.mrf.mxu0
      %v2428 = vadd.f32 0.0, %v2427
      %v2429 = vpop.f32.mrf.mxu0
      %2430 = vmatprep.mubr.bf16.mxu0 0
      %2431 = vmatmul.mubr.bf16.gmra.mxu0 %v2331
      %v2432 = vpop.f32.mrf.mxu0
      %v2433 = vadd.f32 0.0, %v2432
      %v2434 = vpop.f32.mrf.mxu0
      %v2435 = vpop.f32.mrf.mxu0
      %v2436 = vadd.f32 0.0, %v2435
      %v2437 = vpop.f32.mrf.mxu0
      %2438 = vmatprep.mubr.bf16.mxu0 0
      %2439 = vmatmul.mubr.bf16.gmra.mxu0 %v2334
      %v2440 = vpop.f32.mrf.mxu0
      %v2441 = vadd.f32 0.0, %v2440
      %v2442 = vpop.f32.mrf.mxu0
      %v2443 = vpop.f32.mrf.mxu0
      %v2444 = vadd.f32 0.0, %v2443
      %v2445 = vpop.f32.mrf.mxu0
      %2446 = vmatprep.mubr.bf16.mxu0 0
      %2447 = vmatmul.mubr.bf16.gmra.mxu0 %v2337
      %v2448 = vpop.f32.mrf.mxu0
      %v2449 = vadd.f32 0.0, %v2448
      %v2450 = vpop.f32.mrf.mxu0
      %v2451 = vpop.f32.mrf.mxu0
      %v2452 = vadd.f32 0.0, %v2451
      %v2453 = vpop.f32.mrf.mxu0
      %2454 = vmatprep.mubr.bf16.mxu0 0
      %2455 = vmatmul.mubr.bf16.gmra.mxu0 %v2340
      %v2456 = vpop.f32.mrf.mxu0
      %v2457 = vadd.f32 0.0, %v2456
      %v2458 = vpop.f32.mrf.mxu0
      %v2459 = vpop.f32.mrf.mxu0
      %v2460 = vadd.f32 0.0, %v2459
      %v2461 = vpop.f32.mrf.mxu0
      %2462 = vmatprep.mubr.bf16.mxu0 0
      %2463 = vmatmul.mubr.bf16.gmra.mxu0 %v2343
      %v2464 = vpop.f32.mrf.mxu0
      %v2465 = vadd.f32 0.0, %v2464
      %v2466 = vpop.f32.mrf.mxu0
      %v2467 = vpop.f32.mrf.mxu0
      %v2468 = vadd.f32 0.0, %v2467
      %v2469 = vpop.f32.mrf.mxu0
      %2470 = vmatprep.mubr.bf16.mxu0 0
      %2471 = vmatmul.mubr.bf16.gmra.mxu0 %v2346
      %v2472 = vpop.f32.mrf.mxu0
      %v2473 = vadd.f32 0.0, %v2472
      %v2474 = vpop.f32.mrf.mxu0
      %v2475 = vpop.f32.mrf.mxu0
      %v2476 = vadd.f32 0.0, %v2475
      %v2477 = vpop.f32.mrf.mxu0
      %2478 = vmatprep.mubr.bf16.mxu0 0
      %2479 = vmatmul.mubr.bf16.gmra.mxu0 %v2349
      %v2480 = vpop.f32.mrf.mxu0
      %v2481 = vadd.f32 0.0, %v2480
      %v2482 = vpop.f32.mrf.mxu0
      %v2483 = vpop.f32.mrf.mxu0
      %v2484 = vadd.f32 0.0, %v2483
      %v2485 = vpop.f32.mrf.mxu0
      %2486 = vmatprep.mubr.bf16.mxu0 0
      %2487 = vmatmul.mubr.bf16.gmra.mxu0 %v2352
      %v2488 = vpop.f32.mrf.mxu0
      %v2489 = vadd.f32 0.0, %v2488
      %v2490 = vpop.f32.mrf.mxu0
      %v2491 = vpop.f32.mrf.mxu0
      %v2492 = vadd.f32 0.0, %v2491
      %v2493 = vpop.f32.mrf.mxu0
      %2494 = vmatprep.mubr.bf16.mxu0 0
      %2495 = vmatmul.mubr.bf16.gmra.mxu0 %v2355
      %v2496 = vpop.f32.mrf.mxu0
      %v2497 = vadd.f32 0.0, %v2496
      %v2498 = vpop.f32.mrf.mxu0
      %v2499 = vpop.f32.mrf.mxu0
      %v2500 = vadd.f32 0.0, %v2499
      %v2501 = vpop.f32.mrf.mxu0
      %2502 = vmatprep.mubr.bf16.mxu0 0
      %2503 = vmatmul.mubr.bf16.gmra.mxu0 %v2358
      %v2504 = vpop.f32.mrf.mxu0
      %v2505 = vadd.f32 0.0, %v2504
      %v2506 = vpop.f32.mrf.mxu0
      %v2507 = vpop.f32.mrf.mxu0
      %v2508 = vadd.f32 0.0, %v2507
      %v2509 = vpop.f32.mrf.mxu0
      %2510 = vmatprep.mubr.bf16.mxu0 0
      %2511 = vmatmul.mubr.bf16.gmra.mxu0 %v2361
      %v2512 = vpop.f32.mrf.mxu0
      %v2513 = vadd.f32 0.0, %v2512
      %v2514 = vpop.f32.mrf.mxu0
      %v2515 = vpop.f32.mrf.mxu0
      %v2516 = vadd.f32 0.0, %v2515
      %v2517 = vpop.f32.mrf.mxu0
      %2518 = vmatprep.mubr.bf16.mxu0 0
      %2519 = vmatmul.mubr.bf16.gmra.mxu0 %v2364
      %v2520 = vpop.f32.mrf.mxu0
      %v2521 = vadd.f32 0.0, %v2520
      %v2522 = vpop.f32.mrf.mxu0
      %v2523 = vpop.f32.mrf.mxu0
      %v2524 = vadd.f32 0.0, %v2523
      %v2525 = vpop.f32.mrf.mxu0
      %2526 = vdwg.mxu0
      %v2527 = vadd.f32 %v1964, %v2401
      %v2528 = vadd.f32 %v1967, %v2404
      %v2529 = vadd.f32 %v1972, %v2409
      %v2530 = vadd.f32 %v1975, %v2412
      %v2531 = vadd.f32 %v1980, %v2417
      %v2532 = vadd.f32 %v1983, %v2420
      %v2533 = vadd.f32 %v1988, %v2425
      %v2534 = vadd.f32 %v1991, %v2428
      %v2535 = vadd.f32 %v1996, %v2433
      %v2536 = vadd.f32 %v1999, %v2436
      %v2537 = vadd.f32 %v2004, %v2441
      %v2538 = vadd.f32 %v2007, %v2444
      %v2539 = vadd.f32 %v2012, %v2449
      %v2540 = vadd.f32 %v2015, %v2452
      %v2541 = vadd.f32 %v2020, %v2457
      %v2542 = vadd.f32 %v2023, %v2460
      %v2543 = vadd.f32 %v2028, %v2465
      %v2544 = vadd.f32 %v2031, %v2468
      %v2545 = vadd.f32 %v2036, %v2473
      %v2546 = vadd.f32 %v2039, %v2476
      %v2547 = vadd.f32 %v2044, %v2481
      %v2548 = vadd.f32 %v2047, %v2484
      %v2549 = vadd.f32 %v2052, %v2489
      %v2550 = vadd.f32 %v2055, %v2492
      %v2551 = vadd.f32 %v2060, %v2497
      %v2552 = vadd.f32 %v2063, %v2500
      %v2553 = vadd.f32 %v2068, %v2505
      %v2554 = vadd.f32 %v2071, %v2508
      %v2555 = vadd.f32 %v2076, %v2513
      %v2556 = vadd.f32 %v2079, %v2516
      %v2557 = vadd.f32 %v2084, %v2521
      %v2558 = vadd.f32 %v2087, %v2524
      %v2559 = vld [vmem:[%s960] sm:$0xf]
      %v2560 = vld [vmem:[%s960 + $0x4] sm:$0xf]
      %v2561 = vld [vmem:[%s960 + $0xc] sm:$0xf]
      %v2562 = vld [vmem:[%s960 + $0x10] sm:$0xf]
      %v2563 = vld [vmem:[%s960 + $0x18] sm:$0xf]
      %v2564 = vld [vmem:[%s960 + $0x1c] sm:$0xf]
      %v2565 = vld [vmem:[%s960 + $0x24] sm:$0xf]
      %v2566 = vld [vmem:[%s960 + $0x28] sm:$0xf]
      %v2567 = vld [vmem:[%s960 + $0x30] sm:$0xf]
      %v2568 = vld [vmem:[%s960 + $0x34] sm:$0xf]
      %v2569 = vld [vmem:[%s960 + $0x3c] sm:$0xf]
      %v2570 = vld [vmem:[%s960 + $0x40] sm:$0xf]
      %v2571 = vld [vmem:[%s960 + $0x48] sm:$0xf]
      %v2572 = vld [vmem:[%s960 + $0x4c] sm:$0xf]
      %v2573 = vld [vmem:[%s960 + $0x54] sm:$0xf]
      %v2574 = vld [vmem:[%s960 + $0x58] sm:$0xf]
      %v2575 = vld [vmem:[%s960 + $0x60] sm:$0xf]
      %v2576 = vld [vmem:[%s960 + $0x64] sm:$0xf]
      %v2577 = vld [vmem:[%s960 + $0x6c] sm:$0xf]
      %v2578 = vld [vmem:[%s960 + $0x70] sm:$0xf]
      %v2579 = vld [vmem:[%s960 + $0x78] sm:$0xf]
      %v2580 = vld [vmem:[%s960 + $0x7c] sm:$0xf]
      %v2581 = vld [vmem:[%s960 + $0x84] sm:$0xf]
      %v2582 = vld [vmem:[%s960 + $0x88] sm:$0xf]
      %v2583 = vld [vmem:[%s960 + $0x90] sm:$0xf]
      %v2584 = vld [vmem:[%s960 + $0x94] sm:$0xf]
      %v2585 = vld [vmem:[%s960 + $0x9c] sm:$0xf]
      %v2586 = vld [vmem:[%s960 + $0xa0] sm:$0xf]
      %v2587 = vld [vmem:[%s960 + $0xa8] sm:$0xf]
      %v2588 = vld [vmem:[%s960 + $0xac] sm:$0xf]
      %v2589 = vld [vmem:[%s960 + $0xb4] sm:$0xf]
      %v2590 = vld [vmem:[%s960 + $0xb8] sm:$0xf]
      %s2591 = scalar_lea.vmem %s1, 48
      %v2592 = vld [vmem:[%s2591] sm:$0xf]
      %v2593 = vld [vmem:[%s2591 + $0x4] sm:$0xf]
      %v2594 = vld [vmem:[%s2591 + $0x8] sm:$0xf]
      %v2595 = vld [vmem:[%s2591 + $0xc] sm:$0xf]
      %v2628 = vunpack.c.l.b16 %v2559
      %v2629 = vunpack.c.l.b16 %v2560
      %v2630 = vunpack.c.l.b16 %v2561
      %v2631 = vunpack.c.l.b16 %v2562
      %v2632 = vunpack.c.l.b16 %v2563
      %v2633 = vunpack.c.l.b16 %v2564
      %v2634 = vunpack.c.l.b16 %v2565
      %v2635 = vunpack.c.l.b16 %v2566
      %v2636 = vunpack.c.l.b16 %v2567
      %v2637 = vunpack.c.l.b16 %v2568
      %v2638 = vunpack.c.l.b16 %v2569
      %v2639 = vunpack.c.l.b16 %v2570
      %v2640 = vunpack.c.l.b16 %v2571
      %v2641 = vunpack.c.l.b16 %v2572
      %v2642 = vunpack.c.l.b16 %v2573
      %v2643 = vunpack.c.l.b16 %v2574
      %v2644 = vunpack.c.l.b16 %v2575
      %v2645 = vunpack.c.l.b16 %v2576
      %v2646 = vunpack.c.l.b16 %v2577
      %v2647 = vunpack.c.l.b16 %v2578
      %v2648 = vunpack.c.l.b16 %v2579
      %v2649 = vunpack.c.l.b16 %v2580
      %v2650 = vunpack.c.l.b16 %v2581
      %v2651 = vunpack.c.l.b16 %v2582
      %v2652 = vunpack.c.l.b16 %v2583
      %v2653 = vunpack.c.l.b16 %v2584
      %v2654 = vunpack.c.l.b16 %v2585
      %v2655 = vunpack.c.l.b16 %v2586
      %v2656 = vunpack.c.l.b16 %v2587
      %v2657 = vunpack.c.l.b16 %v2588
      %v2658 = vunpack.c.l.b16 %v2589
      %v2659 = vunpack.c.l.b16 %v2590
      %v2660 = vpack.c.b16 %v2629, %v2628
      %v2661 = vpack.c.b16 %v2631, %v2630
      %v2662 = vpack.c.b16 %v2633, %v2632
      %v2663 = vpack.c.b16 %v2635, %v2634
      %v2664 = vpack.c.b16 %v2637, %v2636
      %v2665 = vpack.c.b16 %v2639, %v2638
      %v2666 = vpack.c.b16 %v2641, %v2640
      %v2667 = vpack.c.b16 %v2643, %v2642
      %v2668 = vpack.c.b16 %v2645, %v2644
      %v2669 = vpack.c.b16 %v2647, %v2646
      %v2670 = vpack.c.b16 %v2649, %v2648
      %v2671 = vpack.c.b16 %v2651, %v2650
      %v2672 = vpack.c.b16 %v2653, %v2652
      %v2673 = vpack.c.b16 %v2655, %v2654
      %v2674 = vpack.c.b16 %v2657, %v2656
      %v2675 = vpack.c.b16 %v2659, %v2658
      %v2680 = vunpack.c.l.b16 %v2592
      %v2681 = vunpack.c.l.b16 %v2593
      %v2682 = vunpack.c.l.b16 %v2594
      %v2683 = vunpack.c.l.b16 %v2595
      %v2684 = vpack.c.b16 %v2681, %v2680
      %v2685 = vpack.c.b16 %v2683, %v2682
      %v2689 = vsel %vm1579, %v2660, 0
      %v2692 = vsel %vm1579, %v2661, 0
      %v2695 = vsel %vm1579, %v2662, 0
      %v2698 = vsel %vm1579, %v2663, 0
      %v2701 = vsel %vm1579, %v2664, 0
      %v2704 = vsel %vm1579, %v2665, 0
      %v2707 = vsel %vm1579, %v2666, 0
      %v2710 = vsel %vm1579, %v2667, 0
      %v2713 = vsel %vm1579, %v2668, 0
      %v2716 = vsel %vm1579, %v2669, 0
      %v2719 = vsel %vm1579, %v2670, 0
      %v2722 = vsel %vm1579, %v2671, 0
      %v2725 = vsel %vm1579, %v2672, 0
      %v2728 = vsel %vm1579, %v2673, 0
      %v2731 = vsel %vm1579, %v2674, 0
      %v2734 = vsel %vm1579, %v2675, 0
      %2736 = vmatprep.subr.bf16.mxu0 0
      %2737 = vmatpush1.bf16.msra.mxu0 0
      %2738 = vmatprep.subr.bf16.mxu0 0
      %2739 = vmatpush1.bf16.msra.mxu0 0
      %2740 = vmatprep.subr.bf16.mxu0 0
      %2741 = vmatpush1.bf16.msra.mxu0 0
      %2742 = vmatprep.subr.bf16.mxu0 0
      %2743 = vmatpush1.bf16.msra.mxu0 0
      %2744 = vmatprep.subr.bf16.mxu0 0
      %2745 = vmatpush1.bf16.msra.mxu0 0
      %2746 = vmatprep.subr.bf16.mxu0 0
      %2747 = vmatpush1.bf16.msra.mxu0 0
      %2748 = vmatprep.subr.bf16.mxu0 0
      %2749 = vmatpush1.bf16.msra.mxu0 %v2685
      %2750 = vmatprep.subr.bf16.mxu0 0
      %2751 = vmatpush1.bf16.msra.mxu0 %v2684
      %2752 = vmatprep.subr.bf16.mxu0 0
      %2753 = vmatpush2.bf16.msra.mxu0 0
      %2754 = vmatprep.subr.bf16.mxu0 0
      %2755 = vmatpush2.bf16.msra.mxu0 0
      %2756 = vmatprep.subr.bf16.mxu0 0
      %2757 = vmatpush2.bf16.msra.mxu0 0
      %2758 = vmatprep.subr.bf16.mxu0 0
      %2759 = vmatpush2.bf16.msra.mxu0 0
      %2760 = vmatprep.subr.bf16.mxu0 0
      %2761 = vmatpush2.bf16.msra.mxu0 0
      %2762 = vmatprep.subr.bf16.mxu0 0
      %2763 = vmatpush2.bf16.msra.mxu0 0
      %2764 = vmatprep.subr.bf16.mxu0 0
      %2765 = vmatpush2.bf16.msra.mxu0 0
      %2766 = vmatprep.subr.bf16.mxu0 0
      %2767 = vmatpush2.bf16.msra.mxu0 0
      %2768 = vmatprep.mubr.bf16.mxu0 0
      %2769 = vmatmul.mubr.bf16.gmra.mxu0 %v2689
      %v2770 = vpop.f32.mrf.mxu0
      %v2771 = vadd.f32 0.0, %v2770
      %v2772 = vpop.f32.mrf.mxu0
      %v2773 = vpop.f32.mrf.mxu0
      %v2774 = vadd.f32 0.0, %v2773
      %v2775 = vpop.f32.mrf.mxu0
      %2776 = vmatprep.mubr.bf16.mxu0 0
      %2777 = vmatmul.mubr.bf16.gmra.mxu0 %v2692
      %v2778 = vpop.f32.mrf.mxu0
      %v2779 = vadd.f32 0.0, %v2778
      %v2780 = vpop.f32.mrf.mxu0
      %v2781 = vpop.f32.mrf.mxu0
      %v2782 = vadd.f32 0.0, %v2781
      %v2783 = vpop.f32.mrf.mxu0
      %2784 = vmatprep.mubr.bf16.mxu0 0
      %2785 = vmatmul.mubr.bf16.gmra.mxu0 %v2695
      %v2786 = vpop.f32.mrf.mxu0
      %v2787 = vadd.f32 0.0, %v2786
      %v2788 = vpop.f32.mrf.mxu0
      %v2789 = vpop.f32.mrf.mxu0
      %v2790 = vadd.f32 0.0, %v2789
      %v2791 = vpop.f32.mrf.mxu0
      %2792 = vmatprep.mubr.bf16.mxu0 0
      %2793 = vmatmul.mubr.bf16.gmra.mxu0 %v2698
      %v2794 = vpop.f32.mrf.mxu0
      %v2795 = vadd.f32 0.0, %v2794
      %v2796 = vpop.f32.mrf.mxu0
      %v2797 = vpop.f32.mrf.mxu0
      %v2798 = vadd.f32 0.0, %v2797
      %v2799 = vpop.f32.mrf.mxu0
      %2800 = vmatprep.mubr.bf16.mxu0 0
      %2801 = vmatmul.mubr.bf16.gmra.mxu0 %v2701
      %v2802 = vpop.f32.mrf.mxu0
      %v2803 = vadd.f32 0.0, %v2802
      %v2804 = vpop.f32.mrf.mxu0
      %v2805 = vpop.f32.mrf.mxu0
      %v2806 = vadd.f32 0.0, %v2805
      %v2807 = vpop.f32.mrf.mxu0
      %2808 = vmatprep.mubr.bf16.mxu0 0
      %2809 = vmatmul.mubr.bf16.gmra.mxu0 %v2704
      %v2810 = vpop.f32.mrf.mxu0
      %v2811 = vadd.f32 0.0, %v2810
      %v2812 = vpop.f32.mrf.mxu0
      %v2813 = vpop.f32.mrf.mxu0
      %v2814 = vadd.f32 0.0, %v2813
      %v2815 = vpop.f32.mrf.mxu0
      %2816 = vmatprep.mubr.bf16.mxu0 0
      %2817 = vmatmul.mubr.bf16.gmra.mxu0 %v2707
      %v2818 = vpop.f32.mrf.mxu0
      %v2819 = vadd.f32 0.0, %v2818
      %v2820 = vpop.f32.mrf.mxu0
      %v2821 = vpop.f32.mrf.mxu0
      %v2822 = vadd.f32 0.0, %v2821
      %v2823 = vpop.f32.mrf.mxu0
      %2824 = vmatprep.mubr.bf16.mxu0 0
      %2825 = vmatmul.mubr.bf16.gmra.mxu0 %v2710
      %v2826 = vpop.f32.mrf.mxu0
      %v2827 = vadd.f32 0.0, %v2826
      %v2828 = vpop.f32.mrf.mxu0
      %v2829 = vpop.f32.mrf.mxu0
      %v2830 = vadd.f32 0.0, %v2829
      %v2831 = vpop.f32.mrf.mxu0
      %2832 = vmatprep.mubr.bf16.mxu0 0
      %2833 = vmatmul.mubr.bf16.gmra.mxu0 %v2713
      %v2834 = vpop.f32.mrf.mxu0
      %v2835 = vadd.f32 0.0, %v2834
      %v2836 = vpop.f32.mrf.mxu0
      %v2837 = vpop.f32.mrf.mxu0
      %v2838 = vadd.f32 0.0, %v2837
      %v2839 = vpop.f32.mrf.mxu0
      %2840 = vmatprep.mubr.bf16.mxu0 0
      %2841 = vmatmul.mubr.bf16.gmra.mxu0 %v2716
      %v2842 = vpop.f32.mrf.mxu0
      %v2843 = vadd.f32 0.0, %v2842
      %v2844 = vpop.f32.mrf.mxu0
      %v2845 = vpop.f32.mrf.mxu0
      %v2846 = vadd.f32 0.0, %v2845
      %v2847 = vpop.f32.mrf.mxu0
      %2848 = vmatprep.mubr.bf16.mxu0 0
      %2849 = vmatmul.mubr.bf16.gmra.mxu0 %v2719
      %v2850 = vpop.f32.mrf.mxu0
      %v2851 = vadd.f32 0.0, %v2850
      %v2852 = vpop.f32.mrf.mxu0
      %v2853 = vpop.f32.mrf.mxu0
      %v2854 = vadd.f32 0.0, %v2853
      %v2855 = vpop.f32.mrf.mxu0
      %2856 = vmatprep.mubr.bf16.mxu0 0
      %2857 = vmatmul.mubr.bf16.gmra.mxu0 %v2722
      %v2858 = vpop.f32.mrf.mxu0
      %v2859 = vadd.f32 0.0, %v2858
      %v2860 = vpop.f32.mrf.mxu0
      %v2861 = vpop.f32.mrf.mxu0
      %v2862 = vadd.f32 0.0, %v2861
      %v2863 = vpop.f32.mrf.mxu0
      %2864 = vmatprep.mubr.bf16.mxu0 0
      %2865 = vmatmul.mubr.bf16.gmra.mxu0 %v2725
      %v2866 = vpop.f32.mrf.mxu0
      %v2867 = vadd.f32 0.0, %v2866
      %v2868 = vpop.f32.mrf.mxu0
      %v2869 = vpop.f32.mrf.mxu0
      %v2870 = vadd.f32 0.0, %v2869
      %v2871 = vpop.f32.mrf.mxu0
      %2872 = vmatprep.mubr.bf16.mxu0 0
      %2873 = vmatmul.mubr.bf16.gmra.mxu0 %v2728
      %v2874 = vpop.f32.mrf.mxu0
      %v2875 = vadd.f32 0.0, %v2874
      %v2876 = vpop.f32.mrf.mxu0
      %v2877 = vpop.f32.mrf.mxu0
      %v2878 = vadd.f32 0.0, %v2877
      %v2879 = vpop.f32.mrf.mxu0
      %2880 = vmatprep.mubr.bf16.mxu0 0
      %2881 = vmatmul.mubr.bf16.gmra.mxu0 %v2731
      %v2882 = vpop.f32.mrf.mxu0
      %v2883 = vadd.f32 0.0, %v2882
      %v2884 = vpop.f32.mrf.mxu0
      %v2885 = vpop.f32.mrf.mxu0
      %v2886 = vadd.f32 0.0, %v2885
      %v2887 = vpop.f32.mrf.mxu0
      %2888 = vmatprep.mubr.bf16.mxu0 0
      %2889 = vmatmul.mubr.bf16.gmra.mxu0 %v2734
      %v2890 = vpop.f32.mrf.mxu0
      %v2891 = vadd.f32 0.0, %v2890
      %v2892 = vpop.f32.mrf.mxu0
      %v2893 = vpop.f32.mrf.mxu0
      %v2894 = vadd.f32 0.0, %v2893
      %v2895 = vpop.f32.mrf.mxu0
      %2896 = vdwg.mxu0
      %v2897 = vadd.f32 %v2527, %v2771
      %v2898 = vadd.f32 %v2528, %v2774
      %v2899 = vadd.f32 %v2529, %v2779
      %v2900 = vadd.f32 %v2530, %v2782
      %v2901 = vadd.f32 %v2531, %v2787
      %v2902 = vadd.f32 %v2532, %v2790
      %v2903 = vadd.f32 %v2533, %v2795
      %v2904 = vadd.f32 %v2534, %v2798
      %v2905 = vadd.f32 %v2535, %v2803
      %v2906 = vadd.f32 %v2536, %v2806
      %v2907 = vadd.f32 %v2537, %v2811
      %v2908 = vadd.f32 %v2538, %v2814
      %v2909 = vadd.f32 %v2539, %v2819
      %v2910 = vadd.f32 %v2540, %v2822
      %v2911 = vadd.f32 %v2541, %v2827
      %v2912 = vadd.f32 %v2542, %v2830
      %v2913 = vadd.f32 %v2543, %v2835
      %v2914 = vadd.f32 %v2544, %v2838
      %v2915 = vadd.f32 %v2545, %v2843
      %v2916 = vadd.f32 %v2546, %v2846
      %v2917 = vadd.f32 %v2547, %v2851
      %v2918 = vadd.f32 %v2548, %v2854
      %v2919 = vadd.f32 %v2549, %v2859
      %v2920 = vadd.f32 %v2550, %v2862
      %v2921 = vadd.f32 %v2551, %v2867
      %v2922 = vadd.f32 %v2552, %v2870
      %v2923 = vadd.f32 %v2553, %v2875
      %v2924 = vadd.f32 %v2554, %v2878
      %v2925 = vadd.f32 %v2555, %v2883
      %v2926 = vadd.f32 %v2556, %v2886
      %v2927 = vadd.f32 %v2557, %v2891
      %v2928 = vadd.f32 %v2558, %v2894
      %v2929 = vld [vmem:[%s960] sm:$0xf]
      %v2930 = vld [vmem:[%s960 + $0x4] sm:$0xf]
      %v2931 = vld [vmem:[%s960 + $0x8] sm:$0x1]
      %v2932 = vld [vmem:[%s960 + $0xc] sm:$0xf]
      %v2933 = vld [vmem:[%s960 + $0x10] sm:$0xf]
      %v2934 = vld [vmem:[%s960 + $0x14] sm:$0x1]
      %v2935 = vld [vmem:[%s960 + $0x18] sm:$0xf]
      %v2936 = vld [vmem:[%s960 + $0x1c] sm:$0xf]
      %v2937 = vld [vmem:[%s960 + $0x20] sm:$0x1]
      %v2938 = vld [vmem:[%s960 + $0x24] sm:$0xf]
      %v2939 = vld [vmem:[%s960 + $0x28] sm:$0xf]
      %v2940 = vld [vmem:[%s960 + $0x2c] sm:$0x1]
      %v2941 = vld [vmem:[%s960 + $0x30] sm:$0xf]
      %v2942 = vld [vmem:[%s960 + $0x34] sm:$0xf]
      %v2943 = vld [vmem:[%s960 + $0x38] sm:$0x1]
      %v2944 = vld [vmem:[%s960 + $0x3c] sm:$0xf]
      %v2945 = vld [vmem:[%s960 + $0x40] sm:$0xf]
      %v2946 = vld [vmem:[%s960 + $0x44] sm:$0x1]
      %v2947 = vld [vmem:[%s960 + $0x48] sm:$0xf]
      %v2948 = vld [vmem:[%s960 + $0x4c] sm:$0xf]
      %v2949 = vld [vmem:[%s960 + $0x50] sm:$0x1]
      %v2950 = vld [vmem:[%s960 + $0x54] sm:$0xf]
      %v2951 = vld [vmem:[%s960 + $0x58] sm:$0xf]
      %v2952 = vld [vmem:[%s960 + $0x5c] sm:$0x1]
      %v2953 = vld [vmem:[%s960 + $0x60] sm:$0xf]
      %v2954 = vld [vmem:[%s960 + $0x64] sm:$0xf]
      %v2955 = vld [vmem:[%s960 + $0x68] sm:$0x1]
      %v2956 = vld [vmem:[%s960 + $0x6c] sm:$0xf]
      %v2957 = vld [vmem:[%s960 + $0x70] sm:$0xf]
      %v2958 = vld [vmem:[%s960 + $0x74] sm:$0x1]
      %v2959 = vld [vmem:[%s960 + $0x78] sm:$0xf]
      %v2960 = vld [vmem:[%s960 + $0x7c] sm:$0xf]
      %v2961 = vld [vmem:[%s960 + $0x80] sm:$0x1]
      %v2962 = vld [vmem:[%s960 + $0x84] sm:$0xf]
      %v2963 = vld [vmem:[%s960 + $0x88] sm:$0xf]
      %v2964 = vld [vmem:[%s960 + $0x8c] sm:$0x1]
      %v2965 = vld [vmem:[%s960 + $0x90] sm:$0xf]
      %v2966 = vld [vmem:[%s960 + $0x94] sm:$0xf]
      %v2967 = vld [vmem:[%s960 + $0x98] sm:$0x1]
      %v2968 = vld [vmem:[%s960 + $0x9c] sm:$0xf]
      %v2969 = vld [vmem:[%s960 + $0xa0] sm:$0xf]
      %v2970 = vld [vmem:[%s960 + $0xa4] sm:$0x1]
      %v2971 = vld [vmem:[%s960 + $0xa8] sm:$0xf]
      %v2972 = vld [vmem:[%s960 + $0xac] sm:$0xf]
      %v2973 = vld [vmem:[%s960 + $0xb0] sm:$0x1]
      %v2974 = vld [vmem:[%s960 + $0xb4] sm:$0xf]
      %v2975 = vld [vmem:[%s960 + $0xb8] sm:$0xf]
      %v2976 = vld [vmem:[%s960 + $0xbc] sm:$0x1]
      %v2978 = vshrl.u32 %v2929, 16
      %v2980 = vrot.slane %v2978, 4
      %v2981 = vshll.u32 %v2929, 16
      %v2983 = vrot.slane %v2981, 5
      %v2984 = vor.u32 %v2980, %v2983
      %v2985 = vrot.slane %v2984, 4
      %v2987 = vshll.u32 %v2930, 16
      %v2989 = vrot.slane %v2987, 5
      %v2990 = vsel %vm1129, %v2985, %v2989
      %v2991 = vshrl.u32 %v2930, 16
      %v2993 = vrot.slane %v2991, 4
      %v2994 = vor.u32 %v2993, %v2989
      %v2995 = vrot.slane %v2994, 4
      %v2997 = vshll.u32 %v2931, 16
      %v2999 = vrot.slane %v2997, 5
      %v3000 = vsel %vm1129, %v2995, %v2999
      %v3002 = vshrl.u32 %v2932, 16
      %v3004 = vrot.slane %v3002, 4
      %v3005 = vshll.u32 %v2932, 16
      %v3007 = vrot.slane %v3005, 5
      %v3008 = vor.u32 %v3004, %v3007
      %v3009 = vrot.slane %v3008, 4
      %v3011 = vshll.u32 %v2933, 16
      %v3013 = vrot.slane %v3011, 5
      %v3014 = vsel %vm1129, %v3009, %v3013
      %v3015 = vshrl.u32 %v2933, 16
      %v3017 = vrot.slane %v3015, 4
      %v3018 = vor.u32 %v3017, %v3013
      %v3019 = vrot.slane %v3018, 4
      %v3021 = vshll.u32 %v2934, 16
      %v3023 = vrot.slane %v3021, 5
      %v3024 = vsel %vm1129, %v3019, %v3023
      %v3026 = vshrl.u32 %v2935, 16
      %v3028 = vrot.slane %v3026, 4
      %v3029 = vshll.u32 %v2935, 16
      %v3031 = vrot.slane %v3029, 5
      %v3032 = vor.u32 %v3028, %v3031
      %v3033 = vrot.slane %v3032, 4
      %v3035 = vshll.u32 %v2936, 16
      %v3037 = vrot.slane %v3035, 5
      %v3038 = vsel %vm1129, %v3033, %v3037
      %v3039 = vshrl.u32 %v2936, 16
      %v3041 = vrot.slane %v3039, 4
      %v3042 = vor.u32 %v3041, %v3037
      %v3043 = vrot.slane %v3042, 4
      %v3045 = vshll.u32 %v2937, 16
      %v3047 = vrot.slane %v3045, 5
      %v3048 = vsel %vm1129, %v3043, %v3047
      %v3050 = vshrl.u32 %v2938, 16
      %v3052 = vrot.slane %v3050, 4
      %v3053 = vshll.u32 %v2938, 16
      %v3055 = vrot.slane %v3053, 5
      %v3056 = vor.u32 %v3052, %v3055
      %v3057 = vrot.slane %v3056, 4
      %v3059 = vshll.u32 %v2939, 16
      %v3061 = vrot.slane %v3059, 5
      %v3062 = vsel %vm1129, %v3057, %v3061
      %v3063 = vshrl.u32 %v2939, 16
      %v3065 = vrot.slane %v3063, 4
      %v3066 = vor.u32 %v3065, %v3061
      %v3067 = vrot.slane %v3066, 4
      %v3069 = vshll.u32 %v2940, 16
      %v3071 = vrot.slane %v3069, 5
      %v3072 = vsel %vm1129, %v3067, %v3071
      %v3074 = vshrl.u32 %v2941, 16
      %v3076 = vrot.slane %v3074, 4
      %v3077 = vshll.u32 %v2941, 16
      %v3079 = vrot.slane %v3077, 5
      %v3080 = vor.u32 %v3076, %v3079
      %v3081 = vrot.slane %v3080, 4
      %v3083 = vshll.u32 %v2942, 16
      %v3085 = vrot.slane %v3083, 5
      %v3086 = vsel %vm1129, %v3081, %v3085
      %v3087 = vshrl.u32 %v2942, 16
      %v3089 = vrot.slane %v3087, 4
      %v3090 = vor.u32 %v3089, %v3085
      %v3091 = vrot.slane %v3090, 4
      %v3093 = vshll.u32 %v2943, 16
      %v3095 = vrot.slane %v3093, 5
      %v3096 = vsel %vm1129, %v3091, %v3095
      %v3098 = vshrl.u32 %v2944, 16
      %v3100 = vrot.slane %v3098, 4
      %v3101 = vshll.u32 %v2944, 16
      %v3103 = vrot.slane %v3101, 5
      %v3104 = vor.u32 %v3100, %v3103
      %v3105 = vrot.slane %v3104, 4
      %v3107 = vshll.u32 %v2945, 16
      %v3109 = vrot.slane %v3107, 5
      %v3110 = vsel %vm1129, %v3105, %v3109
      %v3111 = vshrl.u32 %v2945, 16
      %v3113 = vrot.slane %v3111, 4
      %v3114 = vor.u32 %v3113, %v3109
      %v3115 = vrot.slane %v3114, 4
      %v3117 = vshll.u32 %v2946, 16
      %v3119 = vrot.slane %v3117, 5
      %v3120 = vsel %vm1129, %v3115, %v3119
      %v3122 = vshrl.u32 %v2947, 16
      %v3124 = vrot.slane %v3122, 4
      %v3125 = vshll.u32 %v2947, 16
      %v3127 = vrot.slane %v3125, 5
      %v3128 = vor.u32 %v3124, %v3127
      %v3129 = vrot.slane %v3128, 4
      %v3131 = vshll.u32 %v2948, 16
      %v3133 = vrot.slane %v3131, 5
      %v3134 = vsel %vm1129, %v3129, %v3133
      %v3135 = vshrl.u32 %v2948, 16
      %v3137 = vrot.slane %v3135, 4
      %v3138 = vor.u32 %v3137, %v3133
      %v3139 = vrot.slane %v3138, 4
      %v3141 = vshll.u32 %v2949, 16
      %v3143 = vrot.slane %v3141, 5
      %v3144 = vsel %vm1129, %v3139, %v3143
      %v3146 = vshrl.u32 %v2950, 16
      %v3148 = vrot.slane %v3146, 4
      %v3149 = vshll.u32 %v2950, 16
      %v3151 = vrot.slane %v3149, 5
      %v3152 = vor.u32 %v3148, %v3151
      %v3153 = vrot.slane %v3152, 4
      %v3155 = vshll.u32 %v2951, 16
      %v3157 = vrot.slane %v3155, 5
      %v3158 = vsel %vm1129, %v3153, %v3157
      %v3159 = vshrl.u32 %v2951, 16
      %v3161 = vrot.slane %v3159, 4
      %v3162 = vor.u32 %v3161, %v3157
      %v3163 = vrot.slane %v3162, 4
      %v3165 = vshll.u32 %v2952, 16
      %v3167 = vrot.slane %v3165, 5
      %v3168 = vsel %vm1129, %v3163, %v3167
      %v3170 = vshrl.u32 %v2953, 16
      %v3172 = vrot.slane %v3170, 4
      %v3173 = vshll.u32 %v2953, 16
      %v3175 = vrot.slane %v3173, 5
      %v3176 = vor.u32 %v3172, %v3175
      %v3177 = vrot.slane %v3176, 4
      %v3179 = vshll.u32 %v2954, 16
      %v3181 = vrot.slane %v3179, 5
      %v3182 = vsel %vm1129, %v3177, %v3181
      %v3183 = vshrl.u32 %v2954, 16
      %v3185 = vrot.slane %v3183, 4
      %v3186 = vor.u32 %v3185, %v3181
      %v3187 = vrot.slane %v3186, 4
      %v3189 = vshll.u32 %v2955, 16
      %v3191 = vrot.slane %v3189, 5
      %v3192 = vsel %vm1129, %v3187, %v3191
      %v3194 = vshrl.u32 %v2956, 16
      %v3196 = vrot.slane %v3194, 4
      %v3197 = vshll.u32 %v2956, 16
      %v3199 = vrot.slane %v3197, 5
      %v3200 = vor.u32 %v3196, %v3199
      %v3201 = vrot.slane %v3200, 4
      %v3203 = vshll.u32 %v2957, 16
      %v3205 = vrot.slane %v3203, 5
      %v3206 = vsel %vm1129, %v3201, %v3205
      %v3207 = vshrl.u32 %v2957, 16
      %v3209 = vrot.slane %v3207, 4
      %v3210 = vor.u32 %v3209, %v3205
      %v3211 = vrot.slane %v3210, 4
      %v3213 = vshll.u32 %v2958, 16
      %v3215 = vrot.slane %v3213, 5
      %v3216 = vsel %vm1129, %v3211, %v3215
      %v3218 = vshrl.u32 %v2959, 16
      %v3220 = vrot.slane %v3218, 4
      %v3221 = vshll.u32 %v2959, 16
      %v3223 = vrot.slane %v3221, 5
      %v3224 = vor.u32 %v3220, %v3223
      %v3225 = vrot.slane %v3224, 4
      %v3227 = vshll.u32 %v2960, 16
      %v3229 = vrot.slane %v3227, 5
      %v3230 = vsel %vm1129, %v3225, %v3229
      %v3231 = vshrl.u32 %v2960, 16
      %v3233 = vrot.slane %v3231, 4
      %v3234 = vor.u32 %v3233, %v3229
      %v3235 = vrot.slane %v3234, 4
      %v3237 = vshll.u32 %v2961, 16
      %v3239 = vrot.slane %v3237, 5
      %v3240 = vsel %vm1129, %v3235, %v3239
      %v3242 = vshrl.u32 %v2962, 16
      %v3244 = vrot.slane %v3242, 4
      %v3245 = vshll.u32 %v2962, 16
      %v3247 = vrot.slane %v3245, 5
      %v3248 = vor.u32 %v3244, %v3247
      %v3249 = vrot.slane %v3248, 4
      %v3251 = vshll.u32 %v2963, 16
      %v3253 = vrot.slane %v3251, 5
      %v3254 = vsel %vm1129, %v3249, %v3253
      %v3255 = vshrl.u32 %v2963, 16
      %v3257 = vrot.slane %v3255, 4
      %v3258 = vor.u32 %v3257, %v3253
      %v3259 = vrot.slane %v3258, 4
      %v3261 = vshll.u32 %v2964, 16
      %v3263 = vrot.slane %v3261, 5
      %v3264 = vsel %vm1129, %v3259, %v3263
      %v3266 = vshrl.u32 %v2965, 16
      %v3268 = vrot.slane %v3266, 4
      %v3269 = vshll.u32 %v2965, 16
      %v3271 = vrot.slane %v3269, 5
      %v3272 = vor.u32 %v3268, %v3271
      %v3273 = vrot.slane %v3272, 4
      %v3275 = vshll.u32 %v2966, 16
      %v3277 = vrot.slane %v3275, 5
      %v3278 = vsel %vm1129, %v3273, %v3277
      %v3279 = vshrl.u32 %v2966, 16
      %v3281 = vrot.slane %v3279, 4
      %v3282 = vor.u32 %v3281, %v3277
      %v3283 = vrot.slane %v3282, 4
      %v3285 = vshll.u32 %v2967, 16
      %v3287 = vrot.slane %v3285, 5
      %v3288 = vsel %vm1129, %v3283, %v3287
      %v3290 = vshrl.u32 %v2968, 16
      %v3292 = vrot.slane %v3290, 4
      %v3293 = vshll.u32 %v2968, 16
      %v3295 = vrot.slane %v3293, 5
      %v3296 = vor.u32 %v3292, %v3295
      %v3297 = vrot.slane %v3296, 4
      %v3299 = vshll.u32 %v2969, 16
      %v3301 = vrot.slane %v3299, 5
      %v3302 = vsel %vm1129, %v3297, %v3301
      %v3303 = vshrl.u32 %v2969, 16
      %v3305 = vrot.slane %v3303, 4
      %v3306 = vor.u32 %v3305, %v3301
      %v3307 = vrot.slane %v3306, 4
      %v3309 = vshll.u32 %v2970, 16
      %v3311 = vrot.slane %v3309, 5
      %v3312 = vsel %vm1129, %v3307, %v3311
      %v3314 = vshrl.u32 %v2971, 16
      %v3316 = vrot.slane %v3314, 4
      %v3317 = vshll.u32 %v2971, 16
      %v3319 = vrot.slane %v3317, 5
      %v3320 = vor.u32 %v3316, %v3319
      %v3321 = vrot.slane %v3320, 4
      %v3323 = vshll.u32 %v2972, 16
      %v3325 = vrot.slane %v3323, 5
      %v3326 = vsel %vm1129, %v3321, %v3325
      %v3327 = vshrl.u32 %v2972, 16
      %v3329 = vrot.slane %v3327, 4
      %v3330 = vor.u32 %v3329, %v3325
      %v3331 = vrot.slane %v3330, 4
      %v3333 = vshll.u32 %v2973, 16
      %v3335 = vrot.slane %v3333, 5
      %v3336 = vsel %vm1129, %v3331, %v3335
      %v3338 = vshrl.u32 %v2974, 16
      %v3340 = vrot.slane %v3338, 4
      %v3341 = vshll.u32 %v2974, 16
      %v3343 = vrot.slane %v3341, 5
      %v3344 = vor.u32 %v3340, %v3343
      %v3345 = vrot.slane %v3344, 4
      %v3347 = vshll.u32 %v2975, 16
      %v3349 = vrot.slane %v3347, 5
      %v3350 = vsel %vm1129, %v3345, %v3349
      %v3351 = vshrl.u32 %v2975, 16
      %v3353 = vrot.slane %v3351, 4
      %v3354 = vor.u32 %v3353, %v3349
      %v3355 = vrot.slane %v3354, 4
      %v3357 = vshll.u32 %v2976, 16
      %v3359 = vrot.slane %v3357, 5
      %v3360 = vsel %vm1129, %v3355, %v3359
      %s3361 = scalar_lea.vmem %s1, 64
      %v3362 = vld [vmem:[%s3361] sm:$0xf]
      %v3363 = vld [vmem:[%s3361 + $0x4] sm:$0xf]
      %v3364 = vld [vmem:[%s3361 + $0x8] sm:$0xf]
      %v3365 = vld [vmem:[%s3361 + $0xc] sm:$0xf]
      %v3366 = vunpack.c.l.b16 %v2990
      %v3367 = vunpack.c.l.b16 %v3000
      %v3368 = vunpack.c.l.b16 %v3014
      %v3369 = vunpack.c.l.b16 %v3024
      %v3370 = vunpack.c.l.b16 %v3038
      %v3371 = vunpack.c.l.b16 %v3048
      %v3372 = vunpack.c.l.b16 %v3062
      %v3373 = vunpack.c.l.b16 %v3072
      %v3374 = vunpack.c.l.b16 %v3086
      %v3375 = vunpack.c.l.b16 %v3096
      %v3376 = vunpack.c.l.b16 %v3110
      %v3377 = vunpack.c.l.b16 %v3120
      %v3378 = vunpack.c.l.b16 %v3134
      %v3379 = vunpack.c.l.b16 %v3144
      %v3380 = vunpack.c.l.b16 %v3158
      %v3381 = vunpack.c.l.b16 %v3168
      %v3382 = vunpack.c.l.b16 %v3182
      %v3383 = vunpack.c.l.b16 %v3192
      %v3384 = vunpack.c.l.b16 %v3206
      %v3385 = vunpack.c.l.b16 %v3216
      %v3386 = vunpack.c.l.b16 %v3230
      %v3387 = vunpack.c.l.b16 %v3240
      %v3388 = vunpack.c.l.b16 %v3254
      %v3389 = vunpack.c.l.b16 %v3264
      %v3390 = vunpack.c.l.b16 %v3278
      %v3391 = vunpack.c.l.b16 %v3288
      %v3392 = vunpack.c.l.b16 %v3302
      %v3393 = vunpack.c.l.b16 %v3312
      %v3394 = vunpack.c.l.b16 %v3326
      %v3395 = vunpack.c.l.b16 %v3336
      %v3396 = vunpack.c.l.b16 %v3350
      %v3397 = vunpack.c.l.b16 %v3360
      %v3398 = vpack.c.b16 %v3367, %v3366
      %v3399 = vpack.c.b16 %v3369, %v3368
      %v3400 = vpack.c.b16 %v3371, %v3370
      %v3401 = vpack.c.b16 %v3373, %v3372
      %v3402 = vpack.c.b16 %v3375, %v3374
      %v3403 = vpack.c.b16 %v3377, %v3376
      %v3404 = vpack.c.b16 %v3379, %v3378
      %v3405 = vpack.c.b16 %v3381, %v3380
      %v3406 = vpack.c.b16 %v3383, %v3382
      %v3407 = vpack.c.b16 %v3385, %v3384
      %v3408 = vpack.c.b16 %v3387, %v3386
      %v3409 = vpack.c.b16 %v3389, %v3388
      %v3410 = vpack.c.b16 %v3391, %v3390
      %v3411 = vpack.c.b16 %v3393, %v3392
      %v3412 = vpack.c.b16 %v3395, %v3394
      %v3413 = vpack.c.b16 %v3397, %v3396
      %v3418 = vunpack.c.l.b16 %v3362
      %v3419 = vunpack.c.l.b16 %v3363
      %v3420 = vunpack.c.l.b16 %v3364
      %v3421 = vunpack.c.l.b16 %v3365
      %v3422 = vpack.c.b16 %v3419, %v3418
      %v3423 = vpack.c.b16 %v3421, %v3420
      %v3427 = vsel %vm1579, %v3398, 0
      %v3430 = vsel %vm1579, %v3399, 0
      %v3433 = vsel %vm1579, %v3400, 0
      %v3436 = vsel %vm1579, %v3401, 0
      %v3439 = vsel %vm1579, %v3402, 0
      %v3442 = vsel %vm1579, %v3403, 0
      %v3445 = vsel %vm1579, %v3404, 0
      %v3448 = vsel %vm1579, %v3405, 0
      %v3451 = vsel %vm1579, %v3406, 0
      %v3454 = vsel %vm1579, %v3407, 0
      %v3457 = vsel %vm1579, %v3408, 0
      %v3460 = vsel %vm1579, %v3409, 0
      %v3463 = vsel %vm1579, %v3410, 0
      %v3466 = vsel %vm1579, %v3411, 0
      %v3469 = vsel %vm1579, %v3412, 0
      %v3472 = vsel %vm1579, %v3413, 0
      %3474 = vmatprep.subr.bf16.mxu0 0
      %3475 = vmatpush1.bf16.msra.mxu0 0
      %3476 = vmatprep.subr.bf16.mxu0 0
      %3477 = vmatpush1.bf16.msra.mxu0 0
      %3478 = vmatprep.subr.bf16.mxu0 0
      %3479 = vmatpush1.bf16.msra.mxu0 0
      %3480 = vmatprep.subr.bf16.mxu0 0
      %3481 = vmatpush1.bf16.msra.mxu0 0
      %3482 = vmatprep.subr.bf16.mxu0 0
      %3483 = vmatpush1.bf16.msra.mxu0 0
      %3484 = vmatprep.subr.bf16.mxu0 0
      %3485 = vmatpush1.bf16.msra.mxu0 0
      %3486 = vmatprep.subr.bf16.mxu0 0
      %3487 = vmatpush1.bf16.msra.mxu0 %v3423
      %3488 = vmatprep.subr.bf16.mxu0 0
      %3489 = vmatpush1.bf16.msra.mxu0 %v3422
      %3490 = vmatprep.subr.bf16.mxu0 0
      %3491 = vmatpush2.bf16.msra.mxu0 0
      %3492 = vmatprep.subr.bf16.mxu0 0
      %3493 = vmatpush2.bf16.msra.mxu0 0
      %3494 = vmatprep.subr.bf16.mxu0 0
      %3495 = vmatpush2.bf16.msra.mxu0 0
      %3496 = vmatprep.subr.bf16.mxu0 0
      %3497 = vmatpush2.bf16.msra.mxu0 0
      %3498 = vmatprep.subr.bf16.mxu0 0
      %3499 = vmatpush2.bf16.msra.mxu0 0
      %3500 = vmatprep.subr.bf16.mxu0 0
      %3501 = vmatpush2.bf16.msra.mxu0 0
      %3502 = vmatprep.subr.bf16.mxu0 0
      %3503 = vmatpush2.bf16.msra.mxu0 0
      %3504 = vmatprep.subr.bf16.mxu0 0
      %3505 = vmatpush2.bf16.msra.mxu0 0
      %3506 = vmatprep.mubr.bf16.mxu0 0
      %3507 = vmatmul.mubr.bf16.gmra.mxu0 %v3427
      %v3508 = vpop.f32.mrf.mxu0
      %v3509 = vadd.f32 0.0, %v3508
      %v3510 = vpop.f32.mrf.mxu0
      %v3511 = vpop.f32.mrf.mxu0
      %v3512 = vadd.f32 0.0, %v3511
      %v3513 = vpop.f32.mrf.mxu0
      %3514 = vmatprep.mubr.bf16.mxu0 0
      %3515 = vmatmul.mubr.bf16.gmra.mxu0 %v3430
      %v3516 = vpop.f32.mrf.mxu0
      %v3517 = vadd.f32 0.0, %v3516
      %v3518 = vpop.f32.mrf.mxu0
      %v3519 = vpop.f32.mrf.mxu0
      %v3520 = vadd.f32 0.0, %v3519
      %v3521 = vpop.f32.mrf.mxu0
      %3522 = vmatprep.mubr.bf16.mxu0 0
      %3523 = vmatmul.mubr.bf16.gmra.mxu0 %v3433
      %v3524 = vpop.f32.mrf.mxu0
      %v3525 = vadd.f32 0.0, %v3524
      %v3526 = vpop.f32.mrf.mxu0
      %v3527 = vpop.f32.mrf.mxu0
      %v3528 = vadd.f32 0.0, %v3527
      %v3529 = vpop.f32.mrf.mxu0
      %3530 = vmatprep.mubr.bf16.mxu0 0
      %3531 = vmatmul.mubr.bf16.gmra.mxu0 %v3436
      %v3532 = vpop.f32.mrf.mxu0
      %v3533 = vadd.f32 0.0, %v3532
      %v3534 = vpop.f32.mrf.mxu0
      %v3535 = vpop.f32.mrf.mxu0
      %v3536 = vadd.f32 0.0, %v3535
      %v3537 = vpop.f32.mrf.mxu0
      %3538 = vmatprep.mubr.bf16.mxu0 0
      %3539 = vmatmul.mubr.bf16.gmra.mxu0 %v3439
      %v3540 = vpop.f32.mrf.mxu0
      %v3541 = vadd.f32 0.0, %v3540
      %v3542 = vpop.f32.mrf.mxu0
      %v3543 = vpop.f32.mrf.mxu0
      %v3544 = vadd.f32 0.0, %v3543
      %v3545 = vpop.f32.mrf.mxu0
      %3546 = vmatprep.mubr.bf16.mxu0 0
      %3547 = vmatmul.mubr.bf16.gmra.mxu0 %v3442
      %v3548 = vpop.f32.mrf.mxu0
      %v3549 = vadd.f32 0.0, %v3548
      %v3550 = vpop.f32.mrf.mxu0
      %v3551 = vpop.f32.mrf.mxu0
      %v3552 = vadd.f32 0.0, %v3551
      %v3553 = vpop.f32.mrf.mxu0
      %3554 = vmatprep.mubr.bf16.mxu0 0
      %3555 = vmatmul.mubr.bf16.gmra.mxu0 %v3445
      %v3556 = vpop.f32.mrf.mxu0
      %v3557 = vadd.f32 0.0, %v3556
      %v3558 = vpop.f32.mrf.mxu0
      %v3559 = vpop.f32.mrf.mxu0
      %v3560 = vadd.f32 0.0, %v3559
      %v3561 = vpop.f32.mrf.mxu0
      %3562 = vmatprep.mubr.bf16.mxu0 0
      %3563 = vmatmul.mubr.bf16.gmra.mxu0 %v3448
      %v3564 = vpop.f32.mrf.mxu0
      %v3565 = vadd.f32 0.0, %v3564
      %v3566 = vpop.f32.mrf.mxu0
      %v3567 = vpop.f32.mrf.mxu0
      %v3568 = vadd.f32 0.0, %v3567
      %v3569 = vpop.f32.mrf.mxu0
      %3570 = vmatprep.mubr.bf16.mxu0 0
      %3571 = vmatmul.mubr.bf16.gmra.mxu0 %v3451
      %v3572 = vpop.f32.mrf.mxu0
      %v3573 = vadd.f32 0.0, %v3572
      %v3574 = vpop.f32.mrf.mxu0
      %v3575 = vpop.f32.mrf.mxu0
      %v3576 = vadd.f32 0.0, %v3575
      %v3577 = vpop.f32.mrf.mxu0
      %3578 = vmatprep.mubr.bf16.mxu0 0
      %3579 = vmatmul.mubr.bf16.gmra.mxu0 %v3454
      %v3580 = vpop.f32.mrf.mxu0
      %v3581 = vadd.f32 0.0, %v3580
      %v3582 = vpop.f32.mrf.mxu0
      %v3583 = vpop.f32.mrf.mxu0
      %v3584 = vadd.f32 0.0, %v3583
      %v3585 = vpop.f32.mrf.mxu0
      %3586 = vmatprep.mubr.bf16.mxu0 0
      %3587 = vmatmul.mubr.bf16.gmra.mxu0 %v3457
      %v3588 = vpop.f32.mrf.mxu0
      %v3589 = vadd.f32 0.0, %v3588
      %v3590 = vpop.f32.mrf.mxu0
      %v3591 = vpop.f32.mrf.mxu0
      %v3592 = vadd.f32 0.0, %v3591
      %v3593 = vpop.f32.mrf.mxu0
      %3594 = vmatprep.mubr.bf16.mxu0 0
      %3595 = vmatmul.mubr.bf16.gmra.mxu0 %v3460
      %v3596 = vpop.f32.mrf.mxu0
      %v3597 = vadd.f32 0.0, %v3596
      %v3598 = vpop.f32.mrf.mxu0
      %v3599 = vpop.f32.mrf.mxu0
      %v3600 = vadd.f32 0.0, %v3599
      %v3601 = vpop.f32.mrf.mxu0
      %3602 = vmatprep.mubr.bf16.mxu0 0
      %3603 = vmatmul.mubr.bf16.gmra.mxu0 %v3463
      %v3604 = vpop.f32.mrf.mxu0
      %v3605 = vadd.f32 0.0, %v3604
      %v3606 = vpop.f32.mrf.mxu0
      %v3607 = vpop.f32.mrf.mxu0
      %v3608 = vadd.f32 0.0, %v3607
      %v3609 = vpop.f32.mrf.mxu0
      %3610 = vmatprep.mubr.bf16.mxu0 0
      %3611 = vmatmul.mubr.bf16.gmra.mxu0 %v3466
      %v3612 = vpop.f32.mrf.mxu0
      %v3613 = vadd.f32 0.0, %v3612
      %v3614 = vpop.f32.mrf.mxu0
      %v3615 = vpop.f32.mrf.mxu0
      %v3616 = vadd.f32 0.0, %v3615
      %v3617 = vpop.f32.mrf.mxu0
      %3618 = vmatprep.mubr.bf16.mxu0 0
      %3619 = vmatmul.mubr.bf16.gmra.mxu0 %v3469
      %v3620 = vpop.f32.mrf.mxu0
      %v3621 = vadd.f32 0.0, %v3620
      %v3622 = vpop.f32.mrf.mxu0
      %v3623 = vpop.f32.mrf.mxu0
      %v3624 = vadd.f32 0.0, %v3623
      %v3625 = vpop.f32.mrf.mxu0
      %3626 = vmatprep.mubr.bf16.mxu0 0
      %3627 = vmatmul.mubr.bf16.gmra.mxu0 %v3472
      %v3628 = vpop.f32.mrf.mxu0
      %v3629 = vadd.f32 0.0, %v3628
      %v3630 = vpop.f32.mrf.mxu0
      %v3631 = vpop.f32.mrf.mxu0
      %v3632 = vadd.f32 0.0, %v3631
      %v3633 = vpop.f32.mrf.mxu0
      %3634 = vdwg.mxu0
      %v3635 = vadd.f32 %v2897, %v3509
      %v3636 = vadd.f32 %v2898, %v3512
      %v3637 = vadd.f32 %v2899, %v3517
      %v3638 = vadd.f32 %v2900, %v3520
      %v3639 = vadd.f32 %v2901, %v3525
      %v3640 = vadd.f32 %v2902, %v3528
      %v3641 = vadd.f32 %v2903, %v3533
      %v3642 = vadd.f32 %v2904, %v3536
      %v3643 = vadd.f32 %v2905, %v3541
      %v3644 = vadd.f32 %v2906, %v3544
      %v3645 = vadd.f32 %v2907, %v3549
      %v3646 = vadd.f32 %v2908, %v3552
      %v3647 = vadd.f32 %v2909, %v3557
      %v3648 = vadd.f32 %v2910, %v3560
      %v3649 = vadd.f32 %v2911, %v3565
      %v3650 = vadd.f32 %v2912, %v3568
      %v3651 = vadd.f32 %v2913, %v3573
      %v3652 = vadd.f32 %v2914, %v3576
      %v3653 = vadd.f32 %v2915, %v3581
      %v3654 = vadd.f32 %v2916, %v3584
      %v3655 = vadd.f32 %v2917, %v3589
      %v3656 = vadd.f32 %v2918, %v3592
      %v3657 = vadd.f32 %v2919, %v3597
      %v3658 = vadd.f32 %v2920, %v3600
      %v3659 = vadd.f32 %v2921, %v3605
      %v3660 = vadd.f32 %v2922, %v3608
      %v3661 = vadd.f32 %v2923, %v3613
      %v3662 = vadd.f32 %v2924, %v3616
      %v3663 = vadd.f32 %v2925, %v3621
      %v3664 = vadd.f32 %v2926, %v3624
      %v3665 = vadd.f32 %v2927, %v3629
      %v3666 = vadd.f32 %v2928, %v3632
      %v3667 = vld [vmem:[%s960] sm:$0xe]
      %v3668 = vld [vmem:[%s960 + $0xc] sm:$0xe]
      %v3669 = vld [vmem:[%s960 + $0x18] sm:$0xe]
      %v3670 = vld [vmem:[%s960 + $0x24] sm:$0xe]
      %v3671 = vld [vmem:[%s960 + $0x30] sm:$0xe]
      %v3672 = vld [vmem:[%s960 + $0x3c] sm:$0xe]
      %v3673 = vld [vmem:[%s960 + $0x48] sm:$0xe]
      %v3674 = vld [vmem:[%s960 + $0x54] sm:$0xe]
      %v3675 = vld [vmem:[%s960 + $0x60] sm:$0xe]
      %v3676 = vld [vmem:[%s960 + $0x6c] sm:$0xe]
      %v3677 = vld [vmem:[%s960 + $0x78] sm:$0xe]
      %v3678 = vld [vmem:[%s960 + $0x84] sm:$0xe]
      %v3679 = vld [vmem:[%s960 + $0x90] sm:$0xe]
      %v3680 = vld [vmem:[%s960 + $0x9c] sm:$0xe]
      %v3681 = vld [vmem:[%s960 + $0xa8] sm:$0xe]
      %v3682 = vld [vmem:[%s960 + $0xb4] sm:$0xe]
      %v3731 = vrot.slane %v3667, 5
      %v3732 = vrot.slane %v3731, 4
      %v3733 = vrot.slane %v2930, 5
      %v3734 = vsel %vm2140, %v3732, %v3733
      %v3735 = vrot.slane %v3733, 4
      %v3736 = vrot.slane %v2931, 5
      %v3737 = vsel %vm2140, %v3735, %v3736
      %v3738 = vrot.slane %v3668, 5
      %v3739 = vrot.slane %v3738, 4
      %v3740 = vrot.slane %v2933, 5
      %v3741 = vsel %vm2140, %v3739, %v3740
      %v3742 = vrot.slane %v3740, 4
      %v3743 = vrot.slane %v2934, 5
      %v3744 = vsel %vm2140, %v3742, %v3743
      %v3745 = vrot.slane %v3669, 5
      %v3746 = vrot.slane %v3745, 4
      %v3747 = vrot.slane %v2936, 5
      %v3748 = vsel %vm2140, %v3746, %v3747
      %v3749 = vrot.slane %v3747, 4
      %v3750 = vrot.slane %v2937, 5
      %v3751 = vsel %vm2140, %v3749, %v3750
      %v3752 = vrot.slane %v3670, 5
      %v3753 = vrot.slane %v3752, 4
      %v3754 = vrot.slane %v2939, 5
      %v3755 = vsel %vm2140, %v3753, %v3754
      %v3756 = vrot.slane %v3754, 4
      %v3757 = vrot.slane %v2940, 5
      %v3758 = vsel %vm2140, %v3756, %v3757
      %v3759 = vrot.slane %v3671, 5
      %v3760 = vrot.slane %v3759, 4
      %v3761 = vrot.slane %v2942, 5
      %v3762 = vsel %vm2140, %v3760, %v3761
      %v3763 = vrot.slane %v3761, 4
      %v3764 = vrot.slane %v2943, 5
      %v3765 = vsel %vm2140, %v3763, %v3764
      %v3766 = vrot.slane %v3672, 5
      %v3767 = vrot.slane %v3766, 4
      %v3768 = vrot.slane %v2945, 5
      %v3769 = vsel %vm2140, %v3767, %v3768
      %v3770 = vrot.slane %v3768, 4
      %v3771 = vrot.slane %v2946, 5
      %v3772 = vsel %vm2140, %v3770, %v3771
      %v3773 = vrot.slane %v3673, 5
      %v3774 = vrot.slane %v3773, 4
      %v3775 = vrot.slane %v2948, 5
      %v3776 = vsel %vm2140, %v3774, %v3775
      %v3777 = vrot.slane %v3775, 4
      %v3778 = vrot.slane %v2949, 5
      %v3779 = vsel %vm2140, %v3777, %v3778
      %v3780 = vrot.slane %v3674, 5
      %v3781 = vrot.slane %v3780, 4
      %v3782 = vrot.slane %v2951, 5
      %v3783 = vsel %vm2140, %v3781, %v3782
      %v3784 = vrot.slane %v3782, 4
      %v3785 = vrot.slane %v2952, 5
      %v3786 = vsel %vm2140, %v3784, %v3785
      %v3787 = vrot.slane %v3675, 5
      %v3788 = vrot.slane %v3787, 4
      %v3789 = vrot.slane %v2954, 5
      %v3790 = vsel %vm2140, %v3788, %v3789
      %v3791 = vrot.slane %v3789, 4
      %v3792 = vrot.slane %v2955, 5
      %v3793 = vsel %vm2140, %v3791, %v3792
      %v3794 = vrot.slane %v3676, 5
      %v3795 = vrot.slane %v3794, 4
      %v3796 = vrot.slane %v2957, 5
      %v3797 = vsel %vm2140, %v3795, %v3796
      %v3798 = vrot.slane %v3796, 4
      %v3799 = vrot.slane %v2958, 5
      %v3800 = vsel %vm2140, %v3798, %v3799
      %v3801 = vrot.slane %v3677, 5
      %v3802 = vrot.slane %v3801, 4
      %v3803 = vrot.slane %v2960, 5
      %v3804 = vsel %vm2140, %v3802, %v3803
      %v3805 = vrot.slane %v3803, 4
      %v3806 = vrot.slane %v2961, 5
      %v3807 = vsel %vm2140, %v3805, %v3806
      %v3808 = vrot.slane %v3678, 5
      %v3809 = vrot.slane %v3808, 4
      %v3810 = vrot.slane %v2963, 5
      %v3811 = vsel %vm2140, %v3809, %v3810
      %v3812 = vrot.slane %v3810, 4
      %v3813 = vrot.slane %v2964, 5
      %v3814 = vsel %vm2140, %v3812, %v3813
      %v3815 = vrot.slane %v3679, 5
      %v3816 = vrot.slane %v3815, 4
      %v3817 = vrot.slane %v2966, 5
      %v3818 = vsel %vm2140, %v3816, %v3817
      %v3819 = vrot.slane %v3817, 4
      %v3820 = vrot.slane %v2967, 5
      %v3821 = vsel %vm2140, %v3819, %v3820
      %v3822 = vrot.slane %v3680, 5
      %v3823 = vrot.slane %v3822, 4
      %v3824 = vrot.slane %v2969, 5
      %v3825 = vsel %vm2140, %v3823, %v3824
      %v3826 = vrot.slane %v3824, 4
      %v3827 = vrot.slane %v2970, 5
      %v3828 = vsel %vm2140, %v3826, %v3827
      %v3829 = vrot.slane %v3681, 5
      %v3830 = vrot.slane %v3829, 4
      %v3831 = vrot.slane %v2972, 5
      %v3832 = vsel %vm2140, %v3830, %v3831
      %v3833 = vrot.slane %v3831, 4
      %v3834 = vrot.slane %v2973, 5
      %v3835 = vsel %vm2140, %v3833, %v3834
      %v3836 = vrot.slane %v3682, 5
      %v3837 = vrot.slane %v3836, 4
      %v3838 = vrot.slane %v2975, 5
      %v3839 = vsel %vm2140, %v3837, %v3838
      %v3840 = vrot.slane %v3838, 4
      %v3841 = vrot.slane %v2976, 5
      %v3842 = vsel %vm2140, %v3840, %v3841
      %s3843 = scalar_lea.vmem %s1, 80
      %v3844 = vld [vmem:[%s3843] sm:$0xf]
      %v3845 = vld [vmem:[%s3843 + $0x4] sm:$0xf]
      %v3846 = vld [vmem:[%s3843 + $0x8] sm:$0xf]
      %v3847 = vld [vmem:[%s3843 + $0xc] sm:$0xf]
      %v3848 = vunpack.c.l.b16 %v3734
      %v3849 = vunpack.c.l.b16 %v3737
      %v3850 = vunpack.c.l.b16 %v3741
      %v3851 = vunpack.c.l.b16 %v3744
      %v3852 = vunpack.c.l.b16 %v3748
      %v3853 = vunpack.c.l.b16 %v3751
      %v3854 = vunpack.c.l.b16 %v3755
      %v3855 = vunpack.c.l.b16 %v3758
      %v3856 = vunpack.c.l.b16 %v3762
      %v3857 = vunpack.c.l.b16 %v3765
      %v3858 = vunpack.c.l.b16 %v3769
      %v3859 = vunpack.c.l.b16 %v3772
      %v3860 = vunpack.c.l.b16 %v3776
      %v3861 = vunpack.c.l.b16 %v3779
      %v3862 = vunpack.c.l.b16 %v3783
      %v3863 = vunpack.c.l.b16 %v3786
      %v3864 = vunpack.c.l.b16 %v3790
      %v3865 = vunpack.c.l.b16 %v3793
      %v3866 = vunpack.c.l.b16 %v3797
      %v3867 = vunpack.c.l.b16 %v3800
      %v3868 = vunpack.c.l.b16 %v3804
      %v3869 = vunpack.c.l.b16 %v3807
      %v3870 = vunpack.c.l.b16 %v3811
      %v3871 = vunpack.c.l.b16 %v3814
      %v3872 = vunpack.c.l.b16 %v3818
      %v3873 = vunpack.c.l.b16 %v3821
      %v3874 = vunpack.c.l.b16 %v3825
      %v3875 = vunpack.c.l.b16 %v3828
      %v3876 = vunpack.c.l.b16 %v3832
      %v3877 = vunpack.c.l.b16 %v3835
      %v3878 = vunpack.c.l.b16 %v3839
      %v3879 = vunpack.c.l.b16 %v3842
      %v3880 = vpack.c.b16 %v3849, %v3848
      %v3881 = vpack.c.b16 %v3851, %v3850
      %v3882 = vpack.c.b16 %v3853, %v3852
      %v3883 = vpack.c.b16 %v3855, %v3854
      %v3884 = vpack.c.b16 %v3857, %v3856
      %v3885 = vpack.c.b16 %v3859, %v3858
      %v3886 = vpack.c.b16 %v3861, %v3860
      %v3887 = vpack.c.b16 %v3863, %v3862
      %v3888 = vpack.c.b16 %v3865, %v3864
      %v3889 = vpack.c.b16 %v3867, %v3866
      %v3890 = vpack.c.b16 %v3869, %v3868
      %v3891 = vpack.c.b16 %v3871, %v3870
      %v3892 = vpack.c.b16 %v3873, %v3872
      %v3893 = vpack.c.b16 %v3875, %v3874
      %v3894 = vpack.c.b16 %v3877, %v3876
      %v3895 = vpack.c.b16 %v3879, %v3878
      %v3900 = vunpack.c.l.b16 %v3844
      %v3901 = vunpack.c.l.b16 %v3845
      %v3902 = vunpack.c.l.b16 %v3846
      %v3903 = vunpack.c.l.b16 %v3847
      %v3904 = vpack.c.b16 %v3901, %v3900
      %v3905 = vpack.c.b16 %v3903, %v3902
      %v3909 = vsel %vm1579, %v3880, 0
      %v3912 = vsel %vm1579, %v3881, 0
      %v3915 = vsel %vm1579, %v3882, 0
      %v3918 = vsel %vm1579, %v3883, 0
      %v3921 = vsel %vm1579, %v3884, 0
      %v3924 = vsel %vm1579, %v3885, 0
      %v3927 = vsel %vm1579, %v3886, 0
      %v3930 = vsel %vm1579, %v3887, 0
      %v3933 = vsel %vm1579, %v3888, 0
      %v3936 = vsel %vm1579, %v3889, 0
      %v3939 = vsel %vm1579, %v3890, 0
      %v3942 = vsel %vm1579, %v3891, 0
      %v3945 = vsel %vm1579, %v3892, 0
      %v3948 = vsel %vm1579, %v3893, 0
      %v3951 = vsel %vm1579, %v3894, 0
      %v3954 = vsel %vm1579, %v3895, 0
      %3956 = vmatprep.subr.bf16.mxu0 0
      %3957 = vmatpush1.bf16.msra.mxu0 0
      %3958 = vmatprep.subr.bf16.mxu0 0
      %3959 = vmatpush1.bf16.msra.mxu0 0
      %3960 = vmatprep.subr.bf16.mxu0 0
      %3961 = vmatpush1.bf16.msra.mxu0 0
      %3962 = vmatprep.subr.bf16.mxu0 0
      %3963 = vmatpush1.bf16.msra.mxu0 0
      %3964 = vmatprep.subr.bf16.mxu0 0
      %3965 = vmatpush1.bf16.msra.mxu0 0
      %3966 = vmatprep.subr.bf16.mxu0 0
      %3967 = vmatpush1.bf16.msra.mxu0 0
      %3968 = vmatprep.subr.bf16.mxu0 0
      %3969 = vmatpush1.bf16.msra.mxu0 %v3905
      %3970 = vmatprep.subr.bf16.mxu0 0
      %3971 = vmatpush1.bf16.msra.mxu0 %v3904
      %3972 = vmatprep.subr.bf16.mxu0 0
      %3973 = vmatpush2.bf16.msra.mxu0 0
      %3974 = vmatprep.subr.bf16.mxu0 0
      %3975 = vmatpush2.bf16.msra.mxu0 0
      %3976 = vmatprep.subr.bf16.mxu0 0
      %3977 = vmatpush2.bf16.msra.mxu0 0
      %3978 = vmatprep.subr.bf16.mxu0 0
      %3979 = vmatpush2.bf16.msra.mxu0 0
      %3980 = vmatprep.subr.bf16.mxu0 0
      %3981 = vmatpush2.bf16.msra.mxu0 0
      %3982 = vmatprep.subr.bf16.mxu0 0
      %3983 = vmatpush2.bf16.msra.mxu0 0
      %3984 = vmatprep.subr.bf16.mxu0 0
      %3985 = vmatpush2.bf16.msra.mxu0 0
      %3986 = vmatprep.subr.bf16.mxu0 0
      %3987 = vmatpush2.bf16.msra.mxu0 0
      %3988 = vmatprep.mubr.bf16.mxu0 0
      %3989 = vmatmul.mubr.bf16.gmra.mxu0 %v3909
      %v3990 = vpop.f32.mrf.mxu0
      %v3991 = vadd.f32 0.0, %v3990
      %v3992 = vpop.f32.mrf.mxu0
      %v3993 = vpop.f32.mrf.mxu0
      %v3994 = vadd.f32 0.0, %v3993
      %v3995 = vpop.f32.mrf.mxu0
      %3996 = vmatprep.mubr.bf16.mxu0 0
      %3997 = vmatmul.mubr.bf16.gmra.mxu0 %v3912
      %v3998 = vpop.f32.mrf.mxu0
      %v3999 = vadd.f32 0.0, %v3998
      %v4000 = vpop.f32.mrf.mxu0
      %v4001 = vpop.f32.mrf.mxu0
      %v4002 = vadd.f32 0.0, %v4001
      %v4003 = vpop.f32.mrf.mxu0
      %4004 = vmatprep.mubr.bf16.mxu0 0
      %4005 = vmatmul.mubr.bf16.gmra.mxu0 %v3915
      %v4006 = vpop.f32.mrf.mxu0
      %v4007 = vadd.f32 0.0, %v4006
      %v4008 = vpop.f32.mrf.mxu0
      %v4009 = vpop.f32.mrf.mxu0
      %v4010 = vadd.f32 0.0, %v4009
      %v4011 = vpop.f32.mrf.mxu0
      %4012 = vmatprep.mubr.bf16.mxu0 0
      %4013 = vmatmul.mubr.bf16.gmra.mxu0 %v3918
      %v4014 = vpop.f32.mrf.mxu0
      %v4015 = vadd.f32 0.0, %v4014
      %v4016 = vpop.f32.mrf.mxu0
      %v4017 = vpop.f32.mrf.mxu0
      %v4018 = vadd.f32 0.0, %v4017
      %v4019 = vpop.f32.mrf.mxu0
      %4020 = vmatprep.mubr.bf16.mxu0 0
      %4021 = vmatmul.mubr.bf16.gmra.mxu0 %v3921
      %v4022 = vpop.f32.mrf.mxu0
      %v4023 = vadd.f32 0.0, %v4022
      %v4024 = vpop.f32.mrf.mxu0
      %v4025 = vpop.f32.mrf.mxu0
      %v4026 = vadd.f32 0.0, %v4025
      %v4027 = vpop.f32.mrf.mxu0
      %4028 = vmatprep.mubr.bf16.mxu0 0
      %4029 = vmatmul.mubr.bf16.gmra.mxu0 %v3924
      %v4030 = vpop.f32.mrf.mxu0
      %v4031 = vadd.f32 0.0, %v4030
      %v4032 = vpop.f32.mrf.mxu0
      %v4033 = vpop.f32.mrf.mxu0
      %v4034 = vadd.f32 0.0, %v4033
      %v4035 = vpop.f32.mrf.mxu0
      %4036 = vmatprep.mubr.bf16.mxu0 0
      %4037 = vmatmul.mubr.bf16.gmra.mxu0 %v3927
      %v4038 = vpop.f32.mrf.mxu0
      %v4039 = vadd.f32 0.0, %v4038
      %v4040 = vpop.f32.mrf.mxu0
      %v4041 = vpop.f32.mrf.mxu0
      %v4042 = vadd.f32 0.0, %v4041
      %v4043 = vpop.f32.mrf.mxu0
      %4044 = vmatprep.mubr.bf16.mxu0 0
      %4045 = vmatmul.mubr.bf16.gmra.mxu0 %v3930
      %v4046 = vpop.f32.mrf.mxu0
      %v4047 = vadd.f32 0.0, %v4046
      %v4048 = vpop.f32.mrf.mxu0
      %v4049 = vpop.f32.mrf.mxu0
      %v4050 = vadd.f32 0.0, %v4049
      %v4051 = vpop.f32.mrf.mxu0
      %4052 = vmatprep.mubr.bf16.mxu0 0
      %4053 = vmatmul.mubr.bf16.gmra.mxu0 %v3933
      %v4054 = vpop.f32.mrf.mxu0
      %v4055 = vadd.f32 0.0, %v4054
      %v4056 = vpop.f32.mrf.mxu0
      %v4057 = vpop.f32.mrf.mxu0
      %v4058 = vadd.f32 0.0, %v4057
      %v4059 = vpop.f32.mrf.mxu0
      %4060 = vmatprep.mubr.bf16.mxu0 0
      %4061 = vmatmul.mubr.bf16.gmra.mxu0 %v3936
      %v4062 = vpop.f32.mrf.mxu0
      %v4063 = vadd.f32 0.0, %v4062
      %v4064 = vpop.f32.mrf.mxu0
      %v4065 = vpop.f32.mrf.mxu0
      %v4066 = vadd.f32 0.0, %v4065
      %v4067 = vpop.f32.mrf.mxu0
      %4068 = vmatprep.mubr.bf16.mxu0 0
      %4069 = vmatmul.mubr.bf16.gmra.mxu0 %v3939
      %v4070 = vpop.f32.mrf.mxu0
      %v4071 = vadd.f32 0.0, %v4070
      %v4072 = vpop.f32.mrf.mxu0
      %v4073 = vpop.f32.mrf.mxu0
      %v4074 = vadd.f32 0.0, %v4073
      %v4075 = vpop.f32.mrf.mxu0
      %4076 = vmatprep.mubr.bf16.mxu0 0
      %4077 = vmatmul.mubr.bf16.gmra.mxu0 %v3942
      %v4078 = vpop.f32.mrf.mxu0
      %v4079 = vadd.f32 0.0, %v4078
      %v4080 = vpop.f32.mrf.mxu0
      %v4081 = vpop.f32.mrf.mxu0
      %v4082 = vadd.f32 0.0, %v4081
      %v4083 = vpop.f32.mrf.mxu0
      %4084 = vmatprep.mubr.bf16.mxu0 0
      %4085 = vmatmul.mubr.bf16.gmra.mxu0 %v3945
      %v4086 = vpop.f32.mrf.mxu0
      %v4087 = vadd.f32 0.0, %v4086
      %v4088 = vpop.f32.mrf.mxu0
      %v4089 = vpop.f32.mrf.mxu0
      %v4090 = vadd.f32 0.0, %v4089
      %v4091 = vpop.f32.mrf.mxu0
      %4092 = vmatprep.mubr.bf16.mxu0 0
      %4093 = vmatmul.mubr.bf16.gmra.mxu0 %v3948
      %v4094 = vpop.f32.mrf.mxu0
      %v4095 = vadd.f32 0.0, %v4094
      %v4096 = vpop.f32.mrf.mxu0
      %v4097 = vpop.f32.mrf.mxu0
      %v4098 = vadd.f32 0.0, %v4097
      %v4099 = vpop.f32.mrf.mxu0
      %4100 = vmatprep.mubr.bf16.mxu0 0
      %4101 = vmatmul.mubr.bf16.gmra.mxu0 %v3951
      %v4102 = vpop.f32.mrf.mxu0
      %v4103 = vadd.f32 0.0, %v4102
      %v4104 = vpop.f32.mrf.mxu0
      %v4105 = vpop.f32.mrf.mxu0
      %v4106 = vadd.f32 0.0, %v4105
      %v4107 = vpop.f32.mrf.mxu0
      %4108 = vmatprep.mubr.bf16.mxu0 0
      %4109 = vmatmul.mubr.bf16.gmra.mxu0 %v3954
      %v4110 = vpop.f32.mrf.mxu0
      %v4111 = vadd.f32 0.0, %v4110
      %v4112 = vpop.f32.mrf.mxu0
      %v4113 = vpop.f32.mrf.mxu0
      %v4114 = vadd.f32 0.0, %v4113
      %v4115 = vpop.f32.mrf.mxu0
      %4116 = vdwg.mxu0
      %v4117 = vadd.f32 %v3635, %v3991
      %v4118 = vadd.f32 %v3636, %v3994
      %v4119 = vadd.f32 %v3637, %v3999
      %v4120 = vadd.f32 %v3638, %v4002
      %v4121 = vadd.f32 %v3639, %v4007
      %v4122 = vadd.f32 %v3640, %v4010
      %v4123 = vadd.f32 %v3641, %v4015
      %v4124 = vadd.f32 %v3642, %v4018
      %v4125 = vadd.f32 %v3643, %v4023
      %v4126 = vadd.f32 %v3644, %v4026
      %v4127 = vadd.f32 %v3645, %v4031
      %v4128 = vadd.f32 %v3646, %v4034
      %v4129 = vadd.f32 %v3647, %v4039
      %v4130 = vadd.f32 %v3648, %v4042
      %v4131 = vadd.f32 %v3649, %v4047
      %v4132 = vadd.f32 %v3650, %v4050
      %v4133 = vadd.f32 %v3651, %v4055
      %v4134 = vadd.f32 %v3652, %v4058
      %v4135 = vadd.f32 %v3653, %v4063
      %v4136 = vadd.f32 %v3654, %v4066
      %v4137 = vadd.f32 %v3655, %v4071
      %v4138 = vadd.f32 %v3656, %v4074
      %v4139 = vadd.f32 %v3657, %v4079
      %v4140 = vadd.f32 %v3658, %v4082
      %v4141 = vadd.f32 %v3659, %v4087
      %v4142 = vadd.f32 %v3660, %v4090
      %v4143 = vadd.f32 %v3661, %v4095
      %v4144 = vadd.f32 %v3662, %v4098
      %v4145 = vadd.f32 %v3663, %v4103
      %v4146 = vadd.f32 %v3664, %v4106
      %v4147 = vadd.f32 %v3665, %v4111
      %v4148 = vadd.f32 %v3666, %v4114
      %s4149 = scalar_lea.vmem [#allocation2], 24
      %v4150 = vld [vmem:[%s4149] sm:$0xf]
      %v4151 = vld [vmem:[%s4149 + $0x4] sm:$0xf]
      %v4152 = vld [vmem:[%s4149 + $0xc] sm:$0xf]
      %v4153 = vld [vmem:[%s4149 + $0x10] sm:$0xf]
      %v4154 = vld [vmem:[%s4149 + $0x18] sm:$0xf]
      %v4155 = vld [vmem:[%s4149 + $0x1c] sm:$0xf]
      %v4156 = vld [vmem:[%s4149 + $0x24] sm:$0xf]
      %v4157 = vld [vmem:[%s4149 + $0x28] sm:$0xf]
      %v4158 = vld [vmem:[%s4149 + $0x30] sm:$0xf]
      %v4159 = vld [vmem:[%s4149 + $0x34] sm:$0xf]
      %v4160 = vld [vmem:[%s4149 + $0x3c] sm:$0xf]
      %v4161 = vld [vmem:[%s4149 + $0x40] sm:$0xf]
      %v4162 = vld [vmem:[%s4149 + $0x48] sm:$0xf]
      %v4163 = vld [vmem:[%s4149 + $0x4c] sm:$0xf]
      %v4164 = vld [vmem:[%s4149 + $0x54] sm:$0xf]
      %v4165 = vld [vmem:[%s4149 + $0x58] sm:$0xf]
      %v4166 = vld [vmem:[%s4149 + $0x60] sm:$0xf]
      %v4167 = vld [vmem:[%s4149 + $0x64] sm:$0xf]
      %v4168 = vld [vmem:[%s4149 + $0x6c] sm:$0xf]
      %v4169 = vld [vmem:[%s4149 + $0x70] sm:$0xf]
      %v4170 = vld [vmem:[%s4149 + $0x78] sm:$0xf]
      %v4171 = vld [vmem:[%s4149 + $0x7c] sm:$0xf]
      %v4172 = vld [vmem:[%s4149 + $0x84] sm:$0xf]
      %v4173 = vld [vmem:[%s4149 + $0x88] sm:$0xf]
      %v4174 = vld [vmem:[%s4149 + $0x90] sm:$0xf]
      %v4175 = vld [vmem:[%s4149 + $0x94] sm:$0xf]
      %v4176 = vld [vmem:[%s4149 + $0x9c] sm:$0xf]
      %v4177 = vld [vmem:[%s4149 + $0xa0] sm:$0xf]
      %v4178 = vld [vmem:[%s4149 + $0xa8] sm:$0xf]
      %v4179 = vld [vmem:[%s4149 + $0xac] sm:$0xf]
      %v4180 = vld [vmem:[%s4149 + $0xb4] sm:$0xf]
      %v4181 = vld [vmem:[%s4149 + $0xb8] sm:$0xf]
      %s4182 = scalar_lea.vmem %s1, 96
      %v4183 = vld [vmem:[%s4182] sm:$0xf]
      %v4184 = vld [vmem:[%s4182 + $0x4] sm:$0xf]
      %v4185 = vld [vmem:[%s4182 + $0x8] sm:$0xf]
      %v4186 = vld [vmem:[%s4182 + $0xc] sm:$0xf]
      %v4219 = vunpack.c.l.b16 %v4150
      %v4220 = vunpack.c.l.b16 %v4151
      %v4221 = vunpack.c.l.b16 %v4152
      %v4222 = vunpack.c.l.b16 %v4153
      %v4223 = vunpack.c.l.b16 %v4154
      %v4224 = vunpack.c.l.b16 %v4155
      %v4225 = vunpack.c.l.b16 %v4156
      %v4226 = vunpack.c.l.b16 %v4157
      %v4227 = vunpack.c.l.b16 %v4158
      %v4228 = vunpack.c.l.b16 %v4159
      %v4229 = vunpack.c.l.b16 %v4160
      %v4230 = vunpack.c.l.b16 %v4161
      %v4231 = vunpack.c.l.b16 %v4162
      %v4232 = vunpack.c.l.b16 %v4163
      %v4233 = vunpack.c.l.b16 %v4164
      %v4234 = vunpack.c.l.b16 %v4165
      %v4235 = vunpack.c.l.b16 %v4166
      %v4236 = vunpack.c.l.b16 %v4167
      %v4237 = vunpack.c.l.b16 %v4168
      %v4238 = vunpack.c.l.b16 %v4169
      %v4239 = vunpack.c.l.b16 %v4170
      %v4240 = vunpack.c.l.b16 %v4171
      %v4241 = vunpack.c.l.b16 %v4172
      %v4242 = vunpack.c.l.b16 %v4173
      %v4243 = vunpack.c.l.b16 %v4174
      %v4244 = vunpack.c.l.b16 %v4175
      %v4245 = vunpack.c.l.b16 %v4176
      %v4246 = vunpack.c.l.b16 %v4177
      %v4247 = vunpack.c.l.b16 %v4178
      %v4248 = vunpack.c.l.b16 %v4179
      %v4249 = vunpack.c.l.b16 %v4180
      %v4250 = vunpack.c.l.b16 %v4181
      %v4251 = vpack.c.b16 %v4220, %v4219
      %v4252 = vpack.c.b16 %v4222, %v4221
      %v4253 = vpack.c.b16 %v4224, %v4223
      %v4254 = vpack.c.b16 %v4226, %v4225
      %v4255 = vpack.c.b16 %v4228, %v4227
      %v4256 = vpack.c.b16 %v4230, %v4229
      %v4257 = vpack.c.b16 %v4232, %v4231
      %v4258 = vpack.c.b16 %v4234, %v4233
      %v4259 = vpack.c.b16 %v4236, %v4235
      %v4260 = vpack.c.b16 %v4238, %v4237
      %v4261 = vpack.c.b16 %v4240, %v4239
      %v4262 = vpack.c.b16 %v4242, %v4241
      %v4263 = vpack.c.b16 %v4244, %v4243
      %v4264 = vpack.c.b16 %v4246, %v4245
      %v4265 = vpack.c.b16 %v4248, %v4247
      %v4266 = vpack.c.b16 %v4250, %v4249
      %v4271 = vunpack.c.l.b16 %v4183
      %v4272 = vunpack.c.l.b16 %v4184
      %v4273 = vunpack.c.l.b16 %v4185
      %v4274 = vunpack.c.l.b16 %v4186
      %v4275 = vpack.c.b16 %v4272, %v4271
      %v4276 = vpack.c.b16 %v4274, %v4273
      %v4280 = vsel %vm1579, %v4251, 0
      %v4283 = vsel %vm1579, %v4252, 0
      %v4286 = vsel %vm1579, %v4253, 0
      %v4289 = vsel %vm1579, %v4254, 0
      %v4292 = vsel %vm1579, %v4255, 0
      %v4295 = vsel %vm1579, %v4256, 0
      %v4298 = vsel %vm1579, %v4257, 0
      %v4301 = vsel %vm1579, %v4258, 0
      %v4304 = vsel %vm1579, %v4259, 0
      %v4307 = vsel %vm1579, %v4260, 0
      %v4310 = vsel %vm1579, %v4261, 0
      %v4313 = vsel %vm1579, %v4262, 0
      %v4316 = vsel %vm1579, %v4263, 0
      %v4319 = vsel %vm1579, %v4264, 0
      %v4322 = vsel %vm1579, %v4265, 0
      %v4325 = vsel %vm1579, %v4266, 0
      %4327 = vmatprep.subr.bf16.mxu0 0
      %4328 = vmatpush1.bf16.msra.mxu0 0
      %4329 = vmatprep.subr.bf16.mxu0 0
      %4330 = vmatpush1.bf16.msra.mxu0 0
      %4331 = vmatprep.subr.bf16.mxu0 0
      %4332 = vmatpush1.bf16.msra.mxu0 0
      %4333 = vmatprep.subr.bf16.mxu0 0
      %4334 = vmatpush1.bf16.msra.mxu0 0
      %4335 = vmatprep.subr.bf16.mxu0 0
      %4336 = vmatpush1.bf16.msra.mxu0 0
      %4337 = vmatprep.subr.bf16.mxu0 0
      %4338 = vmatpush1.bf16.msra.mxu0 0
      %4339 = vmatprep.subr.bf16.mxu0 0
      %4340 = vmatpush1.bf16.msra.mxu0 %v4276
      %4341 = vmatprep.subr.bf16.mxu0 0
      %4342 = vmatpush1.bf16.msra.mxu0 %v4275
      %4343 = vmatprep.subr.bf16.mxu0 0
      %4344 = vmatpush2.bf16.msra.mxu0 0
      %4345 = vmatprep.subr.bf16.mxu0 0
      %4346 = vmatpush2.bf16.msra.mxu0 0
      %4347 = vmatprep.subr.bf16.mxu0 0
      %4348 = vmatpush2.bf16.msra.mxu0 0
      %4349 = vmatprep.subr.bf16.mxu0 0
      %4350 = vmatpush2.bf16.msra.mxu0 0
      %4351 = vmatprep.subr.bf16.mxu0 0
      %4352 = vmatpush2.bf16.msra.mxu0 0
      %4353 = vmatprep.subr.bf16.mxu0 0
      %4354 = vmatpush2.bf16.msra.mxu0 0
      %4355 = vmatprep.subr.bf16.mxu0 0
      %4356 = vmatpush2.bf16.msra.mxu0 0
      %4357 = vmatprep.subr.bf16.mxu0 0
      %4358 = vmatpush2.bf16.msra.mxu0 0
      %4359 = vmatprep.mubr.bf16.mxu0 0
      %4360 = vmatmul.mubr.bf16.gmra.mxu0 %v4280
      %v4361 = vpop.f32.mrf.mxu0
      %v4362 = vadd.f32 0.0, %v4361
      %v4363 = vpop.f32.mrf.mxu0
      %v4364 = vpop.f32.mrf.mxu0
      %v4365 = vadd.f32 0.0, %v4364
      %v4366 = vpop.f32.mrf.mxu0
      %4367 = vmatprep.mubr.bf16.mxu0 0
      %4368 = vmatmul.mubr.bf16.gmra.mxu0 %v4283
      %v4369 = vpop.f32.mrf.mxu0
      %v4370 = vadd.f32 0.0, %v4369
      %v4371 = vpop.f32.mrf.mxu0
      %v4372 = vpop.f32.mrf.mxu0
      %v4373 = vadd.f32 0.0, %v4372
      %v4374 = vpop.f32.mrf.mxu0
      %4375 = vmatprep.mubr.bf16.mxu0 0
      %4376 = vmatmul.mubr.bf16.gmra.mxu0 %v4286
      %v4377 = vpop.f32.mrf.mxu0
      %v4378 = vadd.f32 0.0, %v4377
      %v4379 = vpop.f32.mrf.mxu0
      %v4380 = vpop.f32.mrf.mxu0
      %v4381 = vadd.f32 0.0, %v4380
      %v4382 = vpop.f32.mrf.mxu0
      %4383 = vmatprep.mubr.bf16.mxu0 0
      %4384 = vmatmul.mubr.bf16.gmra.mxu0 %v4289
      %v4385 = vpop.f32.mrf.mxu0
      %v4386 = vadd.f32 0.0, %v4385
      %v4387 = vpop.f32.mrf.mxu0
      %v4388 = vpop.f32.mrf.mxu0
      %v4389 = vadd.f32 0.0, %v4388
      %v4390 = vpop.f32.mrf.mxu0
      %4391 = vmatprep.mubr.bf16.mxu0 0
      %4392 = vmatmul.mubr.bf16.gmra.mxu0 %v4292
      %v4393 = vpop.f32.mrf.mxu0
      %v4394 = vadd.f32 0.0, %v4393
      %v4395 = vpop.f32.mrf.mxu0
      %v4396 = vpop.f32.mrf.mxu0
      %v4397 = vadd.f32 0.0, %v4396
      %v4398 = vpop.f32.mrf.mxu0
      %4399 = vmatprep.mubr.bf16.mxu0 0
      %4400 = vmatmul.mubr.bf16.gmra.mxu0 %v4295
      %v4401 = vpop.f32.mrf.mxu0
      %v4402 = vadd.f32 0.0, %v4401
      %v4403 = vpop.f32.mrf.mxu0
      %v4404 = vpop.f32.mrf.mxu0
      %v4405 = vadd.f32 0.0, %v4404
      %v4406 = vpop.f32.mrf.mxu0
      %4407 = vmatprep.mubr.bf16.mxu0 0
      %4408 = vmatmul.mubr.bf16.gmra.mxu0 %v4298
      %v4409 = vpop.f32.mrf.mxu0
      %v4410 = vadd.f32 0.0, %v4409
      %v4411 = vpop.f32.mrf.mxu0
      %v4412 = vpop.f32.mrf.mxu0
      %v4413 = vadd.f32 0.0, %v4412
      %v4414 = vpop.f32.mrf.mxu0
      %4415 = vmatprep.mubr.bf16.mxu0 0
      %4416 = vmatmul.mubr.bf16.gmra.mxu0 %v4301
      %v4417 = vpop.f32.mrf.mxu0
      %v4418 = vadd.f32 0.0, %v4417
      %v4419 = vpop.f32.mrf.mxu0
      %v4420 = vpop.f32.mrf.mxu0
      %v4421 = vadd.f32 0.0, %v4420
      %v4422 = vpop.f32.mrf.mxu0
      %4423 = vmatprep.mubr.bf16.mxu0 0
      %4424 = vmatmul.mubr.bf16.gmra.mxu0 %v4304
      %v4425 = vpop.f32.mrf.mxu0
      %v4426 = vadd.f32 0.0, %v4425
      %v4427 = vpop.f32.mrf.mxu0
      %v4428 = vpop.f32.mrf.mxu0
      %v4429 = vadd.f32 0.0, %v4428
      %v4430 = vpop.f32.mrf.mxu0
      %4431 = vmatprep.mubr.bf16.mxu0 0
      %4432 = vmatmul.mubr.bf16.gmra.mxu0 %v4307
      %v4433 = vpop.f32.mrf.mxu0
      %v4434 = vadd.f32 0.0, %v4433
      %v4435 = vpop.f32.mrf.mxu0
      %v4436 = vpop.f32.mrf.mxu0
      %v4437 = vadd.f32 0.0, %v4436
      %v4438 = vpop.f32.mrf.mxu0
      %4439 = vmatprep.mubr.bf16.mxu0 0
      %4440 = vmatmul.mubr.bf16.gmra.mxu0 %v4310
      %v4441 = vpop.f32.mrf.mxu0
      %v4442 = vadd.f32 0.0, %v4441
      %v4443 = vpop.f32.mrf.mxu0
      %v4444 = vpop.f32.mrf.mxu0
      %v4445 = vadd.f32 0.0, %v4444
      %v4446 = vpop.f32.mrf.mxu0
      %4447 = vmatprep.mubr.bf16.mxu0 0
      %4448 = vmatmul.mubr.bf16.gmra.mxu0 %v4313
      %v4449 = vpop.f32.mrf.mxu0
      %v4450 = vadd.f32 0.0, %v4449
      %v4451 = vpop.f32.mrf.mxu0
      %v4452 = vpop.f32.mrf.mxu0
      %v4453 = vadd.f32 0.0, %v4452
      %v4454 = vpop.f32.mrf.mxu0
      %4455 = vmatprep.mubr.bf16.mxu0 0
      %4456 = vmatmul.mubr.bf16.gmra.mxu0 %v4316
      %v4457 = vpop.f32.mrf.mxu0
      %v4458 = vadd.f32 0.0, %v4457
      %v4459 = vpop.f32.mrf.mxu0
      %v4460 = vpop.f32.mrf.mxu0
      %v4461 = vadd.f32 0.0, %v4460
      %v4462 = vpop.f32.mrf.mxu0
      %4463 = vmatprep.mubr.bf16.mxu0 0
      %4464 = vmatmul.mubr.bf16.gmra.mxu0 %v4319
      %v4465 = vpop.f32.mrf.mxu0
      %v4466 = vadd.f32 0.0, %v4465
      %v4467 = vpop.f32.mrf.mxu0
      %v4468 = vpop.f32.mrf.mxu0
      %v4469 = vadd.f32 0.0, %v4468
      %v4470 = vpop.f32.mrf.mxu0
      %4471 = vmatprep.mubr.bf16.mxu0 0
      %4472 = vmatmul.mubr.bf16.gmra.mxu0 %v4322
      %v4473 = vpop.f32.mrf.mxu0
      %v4474 = vadd.f32 0.0, %v4473
      %v4475 = vpop.f32.mrf.mxu0
      %v4476 = vpop.f32.mrf.mxu0
      %v4477 = vadd.f32 0.0, %v4476
      %v4478 = vpop.f32.mrf.mxu0
      %4479 = vmatprep.mubr.bf16.mxu0 0
      %4480 = vmatmul.mubr.bf16.gmra.mxu0 %v4325
      %v4481 = vpop.f32.mrf.mxu0
      %v4482 = vadd.f32 0.0, %v4481
      %v4483 = vpop.f32.mrf.mxu0
      %v4484 = vpop.f32.mrf.mxu0
      %v4485 = vadd.f32 0.0, %v4484
      %v4486 = vpop.f32.mrf.mxu0
      %4487 = vdwg.mxu0
      %v4488 = vadd.f32 %v4117, %v4362
      %v4489 = vadd.f32 %v4118, %v4365
      %v4490 = vadd.f32 %v4119, %v4370
      %v4491 = vadd.f32 %v4120, %v4373
      %v4492 = vadd.f32 %v4121, %v4378
      %v4493 = vadd.f32 %v4122, %v4381
      %v4494 = vadd.f32 %v4123, %v4386
      %v4495 = vadd.f32 %v4124, %v4389
      %v4496 = vadd.f32 %v4125, %v4394
      %v4497 = vadd.f32 %v4126, %v4397
      %v4498 = vadd.f32 %v4127, %v4402
      %v4499 = vadd.f32 %v4128, %v4405
      %v4500 = vadd.f32 %v4129, %v4410
      %v4501 = vadd.f32 %v4130, %v4413
      %v4502 = vadd.f32 %v4131, %v4418
      %v4503 = vadd.f32 %v4132, %v4421
      %v4504 = vadd.f32 %v4133, %v4426
      %v4505 = vadd.f32 %v4134, %v4429
      %v4506 = vadd.f32 %v4135, %v4434
      %v4507 = vadd.f32 %v4136, %v4437
      %v4508 = vadd.f32 %v4137, %v4442
      %v4509 = vadd.f32 %v4138, %v4445
      %v4510 = vadd.f32 %v4139, %v4450
      %v4511 = vadd.f32 %v4140, %v4453
      %v4512 = vadd.f32 %v4141, %v4458
      %v4513 = vadd.f32 %v4142, %v4461
      %v4514 = vadd.f32 %v4143, %v4466
      %v4515 = vadd.f32 %v4144, %v4469
      %v4516 = vadd.f32 %v4145, %v4474
      %v4517 = vadd.f32 %v4146, %v4477
      %v4518 = vadd.f32 %v4147, %v4482
      %v4519 = vadd.f32 %v4148, %v4485
      %v4520 = vld [vmem:[%s4149] sm:$0xf]
      %v4521 = vld [vmem:[%s4149 + $0x4] sm:$0xf]
      %v4522 = vld [vmem:[%s4149 + $0x8] sm:$0x1]
      %v4523 = vld [vmem:[%s4149 + $0xc] sm:$0xf]
      %v4524 = vld [vmem:[%s4149 + $0x10] sm:$0xf]
      %v4525 = vld [vmem:[%s4149 + $0x14] sm:$0x1]
      %v4526 = vld [vmem:[%s4149 + $0x18] sm:$0xf]
      %v4527 = vld [vmem:[%s4149 + $0x1c] sm:$0xf]
      %v4528 = vld [vmem:[%s4149 + $0x20] sm:$0x1]
      %v4529 = vld [vmem:[%s4149 + $0x24] sm:$0xf]
      %v4530 = vld [vmem:[%s4149 + $0x28] sm:$0xf]
      %v4531 = vld [vmem:[%s4149 + $0x2c] sm:$0x1]
      %v4532 = vld [vmem:[%s4149 + $0x30] sm:$0xf]
      %v4533 = vld [vmem:[%s4149 + $0x34] sm:$0xf]
      %v4534 = vld [vmem:[%s4149 + $0x38] sm:$0x1]
      %v4535 = vld [vmem:[%s4149 + $0x3c] sm:$0xf]
      %v4536 = vld [vmem:[%s4149 + $0x40] sm:$0xf]
      %v4537 = vld [vmem:[%s4149 + $0x44] sm:$0x1]
      %v4538 = vld [vmem:[%s4149 + $0x48] sm:$0xf]
      %v4539 = vld [vmem:[%s4149 + $0x4c] sm:$0xf]
      %v4540 = vld [vmem:[%s4149 + $0x50] sm:$0x1]
      %v4541 = vld [vmem:[%s4149 + $0x54] sm:$0xf]
      %v4542 = vld [vmem:[%s4149 + $0x58] sm:$0xf]
      %v4543 = vld [vmem:[%s4149 + $0x5c] sm:$0x1]
      %v4544 = vld [vmem:[%s4149 + $0x60] sm:$0xf]
      %v4545 = vld [vmem:[%s4149 + $0x64] sm:$0xf]
      %v4546 = vld [vmem:[%s4149 + $0x68] sm:$0x1]
      %v4547 = vld [vmem:[%s4149 + $0x6c] sm:$0xf]
      %v4548 = vld [vmem:[%s4149 + $0x70] sm:$0xf]
      %v4549 = vld [vmem:[%s4149 + $0x74] sm:$0x1]
      %v4550 = vld [vmem:[%s4149 + $0x78] sm:$0xf]
      %v4551 = vld [vmem:[%s4149 + $0x7c] sm:$0xf]
      %v4552 = vld [vmem:[%s4149 + $0x80] sm:$0x1]
      %v4553 = vld [vmem:[%s4149 + $0x84] sm:$0xf]
      %v4554 = vld [vmem:[%s4149 + $0x88] sm:$0xf]
      %v4555 = vld [vmem:[%s4149 + $0x8c] sm:$0x1]
      %v4556 = vld [vmem:[%s4149 + $0x90] sm:$0xf]
      %v4557 = vld [vmem:[%s4149 + $0x94] sm:$0xf]
      %v4558 = vld [vmem:[%s4149 + $0x98] sm:$0x1]
      %v4559 = vld [vmem:[%s4149 + $0x9c] sm:$0xf]
      %v4560 = vld [vmem:[%s4149 + $0xa0] sm:$0xf]
      %v4561 = vld [vmem:[%s4149 + $0xa4] sm:$0x1]
      %v4562 = vld [vmem:[%s4149 + $0xa8] sm:$0xf]
      %v4563 = vld [vmem:[%s4149 + $0xac] sm:$0xf]
      %v4564 = vld [vmem:[%s4149 + $0xb0] sm:$0x1]
      %v4565 = vld [vmem:[%s4149 + $0xb4] sm:$0xf]
      %v4566 = vld [vmem:[%s4149 + $0xb8] sm:$0xf]
      %v4567 = vld [vmem:[%s4149 + $0xbc] sm:$0x1]
      %v4569 = vshrl.u32 %v4520, 16
      %v4571 = vrot.slane %v4569, 4
      %v4572 = vshll.u32 %v4520, 16
      %v4574 = vrot.slane %v4572, 5
      %v4575 = vor.u32 %v4571, %v4574
      %v4576 = vrot.slane %v4575, 4
      %v4578 = vshll.u32 %v4521, 16
      %v4580 = vrot.slane %v4578, 5
      %v4581 = vsel %vm1129, %v4576, %v4580
      %v4582 = vshrl.u32 %v4521, 16
      %v4584 = vrot.slane %v4582, 4
      %v4585 = vor.u32 %v4584, %v4580
      %v4586 = vrot.slane %v4585, 4
      %v4588 = vshll.u32 %v4522, 16
      %v4590 = vrot.slane %v4588, 5
      %v4591 = vsel %vm1129, %v4586, %v4590
      %v4593 = vshrl.u32 %v4523, 16
      %v4595 = vrot.slane %v4593, 4
      %v4596 = vshll.u32 %v4523, 16
      %v4598 = vrot.slane %v4596, 5
      %v4599 = vor.u32 %v4595, %v4598
      %v4600 = vrot.slane %v4599, 4
      %v4602 = vshll.u32 %v4524, 16
      %v4604 = vrot.slane %v4602, 5
      %v4605 = vsel %vm1129, %v4600, %v4604
      %v4606 = vshrl.u32 %v4524, 16
      %v4608 = vrot.slane %v4606, 4
      %v4609 = vor.u32 %v4608, %v4604
      %v4610 = vrot.slane %v4609, 4
      %v4612 = vshll.u32 %v4525, 16
      %v4614 = vrot.slane %v4612, 5
      %v4615 = vsel %vm1129, %v4610, %v4614
      %v4617 = vshrl.u32 %v4526, 16
      %v4619 = vrot.slane %v4617, 4
      %v4620 = vshll.u32 %v4526, 16
      %v4622 = vrot.slane %v4620, 5
      %v4623 = vor.u32 %v4619, %v4622
      %v4624 = vrot.slane %v4623, 4
      %v4626 = vshll.u32 %v4527, 16
      %v4628 = vrot.slane %v4626, 5
      %v4629 = vsel %vm1129, %v4624, %v4628
      %v4630 = vshrl.u32 %v4527, 16
      %v4632 = vrot.slane %v4630, 4
      %v4633 = vor.u32 %v4632, %v4628
      %v4634 = vrot.slane %v4633, 4
      %v4636 = vshll.u32 %v4528, 16
      %v4638 = vrot.slane %v4636, 5
      %v4639 = vsel %vm1129, %v4634, %v4638
      %v4641 = vshrl.u32 %v4529, 16
      %v4643 = vrot.slane %v4641, 4
      %v4644 = vshll.u32 %v4529, 16
      %v4646 = vrot.slane %v4644, 5
      %v4647 = vor.u32 %v4643, %v4646
      %v4648 = vrot.slane %v4647, 4
      %v4650 = vshll.u32 %v4530, 16
      %v4652 = vrot.slane %v4650, 5
      %v4653 = vsel %vm1129, %v4648, %v4652
      %v4654 = vshrl.u32 %v4530, 16
      %v4656 = vrot.slane %v4654, 4
      %v4657 = vor.u32 %v4656, %v4652
      %v4658 = vrot.slane %v4657, 4
      %v4660 = vshll.u32 %v4531, 16
      %v4662 = vrot.slane %v4660, 5
      %v4663 = vsel %vm1129, %v4658, %v4662
      %v4665 = vshrl.u32 %v4532, 16
      %v4667 = vrot.slane %v4665, 4
      %v4668 = vshll.u32 %v4532, 16
      %v4670 = vrot.slane %v4668, 5
      %v4671 = vor.u32 %v4667, %v4670
      %v4672 = vrot.slane %v4671, 4
      %v4674 = vshll.u32 %v4533, 16
      %v4676 = vrot.slane %v4674, 5
      %v4677 = vsel %vm1129, %v4672, %v4676
      %v4678 = vshrl.u32 %v4533, 16
      %v4680 = vrot.slane %v4678, 4
      %v4681 = vor.u32 %v4680, %v4676
      %v4682 = vrot.slane %v4681, 4
      %v4684 = vshll.u32 %v4534, 16
      %v4686 = vrot.slane %v4684, 5
      %v4687 = vsel %vm1129, %v4682, %v4686
      %v4689 = vshrl.u32 %v4535, 16
      %v4691 = vrot.slane %v4689, 4
      %v4692 = vshll.u32 %v4535, 16
      %v4694 = vrot.slane %v4692, 5
      %v4695 = vor.u32 %v4691, %v4694
      %v4696 = vrot.slane %v4695, 4
      %v4698 = vshll.u32 %v4536, 16
      %v4700 = vrot.slane %v4698, 5
      %v4701 = vsel %vm1129, %v4696, %v4700
      %v4702 = vshrl.u32 %v4536, 16
      %v4704 = vrot.slane %v4702, 4
      %v4705 = vor.u32 %v4704, %v4700
      %v4706 = vrot.slane %v4705, 4
      %v4708 = vshll.u32 %v4537, 16
      %v4710 = vrot.slane %v4708, 5
      %v4711 = vsel %vm1129, %v4706, %v4710
      %v4713 = vshrl.u32 %v4538, 16
      %v4715 = vrot.slane %v4713, 4
      %v4716 = vshll.u32 %v4538, 16
      %v4718 = vrot.slane %v4716, 5
      %v4719 = vor.u32 %v4715, %v4718
      %v4720 = vrot.slane %v4719, 4
      %v4722 = vshll.u32 %v4539, 16
      %v4724 = vrot.slane %v4722, 5
      %v4725 = vsel %vm1129, %v4720, %v4724
      %v4726 = vshrl.u32 %v4539, 16
      %v4728 = vrot.slane %v4726, 4
      %v4729 = vor.u32 %v4728, %v4724
      %v4730 = vrot.slane %v4729, 4
      %v4732 = vshll.u32 %v4540, 16
      %v4734 = vrot.slane %v4732, 5
      %v4735 = vsel %vm1129, %v4730, %v4734
      %v4737 = vshrl.u32 %v4541, 16
      %v4739 = vrot.slane %v4737, 4
      %v4740 = vshll.u32 %v4541, 16
      %v4742 = vrot.slane %v4740, 5
      %v4743 = vor.u32 %v4739, %v4742
      %v4744 = vrot.slane %v4743, 4
      %v4746 = vshll.u32 %v4542, 16
      %v4748 = vrot.slane %v4746, 5
      %v4749 = vsel %vm1129, %v4744, %v4748
      %v4750 = vshrl.u32 %v4542, 16
      %v4752 = vrot.slane %v4750, 4
      %v4753 = vor.u32 %v4752, %v4748
      %v4754 = vrot.slane %v4753, 4
      %v4756 = vshll.u32 %v4543, 16
      %v4758 = vrot.slane %v4756, 5
      %v4759 = vsel %vm1129, %v4754, %v4758
      %v4761 = vshrl.u32 %v4544, 16
      %v4763 = vrot.slane %v4761, 4
      %v4764 = vshll.u32 %v4544, 16
      %v4766 = vrot.slane %v4764, 5
      %v4767 = vor.u32 %v4763, %v4766
      %v4768 = vrot.slane %v4767, 4
      %v4770 = vshll.u32 %v4545, 16
      %v4772 = vrot.slane %v4770, 5
      %v4773 = vsel %vm1129, %v4768, %v4772
      %v4774 = vshrl.u32 %v4545, 16
      %v4776 = vrot.slane %v4774, 4
      %v4777 = vor.u32 %v4776, %v4772
      %v4778 = vrot.slane %v4777, 4
      %v4780 = vshll.u32 %v4546, 16
      %v4782 = vrot.slane %v4780, 5
      %v4783 = vsel %vm1129, %v4778, %v4782
      %v4785 = vshrl.u32 %v4547, 16
      %v4787 = vrot.slane %v4785, 4
      %v4788 = vshll.u32 %v4547, 16
      %v4790 = vrot.slane %v4788, 5
      %v4791 = vor.u32 %v4787, %v4790
      %v4792 = vrot.slane %v4791, 4
      %v4794 = vshll.u32 %v4548, 16
      %v4796 = vrot.slane %v4794, 5
      %v4797 = vsel %vm1129, %v4792, %v4796
      %v4798 = vshrl.u32 %v4548, 16
      %v4800 = vrot.slane %v4798, 4
      %v4801 = vor.u32 %v4800, %v4796
      %v4802 = vrot.slane %v4801, 4
      %v4804 = vshll.u32 %v4549, 16
      %v4806 = vrot.slane %v4804, 5
      %v4807 = vsel %vm1129, %v4802, %v4806
      %v4809 = vshrl.u32 %v4550, 16
      %v4811 = vrot.slane %v4809, 4
      %v4812 = vshll.u32 %v4550, 16
      %v4814 = vrot.slane %v4812, 5
      %v4815 = vor.u32 %v4811, %v4814
      %v4816 = vrot.slane %v4815, 4
      %v4818 = vshll.u32 %v4551, 16
      %v4820 = vrot.slane %v4818, 5
      %v4821 = vsel %vm1129, %v4816, %v4820
      %v4822 = vshrl.u32 %v4551, 16
      %v4824 = vrot.slane %v4822, 4
      %v4825 = vor.u32 %v4824, %v4820
      %v4826 = vrot.slane %v4825, 4
      %v4828 = vshll.u32 %v4552, 16
      %v4830 = vrot.slane %v4828, 5
      %v4831 = vsel %vm1129, %v4826, %v4830
      %v4833 = vshrl.u32 %v4553, 16
      %v4835 = vrot.slane %v4833, 4
      %v4836 = vshll.u32 %v4553, 16
      %v4838 = vrot.slane %v4836, 5
      %v4839 = vor.u32 %v4835, %v4838
      %v4840 = vrot.slane %v4839, 4
      %v4842 = vshll.u32 %v4554, 16
      %v4844 = vrot.slane %v4842, 5
      %v4845 = vsel %vm1129, %v4840, %v4844
      %v4846 = vshrl.u32 %v4554, 16
      %v4848 = vrot.slane %v4846, 4
      %v4849 = vor.u32 %v4848, %v4844
      %v4850 = vrot.slane %v4849, 4
      %v4852 = vshll.u32 %v4555, 16
      %v4854 = vrot.slane %v4852, 5
      %v4855 = vsel %vm1129, %v4850, %v4854
      %v4857 = vshrl.u32 %v4556, 16
      %v4859 = vrot.slane %v4857, 4
      %v4860 = vshll.u32 %v4556, 16
      %v4862 = vrot.slane %v4860, 5
      %v4863 = vor.u32 %v4859, %v4862
      %v4864 = vrot.slane %v4863, 4
      %v4866 = vshll.u32 %v4557, 16
      %v4868 = vrot.slane %v4866, 5
      %v4869 = vsel %vm1129, %v4864, %v4868
      %v4870 = vshrl.u32 %v4557, 16
      %v4872 = vrot.slane %v4870, 4
      %v4873 = vor.u32 %v4872, %v4868
      %v4874 = vrot.slane %v4873, 4
      %v4876 = vshll.u32 %v4558, 16
      %v4878 = vrot.slane %v4876, 5
      %v4879 = vsel %vm1129, %v4874, %v4878
      %v4881 = vshrl.u32 %v4559, 16
      %v4883 = vrot.slane %v4881, 4
      %v4884 = vshll.u32 %v4559, 16
      %v4886 = vrot.slane %v4884, 5
      %v4887 = vor.u32 %v4883, %v4886
      %v4888 = vrot.slane %v4887, 4
      %v4890 = vshll.u32 %v4560, 16
      %v4892 = vrot.slane %v4890, 5
      %v4893 = vsel %vm1129, %v4888, %v4892
      %v4894 = vshrl.u32 %v4560, 16
      %v4896 = vrot.slane %v4894, 4
      %v4897 = vor.u32 %v4896, %v4892
      %v4898 = vrot.slane %v4897, 4
      %v4900 = vshll.u32 %v4561, 16
      %v4902 = vrot.slane %v4900, 5
      %v4903 = vsel %vm1129, %v4898, %v4902
      %v4905 = vshrl.u32 %v4562, 16
      %v4907 = vrot.slane %v4905, 4
      %v4908 = vshll.u32 %v4562, 16
      %v4910 = vrot.slane %v4908, 5
      %v4911 = vor.u32 %v4907, %v4910
      %v4912 = vrot.slane %v4911, 4
      %v4914 = vshll.u32 %v4563, 16
      %v4916 = vrot.slane %v4914, 5
      %v4917 = vsel %vm1129, %v4912, %v4916
      %v4918 = vshrl.u32 %v4563, 16
      %v4920 = vrot.slane %v4918, 4
      %v4921 = vor.u32 %v4920, %v4916
      %v4922 = vrot.slane %v4921, 4
      %v4924 = vshll.u32 %v4564, 16
      %v4926 = vrot.slane %v4924, 5
      %v4927 = vsel %vm1129, %v4922, %v4926
      %v4929 = vshrl.u32 %v4565, 16
      %v4931 = vrot.slane %v4929, 4
      %v4932 = vshll.u32 %v4565, 16
      %v4934 = vrot.slane %v4932, 5
      %v4935 = vor.u32 %v4931, %v4934
      %v4936 = vrot.slane %v4935, 4
      %v4938 = vshll.u32 %v4566, 16
      %v4940 = vrot.slane %v4938, 5
      %v4941 = vsel %vm1129, %v4936, %v4940
      %v4942 = vshrl.u32 %v4566, 16
      %v4944 = vrot.slane %v4942, 4
      %v4945 = vor.u32 %v4944, %v4940
      %v4946 = vrot.slane %v4945, 4
      %v4948 = vshll.u32 %v4567, 16
      %v4950 = vrot.slane %v4948, 5
      %v4951 = vsel %vm1129, %v4946, %v4950
      %s4952 = scalar_lea.vmem %s1, 112
      %v4953 = vld [vmem:[%s4952] sm:$0xf]
      %v4954 = vld [vmem:[%s4952 + $0x4] sm:$0xf]
      %v4955 = vld [vmem:[%s4952 + $0x8] sm:$0xf]
      %v4956 = vld [vmem:[%s4952 + $0xc] sm:$0xf]
      %v4957 = vunpack.c.l.b16 %v4581
      %v4958 = vunpack.c.l.b16 %v4591
      %v4959 = vunpack.c.l.b16 %v4605
      %v4960 = vunpack.c.l.b16 %v4615
      %v4961 = vunpack.c.l.b16 %v4629
      %v4962 = vunpack.c.l.b16 %v4639
      %v4963 = vunpack.c.l.b16 %v4653
      %v4964 = vunpack.c.l.b16 %v4663
      %v4965 = vunpack.c.l.b16 %v4677
      %v4966 = vunpack.c.l.b16 %v4687
      %v4967 = vunpack.c.l.b16 %v4701
      %v4968 = vunpack.c.l.b16 %v4711
      %v4969 = vunpack.c.l.b16 %v4725
      %v4970 = vunpack.c.l.b16 %v4735
      %v4971 = vunpack.c.l.b16 %v4749
      %v4972 = vunpack.c.l.b16 %v4759
      %v4973 = vunpack.c.l.b16 %v4773
      %v4974 = vunpack.c.l.b16 %v4783
      %v4975 = vunpack.c.l.b16 %v4797
      %v4976 = vunpack.c.l.b16 %v4807
      %v4977 = vunpack.c.l.b16 %v4821
      %v4978 = vunpack.c.l.b16 %v4831
      %v4979 = vunpack.c.l.b16 %v4845
      %v4980 = vunpack.c.l.b16 %v4855
      %v4981 = vunpack.c.l.b16 %v4869
      %v4982 = vunpack.c.l.b16 %v4879
      %v4983 = vunpack.c.l.b16 %v4893
      %v4984 = vunpack.c.l.b16 %v4903
      %v4985 = vunpack.c.l.b16 %v4917
      %v4986 = vunpack.c.l.b16 %v4927
      %v4987 = vunpack.c.l.b16 %v4941
      %v4988 = vunpack.c.l.b16 %v4951
      %v4989 = vpack.c.b16 %v4958, %v4957
      %v4990 = vpack.c.b16 %v4960, %v4959
      %v4991 = vpack.c.b16 %v4962, %v4961
      %v4992 = vpack.c.b16 %v4964, %v4963
      %v4993 = vpack.c.b16 %v4966, %v4965
      %v4994 = vpack.c.b16 %v4968, %v4967
      %v4995 = vpack.c.b16 %v4970, %v4969
      %v4996 = vpack.c.b16 %v4972, %v4971
      %v4997 = vpack.c.b16 %v4974, %v4973
      %v4998 = vpack.c.b16 %v4976, %v4975
      %v4999 = vpack.c.b16 %v4978, %v4977
      %v5000 = vpack.c.b16 %v4980, %v4979
      %v5001 = vpack.c.b16 %v4982, %v4981
      %v5002 = vpack.c.b16 %v4984, %v4983
      %v5003 = vpack.c.b16 %v4986, %v4985
      %v5004 = vpack.c.b16 %v4988, %v4987
      %v5009 = vunpack.c.l.b16 %v4953
      %v5010 = vunpack.c.l.b16 %v4954
      %v5011 = vunpack.c.l.b16 %v4955
      %v5012 = vunpack.c.l.b16 %v4956
      %v5013 = vpack.c.b16 %v5010, %v5009
      %v5014 = vpack.c.b16 %v5012, %v5011
      %v5018 = vsel %vm1579, %v4989, 0
      %v5021 = vsel %vm1579, %v4990, 0
      %v5024 = vsel %vm1579, %v4991, 0
      %v5027 = vsel %vm1579, %v4992, 0
      %v5030 = vsel %vm1579, %v4993, 0
      %v5033 = vsel %vm1579, %v4994, 0
      %v5036 = vsel %vm1579, %v4995, 0
      %v5039 = vsel %vm1579, %v4996, 0
      %v5042 = vsel %vm1579, %v4997, 0
      %v5045 = vsel %vm1579, %v4998, 0
      %v5048 = vsel %vm1579, %v4999, 0
      %v5051 = vsel %vm1579, %v5000, 0
      %v5054 = vsel %vm1579, %v5001, 0
      %v5057 = vsel %vm1579, %v5002, 0
      %v5060 = vsel %vm1579, %v5003, 0
      %v5063 = vsel %vm1579, %v5004, 0
      %5065 = vmatprep.subr.bf16.mxu0 0
      %5066 = vmatpush1.bf16.msra.mxu0 0
      %5067 = vmatprep.subr.bf16.mxu0 0
      %5068 = vmatpush1.bf16.msra.mxu0 0
      %5069 = vmatprep.subr.bf16.mxu0 0
      %5070 = vmatpush1.bf16.msra.mxu0 0
      %5071 = vmatprep.subr.bf16.mxu0 0
      %5072 = vmatpush1.bf16.msra.mxu0 0
      %5073 = vmatprep.subr.bf16.mxu0 0
      %5074 = vmatpush1.bf16.msra.mxu0 0
      %5075 = vmatprep.subr.bf16.mxu0 0
      %5076 = vmatpush1.bf16.msra.mxu0 0
      %5077 = vmatprep.subr.bf16.mxu0 0
      %5078 = vmatpush1.bf16.msra.mxu0 %v5014
      %5079 = vmatprep.subr.bf16.mxu0 0
      %5080 = vmatpush1.bf16.msra.mxu0 %v5013
      %5081 = vmatprep.subr.bf16.mxu0 0
      %5082 = vmatpush2.bf16.msra.mxu0 0
      %5083 = vmatprep.subr.bf16.mxu0 0
      %5084 = vmatpush2.bf16.msra.mxu0 0
      %5085 = vmatprep.subr.bf16.mxu0 0
      %5086 = vmatpush2.bf16.msra.mxu0 0
      %5087 = vmatprep.subr.bf16.mxu0 0
      %5088 = vmatpush2.bf16.msra.mxu0 0
      %5089 = vmatprep.subr.bf16.mxu0 0
      %5090 = vmatpush2.bf16.msra.mxu0 0
      %5091 = vmatprep.subr.bf16.mxu0 0
      %5092 = vmatpush2.bf16.msra.mxu0 0
      %5093 = vmatprep.subr.bf16.mxu0 0
      %5094 = vmatpush2.bf16.msra.mxu0 0
      %5095 = vmatprep.subr.bf16.mxu0 0
      %5096 = vmatpush2.bf16.msra.mxu0 0
      %5097 = vmatprep.mubr.bf16.mxu0 0
      %5098 = vmatmul.mubr.bf16.gmra.mxu0 %v5018
      %v5099 = vpop.f32.mrf.mxu0
      %v5100 = vadd.f32 0.0, %v5099
      %v5101 = vpop.f32.mrf.mxu0
      %v5102 = vpop.f32.mrf.mxu0
      %v5103 = vadd.f32 0.0, %v5102
      %v5104 = vpop.f32.mrf.mxu0
      %5105 = vmatprep.mubr.bf16.mxu0 0
      %5106 = vmatmul.mubr.bf16.gmra.mxu0 %v5021
      %v5107 = vpop.f32.mrf.mxu0
      %v5108 = vadd.f32 0.0, %v5107
      %v5109 = vpop.f32.mrf.mxu0
      %v5110 = vpop.f32.mrf.mxu0
      %v5111 = vadd.f32 0.0, %v5110
      %v5112 = vpop.f32.mrf.mxu0
      %5113 = vmatprep.mubr.bf16.mxu0 0
      %5114 = vmatmul.mubr.bf16.gmra.mxu0 %v5024
      %v5115 = vpop.f32.mrf.mxu0
      %v5116 = vadd.f32 0.0, %v5115
      %v5117 = vpop.f32.mrf.mxu0
      %v5118 = vpop.f32.mrf.mxu0
      %v5119 = vadd.f32 0.0, %v5118
      %v5120 = vpop.f32.mrf.mxu0
      %5121 = vmatprep.mubr.bf16.mxu0 0
      %5122 = vmatmul.mubr.bf16.gmra.mxu0 %v5027
      %v5123 = vpop.f32.mrf.mxu0
      %v5124 = vadd.f32 0.0, %v5123
      %v5125 = vpop.f32.mrf.mxu0
      %v5126 = vpop.f32.mrf.mxu0
      %v5127 = vadd.f32 0.0, %v5126
      %v5128 = vpop.f32.mrf.mxu0
      %5129 = vmatprep.mubr.bf16.mxu0 0
      %5130 = vmatmul.mubr.bf16.gmra.mxu0 %v5030
      %v5131 = vpop.f32.mrf.mxu0
      %v5132 = vadd.f32 0.0, %v5131
      %v5133 = vpop.f32.mrf.mxu0
      %v5134 = vpop.f32.mrf.mxu0
      %v5135 = vadd.f32 0.0, %v5134
      %v5136 = vpop.f32.mrf.mxu0
      %5137 = vmatprep.mubr.bf16.mxu0 0
      %5138 = vmatmul.mubr.bf16.gmra.mxu0 %v5033
      %v5139 = vpop.f32.mrf.mxu0
      %v5140 = vadd.f32 0.0, %v5139
      %v5141 = vpop.f32.mrf.mxu0
      %v5142 = vpop.f32.mrf.mxu0
      %v5143 = vadd.f32 0.0, %v5142
      %v5144 = vpop.f32.mrf.mxu0
      %5145 = vmatprep.mubr.bf16.mxu0 0
      %5146 = vmatmul.mubr.bf16.gmra.mxu0 %v5036
      %v5147 = vpop.f32.mrf.mxu0
      %v5148 = vadd.f32 0.0, %v5147
      %v5149 = vpop.f32.mrf.mxu0
      %v5150 = vpop.f32.mrf.mxu0
      %v5151 = vadd.f32 0.0, %v5150
      %v5152 = vpop.f32.mrf.mxu0
      %5153 = vmatprep.mubr.bf16.mxu0 0
      %5154 = vmatmul.mubr.bf16.gmra.mxu0 %v5039
      %v5155 = vpop.f32.mrf.mxu0
      %v5156 = vadd.f32 0.0, %v5155
      %v5157 = vpop.f32.mrf.mxu0
      %v5158 = vpop.f32.mrf.mxu0
      %v5159 = vadd.f32 0.0, %v5158
      %v5160 = vpop.f32.mrf.mxu0
      %5161 = vmatprep.mubr.bf16.mxu0 0
      %5162 = vmatmul.mubr.bf16.gmra.mxu0 %v5042
      %v5163 = vpop.f32.mrf.mxu0
      %v5164 = vadd.f32 0.0, %v5163
      %v5165 = vpop.f32.mrf.mxu0
      %v5166 = vpop.f32.mrf.mxu0
      %v5167 = vadd.f32 0.0, %v5166
      %v5168 = vpop.f32.mrf.mxu0
      %5169 = vmatprep.mubr.bf16.mxu0 0
      %5170 = vmatmul.mubr.bf16.gmra.mxu0 %v5045
      %v5171 = vpop.f32.mrf.mxu0
      %v5172 = vadd.f32 0.0, %v5171
      %v5173 = vpop.f32.mrf.mxu0
      %v5174 = vpop.f32.mrf.mxu0
      %v5175 = vadd.f32 0.0, %v5174
      %v5176 = vpop.f32.mrf.mxu0
      %5177 = vmatprep.mubr.bf16.mxu0 0
      %5178 = vmatmul.mubr.bf16.gmra.mxu0 %v5048
      %v5179 = vpop.f32.mrf.mxu0
      %v5180 = vadd.f32 0.0, %v5179
      %v5181 = vpop.f32.mrf.mxu0
      %v5182 = vpop.f32.mrf.mxu0
      %v5183 = vadd.f32 0.0, %v5182
      %v5184 = vpop.f32.mrf.mxu0
      %5185 = vmatprep.mubr.bf16.mxu0 0
      %5186 = vmatmul.mubr.bf16.gmra.mxu0 %v5051
      %v5187 = vpop.f32.mrf.mxu0
      %v5188 = vadd.f32 0.0, %v5187
      %v5189 = vpop.f32.mrf.mxu0
      %v5190 = vpop.f32.mrf.mxu0
      %v5191 = vadd.f32 0.0, %v5190
      %v5192 = vpop.f32.mrf.mxu0
      %5193 = vmatprep.mubr.bf16.mxu0 0
      %5194 = vmatmul.mubr.bf16.gmra.mxu0 %v5054
      %v5195 = vpop.f32.mrf.mxu0
      %v5196 = vadd.f32 0.0, %v5195
      %v5197 = vpop.f32.mrf.mxu0
      %v5198 = vpop.f32.mrf.mxu0
      %v5199 = vadd.f32 0.0, %v5198
      %v5200 = vpop.f32.mrf.mxu0
      %5201 = vmatprep.mubr.bf16.mxu0 0
      %5202 = vmatmul.mubr.bf16.gmra.mxu0 %v5057
      %v5203 = vpop.f32.mrf.mxu0
      %v5204 = vadd.f32 0.0, %v5203
      %v5205 = vpop.f32.mrf.mxu0
      %v5206 = vpop.f32.mrf.mxu0
      %v5207 = vadd.f32 0.0, %v5206
      %v5208 = vpop.f32.mrf.mxu0
      %5209 = vmatprep.mubr.bf16.mxu0 0
      %5210 = vmatmul.mubr.bf16.gmra.mxu0 %v5060
      %v5211 = vpop.f32.mrf.mxu0
      %v5212 = vadd.f32 0.0, %v5211
      %v5213 = vpop.f32.mrf.mxu0
      %v5214 = vpop.f32.mrf.mxu0
      %v5215 = vadd.f32 0.0, %v5214
      %v5216 = vpop.f32.mrf.mxu0
      %5217 = vmatprep.mubr.bf16.mxu0 0
      %5218 = vmatmul.mubr.bf16.gmra.mxu0 %v5063
      %v5219 = vpop.f32.mrf.mxu0
      %v5220 = vadd.f32 0.0, %v5219
      %v5221 = vpop.f32.mrf.mxu0
      %v5222 = vpop.f32.mrf.mxu0
      %v5223 = vadd.f32 0.0, %v5222
      %v5224 = vpop.f32.mrf.mxu0
      %5225 = vdwg.mxu0
      %v5226 = vadd.f32 %v4488, %v5100
      %v5227 = vadd.f32 %v4489, %v5103
      %v5228 = vadd.f32 %v4490, %v5108
      %v5229 = vadd.f32 %v4491, %v5111
      %v5230 = vadd.f32 %v4492, %v5116
      %v5231 = vadd.f32 %v4493, %v5119
      %v5232 = vadd.f32 %v4494, %v5124
      %v5233 = vadd.f32 %v4495, %v5127
      %v5234 = vadd.f32 %v4496, %v5132
      %v5235 = vadd.f32 %v4497, %v5135
      %v5236 = vadd.f32 %v4498, %v5140
      %v5237 = vadd.f32 %v4499, %v5143
      %v5238 = vadd.f32 %v4500, %v5148
      %v5239 = vadd.f32 %v4501, %v5151
      %v5240 = vadd.f32 %v4502, %v5156
      %v5241 = vadd.f32 %v4503, %v5159
      %v5242 = vadd.f32 %v4504, %v5164
      %v5243 = vadd.f32 %v4505, %v5167
      %v5244 = vadd.f32 %v4506, %v5172
      %v5245 = vadd.f32 %v4507, %v5175
      %v5246 = vadd.f32 %v4508, %v5180
      %v5247 = vadd.f32 %v4509, %v5183
      %v5248 = vadd.f32 %v4510, %v5188
      %v5249 = vadd.f32 %v4511, %v5191
      %v5250 = vadd.f32 %v4512, %v5196
      %v5251 = vadd.f32 %v4513, %v5199
      %v5252 = vadd.f32 %v4514, %v5204
      %v5253 = vadd.f32 %v4515, %v5207
      %v5254 = vadd.f32 %v4516, %v5212
      %v5255 = vadd.f32 %v4517, %v5215
      %v5256 = vadd.f32 %v4518, %v5220
      %v5257 = vadd.f32 %v4519, %v5223
      %v5258 = vld [vmem:[%s4149] sm:$0xe]
      %v5259 = vld [vmem:[%s4149 + $0xc] sm:$0xe]
      %v5260 = vld [vmem:[%s4149 + $0x18] sm:$0xe]
      %v5261 = vld [vmem:[%s4149 + $0x24] sm:$0xe]
      %v5262 = vld [vmem:[%s4149 + $0x30] sm:$0xe]
      %v5263 = vld [vmem:[%s4149 + $0x3c] sm:$0xe]
      %v5264 = vld [vmem:[%s4149 + $0x48] sm:$0xe]
      %v5265 = vld [vmem:[%s4149 + $0x54] sm:$0xe]
      %v5266 = vld [vmem:[%s4149 + $0x60] sm:$0xe]
      %v5267 = vld [vmem:[%s4149 + $0x6c] sm:$0xe]
      %v5268 = vld [vmem:[%s4149 + $0x78] sm:$0xe]
      %v5269 = vld [vmem:[%s4149 + $0x84] sm:$0xe]
      %v5270 = vld [vmem:[%s4149 + $0x90] sm:$0xe]
      %v5271 = vld [vmem:[%s4149 + $0x9c] sm:$0xe]
      %v5272 = vld [vmem:[%s4149 + $0xa8] sm:$0xe]
      %v5273 = vld [vmem:[%s4149 + $0xb4] sm:$0xe]
      %v5322 = vrot.slane %v5258, 5
      %v5323 = vrot.slane %v5322, 4
      %v5324 = vrot.slane %v4521, 5
      %v5325 = vsel %vm2140, %v5323, %v5324
      %v5326 = vrot.slane %v5324, 4
      %v5327 = vrot.slane %v4522, 5
      %v5328 = vsel %vm2140, %v5326, %v5327
      %v5329 = vrot.slane %v5259, 5
      %v5330 = vrot.slane %v5329, 4
      %v5331 = vrot.slane %v4524, 5
      %v5332 = vsel %vm2140, %v5330, %v5331
      %v5333 = vrot.slane %v5331, 4
      %v5334 = vrot.slane %v4525, 5
      %v5335 = vsel %vm2140, %v5333, %v5334
      %v5336 = vrot.slane %v5260, 5
      %v5337 = vrot.slane %v5336, 4
      %v5338 = vrot.slane %v4527, 5
      %v5339 = vsel %vm2140, %v5337, %v5338
      %v5340 = vrot.slane %v5338, 4
      %v5341 = vrot.slane %v4528, 5
      %v5342 = vsel %vm2140, %v5340, %v5341
      %v5343 = vrot.slane %v5261, 5
      %v5344 = vrot.slane %v5343, 4
      %v5345 = vrot.slane %v4530, 5
      %v5346 = vsel %vm2140, %v5344, %v5345
      %v5347 = vrot.slane %v5345, 4
      %v5348 = vrot.slane %v4531, 5
      %v5349 = vsel %vm2140, %v5347, %v5348
      %v5350 = vrot.slane %v5262, 5
      %v5351 = vrot.slane %v5350, 4
      %v5352 = vrot.slane %v4533, 5
      %v5353 = vsel %vm2140, %v5351, %v5352
      %v5354 = vrot.slane %v5352, 4
      %v5355 = vrot.slane %v4534, 5
      %v5356 = vsel %vm2140, %v5354, %v5355
      %v5357 = vrot.slane %v5263, 5
      %v5358 = vrot.slane %v5357, 4
      %v5359 = vrot.slane %v4536, 5
      %v5360 = vsel %vm2140, %v5358, %v5359
      %v5361 = vrot.slane %v5359, 4
      %v5362 = vrot.slane %v4537, 5
      %v5363 = vsel %vm2140, %v5361, %v5362
      %v5364 = vrot.slane %v5264, 5
      %v5365 = vrot.slane %v5364, 4
      %v5366 = vrot.slane %v4539, 5
      %v5367 = vsel %vm2140, %v5365, %v5366
      %v5368 = vrot.slane %v5366, 4
      %v5369 = vrot.slane %v4540, 5
      %v5370 = vsel %vm2140, %v5368, %v5369
      %v5371 = vrot.slane %v5265, 5
      %v5372 = vrot.slane %v5371, 4
      %v5373 = vrot.slane %v4542, 5
      %v5374 = vsel %vm2140, %v5372, %v5373
      %v5375 = vrot.slane %v5373, 4
      %v5376 = vrot.slane %v4543, 5
      %v5377 = vsel %vm2140, %v5375, %v5376
      %v5378 = vrot.slane %v5266, 5
      %v5379 = vrot.slane %v5378, 4
      %v5380 = vrot.slane %v4545, 5
      %v5381 = vsel %vm2140, %v5379, %v5380
      %v5382 = vrot.slane %v5380, 4
      %v5383 = vrot.slane %v4546, 5
      %v5384 = vsel %vm2140, %v5382, %v5383
      %v5385 = vrot.slane %v5267, 5
      %v5386 = vrot.slane %v5385, 4
      %v5387 = vrot.slane %v4548, 5
      %v5388 = vsel %vm2140, %v5386, %v5387
      %v5389 = vrot.slane %v5387, 4
      %v5390 = vrot.slane %v4549, 5
      %v5391 = vsel %vm2140, %v5389, %v5390
      %v5392 = vrot.slane %v5268, 5
      %v5393 = vrot.slane %v5392, 4
      %v5394 = vrot.slane %v4551, 5
      %v5395 = vsel %vm2140, %v5393, %v5394
      %v5396 = vrot.slane %v5394, 4
      %v5397 = vrot.slane %v4552, 5
      %v5398 = vsel %vm2140, %v5396, %v5397
      %v5399 = vrot.slane %v5269, 5
      %v5400 = vrot.slane %v5399, 4
      %v5401 = vrot.slane %v4554, 5
      %v5402 = vsel %vm2140, %v5400, %v5401
      %v5403 = vrot.slane %v5401, 4
      %v5404 = vrot.slane %v4555, 5
      %v5405 = vsel %vm2140, %v5403, %v5404
      %v5406 = vrot.slane %v5270, 5
      %v5407 = vrot.slane %v5406, 4
      %v5408 = vrot.slane %v4557, 5
      %v5409 = vsel %vm2140, %v5407, %v5408
      %v5410 = vrot.slane %v5408, 4
      %v5411 = vrot.slane %v4558, 5
      %v5412 = vsel %vm2140, %v5410, %v5411
      %v5413 = vrot.slane %v5271, 5
      %v5414 = vrot.slane %v5413, 4
      %v5415 = vrot.slane %v4560, 5
      %v5416 = vsel %vm2140, %v5414, %v5415
      %v5417 = vrot.slane %v5415, 4
      %v5418 = vrot.slane %v4561, 5
      %v5419 = vsel %vm2140, %v5417, %v5418
      %v5420 = vrot.slane %v5272, 5
      %v5421 = vrot.slane %v5420, 4
      %v5422 = vrot.slane %v4563, 5
      %v5423 = vsel %vm2140, %v5421, %v5422
      %v5424 = vrot.slane %v5422, 4
      %v5425 = vrot.slane %v4564, 5
      %v5426 = vsel %vm2140, %v5424, %v5425
      %v5427 = vrot.slane %v5273, 5
      %v5428 = vrot.slane %v5427, 4
      %v5429 = vrot.slane %v4566, 5
      %v5430 = vsel %vm2140, %v5428, %v5429
      %v5431 = vrot.slane %v5429, 4
      %v5432 = vrot.slane %v4567, 5
      %v5433 = vsel %vm2140, %v5431, %v5432
      %s5434 = scalar_lea.vmem %s1, 128
      %v5435 = vld [vmem:[%s5434] sm:$0xf]
      %v5436 = vld [vmem:[%s5434 + $0x4] sm:$0xf]
      %v5437 = vld [vmem:[%s5434 + $0x8] sm:$0xf]
      %v5438 = vld [vmem:[%s5434 + $0xc] sm:$0xf]
      %v5439 = vunpack.c.l.b16 %v5325
      %v5440 = vunpack.c.l.b16 %v5328
      %v5441 = vunpack.c.l.b16 %v5332
      %v5442 = vunpack.c.l.b16 %v5335
      %v5443 = vunpack.c.l.b16 %v5339
      %v5444 = vunpack.c.l.b16 %v5342
      %v5445 = vunpack.c.l.b16 %v5346
      %v5446 = vunpack.c.l.b16 %v5349
      %v5447 = vunpack.c.l.b16 %v5353
      %v5448 = vunpack.c.l.b16 %v5356
      %v5449 = vunpack.c.l.b16 %v5360
      %v5450 = vunpack.c.l.b16 %v5363
      %v5451 = vunpack.c.l.b16 %v5367
      %v5452 = vunpack.c.l.b16 %v5370
      %v5453 = vunpack.c.l.b16 %v5374
      %v5454 = vunpack.c.l.b16 %v5377
      %v5455 = vunpack.c.l.b16 %v5381
      %v5456 = vunpack.c.l.b16 %v5384
      %v5457 = vunpack.c.l.b16 %v5388
      %v5458 = vunpack.c.l.b16 %v5391
      %v5459 = vunpack.c.l.b16 %v5395
      %v5460 = vunpack.c.l.b16 %v5398
      %v5461 = vunpack.c.l.b16 %v5402
      %v5462 = vunpack.c.l.b16 %v5405
      %v5463 = vunpack.c.l.b16 %v5409
      %v5464 = vunpack.c.l.b16 %v5412
      %v5465 = vunpack.c.l.b16 %v5416
      %v5466 = vunpack.c.l.b16 %v5419
      %v5467 = vunpack.c.l.b16 %v5423
      %v5468 = vunpack.c.l.b16 %v5426
      %v5469 = vunpack.c.l.b16 %v5430
      %v5470 = vunpack.c.l.b16 %v5433
      %v5471 = vpack.c.b16 %v5440, %v5439
      %v5472 = vpack.c.b16 %v5442, %v5441
      %v5473 = vpack.c.b16 %v5444, %v5443
      %v5474 = vpack.c.b16 %v5446, %v5445
      %v5475 = vpack.c.b16 %v5448, %v5447
      %v5476 = vpack.c.b16 %v5450, %v5449
      %v5477 = vpack.c.b16 %v5452, %v5451
      %v5478 = vpack.c.b16 %v5454, %v5453
      %v5479 = vpack.c.b16 %v5456, %v5455
      %v5480 = vpack.c.b16 %v5458, %v5457
      %v5481 = vpack.c.b16 %v5460, %v5459
      %v5482 = vpack.c.b16 %v5462, %v5461
      %v5483 = vpack.c.b16 %v5464, %v5463
      %v5484 = vpack.c.b16 %v5466, %v5465
      %v5485 = vpack.c.b16 %v5468, %v5467
      %v5486 = vpack.c.b16 %v5470, %v5469
      %v5491 = vunpack.c.l.b16 %v5435
      %v5492 = vunpack.c.l.b16 %v5436
      %v5493 = vunpack.c.l.b16 %v5437
      %v5494 = vunpack.c.l.b16 %v5438
      %v5495 = vpack.c.b16 %v5492, %v5491
      %v5496 = vpack.c.b16 %v5494, %v5493
      %v5500 = vsel %vm1579, %v5471, 0
      %v5503 = vsel %vm1579, %v5472, 0
      %v5506 = vsel %vm1579, %v5473, 0
      %v5509 = vsel %vm1579, %v5474, 0
      %v5512 = vsel %vm1579, %v5475, 0
      %v5515 = vsel %vm1579, %v5476, 0
      %v5518 = vsel %vm1579, %v5477, 0
      %v5521 = vsel %vm1579, %v5478, 0
      %v5524 = vsel %vm1579, %v5479, 0
      %v5527 = vsel %vm1579, %v5480, 0
      %v5530 = vsel %vm1579, %v5481, 0
      %v5533 = vsel %vm1579, %v5482, 0
      %v5536 = vsel %vm1579, %v5483, 0
      %v5539 = vsel %vm1579, %v5484, 0
      %v5542 = vsel %vm1579, %v5485, 0
      %v5545 = vsel %vm1579, %v5486, 0
      %5547 = vmatprep.subr.bf16.mxu0 0
      %5548 = vmatpush1.bf16.msra.mxu0 0
      %5549 = vmatprep.subr.bf16.mxu0 0
      %5550 = vmatpush1.bf16.msra.mxu0 0
      %5551 = vmatprep.subr.bf16.mxu0 0
      %5552 = vmatpush1.bf16.msra.mxu0 0
      %5553 = vmatprep.subr.bf16.mxu0 0
      %5554 = vmatpush1.bf16.msra.mxu0 0
      %5555 = vmatprep.subr.bf16.mxu0 0
      %5556 = vmatpush1.bf16.msra.mxu0 0
      %5557 = vmatprep.subr.bf16.mxu0 0
      %5558 = vmatpush1.bf16.msra.mxu0 0
      %5559 = vmatprep.subr.bf16.mxu0 0
      %5560 = vmatpush1.bf16.msra.mxu0 %v5496
      %5561 = vmatprep.subr.bf16.mxu0 0
      %5562 = vmatpush1.bf16.msra.mxu0 %v5495
      %5563 = vmatprep.subr.bf16.mxu0 0
      %5564 = vmatpush2.bf16.msra.mxu0 0
      %5565 = vmatprep.subr.bf16.mxu0 0
      %5566 = vmatpush2.bf16.msra.mxu0 0
      %5567 = vmatprep.subr.bf16.mxu0 0
      %5568 = vmatpush2.bf16.msra.mxu0 0
      %5569 = vmatprep.subr.bf16.mxu0 0
      %5570 = vmatpush2.bf16.msra.mxu0 0
      %5571 = vmatprep.subr.bf16.mxu0 0
      %5572 = vmatpush2.bf16.msra.mxu0 0
      %5573 = vmatprep.subr.bf16.mxu0 0
      %5574 = vmatpush2.bf16.msra.mxu0 0
      %5575 = vmatprep.subr.bf16.mxu0 0
      %5576 = vmatpush2.bf16.msra.mxu0 0
      %5577 = vmatprep.subr.bf16.mxu0 0
      %5578 = vmatpush2.bf16.msra.mxu0 0
      %5579 = vmatprep.mubr.bf16.mxu0 0
      %5580 = vmatmul.mubr.bf16.gmra.mxu0 %v5500
      %v5581 = vpop.f32.mrf.mxu0
      %v5582 = vadd.f32 0.0, %v5581
      %v5583 = vpop.f32.mrf.mxu0
      %v5584 = vpop.f32.mrf.mxu0
      %v5585 = vadd.f32 0.0, %v5584
      %v5586 = vpop.f32.mrf.mxu0
      %5587 = vmatprep.mubr.bf16.mxu0 0
      %5588 = vmatmul.mubr.bf16.gmra.mxu0 %v5503
      %v5589 = vpop.f32.mrf.mxu0
      %v5590 = vadd.f32 0.0, %v5589
      %v5591 = vpop.f32.mrf.mxu0
      %v5592 = vpop.f32.mrf.mxu0
      %v5593 = vadd.f32 0.0, %v5592
      %v5594 = vpop.f32.mrf.mxu0
      %5595 = vmatprep.mubr.bf16.mxu0 0
      %5596 = vmatmul.mubr.bf16.gmra.mxu0 %v5506
      %v5597 = vpop.f32.mrf.mxu0
      %v5598 = vadd.f32 0.0, %v5597
      %v5599 = vpop.f32.mrf.mxu0
      %v5600 = vpop.f32.mrf.mxu0
      %v5601 = vadd.f32 0.0, %v5600
      %v5602 = vpop.f32.mrf.mxu0
      %5603 = vmatprep.mubr.bf16.mxu0 0
      %5604 = vmatmul.mubr.bf16.gmra.mxu0 %v5509
      %v5605 = vpop.f32.mrf.mxu0
      %v5606 = vadd.f32 0.0, %v5605
      %v5607 = vpop.f32.mrf.mxu0
      %v5608 = vpop.f32.mrf.mxu0
      %v5609 = vadd.f32 0.0, %v5608
      %v5610 = vpop.f32.mrf.mxu0
      %5611 = vmatprep.mubr.bf16.mxu0 0
      %5612 = vmatmul.mubr.bf16.gmra.mxu0 %v5512
      %v5613 = vpop.f32.mrf.mxu0
      %v5614 = vadd.f32 0.0, %v5613
      %v5615 = vpop.f32.mrf.mxu0
      %v5616 = vpop.f32.mrf.mxu0
      %v5617 = vadd.f32 0.0, %v5616
      %v5618 = vpop.f32.mrf.mxu0
      %5619 = vmatprep.mubr.bf16.mxu0 0
      %5620 = vmatmul.mubr.bf16.gmra.mxu0 %v5515
      %v5621 = vpop.f32.mrf.mxu0
      %v5622 = vadd.f32 0.0, %v5621
      %v5623 = vpop.f32.mrf.mxu0
      %v5624 = vpop.f32.mrf.mxu0
      %v5625 = vadd.f32 0.0, %v5624
      %v5626 = vpop.f32.mrf.mxu0
      %5627 = vmatprep.mubr.bf16.mxu0 0
      %5628 = vmatmul.mubr.bf16.gmra.mxu0 %v5518
      %v5629 = vpop.f32.mrf.mxu0
      %v5630 = vadd.f32 0.0, %v5629
      %v5631 = vpop.f32.mrf.mxu0
      %v5632 = vpop.f32.mrf.mxu0
      %v5633 = vadd.f32 0.0, %v5632
      %v5634 = vpop.f32.mrf.mxu0
      %5635 = vmatprep.mubr.bf16.mxu0 0
      %5636 = vmatmul.mubr.bf16.gmra.mxu0 %v5521
      %v5637 = vpop.f32.mrf.mxu0
      %v5638 = vadd.f32 0.0, %v5637
      %v5639 = vpop.f32.mrf.mxu0
      %v5640 = vpop.f32.mrf.mxu0
      %v5641 = vadd.f32 0.0, %v5640
      %v5642 = vpop.f32.mrf.mxu0
      %5643 = vmatprep.mubr.bf16.mxu0 0
      %5644 = vmatmul.mubr.bf16.gmra.mxu0 %v5524
      %v5645 = vpop.f32.mrf.mxu0
      %v5646 = vadd.f32 0.0, %v5645
      %v5647 = vpop.f32.mrf.mxu0
      %v5648 = vpop.f32.mrf.mxu0
      %v5649 = vadd.f32 0.0, %v5648
      %v5650 = vpop.f32.mrf.mxu0
      %5651 = vmatprep.mubr.bf16.mxu0 0
      %5652 = vmatmul.mubr.bf16.gmra.mxu0 %v5527
      %v5653 = vpop.f32.mrf.mxu0
      %v5654 = vadd.f32 0.0, %v5653
      %v5655 = vpop.f32.mrf.mxu0
      %v5656 = vpop.f32.mrf.mxu0
      %v5657 = vadd.f32 0.0, %v5656
      %v5658 = vpop.f32.mrf.mxu0
      %5659 = vmatprep.mubr.bf16.mxu0 0
      %5660 = vmatmul.mubr.bf16.gmra.mxu0 %v5530
      %v5661 = vpop.f32.mrf.mxu0
      %v5662 = vadd.f32 0.0, %v5661
      %v5663 = vpop.f32.mrf.mxu0
      %v5664 = vpop.f32.mrf.mxu0
      %v5665 = vadd.f32 0.0, %v5664
      %v5666 = vpop.f32.mrf.mxu0
      %5667 = vmatprep.mubr.bf16.mxu0 0
      %5668 = vmatmul.mubr.bf16.gmra.mxu0 %v5533
      %v5669 = vpop.f32.mrf.mxu0
      %v5670 = vadd.f32 0.0, %v5669
      %v5671 = vpop.f32.mrf.mxu0
      %v5672 = vpop.f32.mrf.mxu0
      %v5673 = vadd.f32 0.0, %v5672
      %v5674 = vpop.f32.mrf.mxu0
      %5675 = vmatprep.mubr.bf16.mxu0 0
      %5676 = vmatmul.mubr.bf16.gmra.mxu0 %v5536
      %v5677 = vpop.f32.mrf.mxu0
      %v5678 = vadd.f32 0.0, %v5677
      %v5679 = vpop.f32.mrf.mxu0
      %v5680 = vpop.f32.mrf.mxu0
      %v5681 = vadd.f32 0.0, %v5680
      %v5682 = vpop.f32.mrf.mxu0
      %5683 = vmatprep.mubr.bf16.mxu0 0
      %5684 = vmatmul.mubr.bf16.gmra.mxu0 %v5539
      %v5685 = vpop.f32.mrf.mxu0
      %v5686 = vadd.f32 0.0, %v5685
      %v5687 = vpop.f32.mrf.mxu0
      %v5688 = vpop.f32.mrf.mxu0
      %v5689 = vadd.f32 0.0, %v5688
      %v5690 = vpop.f32.mrf.mxu0
      %5691 = vmatprep.mubr.bf16.mxu0 0
      %5692 = vmatmul.mubr.bf16.gmra.mxu0 %v5542
      %v5693 = vpop.f32.mrf.mxu0
      %v5694 = vadd.f32 0.0, %v5693
      %v5695 = vpop.f32.mrf.mxu0
      %v5696 = vpop.f32.mrf.mxu0
      %v5697 = vadd.f32 0.0, %v5696
      %v5698 = vpop.f32.mrf.mxu0
      %5699 = vmatprep.mubr.bf16.mxu0 0
      %5700 = vmatmul.mubr.bf16.gmra.mxu0 %v5545
      %v5701 = vpop.f32.mrf.mxu0
      %v5702 = vadd.f32 0.0, %v5701
      %v5703 = vpop.f32.mrf.mxu0
      %v5704 = vpop.f32.mrf.mxu0
      %v5705 = vadd.f32 0.0, %v5704
      %v5706 = vpop.f32.mrf.mxu0
      %5707 = vdwg.mxu0
      %v5708 = vadd.f32 %v5226, %v5582
      %v5709 = vadd.f32 %v5227, %v5585
      %v5710 = vadd.f32 %v5228, %v5590
      %v5711 = vadd.f32 %v5229, %v5593
      %v5712 = vadd.f32 %v5230, %v5598
      %v5713 = vadd.f32 %v5231, %v5601
      %v5714 = vadd.f32 %v5232, %v5606
      %v5715 = vadd.f32 %v5233, %v5609
      %v5716 = vadd.f32 %v5234, %v5614
      %v5717 = vadd.f32 %v5235, %v5617
      %v5718 = vadd.f32 %v5236, %v5622
      %v5719 = vadd.f32 %v5237, %v5625
      %v5720 = vadd.f32 %v5238, %v5630
      %v5721 = vadd.f32 %v5239, %v5633
      %v5722 = vadd.f32 %v5240, %v5638
      %v5723 = vadd.f32 %v5241, %v5641
      %v5724 = vadd.f32 %v5242, %v5646
      %v5725 = vadd.f32 %v5243, %v5649
      %v5726 = vadd.f32 %v5244, %v5654
      %v5727 = vadd.f32 %v5245, %v5657
      %v5728 = vadd.f32 %v5246, %v5662
      %v5729 = vadd.f32 %v5247, %v5665
      %v5730 = vadd.f32 %v5248, %v5670
      %v5731 = vadd.f32 %v5249, %v5673
      %v5732 = vadd.f32 %v5250, %v5678
      %v5733 = vadd.f32 %v5251, %v5681
      %v5734 = vadd.f32 %v5252, %v5686
      %v5735 = vadd.f32 %v5253, %v5689
      %v5736 = vadd.f32 %v5254, %v5694
      %v5737 = vadd.f32 %v5255, %v5697
      %v5738 = vadd.f32 %v5256, %v5702
      %v5739 = vadd.f32 %v5257, %v5705
      %v5740 = vld [vmem:[%s2] sm:$0x1]
      %v5742 = vlaneseq
      %v5743 = vshrl.u32 %v5742, 7
      %v5744 = vsub.s32 0, %v5743
      %v5745 = vrot.slane %v5740, %v5744
      %v5747 = vadd.f32 %v5708, %v5745
      %v5748 = vadd.f32 %v5709, %v5745
      %v5749 = vadd.f32 %v5710, %v5745
      %v5750 = vadd.f32 %v5711, %v5745
      %v5751 = vadd.f32 %v5712, %v5745
      %v5752 = vadd.f32 %v5713, %v5745
      %v5753 = vadd.f32 %v5714, %v5745
      %v5754 = vadd.f32 %v5715, %v5745
      %v5755 = vadd.f32 %v5716, %v5745
      %v5756 = vadd.f32 %v5717, %v5745
      %v5757 = vadd.f32 %v5718, %v5745
      %v5758 = vadd.f32 %v5719, %v5745
      %v5759 = vadd.f32 %v5720, %v5745
      %v5760 = vadd.f32 %v5721, %v5745
      %v5761 = vadd.f32 %v5722, %v5745
      %v5762 = vadd.f32 %v5723, %v5745
      %v5763 = vadd.f32 %v5724, %v5745
      %v5764 = vadd.f32 %v5725, %v5745
      %v5765 = vadd.f32 %v5726, %v5745
      %v5766 = vadd.f32 %v5727, %v5745
      %v5767 = vadd.f32 %v5728, %v5745
      %v5768 = vadd.f32 %v5729, %v5745
      %v5769 = vadd.f32 %v5730, %v5745
      %v5770 = vadd.f32 %v5731, %v5745
      %v5771 = vadd.f32 %v5732, %v5745
      %v5772 = vadd.f32 %v5733, %v5745
      %v5773 = vadd.f32 %v5734, %v5745
      %v5774 = vadd.f32 %v5735, %v5745
      %v5775 = vadd.f32 %v5736, %v5745
      %v5776 = vadd.f32 %v5737, %v5745
      %v5777 = vadd.f32 %v5738, %v5745
      %v5778 = vadd.f32 %v5739, %v5745
      %v5779 = vld [vmem:[%s3] sm:$0x1]
      %v5780 = vld [vmem:[%s4] sm:$0x1]
      %v5781 = vld [vmem:[%s5] sm:$0xff]
      %v5782 = vld [vmem:[%s5 + $0x8] sm:$0xff]
      %v5783 = vld [vmem:[%s5 + $0x10] sm:$0xff]
      %v5784 = vld [vmem:[%s5 + $0x18] sm:$0xff]
      %v5785 = vld [vmem:[%s5 + $0x20] sm:$0xff]
      %v5786 = vld [vmem:[%s5 + $0x28] sm:$0xff]
      %v5787 = vld [vmem:[%s5 + $0x30] sm:$0xff]
      %v5788 = vld [vmem:[%s5 + $0x38] sm:$0xff]
      %v5789 = vld [vmem:[%s5 + $0x40] sm:$0xff]
      %v5790 = vld [vmem:[%s5 + $0x48] sm:$0xff]
      %v5791 = vld [vmem:[%s5 + $0x50] sm:$0xff]
      %v5792 = vld [vmem:[%s5 + $0x58] sm:$0xff]
      %v5793 = vld [vmem:[%s5 + $0x60] sm:$0xff]
      %v5794 = vld [vmem:[%s5 + $0x68] sm:$0xff]
      %v5795 = vld [vmem:[%s5 + $0x70] sm:$0xff]
      %v5796 = vld [vmem:[%s5 + $0x78] sm:$0xff]
      %v5797 = vadd.f32 %v5747, %v5748
      %v5798 = vadd.f32 %v5797, %v5749
      %v5799 = vadd.f32 %v5798, %v5750
      %v5800 = vadd.f32 %v5799, %v5751
      %v5801 = vadd.f32 %v5800, %v5752
      %v5802 = vadd.f32 %v5801, %v5753
      %v5803 = vadd.f32 %v5802, %v5754
      %v5804 = vadd.f32 %v5803, %v5755
      %v5805 = vadd.f32 %v5804, %v5756
      %v5806 = vadd.f32 %v5805, %v5757
      %v5807 = vadd.f32 %v5806, %v5758
      %v5808 = vadd.f32 %v5807, %v5759
      %v5809 = vadd.f32 %v5808, %v5760
      %v5810 = vadd.f32 %v5809, %v5761
      %v5811 = vadd.f32 %v5810, %v5762
      %v5812 = vadd.f32 %v5811, %v5763
      %v5813 = vadd.f32 %v5812, %v5764
      %v5814 = vadd.f32 %v5813, %v5765
      %v5815 = vadd.f32 %v5814, %v5766
      %v5816 = vadd.f32 %v5815, %v5767
      %v5817 = vadd.f32 %v5816, %v5768
      %v5818 = vadd.f32 %v5817, %v5769
      %v5819 = vadd.f32 %v5818, %v5770
      %v5820 = vadd.f32 %v5819, %v5771
      %v5821 = vadd.f32 %v5820, %v5772
      %v5822 = vadd.f32 %v5821, %v5773
      %v5823 = vadd.f32 %v5822, %v5774
      %v5824 = vadd.f32 %v5823, %v5775
      %v5825 = vadd.f32 %v5824, %v5776
      %v5826 = vadd.f32 %v5825, %v5777
      %v5827 = vadd.f32 %v5826, %v5778
      %v5828 = vrot.slane %v5827, 4
      %v5829 = vadd.f32 %v5827, %v5828
      %v5830 = vrot.slane %v5829, 2
      %v5831 = vadd.f32 %v5829, %v5830
      %v5832 = vrot.slane %v5831, 1
      %v5833 = vadd.f32 %v5831, %v5832
      %v5834 = vmul.f32 %v5747, %v5747
      %v5835 = vmul.f32 %v5748, %v5748
      %v5836 = vmul.f32 %v5749, %v5749
      %v5837 = vmul.f32 %v5750, %v5750
      %v5838 = vmul.f32 %v5751, %v5751
      %v5839 = vmul.f32 %v5752, %v5752
      %v5840 = vmul.f32 %v5753, %v5753
      %v5841 = vmul.f32 %v5754, %v5754
      %v5842 = vmul.f32 %v5755, %v5755
      %v5843 = vmul.f32 %v5756, %v5756
      %v5844 = vmul.f32 %v5757, %v5757
      %v5845 = vmul.f32 %v5758, %v5758
      %v5846 = vmul.f32 %v5759, %v5759
      %v5847 = vmul.f32 %v5760, %v5760
      %v5848 = vmul.f32 %v5761, %v5761
      %v5849 = vmul.f32 %v5762, %v5762
      %v5850 = vmul.f32 %v5763, %v5763
      %v5851 = vmul.f32 %v5764, %v5764
      %v5852 = vmul.f32 %v5765, %v5765
      %v5853 = vmul.f32 %v5766, %v5766
      %v5854 = vmul.f32 %v5767, %v5767
      %v5855 = vmul.f32 %v5768, %v5768
      %v5856 = vmul.f32 %v5769, %v5769
      %v5857 = vmul.f32 %v5770, %v5770
      %v5858 = vmul.f32 %v5771, %v5771
      %v5859 = vmul.f32 %v5772, %v5772
      %v5860 = vmul.f32 %v5773, %v5773
      %v5861 = vmul.f32 %v5774, %v5774
      %v5862 = vmul.f32 %v5775, %v5775
      %v5863 = vmul.f32 %v5776, %v5776
      %v5864 = vmul.f32 %v5777, %v5777
      %v5865 = vmul.f32 %v5778, %v5778
      %v5866 = vadd.f32 %v5834, %v5835
      %v5867 = vadd.f32 %v5866, %v5836
      %v5868 = vadd.f32 %v5867, %v5837
      %v5869 = vadd.f32 %v5868, %v5838
      %v5870 = vadd.f32 %v5869, %v5839
      %v5871 = vadd.f32 %v5870, %v5840
      %v5872 = vadd.f32 %v5871, %v5841
      %v5873 = vadd.f32 %v5872, %v5842
      %v5874 = vadd.f32 %v5873, %v5843
      %v5875 = vadd.f32 %v5874, %v5844
      %v5876 = vadd.f32 %v5875, %v5845
      %v5877 = vadd.f32 %v5876, %v5846
      %v5878 = vadd.f32 %v5877, %v5847
      %v5879 = vadd.f32 %v5878, %v5848
      %v5880 = vadd.f32 %v5879, %v5849
      %v5881 = vadd.f32 %v5880, %v5850
      %v5882 = vadd.f32 %v5881, %v5851
      %v5883 = vadd.f32 %v5882, %v5852
      %v5884 = vadd.f32 %v5883, %v5853
      %v5885 = vadd.f32 %v5884, %v5854
      %v5886 = vadd.f32 %v5885, %v5855
      %v5887 = vadd.f32 %v5886, %v5856
      %v5888 = vadd.f32 %v5887, %v5857
      %v5889 = vadd.f32 %v5888, %v5858
      %v5890 = vadd.f32 %v5889, %v5859
      %v5891 = vadd.f32 %v5890, %v5860
      %v5892 = vadd.f32 %v5891, %v5861
      %v5893 = vadd.f32 %v5892, %v5862
      %v5894 = vadd.f32 %v5893, %v5863
      %v5895 = vadd.f32 %v5894, %v5864
      %v5896 = vadd.f32 %v5895, %v5865
      %v5897 = vrot.slane %v5896, 4
      %v5898 = vadd.f32 %v5896, %v5897
      %v5899 = vrot.slane %v5898, 2
      %v5900 = vadd.f32 %v5898, %v5899
      %v5901 = vrot.slane %v5900, 1
      %v5902 = vadd.f32 %v5900, %v5901
      %5903 = vmatprep.subr.mxu0 0.0
      %5904 = vmatpush1.msra.mxu0 %v5796
      %5905 = vmatprep.subr.mxu0 0.0
      %5906 = vmatpush1.msra.mxu0 %v5795
      %5907 = vmatprep.subr.mxu0 0.0
      %5908 = vmatpush1.msra.mxu0 %v5794
      %5909 = vmatprep.subr.mxu0 0.0
      %5910 = vmatpush1.msra.mxu0 %v5793
      %5911 = vmatprep.subr.mxu0 0.0
      %5912 = vmatpush1.msra.mxu0 %v5792
      %5913 = vmatprep.subr.mxu0 0.0
      %5914 = vmatpush1.msra.mxu0 %v5791
      %5915 = vmatprep.subr.mxu0 0.0
      %5916 = vmatpush1.msra.mxu0 %v5790
      %5917 = vmatprep.subr.mxu0 0.0
      %5918 = vmatpush1.msra.mxu0 %v5789
      %5919 = vmatprep.subr.mxu0 0.0
      %5920 = vmatpush1.msra.mxu0 %v5788
      %5921 = vmatprep.subr.mxu0 0.0
      %5922 = vmatpush1.msra.mxu0 %v5787
      %5923 = vmatprep.subr.mxu0 0.0
      %5924 = vmatpush1.msra.mxu0 %v5786
      %5925 = vmatprep.subr.mxu0 0.0
      %5926 = vmatpush1.msra.mxu0 %v5785
      %5927 = vmatprep.subr.mxu0 0.0
      %5928 = vmatpush1.msra.mxu0 %v5784
      %5929 = vmatprep.subr.mxu0 0.0
      %5930 = vmatpush1.msra.mxu0 %v5783
      %5931 = vmatprep.subr.mxu0 0.0
      %5932 = vmatpush1.msra.mxu0 %v5782
      %5933 = vmatprep.subr.mxu0 0.0
      %5934 = vmatpush1.msra.mxu0 %v5781
      %5935 = vmatprep.subr.mxu0 0.0
      %5936 = vmatpush2.msra.mxu0 0.0
      %5937 = vmatprep.subr.mxu0 0.0
      %5938 = vmatpush2.msra.mxu0 0.0
      %5939 = vmatprep.subr.mxu0 0.0
      %5940 = vmatpush2.msra.mxu0 0.0
      %5941 = vmatprep.subr.mxu0 0.0
      %5942 = vmatpush2.msra.mxu0 0.0
      %5943 = vmatprep.subr.mxu0 0.0
      %5944 = vmatpush2.msra.mxu0 0.0
      %5945 = vmatprep.subr.mxu0 0.0
      %5946 = vmatpush2.msra.mxu0 0.0
      %5947 = vmatprep.subr.mxu0 0.0
      %5948 = vmatpush2.msra.mxu0 0.0
      %5949 = vmatprep.subr.mxu0 0.0
      %5950 = vmatpush2.msra.mxu0 0.0
      %5951 = vmatprep.subr.mxu0 0.0
      %5952 = vmatpush2.msra.mxu0 0.0
      %5953 = vmatprep.subr.mxu0 0.0
      %5954 = vmatpush2.msra.mxu0 0.0
      %5955 = vmatprep.subr.mxu0 0.0
      %5956 = vmatpush2.msra.mxu0 0.0
      %5957 = vmatprep.subr.mxu0 0.0
      %5958 = vmatpush2.msra.mxu0 0.0
      %5959 = vmatprep.subr.mxu0 0.0
      %5960 = vmatpush2.msra.mxu0 0.0
      %5961 = vmatprep.subr.mxu0 0.0
      %5962 = vmatpush2.msra.mxu0 0.0
      %5963 = vmatprep.subr.mxu0 0.0
      %5964 = vmatpush2.msra.mxu0 0.0
      %5965 = vmatprep.subr.mxu0 0.0
      %5966 = vmatpush2.msra.mxu0 0.0
      %5967 = vmatprep.mubr.f32.mxu0 0.0
      %5968 = vmatmul.mubr.f32.gmra.mxu0 %v5833
      %v5969 = vpop.f32.mrf.mxu0
      %v5970 = vadd.f32 0.0, %v5969
      %v5971 = vpop.f32.mrf.mxu0
      %5972 = vdwg.mxu0
      %5973 = vmatprep.subr.mxu0 0.0
      %5974 = vmatpush1.msra.mxu0 %v5796
      %5975 = vmatprep.subr.mxu0 0.0
      %5976 = vmatpush1.msra.mxu0 %v5795
      %5977 = vmatprep.subr.mxu0 0.0
      %5978 = vmatpush1.msra.mxu0 %v5794
      %5979 = vmatprep.subr.mxu0 0.0
      %5980 = vmatpush1.msra.mxu0 %v5793
      %5981 = vmatprep.subr.mxu0 0.0
      %5982 = vmatpush1.msra.mxu0 %v5792
      %5983 = vmatprep.subr.mxu0 0.0
      %5984 = vmatpush1.msra.mxu0 %v5791
      %5985 = vmatprep.subr.mxu0 0.0
      %5986 = vmatpush1.msra.mxu0 %v5790
      %5987 = vmatprep.subr.mxu0 0.0
      %5988 = vmatpush1.msra.mxu0 %v5789
      %5989 = vmatprep.subr.mxu0 0.0
      %5990 = vmatpush1.msra.mxu0 %v5788
      %5991 = vmatprep.subr.mxu0 0.0
      %5992 = vmatpush1.msra.mxu0 %v5787
      %5993 = vmatprep.subr.mxu0 0.0
      %5994 = vmatpush1.msra.mxu0 %v5786
      %5995 = vmatprep.subr.mxu0 0.0
      %5996 = vmatpush1.msra.mxu0 %v5785
      %5997 = vmatprep.subr.mxu0 0.0
      %5998 = vmatpush1.msra.mxu0 %v5784
      %5999 = vmatprep.subr.mxu0 0.0
      %6000 = vmatpush1.msra.mxu0 %v5783
      %6001 = vmatprep.subr.mxu0 0.0
      %6002 = vmatpush1.msra.mxu0 %v5782
      %6003 = vmatprep.subr.mxu0 0.0
      %6004 = vmatpush1.msra.mxu0 %v5781
      %6005 = vmatprep.subr.mxu0 0.0
      %6006 = vmatpush2.msra.mxu0 0.0
      %6007 = vmatprep.subr.mxu0 0.0
      %6008 = vmatpush2.msra.mxu0 0.0
      %6009 = vmatprep.subr.mxu0 0.0
      %6010 = vmatpush2.msra.mxu0 0.0
      %6011 = vmatprep.subr.mxu0 0.0
      %6012 = vmatpush2.msra.mxu0 0.0
      %6013 = vmatprep.subr.mxu0 0.0
      %6014 = vmatpush2.msra.mxu0 0.0
      %6015 = vmatprep.subr.mxu0 0.0
      %6016 = vmatpush2.msra.mxu0 0.0
      %6017 = vmatprep.subr.mxu0 0.0
      %6018 = vmatpush2.msra.mxu0 0.0
      %6019 = vmatprep.subr.mxu0 0.0
      %6020 = vmatpush2.msra.mxu0 0.0
      %6021 = vmatprep.subr.mxu0 0.0
      %6022 = vmatpush2.msra.mxu0 0.0
      %6023 = vmatprep.subr.mxu0 0.0
      %6024 = vmatpush2.msra.mxu0 0.0
      %6025 = vmatprep.subr.mxu0 0.0
      %6026 = vmatpush2.msra.mxu0 0.0
      %6027 = vmatprep.subr.mxu0 0.0
      %6028 = vmatpush2.msra.mxu0 0.0
      %6029 = vmatprep.subr.mxu0 0.0
      %6030 = vmatpush2.msra.mxu0 0.0
      %6031 = vmatprep.subr.mxu0 0.0
      %6032 = vmatpush2.msra.mxu0 0.0
      %6033 = vmatprep.subr.mxu0 0.0
      %6034 = vmatpush2.msra.mxu0 0.0
      %6035 = vmatprep.subr.mxu0 0.0
      %6036 = vmatpush2.msra.mxu0 0.0
      %6037 = vmatprep.mubr.f32.mxu0 0.0
      %6038 = vmatmul.mubr.f32.gmra.mxu0 %v5902
      %v6039 = vpop.f32.mrf.mxu0
      %v6040 = vadd.f32 0.0, %v6039
      %v6041 = vpop.f32.mrf.mxu0
      %6042 = vdwg.mxu0
      %v6043 = vmul.f32 %v5970, %v5970
      %v6044 = vsub.f32 %v6040, %v6043
      %v6045 = vmax.f32 %v6044, 0.0
      %v6046 = vadd.f32 %v6045, 1e-05
      %v6047 = vrsqrt.pop %v6046
      %v6048 = vlaneseq
      %v6049 = vshrl.u32 %v6048, 7
      %v6050 = vsub.s32 0, %v6049
      %v6051 = vrot.slane %v5970, %v6050
      %v6052 = vsub.f32 %v5747, %v6051
      %v6053 = vsub.f32 %v5748, %v6051
      %v6054 = vsub.f32 %v5749, %v6051
      %v6055 = vsub.f32 %v5750, %v6051
      %v6056 = vsub.f32 %v5751, %v6051
      %v6057 = vsub.f32 %v5752, %v6051
      %v6058 = vsub.f32 %v5753, %v6051
      %v6059 = vsub.f32 %v5754, %v6051
      %v6060 = vsub.f32 %v5755, %v6051
      %v6061 = vsub.f32 %v5756, %v6051
      %v6062 = vsub.f32 %v5757, %v6051
      %v6063 = vsub.f32 %v5758, %v6051
      %v6064 = vsub.f32 %v5759, %v6051
      %v6065 = vsub.f32 %v5760, %v6051
      %v6066 = vsub.f32 %v5761, %v6051
      %v6067 = vsub.f32 %v5762, %v6051
      %v6068 = vsub.f32 %v5763, %v6051
      %v6069 = vsub.f32 %v5764, %v6051
      %v6070 = vsub.f32 %v5765, %v6051
      %v6071 = vsub.f32 %v5766, %v6051
      %v6072 = vsub.f32 %v5767, %v6051
      %v6073 = vsub.f32 %v5768, %v6051
      %v6074 = vsub.f32 %v5769, %v6051
      %v6075 = vsub.f32 %v5770, %v6051
      %v6076 = vsub.f32 %v5771, %v6051
      %v6077 = vsub.f32 %v5772, %v6051
      %v6078 = vsub.f32 %v5773, %v6051
      %v6079 = vsub.f32 %v5774, %v6051
      %v6080 = vsub.f32 %v5775, %v6051
      %v6081 = vsub.f32 %v5776, %v6051
      %v6082 = vsub.f32 %v5777, %v6051
      %v6083 = vsub.f32 %v5778, %v6051
      %v6084 = vmul.f32 %v6047, %v5779
      %v6085 = vlaneseq
      %v6086 = vshrl.u32 %v6085, 7
      %v6087 = vsub.s32 0, %v6086
      %v6088 = vrot.slane %v6084, %v6087
      %v6089 = vmul.f32 %v6052, %v6088
      %v6090 = vmul.f32 %v6053, %v6088
      %v6091 = vmul.f32 %v6054, %v6088
      %v6092 = vmul.f32 %v6055, %v6088
      %v6093 = vmul.f32 %v6056, %v6088
      %v6094 = vmul.f32 %v6057, %v6088
      %v6095 = vmul.f32 %v6058, %v6088
      %v6096 = vmul.f32 %v6059, %v6088
      %v6097 = vmul.f32 %v6060, %v6088
      %v6098 = vmul.f32 %v6061, %v6088
      %v6099 = vmul.f32 %v6062, %v6088
      %v6100 = vmul.f32 %v6063, %v6088
      %v6101 = vmul.f32 %v6064, %v6088
      %v6102 = vmul.f32 %v6065, %v6088
      %v6103 = vmul.f32 %v6066, %v6088
      %v6104 = vmul.f32 %v6067, %v6088
      %v6105 = vmul.f32 %v6068, %v6088
      %v6106 = vmul.f32 %v6069, %v6088
      %v6107 = vmul.f32 %v6070, %v6088
      %v6108 = vmul.f32 %v6071, %v6088
      %v6109 = vmul.f32 %v6072, %v6088
      %v6110 = vmul.f32 %v6073, %v6088
      %v6111 = vmul.f32 %v6074, %v6088
      %v6112 = vmul.f32 %v6075, %v6088
      %v6113 = vmul.f32 %v6076, %v6088
      %v6114 = vmul.f32 %v6077, %v6088
      %v6115 = vmul.f32 %v6078, %v6088
      %v6116 = vmul.f32 %v6079, %v6088
      %v6117 = vmul.f32 %v6080, %v6088
      %v6118 = vmul.f32 %v6081, %v6088
      %v6119 = vmul.f32 %v6082, %v6088
      %v6120 = vmul.f32 %v6083, %v6088
      %v6122 = vlaneseq
      %v6123 = vshrl.u32 %v6122, 7
      %v6124 = vsub.s32 0, %v6123
      %v6125 = vrot.slane %v5780, %v6124
      %v6127 = vadd.f32 %v6089, %v6125
      %v6128 = vadd.f32 %v6090, %v6125
      %v6129 = vadd.f32 %v6091, %v6125
      %v6130 = vadd.f32 %v6092, %v6125
      %v6131 = vadd.f32 %v6093, %v6125
      %v6132 = vadd.f32 %v6094, %v6125
      %v6133 = vadd.f32 %v6095, %v6125
      %v6134 = vadd.f32 %v6096, %v6125
      %v6135 = vadd.f32 %v6097, %v6125
      %v6136 = vadd.f32 %v6098, %v6125
      %v6137 = vadd.f32 %v6099, %v6125
      %v6138 = vadd.f32 %v6100, %v6125
      %v6139 = vadd.f32 %v6101, %v6125
      %v6140 = vadd.f32 %v6102, %v6125
      %v6141 = vadd.f32 %v6103, %v6125
      %v6142 = vadd.f32 %v6104, %v6125
      %v6143 = vadd.f32 %v6105, %v6125
      %v6144 = vadd.f32 %v6106, %v6125
      %v6145 = vadd.f32 %v6107, %v6125
      %v6146 = vadd.f32 %v6108, %v6125
      %v6147 = vadd.f32 %v6109, %v6125
      %v6148 = vadd.f32 %v6110, %v6125
      %v6149 = vadd.f32 %v6111, %v6125
      %v6150 = vadd.f32 %v6112, %v6125
      %v6151 = vadd.f32 %v6113, %v6125
      %v6152 = vadd.f32 %v6114, %v6125
      %v6153 = vadd.f32 %v6115, %v6125
      %v6154 = vadd.f32 %v6116, %v6125
      %v6155 = vadd.f32 %v6117, %v6125
      %v6156 = vadd.f32 %v6118, %v6125
      %v6157 = vadd.f32 %v6119, %v6125
      %v6158 = vadd.f32 %v6120, %v6125
      %vm6159 = vcmp.ge.f32.partialorder %v6127, 0.0
      %vm6160 = vcmp.ge.f32.partialorder %v6128, 0.0
      %vm6161 = vcmp.ge.f32.partialorder %v6129, 0.0
      %vm6162 = vcmp.ge.f32.partialorder %v6130, 0.0
      %vm6163 = vcmp.ge.f32.partialorder %v6131, 0.0
      %vm6164 = vcmp.ge.f32.partialorder %v6132, 0.0
      %vm6165 = vcmp.ge.f32.partialorder %v6133, 0.0
      %vm6166 = vcmp.ge.f32.partialorder %v6134, 0.0
      %vm6167 = vcmp.ge.f32.partialorder %v6135, 0.0
      %vm6168 = vcmp.ge.f32.partialorder %v6136, 0.0
      %vm6169 = vcmp.ge.f32.partialorder %v6137, 0.0
      %vm6170 = vcmp.ge.f32.partialorder %v6138, 0.0
      %vm6171 = vcmp.ge.f32.partialorder %v6139, 0.0
      %vm6172 = vcmp.ge.f32.partialorder %v6140, 0.0
      %vm6173 = vcmp.ge.f32.partialorder %v6141, 0.0
      %vm6174 = vcmp.ge.f32.partialorder %v6142, 0.0
      %vm6175 = vcmp.ge.f32.partialorder %v6143, 0.0
      %vm6176 = vcmp.ge.f32.partialorder %v6144, 0.0
      %vm6177 = vcmp.ge.f32.partialorder %v6145, 0.0
      %vm6178 = vcmp.ge.f32.partialorder %v6146, 0.0
      %vm6179 = vcmp.ge.f32.partialorder %v6147, 0.0
      %vm6180 = vcmp.ge.f32.partialorder %v6148, 0.0
      %vm6181 = vcmp.ge.f32.partialorder %v6149, 0.0
      %vm6182 = vcmp.ge.f32.partialorder %v6150, 0.0
      %vm6183 = vcmp.ge.f32.partialorder %v6151, 0.0
      %vm6184 = vcmp.ge.f32.partialorder %v6152, 0.0
      %vm6185 = vcmp.ge.f32.partialorder %v6153, 0.0
      %vm6186 = vcmp.ge.f32.partialorder %v6154, 0.0
      %vm6187 = vcmp.ge.f32.partialorder %v6155, 0.0
      %vm6188 = vcmp.ge.f32.partialorder %v6156, 0.0
      %vm6189 = vcmp.ge.f32.partialorder %v6157, 0.0
      %vm6190 = vcmp.ge.f32.partialorder %v6158, 0.0
      %v6191 = vmul.f32 %v6127, 0.2
      %v6192 = vmul.f32 %v6128, 0.2
      %v6193 = vmul.f32 %v6129, 0.2
      %v6194 = vmul.f32 %v6130, 0.2
      %v6195 = vmul.f32 %v6131, 0.2
      %v6196 = vmul.f32 %v6132, 0.2
      %v6197 = vmul.f32 %v6133, 0.2
      %v6198 = vmul.f32 %v6134, 0.2
      %v6199 = vmul.f32 %v6135, 0.2
      %v6200 = vmul.f32 %v6136, 0.2
      %v6201 = vmul.f32 %v6137, 0.2
      %v6202 = vmul.f32 %v6138, 0.2
      %v6203 = vmul.f32 %v6139, 0.2
      %v6204 = vmul.f32 %v6140, 0.2
      %v6205 = vmul.f32 %v6141, 0.2
      %v6206 = vmul.f32 %v6142, 0.2
      %v6207 = vmul.f32 %v6143, 0.2
      %v6208 = vmul.f32 %v6144, 0.2
      %v6209 = vmul.f32 %v6145, 0.2
      %v6210 = vmul.f32 %v6146, 0.2
      %v6211 = vmul.f32 %v6147, 0.2
      %v6212 = vmul.f32 %v6148, 0.2
      %v6213 = vmul.f32 %v6149, 0.2
      %v6214 = vmul.f32 %v6150, 0.2
      %v6215 = vmul.f32 %v6151, 0.2
      %v6216 = vmul.f32 %v6152, 0.2
      %v6217 = vmul.f32 %v6153, 0.2
      %v6218 = vmul.f32 %v6154, 0.2
      %v6219 = vmul.f32 %v6155, 0.2
      %v6220 = vmul.f32 %v6156, 0.2
      %v6221 = vmul.f32 %v6157, 0.2
      %v6222 = vmul.f32 %v6158, 0.2
      %v6223 = vsel %vm6159, %v6127, %v6191
      %v6224 = vsel %vm6160, %v6128, %v6192
      %v6225 = vsel %vm6161, %v6129, %v6193
      %v6226 = vsel %vm6162, %v6130, %v6194
      %v6227 = vsel %vm6163, %v6131, %v6195
      %v6228 = vsel %vm6164, %v6132, %v6196
      %v6229 = vsel %vm6165, %v6133, %v6197
      %v6230 = vsel %vm6166, %v6134, %v6198
      %v6231 = vsel %vm6167, %v6135, %v6199
      %v6232 = vsel %vm6168, %v6136, %v6200
      %v6233 = vsel %vm6169, %v6137, %v6201
      %v6234 = vsel %vm6170, %v6138, %v6202
      %v6235 = vsel %vm6171, %v6139, %v6203
      %v6236 = vsel %vm6172, %v6140, %v6204
      %v6237 = vsel %vm6173, %v6141, %v6205
      %v6238 = vsel %vm6174, %v6142, %v6206
      %v6239 = vsel %vm6175, %v6143, %v6207
      %v6240 = vsel %vm6176, %v6144, %v6208
      %v6241 = vsel %vm6177, %v6145, %v6209
      %v6242 = vsel %vm6178, %v6146, %v6210
      %v6243 = vsel %vm6179, %v6147, %v6211
      %v6244 = vsel %vm6180, %v6148, %v6212
      %v6245 = vsel %vm6181, %v6149, %v6213
      %v6246 = vsel %vm6182, %v6150, %v6214
      %v6247 = vsel %vm6183, %v6151, %v6215
      %v6248 = vsel %vm6184, %v6152, %v6216
      %v6249 = vsel %vm6185, %v6153, %v6217
      %v6250 = vsel %vm6186, %v6154, %v6218
      %v6251 = vsel %vm6187, %v6155, %v6219
      %v6252 = vsel %vm6188, %v6156, %v6220
      %v6253 = vsel %vm6189, %v6157, %v6221
      %v6254 = vsel %vm6190, %v6158, %v6222
      %6255 = vst [vmem:[#allocation3] sm:$0xf] 0
      %6256 = vst [vmem:[#allocation3 + $0x4] sm:$0xf] 0
      %6257 = vst [vmem:[#allocation3 + $0x8] sm:$0x1] 0
      %s6258 = scalar_lea.vmem [#allocation3], 204
      %6259 = vst [vmem:[%s6258] sm:$0xf] 0
      %6260 = vst [vmem:[%s6258 + $0x4] sm:$0xf] 0
      %6261 = vst [vmem:[%s6258 + $0x8] sm:$0x1] 0
      %vm6262 = vcmask 1040384
      %vm6263 = vmand %vm6262, %vm398
      %v6264 = vld [vmem:[#allocation3] sm:$0x1]
      %v6265 = vsel %vm6263, 0, %v6264
      %6266 = vst [vmem:[#allocation3] sm:$0x1] %v6265
      %v6267 = vld [vmem:[#allocation3 + $0xc] sm:$0x1]
      %v6268 = vsel %vm6263, 0, %v6267
      %6269 = vst [vmem:[#allocation3 + $0xc] sm:$0x1] %v6268
      %v6270 = vld [vmem:[#allocation3 + $0x18] sm:$0x1]
      %v6271 = vsel %vm6263, 0, %v6270
      %6272 = vst [vmem:[#allocation3 + $0x18] sm:$0x1] %v6271
      %v6273 = vld [vmem:[#allocation3 + $0x24] sm:$0x1]
      %v6274 = vsel %vm6263, 0, %v6273
      %6275 = vst [vmem:[#allocation3 + $0x24] sm:$0x1] %v6274
      %v6276 = vld [vmem:[#allocation3 + $0x30] sm:$0x1]
      %v6277 = vsel %vm6263, 0, %v6276
      %6278 = vst [vmem:[#allocation3 + $0x30] sm:$0x1] %v6277
      %v6279 = vld [vmem:[#allocation3 + $0x3c] sm:$0x1]
      %v6280 = vsel %vm6263, 0, %v6279
      %6281 = vst [vmem:[#allocation3 + $0x3c] sm:$0x1] %v6280
      %v6282 = vld [vmem:[#allocation3 + $0x48] sm:$0x1]
      %v6283 = vsel %vm6263, 0, %v6282
      %6284 = vst [vmem:[#allocation3 + $0x48] sm:$0x1] %v6283
      %v6285 = vld [vmem:[#allocation3 + $0x54] sm:$0x1]
      %v6286 = vsel %vm6263, 0, %v6285
      %6287 = vst [vmem:[#allocation3 + $0x54] sm:$0x1] %v6286
      %v6288 = vld [vmem:[#allocation3 + $0x60] sm:$0x1]
      %v6289 = vsel %vm6263, 0, %v6288
      %6290 = vst [vmem:[#allocation3 + $0x60] sm:$0x1] %v6289
      %v6291 = vld [vmem:[#allocation3 + $0x6c] sm:$0x1]
      %v6292 = vsel %vm6263, 0, %v6291
      %6293 = vst [vmem:[#allocation3 + $0x6c] sm:$0x1] %v6292
      %v6294 = vld [vmem:[#allocation3 + $0x78] sm:$0x1]
      %v6295 = vsel %vm6263, 0, %v6294
      %6296 = vst [vmem:[#allocation3 + $0x78] sm:$0x1] %v6295
      %v6297 = vld [vmem:[#allocation3 + $0x84] sm:$0x1]
      %v6298 = vsel %vm6263, 0, %v6297
      %6299 = vst [vmem:[#allocation3 + $0x84] sm:$0x1] %v6298
      %v6300 = vld [vmem:[#allocation3 + $0x90] sm:$0x1]
      %v6301 = vsel %vm6263, 0, %v6300
      %6302 = vst [vmem:[#allocation3 + $0x90] sm:$0x1] %v6301
      %v6303 = vld [vmem:[#allocation3 + $0x9c] sm:$0x1]
      %v6304 = vsel %vm6263, 0, %v6303
      %6305 = vst [vmem:[#allocation3 + $0x9c] sm:$0x1] %v6304
      %v6306 = vld [vmem:[#allocation3 + $0xa8] sm:$0x1]
      %v6307 = vsel %vm6263, 0, %v6306
      %6308 = vst [vmem:[#allocation3 + $0xa8] sm:$0x1] %v6307
      %v6309 = vld [vmem:[#allocation3 + $0xb4] sm:$0x1]
      %v6310 = vsel %vm6263, 0, %v6309
      %6311 = vst [vmem:[#allocation3 + $0xb4] sm:$0x1] %v6310
      %v6312 = vld [vmem:[#allocation3 + $0xc0] sm:$0x1]
      %v6313 = vsel %vm6263, 0, %v6312
      %6314 = vst [vmem:[#allocation3 + $0xc0] sm:$0x1] %v6313
      %v6315 = vld [vmem:[#allocation3 + $0xcc] sm:$0x1]
      %v6316 = vsel %vm6263, 0, %v6315
      %6317 = vst [vmem:[#allocation3 + $0xcc] sm:$0x1] %v6316
      %vm6318 = vmand %vm6262, %vm454
      %v6319 = vld [vmem:[#allocation3 + $0x8] sm:$0x1]
      %v6320 = vsel %vm6318, 0, %v6319
      %6321 = vst [vmem:[#allocation3 + $0x8] sm:$0x1] %v6320
      %v6322 = vld [vmem:[#allocation3 + $0x14] sm:$0x1]
      %v6323 = vsel %vm6318, 0, %v6322
      %6324 = vst [vmem:[#allocation3 + $0x14] sm:$0x1] %v6323
      %v6325 = vld [vmem:[#allocation3 + $0x20] sm:$0x1]
      %v6326 = vsel %vm6318, 0, %v6325
      %6327 = vst [vmem:[#allocation3 + $0x20] sm:$0x1] %v6326
      %v6328 = vld [vmem:[#allocation3 + $0x2c] sm:$0x1]
      %v6329 = vsel %vm6318, 0, %v6328
      %6330 = vst [vmem:[#allocation3 + $0x2c] sm:$0x1] %v6329
      %v6331 = vld [vmem:[#allocation3 + $0x38] sm:$0x1]
      %v6332 = vsel %vm6318, 0, %v6331
      %6333 = vst [vmem:[#allocation3 + $0x38] sm:$0x1] %v6332
      %v6334 = vld [vmem:[#allocation3 + $0x44] sm:$0x1]
      %v6335 = vsel %vm6318, 0, %v6334
      %6336 = vst [vmem:[#allocation3 + $0x44] sm:$0x1] %v6335
      %v6337 = vld [vmem:[#allocation3 + $0x50] sm:$0x1]
      %v6338 = vsel %vm6318, 0, %v6337
      %6339 = vst [vmem:[#allocation3 + $0x50] sm:$0x1] %v6338
      %v6340 = vld [vmem:[#allocation3 + $0x5c] sm:$0x1]
      %v6341 = vsel %vm6318, 0, %v6340
      %6342 = vst [vmem:[#allocation3 + $0x5c] sm:$0x1] %v6341
      %v6343 = vld [vmem:[#allocation3 + $0x68] sm:$0x1]
      %v6344 = vsel %vm6318, 0, %v6343
      %6345 = vst [vmem:[#allocation3 + $0x68] sm:$0x1] %v6344
      %v6346 = vld [vmem:[#allocation3 + $0x74] sm:$0x1]
      %v6347 = vsel %vm6318, 0, %v6346
      %6348 = vst [vmem:[#allocation3 + $0x74] sm:$0x1] %v6347
      %v6349 = vld [vmem:[#allocation3 + $0x80] sm:$0x1]
      %v6350 = vsel %vm6318, 0, %v6349
      %6351 = vst [vmem:[#allocation3 + $0x80] sm:$0x1] %v6350
      %v6352 = vld [vmem:[#allocation3 + $0x8c] sm:$0x1]
      %v6353 = vsel %vm6318, 0, %v6352
      %6354 = vst [vmem:[#allocation3 + $0x8c] sm:$0x1] %v6353
      %v6355 = vld [vmem:[#allocation3 + $0x98] sm:$0x1]
      %v6356 = vsel %vm6318, 0, %v6355
      %6357 = vst [vmem:[#allocation3 + $0x98] sm:$0x1] %v6356
      %v6358 = vld [vmem:[#allocation3 + $0xa4] sm:$0x1]
      %v6359 = vsel %vm6318, 0, %v6358
      %6360 = vst [vmem:[#allocation3 + $0xa4] sm:$0x1] %v6359
      %v6361 = vld [vmem:[#allocation3 + $0xb0] sm:$0x1]
      %v6362 = vsel %vm6318, 0, %v6361
      %6363 = vst [vmem:[#allocation3 + $0xb0] sm:$0x1] %v6362
      %v6364 = vld [vmem:[#allocation3 + $0xbc] sm:$0x1]
      %v6365 = vsel %vm6318, 0, %v6364
      %6366 = vst [vmem:[#allocation3 + $0xbc] sm:$0x1] %v6365
      %v6367 = vld [vmem:[#allocation3 + $0xc8] sm:$0x1]
      %v6368 = vsel %vm6318, 0, %v6367
      %6369 = vst [vmem:[#allocation3 + $0xc8] sm:$0x1] %v6368
      %v6370 = vld [vmem:[#allocation3 + $0xd4] sm:$0x1]
      %v6371 = vsel %vm6318, 0, %v6370
      %6372 = vst [vmem:[#allocation3 + $0xd4] sm:$0x1] %v6371
      %v6373 = vpack.c.bf16 %v6224, %v6223
      %v6374 = vpack.c.bf16 %v6226, %v6225
      %v6375 = vpack.c.bf16 %v6228, %v6227
      %v6376 = vpack.c.bf16 %v6230, %v6229
      %v6377 = vpack.c.bf16 %v6232, %v6231
      %v6378 = vpack.c.bf16 %v6234, %v6233
      %v6379 = vpack.c.bf16 %v6236, %v6235
      %v6380 = vpack.c.bf16 %v6238, %v6237
      %v6381 = vpack.c.bf16 %v6240, %v6239
      %v6382 = vpack.c.bf16 %v6242, %v6241
      %v6383 = vpack.c.bf16 %v6244, %v6243
      %v6384 = vpack.c.bf16 %v6246, %v6245
      %v6385 = vpack.c.bf16 %v6248, %v6247
      %v6386 = vpack.c.bf16 %v6250, %v6249
      %v6387 = vpack.c.bf16 %v6252, %v6251
      %v6388 = vpack.c.bf16 %v6254, %v6253
      %v6405 = vunpack.c.l.b16 %v6373
      %v6406 = vunpack.c.h.b16 %v6373
      %v6407 = vunpack.c.l.b16 %v6374
      %v6408 = vunpack.c.h.b16 %v6374
      %v6409 = vunpack.c.l.b16 %v6375
      %v6410 = vunpack.c.h.b16 %v6375
      %v6411 = vunpack.c.l.b16 %v6376
      %v6412 = vunpack.c.h.b16 %v6376
      %v6413 = vunpack.c.l.b16 %v6377
      %v6414 = vunpack.c.h.b16 %v6377
      %v6415 = vunpack.c.l.b16 %v6378
      %v6416 = vunpack.c.h.b16 %v6378
      %v6417 = vunpack.c.l.b16 %v6379
      %v6418 = vunpack.c.h.b16 %v6379
      %v6419 = vunpack.c.l.b16 %v6380
      %v6420 = vunpack.c.h.b16 %v6380
      %v6421 = vunpack.c.l.b16 %v6381
      %v6422 = vunpack.c.h.b16 %v6381
      %v6423 = vunpack.c.l.b16 %v6382
      %v6424 = vunpack.c.h.b16 %v6382
      %v6425 = vunpack.c.l.b16 %v6383
      %v6426 = vunpack.c.h.b16 %v6383
      %v6427 = vunpack.c.l.b16 %v6384
      %v6428 = vunpack.c.h.b16 %v6384
      %v6429 = vunpack.c.l.b16 %v6385
      %v6430 = vunpack.c.h.b16 %v6385
      %v6431 = vunpack.c.l.b16 %v6386
      %v6432 = vunpack.c.h.b16 %v6386
      %v6433 = vunpack.c.l.b16 %v6387
      %v6434 = vunpack.c.h.b16 %v6387
      %v6435 = vunpack.c.l.b16 %v6388
      %v6436 = vunpack.c.h.b16 %v6388
      %v6437 = vpack.c.b16 %v6405, %v6405
      %v6438 = vpack.c.b16 %v6406, %v6406
      %v6439 = vpack.c.b16 %v6407, %v6407
      %v6440 = vpack.c.b16 %v6408, %v6408
      %v6441 = vpack.c.b16 %v6409, %v6409
      %v6442 = vpack.c.b16 %v6410, %v6410
      %v6443 = vpack.c.b16 %v6411, %v6411
      %v6444 = vpack.c.b16 %v6412, %v6412
      %v6445 = vpack.c.b16 %v6413, %v6413
      %v6446 = vpack.c.b16 %v6414, %v6414
      %v6447 = vpack.c.b16 %v6415, %v6415
      %v6448 = vpack.c.b16 %v6416, %v6416
      %v6449 = vpack.c.b16 %v6417, %v6417
      %v6450 = vpack.c.b16 %v6418, %v6418
      %v6451 = vpack.c.b16 %v6419, %v6419
      %v6452 = vpack.c.b16 %v6420, %v6420
      %v6453 = vpack.c.b16 %v6421, %v6421
      %v6454 = vpack.c.b16 %v6422, %v6422
      %v6455 = vpack.c.b16 %v6423, %v6423
      %v6456 = vpack.c.b16 %v6424, %v6424
      %v6457 = vpack.c.b16 %v6425, %v6425
      %v6458 = vpack.c.b16 %v6426, %v6426
      %v6459 = vpack.c.b16 %v6427, %v6427
      %v6460 = vpack.c.b16 %v6428, %v6428
      %v6461 = vpack.c.b16 %v6429, %v6429
      %v6462 = vpack.c.b16 %v6430, %v6430
      %v6463 = vpack.c.b16 %v6431, %v6431
      %v6464 = vpack.c.b16 %v6432, %v6432
      %v6465 = vpack.c.b16 %v6433, %v6433
      %v6466 = vpack.c.b16 %v6434, %v6434
      %v6467 = vpack.c.b16 %v6435, %v6435
      %v6468 = vpack.c.b16 %v6436, %v6436
      %v6470 = vshrl.u32 %v6437, 16
      %v6472 = vrot.slane %v6470, 7
      %v6473 = vshll.u32 %v6437, 16
      %v6475 = vor.u32 %v6472, %v6473
      %v6476 = vrot.slane %v6472, 4
      %v6478 = vshrl.u32 %v6438, 16
      %v6480 = vrot.slane %v6478, 7
      %v6481 = vshll.u32 %v6438, 16
      %v6483 = vor.u32 %v6480, %v6481
      %v6484 = vsel %vm639, %v6476, %v6483
      %v6485 = vrot.slane %v6480, 4
      %v6487 = vshrl.u32 %v6439, 16
      %v6489 = vrot.slane %v6487, 7
      %v6490 = vshll.u32 %v6439, 16
      %v6492 = vor.u32 %v6489, %v6490
      %v6493 = vrot.slane %v6489, 4
      %v6495 = vshrl.u32 %v6440, 16
      %v6497 = vrot.slane %v6495, 7
      %v6498 = vshll.u32 %v6440, 16
      %v6500 = vor.u32 %v6497, %v6498
      %v6501 = vsel %vm639, %v6493, %v6500
      %v6502 = vrot.slane %v6497, 4
      %v6504 = vshrl.u32 %v6441, 16
      %v6506 = vrot.slane %v6504, 7
      %v6507 = vshll.u32 %v6441, 16
      %v6509 = vor.u32 %v6506, %v6507
      %v6510 = vrot.slane %v6506, 4
      %v6512 = vshrl.u32 %v6442, 16
      %v6514 = vrot.slane %v6512, 7
      %v6515 = vshll.u32 %v6442, 16
      %v6517 = vor.u32 %v6514, %v6515
      %v6518 = vsel %vm639, %v6510, %v6517
      %v6519 = vrot.slane %v6514, 4
      %v6521 = vshrl.u32 %v6443, 16
      %v6523 = vrot.slane %v6521, 7
      %v6524 = vshll.u32 %v6443, 16
      %v6526 = vor.u32 %v6523, %v6524
      %v6527 = vrot.slane %v6523, 4
      %v6529 = vshrl.u32 %v6444, 16
      %v6531 = vrot.slane %v6529, 7
      %v6532 = vshll.u32 %v6444, 16
      %v6534 = vor.u32 %v6531, %v6532
      %v6535 = vsel %vm639, %v6527, %v6534
      %v6536 = vrot.slane %v6531, 4
      %v6538 = vshrl.u32 %v6445, 16
      %v6540 = vrot.slane %v6538, 7
      %v6541 = vshll.u32 %v6445, 16
      %v6543 = vor.u32 %v6540, %v6541
      %v6544 = vrot.slane %v6540, 4
      %v6546 = vshrl.u32 %v6446, 16
      %v6548 = vrot.slane %v6546, 7
      %v6549 = vshll.u32 %v6446, 16
      %v6551 = vor.u32 %v6548, %v6549
      %v6552 = vsel %vm639, %v6544, %v6551
      %v6553 = vrot.slane %v6548, 4
      %v6555 = vshrl.u32 %v6447, 16
      %v6557 = vrot.slane %v6555, 7
      %v6558 = vshll.u32 %v6447, 16
      %v6560 = vor.u32 %v6557, %v6558
      %v6561 = vrot.slane %v6557, 4
      %v6563 = vshrl.u32 %v6448, 16
      %v6565 = vrot.slane %v6563, 7
      %v6566 = vshll.u32 %v6448, 16
      %v6568 = vor.u32 %v6565, %v6566
      %v6569 = vsel %vm639, %v6561, %v6568
      %v6570 = vrot.slane %v6565, 4
      %v6572 = vshrl.u32 %v6449, 16
      %v6574 = vrot.slane %v6572, 7
      %v6575 = vshll.u32 %v6449, 16
      %v6577 = vor.u32 %v6574, %v6575
      %v6578 = vrot.slane %v6574, 4
      %v6580 = vshrl.u32 %v6450, 16
      %v6582 = vrot.slane %v6580, 7
      %v6583 = vshll.u32 %v6450, 16
      %v6585 = vor.u32 %v6582, %v6583
      %v6586 = vsel %vm639, %v6578, %v6585
      %v6587 = vrot.slane %v6582, 4
      %v6589 = vshrl.u32 %v6451, 16
      %v6591 = vrot.slane %v6589, 7
      %v6592 = vshll.u32 %v6451, 16
      %v6594 = vor.u32 %v6591, %v6592
      %v6595 = vrot.slane %v6591, 4
      %v6597 = vshrl.u32 %v6452, 16
      %v6599 = vrot.slane %v6597, 7
      %v6600 = vshll.u32 %v6452, 16
      %v6602 = vor.u32 %v6599, %v6600
      %v6603 = vsel %vm639, %v6595, %v6602
      %v6604 = vrot.slane %v6599, 4
      %v6606 = vshrl.u32 %v6453, 16
      %v6608 = vrot.slane %v6606, 7
      %v6609 = vshll.u32 %v6453, 16
      %v6611 = vor.u32 %v6608, %v6609
      %v6612 = vrot.slane %v6608, 4
      %v6614 = vshrl.u32 %v6454, 16
      %v6616 = vrot.slane %v6614, 7
      %v6617 = vshll.u32 %v6454, 16
      %v6619 = vor.u32 %v6616, %v6617
      %v6620 = vsel %vm639, %v6612, %v6619
      %v6621 = vrot.slane %v6616, 4
      %v6623 = vshrl.u32 %v6455, 16
      %v6625 = vrot.slane %v6623, 7
      %v6626 = vshll.u32 %v6455, 16
      %v6628 = vor.u32 %v6625, %v6626
      %v6629 = vrot.slane %v6625, 4
      %v6631 = vshrl.u32 %v6456, 16
      %v6633 = vrot.slane %v6631, 7
      %v6634 = vshll.u32 %v6456, 16
      %v6636 = vor.u32 %v6633, %v6634
      %v6637 = vsel %vm639, %v6629, %v6636
      %v6638 = vrot.slane %v6633, 4
      %v6640 = vshrl.u32 %v6457, 16
      %v6642 = vrot.slane %v6640, 7
      %v6643 = vshll.u32 %v6457, 16
      %v6645 = vor.u32 %v6642, %v6643
      %v6646 = vrot.slane %v6642, 4
      %v6648 = vshrl.u32 %v6458, 16
      %v6650 = vrot.slane %v6648, 7
      %v6651 = vshll.u32 %v6458, 16
      %v6653 = vor.u32 %v6650, %v6651
      %v6654 = vsel %vm639, %v6646, %v6653
      %v6655 = vrot.slane %v6650, 4
      %v6657 = vshrl.u32 %v6459, 16
      %v6659 = vrot.slane %v6657, 7
      %v6660 = vshll.u32 %v6459, 16
      %v6662 = vor.u32 %v6659, %v6660
      %v6663 = vrot.slane %v6659, 4
      %v6665 = vshrl.u32 %v6460, 16
      %v6667 = vrot.slane %v6665, 7
      %v6668 = vshll.u32 %v6460, 16
      %v6670 = vor.u32 %v6667, %v6668
      %v6671 = vsel %vm639, %v6663, %v6670
      %v6672 = vrot.slane %v6667, 4
      %v6674 = vshrl.u32 %v6461, 16
      %v6676 = vrot.slane %v6674, 7
      %v6677 = vshll.u32 %v6461, 16
      %v6679 = vor.u32 %v6676, %v6677
      %v6680 = vrot.slane %v6676, 4
      %v6682 = vshrl.u32 %v6462, 16
      %v6684 = vrot.slane %v6682, 7
      %v6685 = vshll.u32 %v6462, 16
      %v6687 = vor.u32 %v6684, %v6685
      %v6688 = vsel %vm639, %v6680, %v6687
      %v6689 = vrot.slane %v6684, 4
      %v6691 = vshrl.u32 %v6463, 16
      %v6693 = vrot.slane %v6691, 7
      %v6694 = vshll.u32 %v6463, 16
      %v6696 = vor.u32 %v6693, %v6694
      %v6697 = vrot.slane %v6693, 4
      %v6699 = vshrl.u32 %v6464, 16
      %v6701 = vrot.slane %v6699, 7
      %v6702 = vshll.u32 %v6464, 16
      %v6704 = vor.u32 %v6701, %v6702
      %v6705 = vsel %vm639, %v6697, %v6704
      %v6706 = vrot.slane %v6701, 4
      %v6708 = vshrl.u32 %v6465, 16
      %v6710 = vrot.slane %v6708, 7
      %v6711 = vshll.u32 %v6465, 16
      %v6713 = vor.u32 %v6710, %v6711
      %v6714 = vrot.slane %v6710, 4
      %v6716 = vshrl.u32 %v6466, 16
      %v6718 = vrot.slane %v6716, 7
      %v6719 = vshll.u32 %v6466, 16
      %v6721 = vor.u32 %v6718, %v6719
      %v6722 = vsel %vm639, %v6714, %v6721
      %v6723 = vrot.slane %v6718, 4
      %v6725 = vshrl.u32 %v6467, 16
      %v6727 = vrot.slane %v6725, 7
      %v6728 = vshll.u32 %v6467, 16
      %v6730 = vor.u32 %v6727, %v6728
      %v6731 = vrot.slane %v6727, 4
      %v6733 = vshrl.u32 %v6468, 16
      %v6735 = vrot.slane %v6733, 7
      %v6736 = vshll.u32 %v6468, 16
      %v6738 = vor.u32 %v6735, %v6736
      %v6739 = vsel %vm639, %v6731, %v6738
      %v6740 = vrot.slane %v6735, 4
      %s6789 = scalar_lea.vmem [#allocation3], 12
      %vm6790 = vcmask 1043456
      %vm6791 = vmand %vm6790, %vm454
      %v6792 = vld [vmem:[%s6789] sm:$0xf]
      %v6793 = vsel %vm6791, %v6475, %v6792
      %6794 = vst [vmem:[%s6789] sm:$0xf] %v6793
      %6795 = vst [vmem:[%s6789 + $0x4] sm:$0xf] %v6484
      %v6796 = vld [vmem:[%s6789 + $0x8] sm:$0x1]
      %v6797 = vsel %vm6263, %v6485, %v6796
      %6798 = vst [vmem:[%s6789 + $0x8] sm:$0x1] %v6797
      %v6799 = vld [vmem:[%s6789 + $0xc] sm:$0xf]
      %v6800 = vsel %vm6791, %v6492, %v6799
      %6801 = vst [vmem:[%s6789 + $0xc] sm:$0xf] %v6800
      %6802 = vst [vmem:[%s6789 + $0x10] sm:$0xf] %v6501
      %v6803 = vld [vmem:[%s6789 + $0x14] sm:$0x1]
      %v6804 = vsel %vm6263, %v6502, %v6803
      %6805 = vst [vmem:[%s6789 + $0x14] sm:$0x1] %v6804
      %v6806 = vld [vmem:[%s6789 + $0x18] sm:$0xf]
      %v6807 = vsel %vm6791, %v6509, %v6806
      %6808 = vst [vmem:[%s6789 + $0x18] sm:$0xf] %v6807
      %6809 = vst [vmem:[%s6789 + $0x1c] sm:$0xf] %v6518
      %v6810 = vld [vmem:[%s6789 + $0x20] sm:$0x1]
      %v6811 = vsel %vm6263, %v6519, %v6810
      %6812 = vst [vmem:[%s6789 + $0x20] sm:$0x1] %v6811
      %v6813 = vld [vmem:[%s6789 + $0x24] sm:$0xf]
      %v6814 = vsel %vm6791, %v6526, %v6813
      %6815 = vst [vmem:[%s6789 + $0x24] sm:$0xf] %v6814
      %6816 = vst [vmem:[%s6789 + $0x28] sm:$0xf] %v6535
      %v6817 = vld [vmem:[%s6789 + $0x2c] sm:$0x1]
      %v6818 = vsel %vm6263, %v6536, %v6817
      %6819 = vst [vmem:[%s6789 + $0x2c] sm:$0x1] %v6818
      %v6820 = vld [vmem:[%s6789 + $0x30] sm:$0xf]
      %v6821 = vsel %vm6791, %v6543, %v6820
      %6822 = vst [vmem:[%s6789 + $0x30] sm:$0xf] %v6821
      %6823 = vst [vmem:[%s6789 + $0x34] sm:$0xf] %v6552
      %v6824 = vld [vmem:[%s6789 + $0x38] sm:$0x1]
      %v6825 = vsel %vm6263, %v6553, %v6824
      %6826 = vst [vmem:[%s6789 + $0x38] sm:$0x1] %v6825
      %v6827 = vld [vmem:[%s6789 + $0x3c] sm:$0xf]
      %v6828 = vsel %vm6791, %v6560, %v6827
      %6829 = vst [vmem:[%s6789 + $0x3c] sm:$0xf] %v6828
      %6830 = vst [vmem:[%s6789 + $0x40] sm:$0xf] %v6569
      %v6831 = vld [vmem:[%s6789 + $0x44] sm:$0x1]
      %v6832 = vsel %vm6263, %v6570, %v6831
      %6833 = vst [vmem:[%s6789 + $0x44] sm:$0x1] %v6832
      %v6834 = vld [vmem:[%s6789 + $0x48] sm:$0xf]
      %v6835 = vsel %vm6791, %v6577, %v6834
      %6836 = vst [vmem:[%s6789 + $0x48] sm:$0xf] %v6835
      %6837 = vst [vmem:[%s6789 + $0x4c] sm:$0xf] %v6586
      %v6838 = vld [vmem:[%s6789 + $0x50] sm:$0x1]
      %v6839 = vsel %vm6263, %v6587, %v6838
      %6840 = vst [vmem:[%s6789 + $0x50] sm:$0x1] %v6839
      %v6841 = vld [vmem:[%s6789 + $0x54] sm:$0xf]
      %v6842 = vsel %vm6791, %v6594, %v6841
      %6843 = vst [vmem:[%s6789 + $0x54] sm:$0xf] %v6842
      %6844 = vst [vmem:[%s6789 + $0x58] sm:$0xf] %v6603
      %v6845 = vld [vmem:[%s6789 + $0x5c] sm:$0x1]
      %v6846 = vsel %vm6263, %v6604, %v6845
      %6847 = vst [vmem:[%s6789 + $0x5c] sm:$0x1] %v6846
      %v6848 = vld [vmem:[%s6789 + $0x60] sm:$0xf]
      %v6849 = vsel %vm6791, %v6611, %v6848
      %6850 = vst [vmem:[%s6789 + $0x60] sm:$0xf] %v6849
      %6851 = vst [vmem:[%s6789 + $0x64] sm:$0xf] %v6620
      %v6852 = vld [vmem:[%s6789 + $0x68] sm:$0x1]
      %v6853 = vsel %vm6263, %v6621, %v6852
      %6854 = vst [vmem:[%s6789 + $0x68] sm:$0x1] %v6853
      %v6855 = vld [vmem:[%s6789 + $0x6c] sm:$0xf]
      %v6856 = vsel %vm6791, %v6628, %v6855
      %6857 = vst [vmem:[%s6789 + $0x6c] sm:$0xf] %v6856
      %6858 = vst [vmem:[%s6789 + $0x70] sm:$0xf] %v6637
      %v6859 = vld [vmem:[%s6789 + $0x74] sm:$0x1]
      %v6860 = vsel %vm6263, %v6638, %v6859
      %6861 = vst [vmem:[%s6789 + $0x74] sm:$0x1] %v6860
      %v6862 = vld [vmem:[%s6789 + $0x78] sm:$0xf]
      %v6863 = vsel %vm6791, %v6645, %v6862
      %6864 = vst [vmem:[%s6789 + $0x78] sm:$0xf] %v6863
      %6865 = vst [vmem:[%s6789 + $0x7c] sm:$0xf] %v6654
      %v6866 = vld [vmem:[%s6789 + $0x80] sm:$0x1]
      %v6867 = vsel %vm6263, %v6655, %v6866
      %6868 = vst [vmem:[%s6789 + $0x80] sm:$0x1] %v6867
      %v6869 = vld [vmem:[%s6789 + $0x84] sm:$0xf]
      %v6870 = vsel %vm6791, %v6662, %v6869
      %6871 = vst [vmem:[%s6789 + $0x84] sm:$0xf] %v6870
      %6872 = vst [vmem:[%s6789 + $0x88] sm:$0xf] %v6671
      %v6873 = vld [vmem:[%s6789 + $0x8c] sm:$0x1]
      %v6874 = vsel %vm6263, %v6672, %v6873
      %6875 = vst [vmem:[%s6789 + $0x8c] sm:$0x1] %v6874
      %v6876 = vld [vmem:[%s6789 + $0x90] sm:$0xf]
      %v6877 = vsel %vm6791, %v6679, %v6876
      %6878 = vst [vmem:[%s6789 + $0x90] sm:$0xf] %v6877
      %6879 = vst [vmem:[%s6789 + $0x94] sm:$0xf] %v6688
      %v6880 = vld [vmem:[%s6789 + $0x98] sm:$0x1]
      %v6881 = vsel %vm6263, %v6689, %v6880
      %6882 = vst [vmem:[%s6789 + $0x98] sm:$0x1] %v6881
      %v6883 = vld [vmem:[%s6789 + $0x9c] sm:$0xf]
      %v6884 = vsel %vm6791, %v6696, %v6883
      %6885 = vst [vmem:[%s6789 + $0x9c] sm:$0xf] %v6884
      %6886 = vst [vmem:[%s6789 + $0xa0] sm:$0xf] %v6705
      %v6887 = vld [vmem:[%s6789 + $0xa4] sm:$0x1]
      %v6888 = vsel %vm6263, %v6706, %v6887
      %6889 = vst [vmem:[%s6789 + $0xa4] sm:$0x1] %v6888
      %v6890 = vld [vmem:[%s6789 + $0xa8] sm:$0xf]
      %v6891 = vsel %vm6791, %v6713, %v6890
      %6892 = vst [vmem:[%s6789 + $0xa8] sm:$0xf] %v6891
      %6893 = vst [vmem:[%s6789 + $0xac] sm:$0xf] %v6722
      %v6894 = vld [vmem:[%s6789 + $0xb0] sm:$0x1]
      %v6895 = vsel %vm6263, %v6723, %v6894
      %6896 = vst [vmem:[%s6789 + $0xb0] sm:$0x1] %v6895
      %v6897 = vld [vmem:[%s6789 + $0xb4] sm:$0xf]
      %v6898 = vsel %vm6791, %v6730, %v6897
      %6899 = vst [vmem:[%s6789 + $0xb4] sm:$0xf] %v6898
      %6900 = vst [vmem:[%s6789 + $0xb8] sm:$0xf] %v6739
      %v6901 = vld [vmem:[%s6789 + $0xbc] sm:$0x1]
      %v6902 = vsel %vm6263, %v6740, %v6901
      %6903 = vst [vmem:[%s6789 + $0xbc] sm:$0x1] %v6902
      %v6904 = vld [vmem:[#allocation3] sm:$0xf]
      %v6905 = vld [vmem:[#allocation3 + $0x4] sm:$0xf]
      %v6906 = vld [vmem:[#allocation3 + $0xc] sm:$0xf]
      %v6907 = vld [vmem:[#allocation3 + $0x10] sm:$0xf]
      %v6908 = vld [vmem:[#allocation3 + $0x18] sm:$0xf]
      %v6909 = vld [vmem:[#allocation3 + $0x1c] sm:$0xf]
      %v6910 = vld [vmem:[#allocation3 + $0x24] sm:$0xf]
      %v6911 = vld [vmem:[#allocation3 + $0x28] sm:$0xf]
      %v6912 = vld [vmem:[#allocation3 + $0x30] sm:$0xf]
      %v6913 = vld [vmem:[#allocation3 + $0x34] sm:$0xf]
      %v6914 = vld [vmem:[#allocation3 + $0x3c] sm:$0xf]
      %v6915 = vld [vmem:[#allocation3 + $0x40] sm:$0xf]
      %v6916 = vld [vmem:[#allocation3 + $0x48] sm:$0xf]
      %v6917 = vld [vmem:[#allocation3 + $0x4c] sm:$0xf]
      %v6918 = vld [vmem:[#allocation3 + $0x54] sm:$0xf]
      %v6919 = vld [vmem:[#allocation3 + $0x58] sm:$0xf]
      %v6920 = vld [vmem:[#allocation3 + $0x60] sm:$0xf]
      %v6921 = vld [vmem:[#allocation3 + $0x64] sm:$0xf]
      %v6922 = vld [vmem:[#allocation3 + $0x6c] sm:$0xf]
      %v6923 = vld [vmem:[#allocation3 + $0x70] sm:$0xf]
      %v6924 = vld [vmem:[#allocation3 + $0x78] sm:$0xf]
      %v6925 = vld [vmem:[#allocation3 + $0x7c] sm:$0xf]
      %v6926 = vld [vmem:[#allocation3 + $0x84] sm:$0xf]
      %v6927 = vld [vmem:[#allocation3 + $0x88] sm:$0xf]
      %v6928 = vld [vmem:[#allocation3 + $0x90] sm:$0xf]
      %v6929 = vld [vmem:[#allocation3 + $0x94] sm:$0xf]
      %v6930 = vld [vmem:[#allocation3 + $0x9c] sm:$0xf]
      %v6931 = vld [vmem:[#allocation3 + $0xa0] sm:$0xf]
      %v6932 = vld [vmem:[#allocation3 + $0xa8] sm:$0xf]
      %v6933 = vld [vmem:[#allocation3 + $0xac] sm:$0xf]
      %v6934 = vld [vmem:[#allocation3 + $0xb4] sm:$0xf]
      %v6935 = vld [vmem:[#allocation3 + $0xb8] sm:$0xf]
      %v6936 = vld [vmem:[%s6] sm:$0xf]
      %v6937 = vld [vmem:[%s6 + $0x4] sm:$0xf]
      %v6938 = vld [vmem:[%s6 + $0x8] sm:$0xf]
      %v6939 = vld [vmem:[%s6 + $0xc] sm:$0xf]
      %v6940 = vld [vmem:[%s6 + $0x10] sm:$0xf]
      %v6941 = vld [vmem:[%s6 + $0x14] sm:$0xf]
      %v6942 = vld [vmem:[%s6 + $0x18] sm:$0xf]
      %v6943 = vld [vmem:[%s6 + $0x1c] sm:$0xf]
      %v6944 = vld [vmem:[%s6 + $0x20] sm:$0xf]
      %v6945 = vld [vmem:[%s6 + $0x24] sm:$0xf]
      %v6946 = vld [vmem:[%s6 + $0x28] sm:$0xf]
      %v6947 = vld [vmem:[%s6 + $0x2c] sm:$0xf]
      %v6948 = vld [vmem:[%s6 + $0x30] sm:$0xf]
      %v6949 = vld [vmem:[%s6 + $0x34] sm:$0xf]
      %v6950 = vld [vmem:[%s6 + $0x38] sm:$0xf]
      %v6951 = vld [vmem:[%s6 + $0x3c] sm:$0xf]
      %v6952 = vld [vmem:[#allocation3 + $0x8] sm:$0x1]
      %v6953 = vld [vmem:[#allocation3 + $0x14] sm:$0x1]
      %v6954 = vld [vmem:[#allocation3 + $0x20] sm:$0x1]
      %v6955 = vld [vmem:[#allocation3 + $0x2c] sm:$0x1]
      %v6956 = vld [vmem:[#allocation3 + $0x38] sm:$0x1]
      %v6957 = vld [vmem:[#allocation3 + $0x44] sm:$0x1]
      %v6958 = vld [vmem:[#allocation3 + $0x50] sm:$0x1]
      %v6959 = vld [vmem:[#allocation3 + $0x5c] sm:$0x1]
      %v6960 = vld [vmem:[#allocation3 + $0x68] sm:$0x1]
      %v6961 = vld [vmem:[#allocation3 + $0x74] sm:$0x1]
      %v6962 = vld [vmem:[#allocation3 + $0x80] sm:$0x1]
      %v6963 = vld [vmem:[#allocation3 + $0x8c] sm:$0x1]
      %v6964 = vld [vmem:[#allocation3 + $0x98] sm:$0x1]
      %v6965 = vld [vmem:[#allocation3 + $0xa4] sm:$0x1]
      %v6966 = vld [vmem:[#allocation3 + $0xb0] sm:$0x1]
      %v6967 = vld [vmem:[#allocation3 + $0xbc] sm:$0x1]
      %v6969 = vshrl.u32 %v6904, 16
      %v6971 = vrot.slane %v6969, 4
      %v6972 = vshll.u32 %v6904, 16
      %v6974 = vrot.slane %v6972, 5
      %v6975 = vor.u32 %v6971, %v6974
      %v6976 = vrot.slane %v6975, 4
      %v6978 = vshll.u32 %v6905, 16
      %v6980 = vrot.slane %v6978, 5
      %v6981 = vsel %vm1129, %v6976, %v6980
      %v6982 = vshrl.u32 %v6905, 16
      %v6984 = vrot.slane %v6982, 4
      %v6985 = vor.u32 %v6984, %v6980
      %v6986 = vrot.slane %v6985, 4
      %v6988 = vshll.u32 %v6952, 16
      %v6990 = vrot.slane %v6988, 5
      %v6991 = vsel %vm1129, %v6986, %v6990
      %v6993 = vshrl.u32 %v6906, 16
      %v6995 = vrot.slane %v6993, 4
      %v6996 = vshll.u32 %v6906, 16
      %v6998 = vrot.slane %v6996, 5
      %v6999 = vor.u32 %v6995, %v6998
      %v7000 = vrot.slane %v6999, 4
      %v7002 = vshll.u32 %v6907, 16
      %v7004 = vrot.slane %v7002, 5
      %v7005 = vsel %vm1129, %v7000, %v7004
      %v7006 = vshrl.u32 %v6907, 16
      %v7008 = vrot.slane %v7006, 4
      %v7009 = vor.u32 %v7008, %v7004
      %v7010 = vrot.slane %v7009, 4
      %v7012 = vshll.u32 %v6953, 16
      %v7014 = vrot.slane %v7012, 5
      %v7015 = vsel %vm1129, %v7010, %v7014
      %v7017 = vshrl.u32 %v6908, 16
      %v7019 = vrot.slane %v7017, 4
      %v7020 = vshll.u32 %v6908, 16
      %v7022 = vrot.slane %v7020, 5
      %v7023 = vor.u32 %v7019, %v7022
      %v7024 = vrot.slane %v7023, 4
      %v7026 = vshll.u32 %v6909, 16
      %v7028 = vrot.slane %v7026, 5
      %v7029 = vsel %vm1129, %v7024, %v7028
      %v7030 = vshrl.u32 %v6909, 16
      %v7032 = vrot.slane %v7030, 4
      %v7033 = vor.u32 %v7032, %v7028
      %v7034 = vrot.slane %v7033, 4
      %v7036 = vshll.u32 %v6954, 16
      %v7038 = vrot.slane %v7036, 5
      %v7039 = vsel %vm1129, %v7034, %v7038
      %v7041 = vshrl.u32 %v6910, 16
      %v7043 = vrot.slane %v7041, 4
      %v7044 = vshll.u32 %v6910, 16
      %v7046 = vrot.slane %v7044, 5
      %v7047 = vor.u32 %v7043, %v7046
      %v7048 = vrot.slane %v7047, 4
      %v7050 = vshll.u32 %v6911, 16
      %v7052 = vrot.slane %v7050, 5
      %v7053 = vsel %vm1129, %v7048, %v7052
      %v7054 = vshrl.u32 %v6911, 16
      %v7056 = vrot.slane %v7054, 4
      %v7057 = vor.u32 %v7056, %v7052
      %v7058 = vrot.slane %v7057, 4
      %v7060 = vshll.u32 %v6955, 16
      %v7062 = vrot.slane %v7060, 5
      %v7063 = vsel %vm1129, %v7058, %v7062
      %v7065 = vshrl.u32 %v6912, 16
      %v7067 = vrot.slane %v7065, 4
      %v7068 = vshll.u32 %v6912, 16
      %v7070 = vrot.slane %v7068, 5
      %v7071 = vor.u32 %v7067, %v7070
      %v7072 = vrot.slane %v7071, 4
      %v7074 = vshll.u32 %v6913, 16
      %v7076 = vrot.slane %v7074, 5
      %v7077 = vsel %vm1129, %v7072, %v7076
      %v7078 = vshrl.u32 %v6913, 16
      %v7080 = vrot.slane %v7078, 4
      %v7081 = vor.u32 %v7080, %v7076
      %v7082 = vrot.slane %v7081, 4
      %v7084 = vshll.u32 %v6956, 16
      %v7086 = vrot.slane %v7084, 5
      %v7087 = vsel %vm1129, %v7082, %v7086
      %v7089 = vshrl.u32 %v6914, 16
      %v7091 = vrot.slane %v7089, 4
      %v7092 = vshll.u32 %v6914, 16
      %v7094 = vrot.slane %v7092, 5
      %v7095 = vor.u32 %v7091, %v7094
      %v7096 = vrot.slane %v7095, 4
      %v7098 = vshll.u32 %v6915, 16
      %v7100 = vrot.slane %v7098, 5
      %v7101 = vsel %vm1129, %v7096, %v7100
      %v7102 = vshrl.u32 %v6915, 16
      %v7104 = vrot.slane %v7102, 4
      %v7105 = vor.u32 %v7104, %v7100
      %v7106 = vrot.slane %v7105, 4
      %v7108 = vshll.u32 %v6957, 16
      %v7110 = vrot.slane %v7108, 5
      %v7111 = vsel %vm1129, %v7106, %v7110
      %v7113 = vshrl.u32 %v6916, 16
      %v7115 = vrot.slane %v7113, 4
      %v7116 = vshll.u32 %v6916, 16
      %v7118 = vrot.slane %v7116, 5
      %v7119 = vor.u32 %v7115, %v7118
      %v7120 = vrot.slane %v7119, 4
      %v7122 = vshll.u32 %v6917, 16
      %v7124 = vrot.slane %v7122, 5
      %v7125 = vsel %vm1129, %v7120, %v7124
      %v7126 = vshrl.u32 %v6917, 16
      %v7128 = vrot.slane %v7126, 4
      %v7129 = vor.u32 %v7128, %v7124
      %v7130 = vrot.slane %v7129, 4
      %v7132 = vshll.u32 %v6958, 16
      %v7134 = vrot.slane %v7132, 5
      %v7135 = vsel %vm1129, %v7130, %v7134
      %v7137 = vshrl.u32 %v6918, 16
      %v7139 = vrot.slane %v7137, 4
      %v7140 = vshll.u32 %v6918, 16
      %v7142 = vrot.slane %v7140, 5
      %v7143 = vor.u32 %v7139, %v7142
      %v7144 = vrot.slane %v7143, 4
      %v7146 = vshll.u32 %v6919, 16
      %v7148 = vrot.slane %v7146, 5
      %v7149 = vsel %vm1129, %v7144, %v7148
      %v7150 = vshrl.u32 %v6919, 16
      %v7152 = vrot.slane %v7150, 4
      %v7153 = vor.u32 %v7152, %v7148
      %v7154 = vrot.slane %v7153, 4
      %v7156 = vshll.u32 %v6959, 16
      %v7158 = vrot.slane %v7156, 5
      %v7159 = vsel %vm1129, %v7154, %v7158
      %v7161 = vshrl.u32 %v6920, 16
      %v7163 = vrot.slane %v7161, 4
      %v7164 = vshll.u32 %v6920, 16
      %v7166 = vrot.slane %v7164, 5
      %v7167 = vor.u32 %v7163, %v7166
      %v7168 = vrot.slane %v7167, 4
      %v7170 = vshll.u32 %v6921, 16
      %v7172 = vrot.slane %v7170, 5
      %v7173 = vsel %vm1129, %v7168, %v7172
      %v7174 = vshrl.u32 %v6921, 16
      %v7176 = vrot.slane %v7174, 4
      %v7177 = vor.u32 %v7176, %v7172
      %v7178 = vrot.slane %v7177, 4
      %v7180 = vshll.u32 %v6960, 16
      %v7182 = vrot.slane %v7180, 5
      %v7183 = vsel %vm1129, %v7178, %v7182
      %v7185 = vshrl.u32 %v6922, 16
      %v7187 = vrot.slane %v7185, 4
      %v7188 = vshll.u32 %v6922, 16
      %v7190 = vrot.slane %v7188, 5
      %v7191 = vor.u32 %v7187, %v7190
      %v7192 = vrot.slane %v7191, 4
      %v7194 = vshll.u32 %v6923, 16
      %v7196 = vrot.slane %v7194, 5
      %v7197 = vsel %vm1129, %v7192, %v7196
      %v7198 = vshrl.u32 %v6923, 16
      %v7200 = vrot.slane %v7198, 4
      %v7201 = vor.u32 %v7200, %v7196
      %v7202 = vrot.slane %v7201, 4
      %v7204 = vshll.u32 %v6961, 16
      %v7206 = vrot.slane %v7204, 5
      %v7207 = vsel %vm1129, %v7202, %v7206
      %v7209 = vshrl.u32 %v6924, 16
      %v7211 = vrot.slane %v7209, 4
      %v7212 = vshll.u32 %v6924, 16
      %v7214 = vrot.slane %v7212, 5
      %v7215 = vor.u32 %v7211, %v7214
      %v7216 = vrot.slane %v7215, 4
      %v7218 = vshll.u32 %v6925, 16
      %v7220 = vrot.slane %v7218, 5
      %v7221 = vsel %vm1129, %v7216, %v7220
      %v7222 = vshrl.u32 %v6925, 16
      %v7224 = vrot.slane %v7222, 4
      %v7225 = vor.u32 %v7224, %v7220
      %v7226 = vrot.slane %v7225, 4
      %v7228 = vshll.u32 %v6962, 16
      %v7230 = vrot.slane %v7228, 5
      %v7231 = vsel %vm1129, %v7226, %v7230
      %v7233 = vshrl.u32 %v6926, 16
      %v7235 = vrot.slane %v7233, 4
      %v7236 = vshll.u32 %v6926, 16
      %v7238 = vrot.slane %v7236, 5
      %v7239 = vor.u32 %v7235, %v7238
      %v7240 = vrot.slane %v7239, 4
      %v7242 = vshll.u32 %v6927, 16
      %v7244 = vrot.slane %v7242, 5
      %v7245 = vsel %vm1129, %v7240, %v7244
      %v7246 = vshrl.u32 %v6927, 16
      %v7248 = vrot.slane %v7246, 4
      %v7249 = vor.u32 %v7248, %v7244
      %v7250 = vrot.slane %v7249, 4
      %v7252 = vshll.u32 %v6963, 16
      %v7254 = vrot.slane %v7252, 5
      %v7255 = vsel %vm1129, %v7250, %v7254
      %v7257 = vshrl.u32 %v6928, 16
      %v7259 = vrot.slane %v7257, 4
      %v7260 = vshll.u32 %v6928, 16
      %v7262 = vrot.slane %v7260, 5
      %v7263 = vor.u32 %v7259, %v7262
      %v7264 = vrot.slane %v7263, 4
      %v7266 = vshll.u32 %v6929, 16
      %v7268 = vrot.slane %v7266, 5
      %v7269 = vsel %vm1129, %v7264, %v7268
      %v7270 = vshrl.u32 %v6929, 16
      %v7272 = vrot.slane %v7270, 4
      %v7273 = vor.u32 %v7272, %v7268
      %v7274 = vrot.slane %v7273, 4
      %v7276 = vshll.u32 %v6964, 16
      %v7278 = vrot.slane %v7276, 5
      %v7279 = vsel %vm1129, %v7274, %v7278
      %v7281 = vshrl.u32 %v6930, 16
      %v7283 = vrot.slane %v7281, 4
      %v7284 = vshll.u32 %v6930, 16
      %v7286 = vrot.slane %v7284, 5
      %v7287 = vor.u32 %v7283, %v7286
      %v7288 = vrot.slane %v7287, 4
      %v7290 = vshll.u32 %v6931, 16
      %v7292 = vrot.slane %v7290, 5
      %v7293 = vsel %vm1129, %v7288, %v7292
      %v7294 = vshrl.u32 %v6931, 16
      %v7296 = vrot.slane %v7294, 4
      %v7297 = vor.u32 %v7296, %v7292
      %v7298 = vrot.slane %v7297, 4
      %v7300 = vshll.u32 %v6965, 16
      %v7302 = vrot.slane %v7300, 5
      %v7303 = vsel %vm1129, %v7298, %v7302
      %v7305 = vshrl.u32 %v6932, 16
      %v7307 = vrot.slane %v7305, 4
      %v7308 = vshll.u32 %v6932, 16
      %v7310 = vrot.slane %v7308, 5
      %v7311 = vor.u32 %v7307, %v7310
      %v7312 = vrot.slane %v7311, 4
      %v7314 = vshll.u32 %v6933, 16
      %v7316 = vrot.slane %v7314, 5
      %v7317 = vsel %vm1129, %v7312, %v7316
      %v7318 = vshrl.u32 %v6933, 16
      %v7320 = vrot.slane %v7318, 4
      %v7321 = vor.u32 %v7320, %v7316
      %v7322 = vrot.slane %v7321, 4
      %v7324 = vshll.u32 %v6966, 16
      %v7326 = vrot.slane %v7324, 5
      %v7327 = vsel %vm1129, %v7322, %v7326
      %v7329 = vshrl.u32 %v6934, 16
      %v7331 = vrot.slane %v7329, 4
      %v7332 = vshll.u32 %v6934, 16
      %v7334 = vrot.slane %v7332, 5
      %v7335 = vor.u32 %v7331, %v7334
      %v7336 = vrot.slane %v7335, 4
      %v7338 = vshll.u32 %v6935, 16
      %v7340 = vrot.slane %v7338, 5
      %v7341 = vsel %vm1129, %v7336, %v7340
      %v7342 = vshrl.u32 %v6935, 16
      %v7344 = vrot.slane %v7342, 4
      %v7345 = vor.u32 %v7344, %v7340
      %v7346 = vrot.slane %v7345, 4
      %v7348 = vshll.u32 %v6967, 16
      %v7350 = vrot.slane %v7348, 5
      %v7351 = vsel %vm1129, %v7346, %v7350
      %s7352 = scalar_lea.vmem %s6, 64
      %v7353 = vld [vmem:[%s7352] sm:$0xf]
      %v7354 = vld [vmem:[%s7352 + $0x4] sm:$0xf]
      %v7355 = vld [vmem:[%s7352 + $0x8] sm:$0xf]
      %v7356 = vld [vmem:[%s7352 + $0xc] sm:$0xf]
      %v7357 = vld [vmem:[%s7352 + $0x10] sm:$0xf]
      %v7358 = vld [vmem:[%s7352 + $0x14] sm:$0xf]
      %v7359 = vld [vmem:[%s7352 + $0x18] sm:$0xf]
      %v7360 = vld [vmem:[%s7352 + $0x1c] sm:$0xf]
      %v7361 = vld [vmem:[%s7352 + $0x20] sm:$0xf]
      %v7362 = vld [vmem:[%s7352 + $0x24] sm:$0xf]
      %v7363 = vld [vmem:[%s7352 + $0x28] sm:$0xf]
      %v7364 = vld [vmem:[%s7352 + $0x2c] sm:$0xf]
      %v7365 = vld [vmem:[%s7352 + $0x30] sm:$0xf]
      %v7366 = vld [vmem:[%s7352 + $0x34] sm:$0xf]
      %v7367 = vld [vmem:[%s7352 + $0x38] sm:$0xf]
      %v7368 = vld [vmem:[%s7352 + $0x3c] sm:$0xf]
      %v7369 = vunpack.c.l.b16 %v6981
      %v7370 = vunpack.c.l.b16 %v6991
      %v7371 = vunpack.c.l.b16 %v7005
      %v7372 = vunpack.c.l.b16 %v7015
      %v7373 = vunpack.c.l.b16 %v7029
      %v7374 = vunpack.c.l.b16 %v7039
      %v7375 = vunpack.c.l.b16 %v7053
      %v7376 = vunpack.c.l.b16 %v7063
      %v7377 = vunpack.c.l.b16 %v7077
      %v7378 = vunpack.c.l.b16 %v7087
      %v7379 = vunpack.c.l.b16 %v7101
      %v7380 = vunpack.c.l.b16 %v7111
      %v7381 = vunpack.c.l.b16 %v7125
      %v7382 = vunpack.c.l.b16 %v7135
      %v7383 = vunpack.c.l.b16 %v7149
      %v7384 = vunpack.c.l.b16 %v7159
      %v7385 = vunpack.c.l.b16 %v7173
      %v7386 = vunpack.c.l.b16 %v7183
      %v7387 = vunpack.c.l.b16 %v7197
      %v7388 = vunpack.c.l.b16 %v7207
      %v7389 = vunpack.c.l.b16 %v7221
      %v7390 = vunpack.c.l.b16 %v7231
      %v7391 = vunpack.c.l.b16 %v7245
      %v7392 = vunpack.c.l.b16 %v7255
      %v7393 = vunpack.c.l.b16 %v7269
      %v7394 = vunpack.c.l.b16 %v7279
      %v7395 = vunpack.c.l.b16 %v7293
      %v7396 = vunpack.c.l.b16 %v7303
      %v7397 = vunpack.c.l.b16 %v7317
      %v7398 = vunpack.c.l.b16 %v7327
      %v7399 = vunpack.c.l.b16 %v7341
      %v7400 = vunpack.c.l.b16 %v7351
      %v7401 = vpack.c.b16 %v7370, %v7369
      %v7402 = vpack.c.b16 %v7372, %v7371
      %v7403 = vpack.c.b16 %v7374, %v7373
      %v7404 = vpack.c.b16 %v7376, %v7375
      %v7405 = vpack.c.b16 %v7378, %v7377
      %v7406 = vpack.c.b16 %v7380, %v7379
      %v7407 = vpack.c.b16 %v7382, %v7381
      %v7408 = vpack.c.b16 %v7384, %v7383
      %v7409 = vpack.c.b16 %v7386, %v7385
      %v7410 = vpack.c.b16 %v7388, %v7387
      %v7411 = vpack.c.b16 %v7390, %v7389
      %v7412 = vpack.c.b16 %v7392, %v7391
      %v7413 = vpack.c.b16 %v7394, %v7393
      %v7414 = vpack.c.b16 %v7396, %v7395
      %v7415 = vpack.c.b16 %v7398, %v7397
      %v7416 = vpack.c.b16 %v7400, %v7399
      %v7449 = vunpack.c.l.b16 %v7353
      %v7450 = vunpack.c.l.b16 %v7354
      %v7451 = vunpack.c.l.b16 %v7355
      %v7452 = vunpack.c.l.b16 %v7356
      %v7453 = vunpack.c.l.b16 %v7357
      %v7454 = vunpack.c.l.b16 %v7358
      %v7455 = vunpack.c.l.b16 %v7359
      %v7456 = vunpack.c.l.b16 %v7360
      %v7457 = vunpack.c.l.b16 %v7361
      %v7458 = vunpack.c.l.b16 %v7362
      %v7459 = vunpack.c.l.b16 %v7363
      %v7460 = vunpack.c.l.b16 %v7364
      %v7461 = vunpack.c.l.b16 %v7365
      %v7462 = vunpack.c.l.b16 %v7366
      %v7463 = vunpack.c.l.b16 %v7367
      %v7464 = vunpack.c.l.b16 %v7368
      %v7465 = vpack.c.b16 %v7450, %v7449
      %v7466 = vpack.c.b16 %v7452, %v7451
      %v7467 = vpack.c.b16 %v7454, %v7453
      %v7468 = vpack.c.b16 %v7456, %v7455
      %v7469 = vpack.c.b16 %v7458, %v7457
      %v7470 = vpack.c.b16 %v7460, %v7459
      %v7471 = vpack.c.b16 %v7462, %v7461
      %v7472 = vpack.c.b16 %v7464, %v7463
      %7481 = vmatprep.subr.bf16.mxu0 0
      %7482 = vmatpush1.bf16.msra.mxu0 %v7472
      %7483 = vmatprep.subr.bf16.mxu0 0
      %7484 = vmatpush1.bf16.msra.mxu0 %v7471
      %7485 = vmatprep.subr.bf16.mxu0 0
      %7486 = vmatpush1.bf16.msra.mxu0 %v7470
      %7487 = vmatprep.subr.bf16.mxu0 0
      %7488 = vmatpush1.bf16.msra.mxu0 %v7469
      %7489 = vmatprep.subr.bf16.mxu0 0
      %7490 = vmatpush1.bf16.msra.mxu0 %v7468
      %7491 = vmatprep.subr.bf16.mxu0 0
      %7492 = vmatpush1.bf16.msra.mxu0 %v7467
      %7493 = vmatprep.subr.bf16.mxu0 0
      %7494 = vmatpush1.bf16.msra.mxu0 %v7466
      %7495 = vmatprep.subr.bf16.mxu0 0
      %7496 = vmatpush1.bf16.msra.mxu0 %v7465
      %7497 = vmatprep.subr.bf16.mxu0 0
      %7498 = vmatpush2.bf16.msra.mxu0 0
      %7499 = vmatprep.subr.bf16.mxu0 0
      %7500 = vmatpush2.bf16.msra.mxu0 0
      %7501 = vmatprep.subr.bf16.mxu0 0
      %7502 = vmatpush2.bf16.msra.mxu0 0
      %7503 = vmatprep.subr.bf16.mxu0 0
      %7504 = vmatpush2.bf16.msra.mxu0 0
      %7505 = vmatprep.subr.bf16.mxu0 0
      %7506 = vmatpush2.bf16.msra.mxu0 0
      %7507 = vmatprep.subr.bf16.mxu0 0
      %7508 = vmatpush2.bf16.msra.mxu0 0
      %7509 = vmatprep.subr.bf16.mxu0 0
      %7510 = vmatpush2.bf16.msra.mxu0 0
      %7511 = vmatprep.subr.bf16.mxu0 0
      %7512 = vmatpush2.bf16.msra.mxu0 0
      %7513 = vmatprep.mubr.bf16.mxu0 0
      %7514 = vmatmul.mubr.bf16.gmra.mxu0 %v7401
      %v7515 = vpop.f32.mrf.mxu0
      %v7516 = vadd.f32 0.0, %v7515
      %v7517 = vpop.f32.mrf.mxu0
      %v7518 = vpop.f32.mrf.mxu0
      %v7519 = vadd.f32 0.0, %v7518
      %v7520 = vpop.f32.mrf.mxu0
      %7521 = vmatprep.mubr.bf16.mxu0 0
      %7522 = vmatmul.mubr.bf16.gmra.mxu0 %v7402
      %v7523 = vpop.f32.mrf.mxu0
      %v7524 = vadd.f32 0.0, %v7523
      %v7525 = vpop.f32.mrf.mxu0
      %v7526 = vpop.f32.mrf.mxu0
      %v7527 = vadd.f32 0.0, %v7526
      %v7528 = vpop.f32.mrf.mxu0
      %7529 = vmatprep.mubr.bf16.mxu0 0
      %7530 = vmatmul.mubr.bf16.gmra.mxu0 %v7403
      %v7531 = vpop.f32.mrf.mxu0
      %v7532 = vadd.f32 0.0, %v7531
      %v7533 = vpop.f32.mrf.mxu0
      %v7534 = vpop.f32.mrf.mxu0
      %v7535 = vadd.f32 0.0, %v7534
      %v7536 = vpop.f32.mrf.mxu0
      %7537 = vmatprep.mubr.bf16.mxu0 0
      %7538 = vmatmul.mubr.bf16.gmra.mxu0 %v7404
      %v7539 = vpop.f32.mrf.mxu0
      %v7540 = vadd.f32 0.0, %v7539
      %v7541 = vpop.f32.mrf.mxu0
      %v7542 = vpop.f32.mrf.mxu0
      %v7543 = vadd.f32 0.0, %v7542
      %v7544 = vpop.f32.mrf.mxu0
      %7545 = vmatprep.mubr.bf16.mxu0 0
      %7546 = vmatmul.mubr.bf16.gmra.mxu0 %v7405
      %v7547 = vpop.f32.mrf.mxu0
      %v7548 = vadd.f32 0.0, %v7547
      %v7549 = vpop.f32.mrf.mxu0
      %v7550 = vpop.f32.mrf.mxu0
      %v7551 = vadd.f32 0.0, %v7550
      %v7552 = vpop.f32.mrf.mxu0
      %7553 = vmatprep.mubr.bf16.mxu0 0
      %7554 = vmatmul.mubr.bf16.gmra.mxu0 %v7406
      %v7555 = vpop.f32.mrf.mxu0
      %v7556 = vadd.f32 0.0, %v7555
      %v7557 = vpop.f32.mrf.mxu0
      %v7558 = vpop.f32.mrf.mxu0
      %v7559 = vadd.f32 0.0, %v7558
      %v7560 = vpop.f32.mrf.mxu0
      %7561 = vmatprep.mubr.bf16.mxu0 0
      %7562 = vmatmul.mubr.bf16.gmra.mxu0 %v7407
      %v7563 = vpop.f32.mrf.mxu0
      %v7564 = vadd.f32 0.0, %v7563
      %v7565 = vpop.f32.mrf.mxu0
      %v7566 = vpop.f32.mrf.mxu0
      %v7567 = vadd.f32 0.0, %v7566
      %v7568 = vpop.f32.mrf.mxu0
      %7569 = vmatprep.mubr.bf16.mxu0 0
      %7570 = vmatmul.mubr.bf16.gmra.mxu0 %v7408
      %v7571 = vpop.f32.mrf.mxu0
      %v7572 = vadd.f32 0.0, %v7571
      %v7573 = vpop.f32.mrf.mxu0
      %v7574 = vpop.f32.mrf.mxu0
      %v7575 = vadd.f32 0.0, %v7574
      %v7576 = vpop.f32.mrf.mxu0
      %7577 = vmatprep.mubr.bf16.mxu0 0
      %7578 = vmatmul.mubr.bf16.gmra.mxu0 %v7409
      %v7579 = vpop.f32.mrf.mxu0
      %v7580 = vadd.f32 0.0, %v7579
      %v7581 = vpop.f32.mrf.mxu0
      %v7582 = vpop.f32.mrf.mxu0
      %v7583 = vadd.f32 0.0, %v7582
      %v7584 = vpop.f32.mrf.mxu0
      %7585 = vmatprep.mubr.bf16.mxu0 0
      %7586 = vmatmul.mubr.bf16.gmra.mxu0 %v7410
      %v7587 = vpop.f32.mrf.mxu0
      %v7588 = vadd.f32 0.0, %v7587
      %v7589 = vpop.f32.mrf.mxu0
      %v7590 = vpop.f32.mrf.mxu0
      %v7591 = vadd.f32 0.0, %v7590
      %v7592 = vpop.f32.mrf.mxu0
      %7593 = vmatprep.mubr.bf16.mxu0 0
      %7594 = vmatmul.mubr.bf16.gmra.mxu0 %v7411
      %v7595 = vpop.f32.mrf.mxu0
      %v7596 = vadd.f32 0.0, %v7595
      %v7597 = vpop.f32.mrf.mxu0
      %v7598 = vpop.f32.mrf.mxu0
      %v7599 = vadd.f32 0.0, %v7598
      %v7600 = vpop.f32.mrf.mxu0
      %7601 = vmatprep.mubr.bf16.mxu0 0
      %7602 = vmatmul.mubr.bf16.gmra.mxu0 %v7412
      %v7603 = vpop.f32.mrf.mxu0
      %v7604 = vadd.f32 0.0, %v7603
      %v7605 = vpop.f32.mrf.mxu0
      %v7606 = vpop.f32.mrf.mxu0
      %v7607 = vadd.f32 0.0, %v7606
      %v7608 = vpop.f32.mrf.mxu0
      %7609 = vmatprep.mubr.bf16.mxu0 0
      %7610 = vmatmul.mubr.bf16.gmra.mxu0 %v7413
      %v7611 = vpop.f32.mrf.mxu0
      %v7612 = vadd.f32 0.0, %v7611
      %v7613 = vpop.f32.mrf.mxu0
      %v7614 = vpop.f32.mrf.mxu0
      %v7615 = vadd.f32 0.0, %v7614
      %v7616 = vpop.f32.mrf.mxu0
      %7617 = vmatprep.mubr.bf16.mxu0 0
      %7618 = vmatmul.mubr.bf16.gmra.mxu0 %v7414
      %v7619 = vpop.f32.mrf.mxu0
      %v7620 = vadd.f32 0.0, %v7619
      %v7621 = vpop.f32.mrf.mxu0
      %v7622 = vpop.f32.mrf.mxu0
      %v7623 = vadd.f32 0.0, %v7622
      %v7624 = vpop.f32.mrf.mxu0
      %7625 = vmatprep.mubr.bf16.mxu0 0
      %7626 = vmatmul.mubr.bf16.gmra.mxu0 %v7415
      %v7627 = vpop.f32.mrf.mxu0
      %v7628 = vadd.f32 0.0, %v7627
      %v7629 = vpop.f32.mrf.mxu0
      %v7630 = vpop.f32.mrf.mxu0
      %v7631 = vadd.f32 0.0, %v7630
      %v7632 = vpop.f32.mrf.mxu0
      %7633 = vmatprep.mubr.bf16.mxu0 0
      %7634 = vmatmul.mubr.bf16.gmra.mxu0 %v7416
      %v7635 = vpop.f32.mrf.mxu0
      %v7636 = vadd.f32 0.0, %v7635
      %v7637 = vpop.f32.mrf.mxu0
      %v7638 = vpop.f32.mrf.mxu0
      %v7639 = vadd.f32 0.0, %v7638
      %v7640 = vpop.f32.mrf.mxu0
      %7641 = vdwg.mxu0
      %v7674 = vunpack.c.l.b16 %v6904
      %v7675 = vunpack.c.l.b16 %v6905
      %v7676 = vunpack.c.l.b16 %v6906
      %v7677 = vunpack.c.l.b16 %v6907
      %v7678 = vunpack.c.l.b16 %v6908
      %v7679 = vunpack.c.l.b16 %v6909
      %v7680 = vunpack.c.l.b16 %v6910
      %v7681 = vunpack.c.l.b16 %v6911
      %v7682 = vunpack.c.l.b16 %v6912
      %v7683 = vunpack.c.l.b16 %v6913
      %v7684 = vunpack.c.l.b16 %v6914
      %v7685 = vunpack.c.l.b16 %v6915
      %v7686 = vunpack.c.l.b16 %v6916
      %v7687 = vunpack.c.l.b16 %v6917
      %v7688 = vunpack.c.l.b16 %v6918
      %v7689 = vunpack.c.l.b16 %v6919
      %v7690 = vunpack.c.l.b16 %v6920
      %v7691 = vunpack.c.l.b16 %v6921
      %v7692 = vunpack.c.l.b16 %v6922
      %v7693 = vunpack.c.l.b16 %v6923
      %v7694 = vunpack.c.l.b16 %v6924
      %v7695 = vunpack.c.l.b16 %v6925
      %v7696 = vunpack.c.l.b16 %v6926
      %v7697 = vunpack.c.l.b16 %v6927
      %v7698 = vunpack.c.l.b16 %v6928
      %v7699 = vunpack.c.l.b16 %v6929
      %v7700 = vunpack.c.l.b16 %v6930
      %v7701 = vunpack.c.l.b16 %v6931
      %v7702 = vunpack.c.l.b16 %v6932
      %v7703 = vunpack.c.l.b16 %v6933
      %v7704 = vunpack.c.l.b16 %v6934
      %v7705 = vunpack.c.l.b16 %v6935
      %v7706 = vpack.c.b16 %v7675, %v7674
      %v7707 = vpack.c.b16 %v7677, %v7676
      %v7708 = vpack.c.b16 %v7679, %v7678
      %v7709 = vpack.c.b16 %v7681, %v7680
      %v7710 = vpack.c.b16 %v7683, %v7682
      %v7711 = vpack.c.b16 %v7685, %v7684
      %v7712 = vpack.c.b16 %v7687, %v7686
      %v7713 = vpack.c.b16 %v7689, %v7688
      %v7714 = vpack.c.b16 %v7691, %v7690
      %v7715 = vpack.c.b16 %v7693, %v7692
      %v7716 = vpack.c.b16 %v7695, %v7694
      %v7717 = vpack.c.b16 %v7697, %v7696
      %v7718 = vpack.c.b16 %v7699, %v7698
      %v7719 = vpack.c.b16 %v7701, %v7700
      %v7720 = vpack.c.b16 %v7703, %v7702
      %v7721 = vpack.c.b16 %v7705, %v7704
      %v7754 = vunpack.c.l.b16 %v6936
      %v7755 = vunpack.c.l.b16 %v6937
      %v7756 = vunpack.c.l.b16 %v6938
      %v7757 = vunpack.c.l.b16 %v6939
      %v7758 = vunpack.c.l.b16 %v6940
      %v7759 = vunpack.c.l.b16 %v6941
      %v7760 = vunpack.c.l.b16 %v6942
      %v7761 = vunpack.c.l.b16 %v6943
      %v7762 = vunpack.c.l.b16 %v6944
      %v7763 = vunpack.c.l.b16 %v6945
      %v7764 = vunpack.c.l.b16 %v6946
      %v7765 = vunpack.c.l.b16 %v6947
      %v7766 = vunpack.c.l.b16 %v6948
      %v7767 = vunpack.c.l.b16 %v6949
      %v7768 = vunpack.c.l.b16 %v6950
      %v7769 = vunpack.c.l.b16 %v6951
      %v7770 = vpack.c.b16 %v7755, %v7754
      %v7771 = vpack.c.b16 %v7757, %v7756
      %v7772 = vpack.c.b16 %v7759, %v7758
      %v7773 = vpack.c.b16 %v7761, %v7760
      %v7774 = vpack.c.b16 %v7763, %v7762
      %v7775 = vpack.c.b16 %v7765, %v7764
      %v7776 = vpack.c.b16 %v7767, %v7766
      %v7777 = vpack.c.b16 %v7769, %v7768
      %7786 = vmatprep.subr.bf16.mxu0 0
      %7787 = vmatpush1.bf16.msra.mxu0 %v7777
      %7788 = vmatprep.subr.bf16.mxu0 0
      %7789 = vmatpush1.bf16.msra.mxu0 %v7776
      %7790 = vmatprep.subr.bf16.mxu0 0
      %7791 = vmatpush1.bf16.msra.mxu0 %v7775
      %7792 = vmatprep.subr.bf16.mxu0 0
      %7793 = vmatpush1.bf16.msra.mxu0 %v7774
      %7794 = vmatprep.subr.bf16.mxu0 0
      %7795 = vmatpush1.bf16.msra.mxu0 %v7773
      %7796 = vmatprep.subr.bf16.mxu0 0
      %7797 = vmatpush1.bf16.msra.mxu0 %v7772
      %7798 = vmatprep.subr.bf16.mxu0 0
      %7799 = vmatpush1.bf16.msra.mxu0 %v7771
      %7800 = vmatprep.subr.bf16.mxu0 0
      %7801 = vmatpush1.bf16.msra.mxu0 %v7770
      %7802 = vmatprep.subr.bf16.mxu0 0
      %7803 = vmatpush2.bf16.msra.mxu0 0
      %7804 = vmatprep.subr.bf16.mxu0 0
      %7805 = vmatpush2.bf16.msra.mxu0 0
      %7806 = vmatprep.subr.bf16.mxu0 0
      %7807 = vmatpush2.bf16.msra.mxu0 0
      %7808 = vmatprep.subr.bf16.mxu0 0
      %7809 = vmatpush2.bf16.msra.mxu0 0
      %7810 = vmatprep.subr.bf16.mxu0 0
      %7811 = vmatpush2.bf16.msra.mxu0 0
      %7812 = vmatprep.subr.bf16.mxu0 0
      %7813 = vmatpush2.bf16.msra.mxu0 0
      %7814 = vmatprep.subr.bf16.mxu0 0
      %7815 = vmatpush2.bf16.msra.mxu0 0
      %7816 = vmatprep.subr.bf16.mxu0 0
      %7817 = vmatpush2.bf16.msra.mxu0 0
      %7818 = vmatprep.mubr.bf16.mxu0 0
      %7819 = vmatmul.mubr.bf16.gmra.mxu0 %v7706
      %v7820 = vpop.f32.mrf.mxu0
      %v7821 = vadd.f32 %v7516, %v7820
      %v7822 = vpop.f32.mrf.mxu0
      %v7823 = vpop.f32.mrf.mxu0
      %v7824 = vadd.f32 %v7519, %v7823
      %v7825 = vpop.f32.mrf.mxu0
      %7826 = vmatprep.mubr.bf16.mxu0 0
      %7827 = vmatmul.mubr.bf16.gmra.mxu0 %v7707
      %v7828 = vpop.f32.mrf.mxu0
      %v7829 = vadd.f32 %v7524, %v7828
      %v7830 = vpop.f32.mrf.mxu0
      %v7831 = vpop.f32.mrf.mxu0
      %v7832 = vadd.f32 %v7527, %v7831
      %v7833 = vpop.f32.mrf.mxu0
      %7834 = vmatprep.mubr.bf16.mxu0 0
      %7835 = vmatmul.mubr.bf16.gmra.mxu0 %v7708
      %v7836 = vpop.f32.mrf.mxu0
      %v7837 = vadd.f32 %v7532, %v7836
      %v7838 = vpop.f32.mrf.mxu0
      %v7839 = vpop.f32.mrf.mxu0
      %v7840 = vadd.f32 %v7535, %v7839
      %v7841 = vpop.f32.mrf.mxu0
      %7842 = vmatprep.mubr.bf16.mxu0 0
      %7843 = vmatmul.mubr.bf16.gmra.mxu0 %v7709
      %v7844 = vpop.f32.mrf.mxu0
      %v7845 = vadd.f32 %v7540, %v7844
      %v7846 = vpop.f32.mrf.mxu0
      %v7847 = vpop.f32.mrf.mxu0
      %v7848 = vadd.f32 %v7543, %v7847
      %v7849 = vpop.f32.mrf.mxu0
      %7850 = vmatprep.mubr.bf16.mxu0 0
      %7851 = vmatmul.mubr.bf16.gmra.mxu0 %v7710
      %v7852 = vpop.f32.mrf.mxu0
      %v7853 = vadd.f32 %v7548, %v7852
      %v7854 = vpop.f32.mrf.mxu0
      %v7855 = vpop.f32.mrf.mxu0
      %v7856 = vadd.f32 %v7551, %v7855
      %v7857 = vpop.f32.mrf.mxu0
      %7858 = vmatprep.mubr.bf16.mxu0 0
      %7859 = vmatmul.mubr.bf16.gmra.mxu0 %v7711
      %v7860 = vpop.f32.mrf.mxu0
      %v7861 = vadd.f32 %v7556, %v7860
      %v7862 = vpop.f32.mrf.mxu0
      %v7863 = vpop.f32.mrf.mxu0
      %v7864 = vadd.f32 %v7559, %v7863
      %v7865 = vpop.f32.mrf.mxu0
      %7866 = vmatprep.mubr.bf16.mxu0 0
      %7867 = vmatmul.mubr.bf16.gmra.mxu0 %v7712
      %v7868 = vpop.f32.mrf.mxu0
      %v7869 = vadd.f32 %v7564, %v7868
      %v7870 = vpop.f32.mrf.mxu0
      %v7871 = vpop.f32.mrf.mxu0
      %v7872 = vadd.f32 %v7567, %v7871
      %v7873 = vpop.f32.mrf.mxu0
      %7874 = vmatprep.mubr.bf16.mxu0 0
      %7875 = vmatmul.mubr.bf16.gmra.mxu0 %v7713
      %v7876 = vpop.f32.mrf.mxu0
      %v7877 = vadd.f32 %v7572, %v7876
      %v7878 = vpop.f32.mrf.mxu0
      %v7879 = vpop.f32.mrf.mxu0
      %v7880 = vadd.f32 %v7575, %v7879
      %v7881 = vpop.f32.mrf.mxu0
      %7882 = vmatprep.mubr.bf16.mxu0 0
      %7883 = vmatmul.mubr.bf16.gmra.mxu0 %v7714
      %v7884 = vpop.f32.mrf.mxu0
      %v7885 = vadd.f32 %v7580, %v7884
      %v7886 = vpop.f32.mrf.mxu0
      %v7887 = vpop.f32.mrf.mxu0
      %v7888 = vadd.f32 %v7583, %v7887
      %v7889 = vpop.f32.mrf.mxu0
      %7890 = vmatprep.mubr.bf16.mxu0 0
      %7891 = vmatmul.mubr.bf16.gmra.mxu0 %v7715
      %v7892 = vpop.f32.mrf.mxu0
      %v7893 = vadd.f32 %v7588, %v7892
      %v7894 = vpop.f32.mrf.mxu0
      %v7895 = vpop.f32.mrf.mxu0
      %v7896 = vadd.f32 %v7591, %v7895
      %v7897 = vpop.f32.mrf.mxu0
      %7898 = vmatprep.mubr.bf16.mxu0 0
      %7899 = vmatmul.mubr.bf16.gmra.mxu0 %v7716
      %v7900 = vpop.f32.mrf.mxu0
      %v7901 = vadd.f32 %v7596, %v7900
      %v7902 = vpop.f32.mrf.mxu0
      %v7903 = vpop.f32.mrf.mxu0
      %v7904 = vadd.f32 %v7599, %v7903
      %v7905 = vpop.f32.mrf.mxu0
      %7906 = vmatprep.mubr.bf16.mxu0 0
      %7907 = vmatmul.mubr.bf16.gmra.mxu0 %v7717
      %v7908 = vpop.f32.mrf.mxu0
      %v7909 = vadd.f32 %v7604, %v7908
      %v7910 = vpop.f32.mrf.mxu0
      %v7911 = vpop.f32.mrf.mxu0
      %v7912 = vadd.f32 %v7607, %v7911
      %v7913 = vpop.f32.mrf.mxu0
      %7914 = vmatprep.mubr.bf16.mxu0 0
      %7915 = vmatmul.mubr.bf16.gmra.mxu0 %v7718
      %v7916 = vpop.f32.mrf.mxu0
      %v7917 = vadd.f32 %v7612, %v7916
      %v7918 = vpop.f32.mrf.mxu0
      %v7919 = vpop.f32.mrf.mxu0
      %v7920 = vadd.f32 %v7615, %v7919
      %v7921 = vpop.f32.mrf.mxu0
      %7922 = vmatprep.mubr.bf16.mxu0 0
      %7923 = vmatmul.mubr.bf16.gmra.mxu0 %v7719
      %v7924 = vpop.f32.mrf.mxu0
      %v7925 = vadd.f32 %v7620, %v7924
      %v7926 = vpop.f32.mrf.mxu0
      %v7927 = vpop.f32.mrf.mxu0
      %v7928 = vadd.f32 %v7623, %v7927
      %v7929 = vpop.f32.mrf.mxu0
      %7930 = vmatprep.mubr.bf16.mxu0 0
      %7931 = vmatmul.mubr.bf16.gmra.mxu0 %v7720
      %v7932 = vpop.f32.mrf.mxu0
      %v7933 = vadd.f32 %v7628, %v7932
      %v7934 = vpop.f32.mrf.mxu0
      %v7935 = vpop.f32.mrf.mxu0
      %v7936 = vadd.f32 %v7631, %v7935
      %v7937 = vpop.f32.mrf.mxu0
      %7938 = vmatprep.mubr.bf16.mxu0 0
      %7939 = vmatmul.mubr.bf16.gmra.mxu0 %v7721
      %v7940 = vpop.f32.mrf.mxu0
      %v7941 = vadd.f32 %v7636, %v7940
      %v7942 = vpop.f32.mrf.mxu0
      %v7943 = vpop.f32.mrf.mxu0
      %v7944 = vadd.f32 %v7639, %v7943
      %v7945 = vpop.f32.mrf.mxu0
      %7946 = vdwg.mxu0
      %v7947 = vld [vmem:[#allocation3] sm:$0xe]
      %v7948 = vld [vmem:[#allocation3 + $0xc] sm:$0xe]
      %v7949 = vld [vmem:[#allocation3 + $0x18] sm:$0xe]
      %v7950 = vld [vmem:[#allocation3 + $0x24] sm:$0xe]
      %v7951 = vld [vmem:[#allocation3 + $0x30] sm:$0xe]
      %v7952 = vld [vmem:[#allocation3 + $0x3c] sm:$0xe]
      %v7953 = vld [vmem:[#allocation3 + $0x48] sm:$0xe]
      %v7954 = vld [vmem:[#allocation3 + $0x54] sm:$0xe]
      %v7955 = vld [vmem:[#allocation3 + $0x60] sm:$0xe]
      %v7956 = vld [vmem:[#allocation3 + $0x6c] sm:$0xe]
      %v7957 = vld [vmem:[#allocation3 + $0x78] sm:$0xe]
      %v7958 = vld [vmem:[#allocation3 + $0x84] sm:$0xe]
      %v7959 = vld [vmem:[#allocation3 + $0x90] sm:$0xe]
      %v7960 = vld [vmem:[#allocation3 + $0x9c] sm:$0xe]
      %v7961 = vld [vmem:[#allocation3 + $0xa8] sm:$0xe]
      %v7962 = vld [vmem:[#allocation3 + $0xb4] sm:$0xe]
      %v7995 = vrot.slane %v7947, 5
      %v7996 = vrot.slane %v7995, 4
      %v7997 = vrot.slane %v6905, 5
      %v7998 = vsel %vm2140, %v7996, %v7997
      %v7999 = vrot.slane %v7997, 4
      %v8000 = vrot.slane %v6952, 5
      %v8001 = vsel %vm2140, %v7999, %v8000
      %v8002 = vrot.slane %v7948, 5
      %v8003 = vrot.slane %v8002, 4
      %v8004 = vrot.slane %v6907, 5
      %v8005 = vsel %vm2140, %v8003, %v8004
      %v8006 = vrot.slane %v8004, 4
      %v8007 = vrot.slane %v6953, 5
      %v8008 = vsel %vm2140, %v8006, %v8007
      %v8009 = vrot.slane %v7949, 5
      %v8010 = vrot.slane %v8009, 4
      %v8011 = vrot.slane %v6909, 5
      %v8012 = vsel %vm2140, %v8010, %v8011
      %v8013 = vrot.slane %v8011, 4
      %v8014 = vrot.slane %v6954, 5
      %v8015 = vsel %vm2140, %v8013, %v8014
      %v8016 = vrot.slane %v7950, 5
      %v8017 = vrot.slane %v8016, 4
      %v8018 = vrot.slane %v6911, 5
      %v8019 = vsel %vm2140, %v8017, %v8018
      %v8020 = vrot.slane %v8018, 4
      %v8021 = vrot.slane %v6955, 5
      %v8022 = vsel %vm2140, %v8020, %v8021
      %v8023 = vrot.slane %v7951, 5
      %v8024 = vrot.slane %v8023, 4
      %v8025 = vrot.slane %v6913, 5
      %v8026 = vsel %vm2140, %v8024, %v8025
      %v8027 = vrot.slane %v8025, 4
      %v8028 = vrot.slane %v6956, 5
      %v8029 = vsel %vm2140, %v8027, %v8028
      %v8030 = vrot.slane %v7952, 5
      %v8031 = vrot.slane %v8030, 4
      %v8032 = vrot.slane %v6915, 5
      %v8033 = vsel %vm2140, %v8031, %v8032
      %v8034 = vrot.slane %v8032, 4
      %v8035 = vrot.slane %v6957, 5
      %v8036 = vsel %vm2140, %v8034, %v8035
      %v8037 = vrot.slane %v7953, 5
      %v8038 = vrot.slane %v8037, 4
      %v8039 = vrot.slane %v6917, 5
      %v8040 = vsel %vm2140, %v8038, %v8039
      %v8041 = vrot.slane %v8039, 4
      %v8042 = vrot.slane %v6958, 5
      %v8043 = vsel %vm2140, %v8041, %v8042
      %v8044 = vrot.slane %v7954, 5
      %v8045 = vrot.slane %v8044, 4
      %v8046 = vrot.slane %v6919, 5
      %v8047 = vsel %vm2140, %v8045, %v8046
      %v8048 = vrot.slane %v8046, 4
      %v8049 = vrot.slane %v6959, 5
      %v8050 = vsel %vm2140, %v8048, %v8049
      %v8051 = vrot.slane %v7955, 5
      %v8052 = vrot.slane %v8051, 4
      %v8053 = vrot.slane %v6921, 5
      %v8054 = vsel %vm2140, %v8052, %v8053
      %v8055 = vrot.slane %v8053, 4
      %v8056 = vrot.slane %v6960, 5
      %v8057 = vsel %vm2140, %v8055, %v8056
      %v8058 = vrot.slane %v7956, 5
      %v8059 = vrot.slane %v8058, 4
      %v8060 = vrot.slane %v6923, 5
      %v8061 = vsel %vm2140, %v8059, %v8060
      %v8062 = vrot.slane %v8060, 4
      %v8063 = vrot.slane %v6961, 5
      %v8064 = vsel %vm2140, %v8062, %v8063
      %v8065 = vrot.slane %v7957, 5
      %v8066 = vrot.slane %v8065, 4
      %v8067 = vrot.slane %v6925, 5
      %v8068 = vsel %vm2140, %v8066, %v8067
      %v8069 = vrot.slane %v8067, 4
      %v8070 = vrot.slane %v6962, 5
      %v8071 = vsel %vm2140, %v8069, %v8070
      %v8072 = vrot.slane %v7958, 5
      %v8073 = vrot.slane %v8072, 4
      %v8074 = vrot.slane %v6927, 5
      %v8075 = vsel %vm2140, %v8073, %v8074
      %v8076 = vrot.slane %v8074, 4
      %v8077 = vrot.slane %v6963, 5
      %v8078 = vsel %vm2140, %v8076, %v8077
      %v8079 = vrot.slane %v7959, 5
      %v8080 = vrot.slane %v8079, 4
      %v8081 = vrot.slane %v6929, 5
      %v8082 = vsel %vm2140, %v8080, %v8081
      %v8083 = vrot.slane %v8081, 4
      %v8084 = vrot.slane %v6964, 5
      %v8085 = vsel %vm2140, %v8083, %v8084
      %v8086 = vrot.slane %v7960, 5
      %v8087 = vrot.slane %v8086, 4
      %v8088 = vrot.slane %v6931, 5
      %v8089 = vsel %vm2140, %v8087, %v8088
      %v8090 = vrot.slane %v8088, 4
      %v8091 = vrot.slane %v6965, 5
      %v8092 = vsel %vm2140, %v8090, %v8091
      %v8093 = vrot.slane %v7961, 5
      %v8094 = vrot.slane %v8093, 4
      %v8095 = vrot.slane %v6933, 5
      %v8096 = vsel %vm2140, %v8094, %v8095
      %v8097 = vrot.slane %v8095, 4
      %v8098 = vrot.slane %v6966, 5
      %v8099 = vsel %vm2140, %v8097, %v8098
      %v8100 = vrot.slane %v7962, 5
      %v8101 = vrot.slane %v8100, 4
      %v8102 = vrot.slane %v6935, 5
      %v8103 = vsel %vm2140, %v8101, %v8102
      %v8104 = vrot.slane %v8102, 4
      %v8105 = vrot.slane %v6967, 5
      %v8106 = vsel %vm2140, %v8104, %v8105
      %s8107 = scalar_lea.vmem %s6, 128
      %v8108 = vld [vmem:[%s8107] sm:$0xf]
      %v8109 = vld [vmem:[%s8107 + $0x4] sm:$0xf]
      %v8110 = vld [vmem:[%s8107 + $0x8] sm:$0xf]
      %v8111 = vld [vmem:[%s8107 + $0xc] sm:$0xf]
      %v8112 = vld [vmem:[%s8107 + $0x10] sm:$0xf]
      %v8113 = vld [vmem:[%s8107 + $0x14] sm:$0xf]
      %v8114 = vld [vmem:[%s8107 + $0x18] sm:$0xf]
      %v8115 = vld [vmem:[%s8107 + $0x1c] sm:$0xf]
      %v8116 = vld [vmem:[%s8107 + $0x20] sm:$0xf]
      %v8117 = vld [vmem:[%s8107 + $0x24] sm:$0xf]
      %v8118 = vld [vmem:[%s8107 + $0x28] sm:$0xf]
      %v8119 = vld [vmem:[%s8107 + $0x2c] sm:$0xf]
      %v8120 = vld [vmem:[%s8107 + $0x30] sm:$0xf]
      %v8121 = vld [vmem:[%s8107 + $0x34] sm:$0xf]
      %v8122 = vld [vmem:[%s8107 + $0x38] sm:$0xf]
      %v8123 = vld [vmem:[%s8107 + $0x3c] sm:$0xf]
      %v8124 = vunpack.c.l.b16 %v7998
      %v8125 = vunpack.c.l.b16 %v8001
      %v8126 = vunpack.c.l.b16 %v8005
      %v8127 = vunpack.c.l.b16 %v8008
      %v8128 = vunpack.c.l.b16 %v8012
      %v8129 = vunpack.c.l.b16 %v8015
      %v8130 = vunpack.c.l.b16 %v8019
      %v8131 = vunpack.c.l.b16 %v8022
      %v8132 = vunpack.c.l.b16 %v8026
      %v8133 = vunpack.c.l.b16 %v8029
      %v8134 = vunpack.c.l.b16 %v8033
      %v8135 = vunpack.c.l.b16 %v8036
      %v8136 = vunpack.c.l.b16 %v8040
      %v8137 = vunpack.c.l.b16 %v8043
      %v8138 = vunpack.c.l.b16 %v8047
      %v8139 = vunpack.c.l.b16 %v8050
      %v8140 = vunpack.c.l.b16 %v8054
      %v8141 = vunpack.c.l.b16 %v8057
      %v8142 = vunpack.c.l.b16 %v8061
      %v8143 = vunpack.c.l.b16 %v8064
      %v8144 = vunpack.c.l.b16 %v8068
      %v8145 = vunpack.c.l.b16 %v8071
      %v8146 = vunpack.c.l.b16 %v8075
      %v8147 = vunpack.c.l.b16 %v8078
      %v8148 = vunpack.c.l.b16 %v8082
      %v8149 = vunpack.c.l.b16 %v8085
      %v8150 = vunpack.c.l.b16 %v8089
      %v8151 = vunpack.c.l.b16 %v8092
      %v8152 = vunpack.c.l.b16 %v8096
      %v8153 = vunpack.c.l.b16 %v8099
      %v8154 = vunpack.c.l.b16 %v8103
      %v8155 = vunpack.c.l.b16 %v8106
      %v8156 = vpack.c.b16 %v8125, %v8124
      %v8157 = vpack.c.b16 %v8127, %v8126
      %v8158 = vpack.c.b16 %v8129, %v8128
      %v8159 = vpack.c.b16 %v8131, %v8130
      %v8160 = vpack.c.b16 %v8133, %v8132
      %v8161 = vpack.c.b16 %v8135, %v8134
      %v8162 = vpack.c.b16 %v8137, %v8136
      %v8163 = vpack.c.b16 %v8139, %v8138
      %v8164 = vpack.c.b16 %v8141, %v8140
      %v8165 = vpack.c.b16 %v8143, %v8142
      %v8166 = vpack.c.b16 %v8145, %v8144
      %v8167 = vpack.c.b16 %v8147, %v8146
      %v8168 = vpack.c.b16 %v8149, %v8148
      %v8169 = vpack.c.b16 %v8151, %v8150
      %v8170 = vpack.c.b16 %v8153, %v8152
      %v8171 = vpack.c.b16 %v8155, %v8154
      %v8204 = vunpack.c.l.b16 %v8108
      %v8205 = vunpack.c.l.b16 %v8109
      %v8206 = vunpack.c.l.b16 %v8110
      %v8207 = vunpack.c.l.b16 %v8111
      %v8208 = vunpack.c.l.b16 %v8112
      %v8209 = vunpack.c.l.b16 %v8113
      %v8210 = vunpack.c.l.b16 %v8114
      %v8211 = vunpack.c.l.b16 %v8115
      %v8212 = vunpack.c.l.b16 %v8116
      %v8213 = vunpack.c.l.b16 %v8117
      %v8214 = vunpack.c.l.b16 %v8118
      %v8215 = vunpack.c.l.b16 %v8119
      %v8216 = vunpack.c.l.b16 %v8120
      %v8217 = vunpack.c.l.b16 %v8121
      %v8218 = vunpack.c.l.b16 %v8122
      %v8219 = vunpack.c.l.b16 %v8123
      %v8220 = vpack.c.b16 %v8205, %v8204
      %v8221 = vpack.c.b16 %v8207, %v8206
      %v8222 = vpack.c.b16 %v8209, %v8208
      %v8223 = vpack.c.b16 %v8211, %v8210
      %v8224 = vpack.c.b16 %v8213, %v8212
      %v8225 = vpack.c.b16 %v8215, %v8214
      %v8226 = vpack.c.b16 %v8217, %v8216
      %v8227 = vpack.c.b16 %v8219, %v8218
      %8236 = vmatprep.subr.bf16.mxu0 0
      %8237 = vmatpush1.bf16.msra.mxu0 %v8227
      %8238 = vmatprep.subr.bf16.mxu0 0
      %8239 = vmatpush1.bf16.msra.mxu0 %v8226
      %8240 = vmatprep.subr.bf16.mxu0 0
      %8241 = vmatpush1.bf16.msra.mxu0 %v8225
      %8242 = vmatprep.subr.bf16.mxu0 0
      %8243 = vmatpush1.bf16.msra.mxu0 %v8224
      %8244 = vmatprep.subr.bf16.mxu0 0
      %8245 = vmatpush1.bf16.msra.mxu0 %v8223
      %8246 = vmatprep.subr.bf16.mxu0 0
      %8247 = vmatpush1.bf16.msra.mxu0 %v8222
      %8248 = vmatprep.subr.bf16.mxu0 0
      %8249 = vmatpush1.bf16.msra.mxu0 %v8221
      %8250 = vmatprep.subr.bf16.mxu0 0
      %8251 = vmatpush1.bf16.msra.mxu0 %v8220
      %8252 = vmatprep.subr.bf16.mxu0 0
      %8253 = vmatpush2.bf16.msra.mxu0 0
      %8254 = vmatprep.subr.bf16.mxu0 0
      %8255 = vmatpush2.bf16.msra.mxu0 0
      %8256 = vmatprep.subr.bf16.mxu0 0
      %8257 = vmatpush2.bf16.msra.mxu0 0
      %8258 = vmatprep.subr.bf16.mxu0 0
      %8259 = vmatpush2.bf16.msra.mxu0 0
      %8260 = vmatprep.subr.bf16.mxu0 0
      %8261 = vmatpush2.bf16.msra.mxu0 0
      %8262 = vmatprep.subr.bf16.mxu0 0
      %8263 = vmatpush2.bf16.msra.mxu0 0
      %8264 = vmatprep.subr.bf16.mxu0 0
      %8265 = vmatpush2.bf16.msra.mxu0 0
      %8266 = vmatprep.subr.bf16.mxu0 0
      %8267 = vmatpush2.bf16.msra.mxu0 0
      %8268 = vmatprep.mubr.bf16.mxu0 0
      %8269 = vmatmul.mubr.bf16.gmra.mxu0 %v8156
      %v8270 = vpop.f32.mrf.mxu0
      %v8271 = vadd.f32 0.0, %v8270
      %v8272 = vpop.f32.mrf.mxu0
      %v8273 = vpop.f32.mrf.mxu0
      %v8274 = vadd.f32 0.0, %v8273
      %v8275 = vpop.f32.mrf.mxu0
      %8276 = vmatprep.mubr.bf16.mxu0 0
      %8277 = vmatmul.mubr.bf16.gmra.mxu0 %v8157
      %v8278 = vpop.f32.mrf.mxu0
      %v8279 = vadd.f32 0.0, %v8278
      %v8280 = vpop.f32.mrf.mxu0
      %v8281 = vpop.f32.mrf.mxu0
      %v8282 = vadd.f32 0.0, %v8281
      %v8283 = vpop.f32.mrf.mxu0
      %8284 = vmatprep.mubr.bf16.mxu0 0
      %8285 = vmatmul.mubr.bf16.gmra.mxu0 %v8158
      %v8286 = vpop.f32.mrf.mxu0
      %v8287 = vadd.f32 0.0, %v8286
      %v8288 = vpop.f32.mrf.mxu0
      %v8289 = vpop.f32.mrf.mxu0
      %v8290 = vadd.f32 0.0, %v8289
      %v8291 = vpop.f32.mrf.mxu0
      %8292 = vmatprep.mubr.bf16.mxu0 0
      %8293 = vmatmul.mubr.bf16.gmra.mxu0 %v8159
      %v8294 = vpop.f32.mrf.mxu0
      %v8295 = vadd.f32 0.0, %v8294
      %v8296 = vpop.f32.mrf.mxu0
      %v8297 = vpop.f32.mrf.mxu0
      %v8298 = vadd.f32 0.0, %v8297
      %v8299 = vpop.f32.mrf.mxu0
      %8300 = vmatprep.mubr.bf16.mxu0 0
      %8301 = vmatmul.mubr.bf16.gmra.mxu0 %v8160
      %v8302 = vpop.f32.mrf.mxu0
      %v8303 = vadd.f32 0.0, %v8302
      %v8304 = vpop.f32.mrf.mxu0
      %v8305 = vpop.f32.mrf.mxu0
      %v8306 = vadd.f32 0.0, %v8305
      %v8307 = vpop.f32.mrf.mxu0
      %8308 = vmatprep.mubr.bf16.mxu0 0
      %8309 = vmatmul.mubr.bf16.gmra.mxu0 %v8161
      %v8310 = vpop.f32.mrf.mxu0
      %v8311 = vadd.f32 0.0, %v8310
      %v8312 = vpop.f32.mrf.mxu0
      %v8313 = vpop.f32.mrf.mxu0
      %v8314 = vadd.f32 0.0, %v8313
      %v8315 = vpop.f32.mrf.mxu0
      %8316 = vmatprep.mubr.bf16.mxu0 0
      %8317 = vmatmul.mubr.bf16.gmra.mxu0 %v8162
      %v8318 = vpop.f32.mrf.mxu0
      %v8319 = vadd.f32 0.0, %v8318
      %v8320 = vpop.f32.mrf.mxu0
      %v8321 = vpop.f32.mrf.mxu0
      %v8322 = vadd.f32 0.0, %v8321
      %v8323 = vpop.f32.mrf.mxu0
      %8324 = vmatprep.mubr.bf16.mxu0 0
      %8325 = vmatmul.mubr.bf16.gmra.mxu0 %v8163
      %v8326 = vpop.f32.mrf.mxu0
      %v8327 = vadd.f32 0.0, %v8326
      %v8328 = vpop.f32.mrf.mxu0
      %v8329 = vpop.f32.mrf.mxu0
      %v8330 = vadd.f32 0.0, %v8329
      %v8331 = vpop.f32.mrf.mxu0
      %8332 = vmatprep.mubr.bf16.mxu0 0
      %8333 = vmatmul.mubr.bf16.gmra.mxu0 %v8164
      %v8334 = vpop.f32.mrf.mxu0
      %v8335 = vadd.f32 0.0, %v8334
      %v8336 = vpop.f32.mrf.mxu0
      %v8337 = vpop.f32.mrf.mxu0
      %v8338 = vadd.f32 0.0, %v8337
      %v8339 = vpop.f32.mrf.mxu0
      %8340 = vmatprep.mubr.bf16.mxu0 0
      %8341 = vmatmul.mubr.bf16.gmra.mxu0 %v8165
      %v8342 = vpop.f32.mrf.mxu0
      %v8343 = vadd.f32 0.0, %v8342
      %v8344 = vpop.f32.mrf.mxu0
      %v8345 = vpop.f32.mrf.mxu0
      %v8346 = vadd.f32 0.0, %v8345
      %v8347 = vpop.f32.mrf.mxu0
      %8348 = vmatprep.mubr.bf16.mxu0 0
      %8349 = vmatmul.mubr.bf16.gmra.mxu0 %v8166
      %v8350 = vpop.f32.mrf.mxu0
      %v8351 = vadd.f32 0.0, %v8350
      %v8352 = vpop.f32.mrf.mxu0
      %v8353 = vpop.f32.mrf.mxu0
      %v8354 = vadd.f32 0.0, %v8353
      %v8355 = vpop.f32.mrf.mxu0
      %8356 = vmatprep.mubr.bf16.mxu0 0
      %8357 = vmatmul.mubr.bf16.gmra.mxu0 %v8167
      %v8358 = vpop.f32.mrf.mxu0
      %v8359 = vadd.f32 0.0, %v8358
      %v8360 = vpop.f32.mrf.mxu0
      %v8361 = vpop.f32.mrf.mxu0
      %v8362 = vadd.f32 0.0, %v8361
      %v8363 = vpop.f32.mrf.mxu0
      %8364 = vmatprep.mubr.bf16.mxu0 0
      %8365 = vmatmul.mubr.bf16.gmra.mxu0 %v8168
      %v8366 = vpop.f32.mrf.mxu0
      %v8367 = vadd.f32 0.0, %v8366
      %v8368 = vpop.f32.mrf.mxu0
      %v8369 = vpop.f32.mrf.mxu0
      %v8370 = vadd.f32 0.0, %v8369
      %v8371 = vpop.f32.mrf.mxu0
      %8372 = vmatprep.mubr.bf16.mxu0 0
      %8373 = vmatmul.mubr.bf16.gmra.mxu0 %v8169
      %v8374 = vpop.f32.mrf.mxu0
      %v8375 = vadd.f32 0.0, %v8374
      %v8376 = vpop.f32.mrf.mxu0
      %v8377 = vpop.f32.mrf.mxu0
      %v8378 = vadd.f32 0.0, %v8377
      %v8379 = vpop.f32.mrf.mxu0
      %8380 = vmatprep.mubr.bf16.mxu0 0
      %8381 = vmatmul.mubr.bf16.gmra.mxu0 %v8170
      %v8382 = vpop.f32.mrf.mxu0
      %v8383 = vadd.f32 0.0, %v8382
      %v8384 = vpop.f32.mrf.mxu0
      %v8385 = vpop.f32.mrf.mxu0
      %v8386 = vadd.f32 0.0, %v8385
      %v8387 = vpop.f32.mrf.mxu0
      %8388 = vmatprep.mubr.bf16.mxu0 0
      %8389 = vmatmul.mubr.bf16.gmra.mxu0 %v8171
      %v8390 = vpop.f32.mrf.mxu0
      %v8391 = vadd.f32 0.0, %v8390
      %v8392 = vpop.f32.mrf.mxu0
      %v8393 = vpop.f32.mrf.mxu0
      %v8394 = vadd.f32 0.0, %v8393
      %v8395 = vpop.f32.mrf.mxu0
      %8396 = vdwg.mxu0
      %v8397 = vadd.f32 %v7821, %v8271
      %v8398 = vadd.f32 %v7824, %v8274
      %v8399 = vadd.f32 %v7829, %v8279
      %v8400 = vadd.f32 %v7832, %v8282
      %v8401 = vadd.f32 %v7837, %v8287
      %v8402 = vadd.f32 %v7840, %v8290
      %v8403 = vadd.f32 %v7845, %v8295
      %v8404 = vadd.f32 %v7848, %v8298
      %v8405 = vadd.f32 %v7853, %v8303
      %v8406 = vadd.f32 %v7856, %v8306
      %v8407 = vadd.f32 %v7861, %v8311
      %v8408 = vadd.f32 %v7864, %v8314
      %v8409 = vadd.f32 %v7869, %v8319
      %v8410 = vadd.f32 %v7872, %v8322
      %v8411 = vadd.f32 %v7877, %v8327
      %v8412 = vadd.f32 %v7880, %v8330
      %v8413 = vadd.f32 %v7885, %v8335
      %v8414 = vadd.f32 %v7888, %v8338
      %v8415 = vadd.f32 %v7893, %v8343
      %v8416 = vadd.f32 %v7896, %v8346
      %v8417 = vadd.f32 %v7901, %v8351
      %v8418 = vadd.f32 %v7904, %v8354
      %v8419 = vadd.f32 %v7909, %v8359
      %v8420 = vadd.f32 %v7912, %v8362
      %v8421 = vadd.f32 %v7917, %v8367
      %v8422 = vadd.f32 %v7920, %v8370
      %v8423 = vadd.f32 %v7925, %v8375
      %v8424 = vadd.f32 %v7928, %v8378
      %v8425 = vadd.f32 %v7933, %v8383
      %v8426 = vadd.f32 %v7936, %v8386
      %v8427 = vadd.f32 %v7941, %v8391
      %v8428 = vadd.f32 %v7944, %v8394
      %v8429 = vld [vmem:[%s6789] sm:$0xf]
      %v8430 = vld [vmem:[%s6789 + $0x4] sm:$0xf]
      %v8431 = vld [vmem:[%s6789 + $0xc] sm:$0xf]
      %v8432 = vld [vmem:[%s6789 + $0x10] sm:$0xf]
      %v8433 = vld [vmem:[%s6789 + $0x18] sm:$0xf]
      %v8434 = vld [vmem:[%s6789 + $0x1c] sm:$0xf]
      %v8435 = vld [vmem:[%s6789 + $0x24] sm:$0xf]
      %v8436 = vld [vmem:[%s6789 + $0x28] sm:$0xf]
      %v8437 = vld [vmem:[%s6789 + $0x30] sm:$0xf]
      %v8438 = vld [vmem:[%s6789 + $0x34] sm:$0xf]
      %v8439 = vld [vmem:[%s6789 + $0x3c] sm:$0xf]
      %v8440 = vld [vmem:[%s6789 + $0x40] sm:$0xf]
      %v8441 = vld [vmem:[%s6789 + $0x48] sm:$0xf]
      %v8442 = vld [vmem:[%s6789 + $0x4c] sm:$0xf]
      %v8443 = vld [vmem:[%s6789 + $0x54] sm:$0xf]
      %v8444 = vld [vmem:[%s6789 + $0x58] sm:$0xf]
      %v8445 = vld [vmem:[%s6789 + $0x60] sm:$0xf]
      %v8446 = vld [vmem:[%s6789 + $0x64] sm:$0xf]
      %v8447 = vld [vmem:[%s6789 + $0x6c] sm:$0xf]
      %v8448 = vld [vmem:[%s6789 + $0x70] sm:$0xf]
      %v8449 = vld [vmem:[%s6789 + $0x78] sm:$0xf]
      %v8450 = vld [vmem:[%s6789 + $0x7c] sm:$0xf]
      %v8451 = vld [vmem:[%s6789 + $0x84] sm:$0xf]
      %v8452 = vld [vmem:[%s6789 + $0x88] sm:$0xf]
      %v8453 = vld [vmem:[%s6789 + $0x90] sm:$0xf]
      %v8454 = vld [vmem:[%s6789 + $0x94] sm:$0xf]
      %v8455 = vld [vmem:[%s6789 + $0x9c] sm:$0xf]
      %v8456 = vld [vmem:[%s6789 + $0xa0] sm:$0xf]
      %v8457 = vld [vmem:[%s6789 + $0xa8] sm:$0xf]
      %v8458 = vld [vmem:[%s6789 + $0xac] sm:$0xf]
      %v8459 = vld [vmem:[%s6789 + $0xb4] sm:$0xf]
      %v8460 = vld [vmem:[%s6789 + $0xb8] sm:$0xf]
      %s8461 = scalar_lea.vmem %s6, 192
      %v8462 = vld [vmem:[%s8461] sm:$0xf]
      %v8463 = vld [vmem:[%s8461 + $0x4] sm:$0xf]
      %v8464 = vld [vmem:[%s8461 + $0x8] sm:$0xf]
      %v8465 = vld [vmem:[%s8461 + $0xc] sm:$0xf]
      %v8466 = vld [vmem:[%s8461 + $0x10] sm:$0xf]
      %v8467 = vld [vmem:[%s8461 + $0x14] sm:$0xf]
      %v8468 = vld [vmem:[%s8461 + $0x18] sm:$0xf]
      %v8469 = vld [vmem:[%s8461 + $0x1c] sm:$0xf]
      %v8470 = vld [vmem:[%s8461 + $0x20] sm:$0xf]
      %v8471 = vld [vmem:[%s8461 + $0x24] sm:$0xf]
      %v8472 = vld [vmem:[%s8461 + $0x28] sm:$0xf]
      %v8473 = vld [vmem:[%s8461 + $0x2c] sm:$0xf]
      %v8474 = vld [vmem:[%s8461 + $0x30] sm:$0xf]
      %v8475 = vld [vmem:[%s8461 + $0x34] sm:$0xf]
      %v8476 = vld [vmem:[%s8461 + $0x38] sm:$0xf]
      %v8477 = vld [vmem:[%s8461 + $0x3c] sm:$0xf]
      %v8510 = vunpack.c.l.b16 %v8429
      %v8511 = vunpack.c.l.b16 %v8430
      %v8512 = vunpack.c.l.b16 %v8431
      %v8513 = vunpack.c.l.b16 %v8432
      %v8514 = vunpack.c.l.b16 %v8433
      %v8515 = vunpack.c.l.b16 %v8434
      %v8516 = vunpack.c.l.b16 %v8435
      %v8517 = vunpack.c.l.b16 %v8436
      %v8518 = vunpack.c.l.b16 %v8437
      %v8519 = vunpack.c.l.b16 %v8438
      %v8520 = vunpack.c.l.b16 %v8439
      %v8521 = vunpack.c.l.b16 %v8440
      %v8522 = vunpack.c.l.b16 %v8441
      %v8523 = vunpack.c.l.b16 %v8442
      %v8524 = vunpack.c.l.b16 %v8443
      %v8525 = vunpack.c.l.b16 %v8444
      %v8526 = vunpack.c.l.b16 %v8445
      %v8527 = vunpack.c.l.b16 %v8446
      %v8528 = vunpack.c.l.b16 %v8447
      %v8529 = vunpack.c.l.b16 %v8448
      %v8530 = vunpack.c.l.b16 %v8449
      %v8531 = vunpack.c.l.b16 %v8450
      %v8532 = vunpack.c.l.b16 %v8451
      %v8533 = vunpack.c.l.b16 %v8452
      %v8534 = vunpack.c.l.b16 %v8453
      %v8535 = vunpack.c.l.b16 %v8454
      %v8536 = vunpack.c.l.b16 %v8455
      %v8537 = vunpack.c.l.b16 %v8456
      %v8538 = vunpack.c.l.b16 %v8457
      %v8539 = vunpack.c.l.b16 %v8458
      %v8540 = vunpack.c.l.b16 %v8459
      %v8541 = vunpack.c.l.b16 %v8460
      %v8542 = vpack.c.b16 %v8511, %v8510
      %v8543 = vpack.c.b16 %v8513, %v8512
      %v8544 = vpack.c.b16 %v8515, %v8514
      %v8545 = vpack.c.b16 %v8517, %v8516
      %v8546 = vpack.c.b16 %v8519, %v8518
      %v8547 = vpack.c.b16 %v8521, %v8520
      %v8548 = vpack.c.b16 %v8523, %v8522
      %v8549 = vpack.c.b16 %v8525, %v8524
      %v8550 = vpack.c.b16 %v8527, %v8526
      %v8551 = vpack.c.b16 %v8529, %v8528
      %v8552 = vpack.c.b16 %v8531, %v8530
      %v8553 = vpack.c.b16 %v8533, %v8532
      %v8554 = vpack.c.b16 %v8535, %v8534
      %v8555 = vpack.c.b16 %v8537, %v8536
      %v8556 = vpack.c.b16 %v8539, %v8538
      %v8557 = vpack.c.b16 %v8541, %v8540
      %v8590 = vunpack.c.l.b16 %v8462
      %v8591 = vunpack.c.l.b16 %v8463
      %v8592 = vunpack.c.l.b16 %v8464
      %v8593 = vunpack.c.l.b16 %v8465
      %v8594 = vunpack.c.l.b16 %v8466
      %v8595 = vunpack.c.l.b16 %v8467
      %v8596 = vunpack.c.l.b16 %v8468
      %v8597 = vunpack.c.l.b16 %v8469
      %v8598 = vunpack.c.l.b16 %v8470
      %v8599 = vunpack.c.l.b16 %v8471
      %v8600 = vunpack.c.l.b16 %v8472
      %v8601 = vunpack.c.l.b16 %v8473
      %v8602 = vunpack.c.l.b16 %v8474
      %v8603 = vunpack.c.l.b16 %v8475
      %v8604 = vunpack.c.l.b16 %v8476
      %v8605 = vunpack.c.l.b16 %v8477
      %v8606 = vpack.c.b16 %v8591, %v8590
      %v8607 = vpack.c.b16 %v8593, %v8592
      %v8608 = vpack.c.b16 %v8595, %v8594
      %v8609 = vpack.c.b16 %v8597, %v8596
      %v8610 = vpack.c.b16 %v8599, %v8598
      %v8611 = vpack.c.b16 %v8601, %v8600
      %v8612 = vpack.c.b16 %v8603, %v8602
      %v8613 = vpack.c.b16 %v8605, %v8604
      %8622 = vmatprep.subr.bf16.mxu0 0
      %8623 = vmatpush1.bf16.msra.mxu0 %v8613
      %8624 = vmatprep.subr.bf16.mxu0 0
      %8625 = vmatpush1.bf16.msra.mxu0 %v8612
      %8626 = vmatprep.subr.bf16.mxu0 0
      %8627 = vmatpush1.bf16.msra.mxu0 %v8611
      %8628 = vmatprep.subr.bf16.mxu0 0
      %8629 = vmatpush1.bf16.msra.mxu0 %v8610
      %8630 = vmatprep.subr.bf16.mxu0 0
      %8631 = vmatpush1.bf16.msra.mxu0 %v8609
      %8632 = vmatprep.subr.bf16.mxu0 0
      %8633 = vmatpush1.bf16.msra.mxu0 %v8608
      %8634 = vmatprep.subr.bf16.mxu0 0
      %8635 = vmatpush1.bf16.msra.mxu0 %v8607
      %8636 = vmatprep.subr.bf16.mxu0 0
      %8637 = vmatpush1.bf16.msra.mxu0 %v8606
      %8638 = vmatprep.subr.bf16.mxu0 0
      %8639 = vmatpush2.bf16.msra.mxu0 0
      %8640 = vmatprep.subr.bf16.mxu0 0
      %8641 = vmatpush2.bf16.msra.mxu0 0
      %8642 = vmatprep.subr.bf16.mxu0 0
      %8643 = vmatpush2.bf16.msra.mxu0 0
      %8644 = vmatprep.subr.bf16.mxu0 0
      %8645 = vmatpush2.bf16.msra.mxu0 0
      %8646 = vmatprep.subr.bf16.mxu0 0
      %8647 = vmatpush2.bf16.msra.mxu0 0
      %8648 = vmatprep.subr.bf16.mxu0 0
      %8649 = vmatpush2.bf16.msra.mxu0 0
      %8650 = vmatprep.subr.bf16.mxu0 0
      %8651 = vmatpush2.bf16.msra.mxu0 0
      %8652 = vmatprep.subr.bf16.mxu0 0
      %8653 = vmatpush2.bf16.msra.mxu0 0
      %8654 = vmatprep.mubr.bf16.mxu0 0
      %8655 = vmatmul.mubr.bf16.gmra.mxu0 %v8542
      %v8656 = vpop.f32.mrf.mxu0
      %v8657 = vadd.f32 0.0, %v8656
      %v8658 = vpop.f32.mrf.mxu0
      %v8659 = vpop.f32.mrf.mxu0
      %v8660 = vadd.f32 0.0, %v8659
      %v8661 = vpop.f32.mrf.mxu0
      %8662 = vmatprep.mubr.bf16.mxu0 0
      %8663 = vmatmul.mubr.bf16.gmra.mxu0 %v8543
      %v8664 = vpop.f32.mrf.mxu0
      %v8665 = vadd.f32 0.0, %v8664
      %v8666 = vpop.f32.mrf.mxu0
      %v8667 = vpop.f32.mrf.mxu0
      %v8668 = vadd.f32 0.0, %v8667
      %v8669 = vpop.f32.mrf.mxu0
      %8670 = vmatprep.mubr.bf16.mxu0 0
      %8671 = vmatmul.mubr.bf16.gmra.mxu0 %v8544
      %v8672 = vpop.f32.mrf.mxu0
      %v8673 = vadd.f32 0.0, %v8672
      %v8674 = vpop.f32.mrf.mxu0
      %v8675 = vpop.f32.mrf.mxu0
      %v8676 = vadd.f32 0.0, %v8675
      %v8677 = vpop.f32.mrf.mxu0
      %8678 = vmatprep.mubr.bf16.mxu0 0
      %8679 = vmatmul.mubr.bf16.gmra.mxu0 %v8545
      %v8680 = vpop.f32.mrf.mxu0
      %v8681 = vadd.f32 0.0, %v8680
      %v8682 = vpop.f32.mrf.mxu0
      %v8683 = vpop.f32.mrf.mxu0
      %v8684 = vadd.f32 0.0, %v8683
      %v8685 = vpop.f32.mrf.mxu0
      %8686 = vmatprep.mubr.bf16.mxu0 0
      %8687 = vmatmul.mubr.bf16.gmra.mxu0 %v8546
      %v8688 = vpop.f32.mrf.mxu0
      %v8689 = vadd.f32 0.0, %v8688
      %v8690 = vpop.f32.mrf.mxu0
      %v8691 = vpop.f32.mrf.mxu0
      %v8692 = vadd.f32 0.0, %v8691
      %v8693 = vpop.f32.mrf.mxu0
      %8694 = vmatprep.mubr.bf16.mxu0 0
      %8695 = vmatmul.mubr.bf16.gmra.mxu0 %v8547
      %v8696 = vpop.f32.mrf.mxu0
      %v8697 = vadd.f32 0.0, %v8696
      %v8698 = vpop.f32.mrf.mxu0
      %v8699 = vpop.f32.mrf.mxu0
      %v8700 = vadd.f32 0.0, %v8699
      %v8701 = vpop.f32.mrf.mxu0
      %8702 = vmatprep.mubr.bf16.mxu0 0
      %8703 = vmatmul.mubr.bf16.gmra.mxu0 %v8548
      %v8704 = vpop.f32.mrf.mxu0
      %v8705 = vadd.f32 0.0, %v8704
      %v8706 = vpop.f32.mrf.mxu0
      %v8707 = vpop.f32.mrf.mxu0
      %v8708 = vadd.f32 0.0, %v8707
      %v8709 = vpop.f32.mrf.mxu0
      %8710 = vmatprep.mubr.bf16.mxu0 0
      %8711 = vmatmul.mubr.bf16.gmra.mxu0 %v8549
      %v8712 = vpop.f32.mrf.mxu0
      %v8713 = vadd.f32 0.0, %v8712
      %v8714 = vpop.f32.mrf.mxu0
      %v8715 = vpop.f32.mrf.mxu0
      %v8716 = vadd.f32 0.0, %v8715
      %v8717 = vpop.f32.mrf.mxu0
      %8718 = vmatprep.mubr.bf16.mxu0 0
      %8719 = vmatmul.mubr.bf16.gmra.mxu0 %v8550
      %v8720 = vpop.f32.mrf.mxu0
      %v8721 = vadd.f32 0.0, %v8720
      %v8722 = vpop.f32.mrf.mxu0
      %v8723 = vpop.f32.mrf.mxu0
      %v8724 = vadd.f32 0.0, %v8723
      %v8725 = vpop.f32.mrf.mxu0
      %8726 = vmatprep.mubr.bf16.mxu0 0
      %8727 = vmatmul.mubr.bf16.gmra.mxu0 %v8551
      %v8728 = vpop.f32.mrf.mxu0
      %v8729 = vadd.f32 0.0, %v8728
      %v8730 = vpop.f32.mrf.mxu0
      %v8731 = vpop.f32.mrf.mxu0
      %v8732 = vadd.f32 0.0, %v8731
      %v8733 = vpop.f32.mrf.mxu0
      %8734 = vmatprep.mubr.bf16.mxu0 0
      %8735 = vmatmul.mubr.bf16.gmra.mxu0 %v8552
      %v8736 = vpop.f32.mrf.mxu0
      %v8737 = vadd.f32 0.0, %v8736
      %v8738 = vpop.f32.mrf.mxu0
      %v8739 = vpop.f32.mrf.mxu0
      %v8740 = vadd.f32 0.0, %v8739
      %v8741 = vpop.f32.mrf.mxu0
      %8742 = vmatprep.mubr.bf16.mxu0 0
      %8743 = vmatmul.mubr.bf16.gmra.mxu0 %v8553
      %v8744 = vpop.f32.mrf.mxu0
      %v8745 = vadd.f32 0.0, %v8744
      %v8746 = vpop.f32.mrf.mxu0
      %v8747 = vpop.f32.mrf.mxu0
      %v8748 = vadd.f32 0.0, %v8747
      %v8749 = vpop.f32.mrf.mxu0
      %8750 = vmatprep.mubr.bf16.mxu0 0
      %8751 = vmatmul.mubr.bf16.gmra.mxu0 %v8554
      %v8752 = vpop.f32.mrf.mxu0
      %v8753 = vadd.f32 0.0, %v8752
      %v8754 = vpop.f32.mrf.mxu0
      %v8755 = vpop.f32.mrf.mxu0
      %v8756 = vadd.f32 0.0, %v8755
      %v8757 = vpop.f32.mrf.mxu0
      %8758 = vmatprep.mubr.bf16.mxu0 0
      %8759 = vmatmul.mubr.bf16.gmra.mxu0 %v8555
      %v8760 = vpop.f32.mrf.mxu0
      %v8761 = vadd.f32 0.0, %v8760
      %v8762 = vpop.f32.mrf.mxu0
      %v8763 = vpop.f32.mrf.mxu0
      %v8764 = vadd.f32 0.0, %v8763
      %v8765 = vpop.f32.mrf.mxu0
      %8766 = vmatprep.mubr.bf16.mxu0 0
      %8767 = vmatmul.mubr.bf16.gmra.mxu0 %v8556
      %v8768 = vpop.f32.mrf.mxu0
      %v8769 = vadd.f32 0.0, %v8768
      %v8770 = vpop.f32.mrf.mxu0
      %v8771 = vpop.f32.mrf.mxu0
      %v8772 = vadd.f32 0.0, %v8771
      %v8773 = vpop.f32.mrf.mxu0
      %8774 = vmatprep.mubr.bf16.mxu0 0
      %8775 = vmatmul.mubr.bf16.gmra.mxu0 %v8557
      %v8776 = vpop.f32.mrf.mxu0
      %v8777 = vadd.f32 0.0, %v8776
      %v8778 = vpop.f32.mrf.mxu0
      %v8779 = vpop.f32.mrf.mxu0
      %v8780 = vadd.f32 0.0, %v8779
      %v8781 = vpop.f32.mrf.mxu0
      %8782 = vdwg.mxu0
      %v8783 = vadd.f32 %v8397, %v8657
      %v8784 = vadd.f32 %v8398, %v8660
      %v8785 = vadd.f32 %v8399, %v8665
      %v8786 = vadd.f32 %v8400, %v8668
      %v8787 = vadd.f32 %v8401, %v8673
      %v8788 = vadd.f32 %v8402, %v8676
      %v8789 = vadd.f32 %v8403, %v8681
      %v8790 = vadd.f32 %v8404, %v8684
      %v8791 = vadd.f32 %v8405, %v8689
      %v8792 = vadd.f32 %v8406, %v8692
      %v8793 = vadd.f32 %v8407, %v8697
      %v8794 = vadd.f32 %v8408, %v8700
      %v8795 = vadd.f32 %v8409, %v8705
      %v8796 = vadd.f32 %v8410, %v8708
      %v8797 = vadd.f32 %v8411, %v8713
      %v8798 = vadd.f32 %v8412, %v8716
      %v8799 = vadd.f32 %v8413, %v8721
      %v8800 = vadd.f32 %v8414, %v8724
      %v8801 = vadd.f32 %v8415, %v8729
      %v8802 = vadd.f32 %v8416, %v8732
      %v8803 = vadd.f32 %v8417, %v8737
      %v8804 = vadd.f32 %v8418, %v8740
      %v8805 = vadd.f32 %v8419, %v8745
      %v8806 = vadd.f32 %v8420, %v8748
      %v8807 = vadd.f32 %v8421, %v8753
      %v8808 = vadd.f32 %v8422, %v8756
      %v8809 = vadd.f32 %v8423, %v8761
      %v8810 = vadd.f32 %v8424, %v8764
      %v8811 = vadd.f32 %v8425, %v8769
      %v8812 = vadd.f32 %v8426, %v8772
      %v8813 = vadd.f32 %v8427, %v8777
      %v8814 = vadd.f32 %v8428, %v8780
      %v8815 = vld [vmem:[%s6789] sm:$0xf]
      %v8816 = vld [vmem:[%s6789 + $0x4] sm:$0xf]
      %v8817 = vld [vmem:[%s6789 + $0x8] sm:$0x1]
      %v8818 = vld [vmem:[%s6789 + $0xc] sm:$0xf]
      %v8819 = vld [vmem:[%s6789 + $0x10] sm:$0xf]
      %v8820 = vld [vmem:[%s6789 + $0x14] sm:$0x1]
      %v8821 = vld [vmem:[%s6789 + $0x18] sm:$0xf]
      %v8822 = vld [vmem:[%s6789 + $0x1c] sm:$0xf]
      %v8823 = vld [vmem:[%s6789 + $0x20] sm:$0x1]
      %v8824 = vld [vmem:[%s6789 + $0x24] sm:$0xf]
      %v8825 = vld [vmem:[%s6789 + $0x28] sm:$0xf]
      %v8826 = vld [vmem:[%s6789 + $0x2c] sm:$0x1]
      %v8827 = vld [vmem:[%s6789 + $0x30] sm:$0xf]
      %v8828 = vld [vmem:[%s6789 + $0x34] sm:$0xf]
      %v8829 = vld [vmem:[%s6789 + $0x38] sm:$0x1]
      %v8830 = vld [vmem:[%s6789 + $0x3c] sm:$0xf]
      %v8831 = vld [vmem:[%s6789 + $0x40] sm:$0xf]
      %v8832 = vld [vmem:[%s6789 + $0x44] sm:$0x1]
      %v8833 = vld [vmem:[%s6789 + $0x48] sm:$0xf]
      %v8834 = vld [vmem:[%s6789 + $0x4c] sm:$0xf]
      %v8835 = vld [vmem:[%s6789 + $0x50] sm:$0x1]
      %v8836 = vld [vmem:[%s6789 + $0x54] sm:$0xf]
      %v8837 = vld [vmem:[%s6789 + $0x58] sm:$0xf]
      %v8838 = vld [vmem:[%s6789 + $0x5c] sm:$0x1]
      %v8839 = vld [vmem:[%s6789 + $0x60] sm:$0xf]
      %v8840 = vld [vmem:[%s6789 + $0x64] sm:$0xf]
      %v8841 = vld [vmem:[%s6789 + $0x68] sm:$0x1]
      %v8842 = vld [vmem:[%s6789 + $0x6c] sm:$0xf]
      %v8843 = vld [vmem:[%s6789 + $0x70] sm:$0xf]
      %v8844 = vld [vmem:[%s6789 + $0x74] sm:$0x1]
      %v8845 = vld [vmem:[%s6789 + $0x78] sm:$0xf]
      %v8846 = vld [vmem:[%s6789 + $0x7c] sm:$0xf]
      %v8847 = vld [vmem:[%s6789 + $0x80] sm:$0x1]
      %v8848 = vld [vmem:[%s6789 + $0x84] sm:$0xf]
      %v8849 = vld [vmem:[%s6789 + $0x88] sm:$0xf]
      %v8850 = vld [vmem:[%s6789 + $0x8c] sm:$0x1]
      %v8851 = vld [vmem:[%s6789 + $0x90] sm:$0xf]
      %v8852 = vld [vmem:[%s6789 + $0x94] sm:$0xf]
      %v8853 = vld [vmem:[%s6789 + $0x98] sm:$0x1]
      %v8854 = vld [vmem:[%s6789 + $0x9c] sm:$0xf]
      %v8855 = vld [vmem:[%s6789 + $0xa0] sm:$0xf]
      %v8856 = vld [vmem:[%s6789 + $0xa4] sm:$0x1]
      %v8857 = vld [vmem:[%s6789 + $0xa8] sm:$0xf]
      %v8858 = vld [vmem:[%s6789 + $0xac] sm:$0xf]
      %v8859 = vld [vmem:[%s6789 + $0xb0] sm:$0x1]
      %v8860 = vld [vmem:[%s6789 + $0xb4] sm:$0xf]
      %v8861 = vld [vmem:[%s6789 + $0xb8] sm:$0xf]
      %v8862 = vld [vmem:[%s6789 + $0xbc] sm:$0x1]
      %v8864 = vshrl.u32 %v8815, 16
      %v8866 = vrot.slane %v8864, 4
      %v8867 = vshll.u32 %v8815, 16
      %v8869 = vrot.slane %v8867, 5
      %v8870 = vor.u32 %v8866, %v8869
      %v8871 = vrot.slane %v8870, 4
      %v8873 = vshll.u32 %v8816, 16
      %v8875 = vrot.slane %v8873, 5
      %v8876 = vsel %vm1129, %v8871, %v8875
      %v8877 = vshrl.u32 %v8816, 16
      %v8879 = vrot.slane %v8877, 4
      %v8880 = vor.u32 %v8879, %v8875
      %v8881 = vrot.slane %v8880, 4
      %v8883 = vshll.u32 %v8817, 16
      %v8885 = vrot.slane %v8883, 5
      %v8886 = vsel %vm1129, %v8881, %v8885
      %v8888 = vshrl.u32 %v8818, 16
      %v8890 = vrot.slane %v8888, 4
      %v8891 = vshll.u32 %v8818, 16
      %v8893 = vrot.slane %v8891, 5
      %v8894 = vor.u32 %v8890, %v8893
      %v8895 = vrot.slane %v8894, 4
      %v8897 = vshll.u32 %v8819, 16
      %v8899 = vrot.slane %v8897, 5
      %v8900 = vsel %vm1129, %v8895, %v8899
      %v8901 = vshrl.u32 %v8819, 16
      %v8903 = vrot.slane %v8901, 4
      %v8904 = vor.u32 %v8903, %v8899
      %v8905 = vrot.slane %v8904, 4
      %v8907 = vshll.u32 %v8820, 16
      %v8909 = vrot.slane %v8907, 5
      %v8910 = vsel %vm1129, %v8905, %v8909
      %v8912 = vshrl.u32 %v8821, 16
      %v8914 = vrot.slane %v8912, 4
      %v8915 = vshll.u32 %v8821, 16
      %v8917 = vrot.slane %v8915, 5
      %v8918 = vor.u32 %v8914, %v8917
      %v8919 = vrot.slane %v8918, 4
      %v8921 = vshll.u32 %v8822, 16
      %v8923 = vrot.slane %v8921, 5
      %v8924 = vsel %vm1129, %v8919, %v8923
      %v8925 = vshrl.u32 %v8822, 16
      %v8927 = vrot.slane %v8925, 4
      %v8928 = vor.u32 %v8927, %v8923
      %v8929 = vrot.slane %v8928, 4
      %v8931 = vshll.u32 %v8823, 16
      %v8933 = vrot.slane %v8931, 5
      %v8934 = vsel %vm1129, %v8929, %v8933
      %v8936 = vshrl.u32 %v8824, 16
      %v8938 = vrot.slane %v8936, 4
      %v8939 = vshll.u32 %v8824, 16
      %v8941 = vrot.slane %v8939, 5
      %v8942 = vor.u32 %v8938, %v8941
      %v8943 = vrot.slane %v8942, 4
      %v8945 = vshll.u32 %v8825, 16
      %v8947 = vrot.slane %v8945, 5
      %v8948 = vsel %vm1129, %v8943, %v8947
      %v8949 = vshrl.u32 %v8825, 16
      %v8951 = vrot.slane %v8949, 4
      %v8952 = vor.u32 %v8951, %v8947
      %v8953 = vrot.slane %v8952, 4
      %v8955 = vshll.u32 %v8826, 16
      %v8957 = vrot.slane %v8955, 5
      %v8958 = vsel %vm1129, %v8953, %v8957
      %v8960 = vshrl.u32 %v8827, 16
      %v8962 = vrot.slane %v8960, 4
      %v8963 = vshll.u32 %v8827, 16
      %v8965 = vrot.slane %v8963, 5
      %v8966 = vor.u32 %v8962, %v8965
      %v8967 = vrot.slane %v8966, 4
      %v8969 = vshll.u32 %v8828, 16
      %v8971 = vrot.slane %v8969, 5
      %v8972 = vsel %vm1129, %v8967, %v8971
      %v8973 = vshrl.u32 %v8828, 16
      %v8975 = vrot.slane %v8973, 4
      %v8976 = vor.u32 %v8975, %v8971
      %v8977 = vrot.slane %v8976, 4
      %v8979 = vshll.u32 %v8829, 16
      %v8981 = vrot.slane %v8979, 5
      %v8982 = vsel %vm1129, %v8977, %v8981
      %v8984 = vshrl.u32 %v8830, 16
      %v8986 = vrot.slane %v8984, 4
      %v8987 = vshll.u32 %v8830, 16
      %v8989 = vrot.slane %v8987, 5
      %v8990 = vor.u32 %v8986, %v8989
      %v8991 = vrot.slane %v8990, 4
      %v8993 = vshll.u32 %v8831, 16
      %v8995 = vrot.slane %v8993, 5
      %v8996 = vsel %vm1129, %v8991, %v8995
      %v8997 = vshrl.u32 %v8831, 16
      %v8999 = vrot.slane %v8997, 4
      %v9000 = vor.u32 %v8999, %v8995
      %v9001 = vrot.slane %v9000, 4
      %v9003 = vshll.u32 %v8832, 16
      %v9005 = vrot.slane %v9003, 5
      %v9006 = vsel %vm1129, %v9001, %v9005
      %v9008 = vshrl.u32 %v8833, 16
      %v9010 = vrot.slane %v9008, 4
      %v9011 = vshll.u32 %v8833, 16
      %v9013 = vrot.slane %v9011, 5
      %v9014 = vor.u32 %v9010, %v9013
      %v9015 = vrot.slane %v9014, 4
      %v9017 = vshll.u32 %v8834, 16
      %v9019 = vrot.slane %v9017, 5
      %v9020 = vsel %vm1129, %v9015, %v9019
      %v9021 = vshrl.u32 %v8834, 16
      %v9023 = vrot.slane %v9021, 4
      %v9024 = vor.u32 %v9023, %v9019
      %v9025 = vrot.slane %v9024, 4
      %v9027 = vshll.u32 %v8835, 16
      %v9029 = vrot.slane %v9027, 5
      %v9030 = vsel %vm1129, %v9025, %v9029
      %v9032 = vshrl.u32 %v8836, 16
      %v9034 = vrot.slane %v9032, 4
      %v9035 = vshll.u32 %v8836, 16
      %v9037 = vrot.slane %v9035, 5
      %v9038 = vor.u32 %v9034, %v9037
      %v9039 = vrot.slane %v9038, 4
      %v9041 = vshll.u32 %v8837, 16
      %v9043 = vrot.slane %v9041, 5
      %v9044 = vsel %vm1129, %v9039, %v9043
      %v9045 = vshrl.u32 %v8837, 16
      %v9047 = vrot.slane %v9045, 4
      %v9048 = vor.u32 %v9047, %v9043
      %v9049 = vrot.slane %v9048, 4
      %v9051 = vshll.u32 %v8838, 16
      %v9053 = vrot.slane %v9051, 5
      %v9054 = vsel %vm1129, %v9049, %v9053
      %v9056 = vshrl.u32 %v8839, 16
      %v9058 = vrot.slane %v9056, 4
      %v9059 = vshll.u32 %v8839, 16
      %v9061 = vrot.slane %v9059, 5
      %v9062 = vor.u32 %v9058, %v9061
      %v9063 = vrot.slane %v9062, 4
      %v9065 = vshll.u32 %v8840, 16
      %v9067 = vrot.slane %v9065, 5
      %v9068 = vsel %vm1129, %v9063, %v9067
      %v9069 = vshrl.u32 %v8840, 16
      %v9071 = vrot.slane %v9069, 4
      %v9072 = vor.u32 %v9071, %v9067
      %v9073 = vrot.slane %v9072, 4
      %v9075 = vshll.u32 %v8841, 16
      %v9077 = vrot.slane %v9075, 5
      %v9078 = vsel %vm1129, %v9073, %v9077
      %v9080 = vshrl.u32 %v8842, 16
      %v9082 = vrot.slane %v9080, 4
      %v9083 = vshll.u32 %v8842, 16
      %v9085 = vrot.slane %v9083, 5
      %v9086 = vor.u32 %v9082, %v9085
      %v9087 = vrot.slane %v9086, 4
      %v9089 = vshll.u32 %v8843, 16
      %v9091 = vrot.slane %v9089, 5
      %v9092 = vsel %vm1129, %v9087, %v9091
      %v9093 = vshrl.u32 %v8843, 16
      %v9095 = vrot.slane %v9093, 4
      %v9096 = vor.u32 %v9095, %v9091
      %v9097 = vrot.slane %v9096, 4
      %v9099 = vshll.u32 %v8844, 16
      %v9101 = vrot.slane %v9099, 5
      %v9102 = vsel %vm1129, %v9097, %v9101
      %v9104 = vshrl.u32 %v8845, 16
      %v9106 = vrot.slane %v9104, 4
      %v9107 = vshll.u32 %v8845, 16
      %v9109 = vrot.slane %v9107, 5
      %v9110 = vor.u32 %v9106, %v9109
      %v9111 = vrot.slane %v9110, 4
      %v9113 = vshll.u32 %v8846, 16
      %v9115 = vrot.slane %v9113, 5
      %v9116 = vsel %vm1129, %v9111, %v9115
      %v9117 = vshrl.u32 %v8846, 16
      %v9119 = vrot.slane %v9117, 4
      %v9120 = vor.u32 %v9119, %v9115
      %v9121 = vrot.slane %v9120, 4
      %v9123 = vshll.u32 %v8847, 16
      %v9125 = vrot.slane %v9123, 5
      %v9126 = vsel %vm1129, %v9121, %v9125
      %v9128 = vshrl.u32 %v8848, 16
      %v9130 = vrot.slane %v9128, 4
      %v9131 = vshll.u32 %v8848, 16
      %v9133 = vrot.slane %v9131, 5
      %v9134 = vor.u32 %v9130, %v9133
      %v9135 = vrot.slane %v9134, 4
      %v9137 = vshll.u32 %v8849, 16
      %v9139 = vrot.slane %v9137, 5
      %v9140 = vsel %vm1129, %v9135, %v9139
      %v9141 = vshrl.u32 %v8849, 16
      %v9143 = vrot.slane %v9141, 4
      %v9144 = vor.u32 %v9143, %v9139
      %v9145 = vrot.slane %v9144, 4
      %v9147 = vshll.u32 %v8850, 16
      %v9149 = vrot.slane %v9147, 5
      %v9150 = vsel %vm1129, %v9145, %v9149
      %v9152 = vshrl.u32 %v8851, 16
      %v9154 = vrot.slane %v9152, 4
      %v9155 = vshll.u32 %v8851, 16
      %v9157 = vrot.slane %v9155, 5
      %v9158 = vor.u32 %v9154, %v9157
      %v9159 = vrot.slane %v9158, 4
      %v9161 = vshll.u32 %v8852, 16
      %v9163 = vrot.slane %v9161, 5
      %v9164 = vsel %vm1129, %v9159, %v9163
      %v9165 = vshrl.u32 %v8852, 16
      %v9167 = vrot.slane %v9165, 4
      %v9168 = vor.u32 %v9167, %v9163
      %v9169 = vrot.slane %v9168, 4
      %v9171 = vshll.u32 %v8853, 16
      %v9173 = vrot.slane %v9171, 5
      %v9174 = vsel %vm1129, %v9169, %v9173
      %v9176 = vshrl.u32 %v8854, 16
      %v9178 = vrot.slane %v9176, 4
      %v9179 = vshll.u32 %v8854, 16
      %v9181 = vrot.slane %v9179, 5
      %v9182 = vor.u32 %v9178, %v9181
      %v9183 = vrot.slane %v9182, 4
      %v9185 = vshll.u32 %v8855, 16
      %v9187 = vrot.slane %v9185, 5
      %v9188 = vsel %vm1129, %v9183, %v9187
      %v9189 = vshrl.u32 %v8855, 16
      %v9191 = vrot.slane %v9189, 4
      %v9192 = vor.u32 %v9191, %v9187
      %v9193 = vrot.slane %v9192, 4
      %v9195 = vshll.u32 %v8856, 16
      %v9197 = vrot.slane %v9195, 5
      %v9198 = vsel %vm1129, %v9193, %v9197
      %v9200 = vshrl.u32 %v8857, 16
      %v9202 = vrot.slane %v9200, 4
      %v9203 = vshll.u32 %v8857, 16
      %v9205 = vrot.slane %v9203, 5
      %v9206 = vor.u32 %v9202, %v9205
      %v9207 = vrot.slane %v9206, 4
      %v9209 = vshll.u32 %v8858, 16
      %v9211 = vrot.slane %v9209, 5
      %v9212 = vsel %vm1129, %v9207, %v9211
      %v9213 = vshrl.u32 %v8858, 16
      %v9215 = vrot.slane %v9213, 4
      %v9216 = vor.u32 %v9215, %v9211
      %v9217 = vrot.slane %v9216, 4
      %v9219 = vshll.u32 %v8859, 16
      %v9221 = vrot.slane %v9219, 5
      %v9222 = vsel %vm1129, %v9217, %v9221
      %v9224 = vshrl.u32 %v8860, 16
      %v9226 = vrot.slane %v9224, 4
      %v9227 = vshll.u32 %v8860, 16
      %v9229 = vrot.slane %v9227, 5
      %v9230 = vor.u32 %v9226, %v9229
      %v9231 = vrot.slane %v9230, 4
      %v9233 = vshll.u32 %v8861, 16
      %v9235 = vrot.slane %v9233, 5
      %v9236 = vsel %vm1129, %v9231, %v9235
      %v9237 = vshrl.u32 %v8861, 16
      %v9239 = vrot.slane %v9237, 4
      %v9240 = vor.u32 %v9239, %v9235
      %v9241 = vrot.slane %v9240, 4
      %v9243 = vshll.u32 %v8862, 16
      %v9245 = vrot.slane %v9243, 5
      %v9246 = vsel %vm1129, %v9241, %v9245
      %s9247 = scalar_lea.vmem %s6, 256
      %v9248 = vld [vmem:[%s9247] sm:$0xf]
      %v9249 = vld [vmem:[%s9247 + $0x4] sm:$0xf]
      %v9250 = vld [vmem:[%s9247 + $0x8] sm:$0xf]
      %v9251 = vld [vmem:[%s9247 + $0xc] sm:$0xf]
      %v9252 = vld [vmem:[%s9247 + $0x10] sm:$0xf]
      %v9253 = vld [vmem:[%s9247 + $0x14] sm:$0xf]
      %v9254 = vld [vmem:[%s9247 + $0x18] sm:$0xf]
      %v9255 = vld [vmem:[%s9247 + $0x1c] sm:$0xf]
      %v9256 = vld [vmem:[%s9247 + $0x20] sm:$0xf]
      %v9257 = vld [vmem:[%s9247 + $0x24] sm:$0xf]
      %v9258 = vld [vmem:[%s9247 + $0x28] sm:$0xf]
      %v9259 = vld [vmem:[%s9247 + $0x2c] sm:$0xf]
      %v9260 = vld [vmem:[%s9247 + $0x30] sm:$0xf]
      %v9261 = vld [vmem:[%s9247 + $0x34] sm:$0xf]
      %v9262 = vld [vmem:[%s9247 + $0x38] sm:$0xf]
      %v9263 = vld [vmem:[%s9247 + $0x3c] sm:$0xf]
      %v9264 = vunpack.c.l.b16 %v8876
      %v9265 = vunpack.c.l.b16 %v8886
      %v9266 = vunpack.c.l.b16 %v8900
      %v9267 = vunpack.c.l.b16 %v8910
      %v9268 = vunpack.c.l.b16 %v8924
      %v9269 = vunpack.c.l.b16 %v8934
      %v9270 = vunpack.c.l.b16 %v8948
      %v9271 = vunpack.c.l.b16 %v8958
      %v9272 = vunpack.c.l.b16 %v8972
      %v9273 = vunpack.c.l.b16 %v8982
      %v9274 = vunpack.c.l.b16 %v8996
      %v9275 = vunpack.c.l.b16 %v9006
      %v9276 = vunpack.c.l.b16 %v9020
      %v9277 = vunpack.c.l.b16 %v9030
      %v9278 = vunpack.c.l.b16 %v9044
      %v9279 = vunpack.c.l.b16 %v9054
      %v9280 = vunpack.c.l.b16 %v9068
      %v9281 = vunpack.c.l.b16 %v9078
      %v9282 = vunpack.c.l.b16 %v9092
      %v9283 = vunpack.c.l.b16 %v9102
      %v9284 = vunpack.c.l.b16 %v9116
      %v9285 = vunpack.c.l.b16 %v9126
      %v9286 = vunpack.c.l.b16 %v9140
      %v9287 = vunpack.c.l.b16 %v9150
      %v9288 = vunpack.c.l.b16 %v9164
      %v9289 = vunpack.c.l.b16 %v9174
      %v9290 = vunpack.c.l.b16 %v9188
      %v9291 = vunpack.c.l.b16 %v9198
      %v9292 = vunpack.c.l.b16 %v9212
      %v9293 = vunpack.c.l.b16 %v9222
      %v9294 = vunpack.c.l.b16 %v9236
      %v9295 = vunpack.c.l.b16 %v9246
      %v9296 = vpack.c.b16 %v9265, %v9264
      %v9297 = vpack.c.b16 %v9267, %v9266
      %v9298 = vpack.c.b16 %v9269, %v9268
      %v9299 = vpack.c.b16 %v9271, %v9270
      %v9300 = vpack.c.b16 %v9273, %v9272
      %v9301 = vpack.c.b16 %v9275, %v9274
      %v9302 = vpack.c.b16 %v9277, %v9276
      %v9303 = vpack.c.b16 %v9279, %v9278
      %v9304 = vpack.c.b16 %v9281, %v9280
      %v9305 = vpack.c.b16 %v9283, %v9282
      %v9306 = vpack.c.b16 %v9285, %v9284
      %v9307 = vpack.c.b16 %v9287, %v9286
      %v9308 = vpack.c.b16 %v9289, %v9288
      %v9309 = vpack.c.b16 %v9291, %v9290
      %v9310 = vpack.c.b16 %v9293, %v9292
      %v9311 = vpack.c.b16 %v9295, %v9294
      %v9344 = vunpack.c.l.b16 %v9248
      %v9345 = vunpack.c.l.b16 %v9249
      %v9346 = vunpack.c.l.b16 %v9250
      %v9347 = vunpack.c.l.b16 %v9251
      %v9348 = vunpack.c.l.b16 %v9252
      %v9349 = vunpack.c.l.b16 %v9253
      %v9350 = vunpack.c.l.b16 %v9254
      %v9351 = vunpack.c.l.b16 %v9255
      %v9352 = vunpack.c.l.b16 %v9256
      %v9353 = vunpack.c.l.b16 %v9257
      %v9354 = vunpack.c.l.b16 %v9258
      %v9355 = vunpack.c.l.b16 %v9259
      %v9356 = vunpack.c.l.b16 %v9260
      %v9357 = vunpack.c.l.b16 %v9261
      %v9358 = vunpack.c.l.b16 %v9262
      %v9359 = vunpack.c.l.b16 %v9263
      %v9360 = vpack.c.b16 %v9345, %v9344
      %v9361 = vpack.c.b16 %v9347, %v9346
      %v9362 = vpack.c.b16 %v9349, %v9348
      %v9363 = vpack.c.b16 %v9351, %v9350
      %v9364 = vpack.c.b16 %v9353, %v9352
      %v9365 = vpack.c.b16 %v9355, %v9354
      %v9366 = vpack.c.b16 %v9357, %v9356
      %v9367 = vpack.c.b16 %v9359, %v9358
      %9376 = vmatprep.subr.bf16.mxu0 0
      %9377 = vmatpush1.bf16.msra.mxu0 %v9367
      %9378 = vmatprep.subr.bf16.mxu0 0
      %9379 = vmatpush1.bf16.msra.mxu0 %v9366
      %9380 = vmatprep.subr.bf16.mxu0 0
      %9381 = vmatpush1.bf16.msra.mxu0 %v9365
      %9382 = vmatprep.subr.bf16.mxu0 0
      %9383 = vmatpush1.bf16.msra.mxu0 %v9364
      %9384 = vmatprep.subr.bf16.mxu0 0
      %9385 = vmatpush1.bf16.msra.mxu0 %v9363
      %9386 = vmatprep.subr.bf16.mxu0 0
      %9387 = vmatpush1.bf16.msra.mxu0 %v9362
      %9388 = vmatprep.subr.bf16.mxu0 0
      %9389 = vmatpush1.bf16.msra.mxu0 %v9361
      %9390 = vmatprep.subr.bf16.mxu0 0
      %9391 = vmatpush1.bf16.msra.mxu0 %v9360
      %9392 = vmatprep.subr.bf16.mxu0 0
      %9393 = vmatpush2.bf16.msra.mxu0 0
      %9394 = vmatprep.subr.bf16.mxu0 0
      %9395 = vmatpush2.bf16.msra.mxu0 0
      %9396 = vmatprep.subr.bf16.mxu0 0
      %9397 = vmatpush2.bf16.msra.mxu0 0
      %9398 = vmatprep.subr.bf16.mxu0 0
      %9399 = vmatpush2.bf16.msra.mxu0 0
      %9400 = vmatprep.subr.bf16.mxu0 0
      %9401 = vmatpush2.bf16.msra.mxu0 0
      %9402 = vmatprep.subr.bf16.mxu0 0
      %9403 = vmatpush2.bf16.msra.mxu0 0
      %9404 = vmatprep.subr.bf16.mxu0 0
      %9405 = vmatpush2.bf16.msra.mxu0 0
      %9406 = vmatprep.subr.bf16.mxu0 0
      %9407 = vmatpush2.bf16.msra.mxu0 0
      %9408 = vmatprep.mubr.bf16.mxu0 0
      %9409 = vmatmul.mubr.bf16.gmra.mxu0 %v9296
      %v9410 = vpop.f32.mrf.mxu0
      %v9411 = vadd.f32 0.0, %v9410
      %v9412 = vpop.f32.mrf.mxu0
      %v9413 = vpop.f32.mrf.mxu0
      %v9414 = vadd.f32 0.0, %v9413
      %v9415 = vpop.f32.mrf.mxu0
      %9416 = vmatprep.mubr.bf16.mxu0 0
      %9417 = vmatmul.mubr.bf16.gmra.mxu0 %v9297
      %v9418 = vpop.f32.mrf.mxu0
      %v9419 = vadd.f32 0.0, %v9418
      %v9420 = vpop.f32.mrf.mxu0
      %v9421 = vpop.f32.mrf.mxu0
      %v9422 = vadd.f32 0.0, %v9421
      %v9423 = vpop.f32.mrf.mxu0
      %9424 = vmatprep.mubr.bf16.mxu0 0
      %9425 = vmatmul.mubr.bf16.gmra.mxu0 %v9298
      %v9426 = vpop.f32.mrf.mxu0
      %v9427 = vadd.f32 0.0, %v9426
      %v9428 = vpop.f32.mrf.mxu0
      %v9429 = vpop.f32.mrf.mxu0
      %v9430 = vadd.f32 0.0, %v9429
      %v9431 = vpop.f32.mrf.mxu0
      %9432 = vmatprep.mubr.bf16.mxu0 0
      %9433 = vmatmul.mubr.bf16.gmra.mxu0 %v9299
      %v9434 = vpop.f32.mrf.mxu0
      %v9435 = vadd.f32 0.0, %v9434
      %v9436 = vpop.f32.mrf.mxu0
      %v9437 = vpop.f32.mrf.mxu0
      %v9438 = vadd.f32 0.0, %v9437
      %v9439 = vpop.f32.mrf.mxu0
      %9440 = vmatprep.mubr.bf16.mxu0 0
      %9441 = vmatmul.mubr.bf16.gmra.mxu0 %v9300
      %v9442 = vpop.f32.mrf.mxu0
      %v9443 = vadd.f32 0.0, %v9442
      %v9444 = vpop.f32.mrf.mxu0
      %v9445 = vpop.f32.mrf.mxu0
      %v9446 = vadd.f32 0.0, %v9445
      %v9447 = vpop.f32.mrf.mxu0
      %9448 = vmatprep.mubr.bf16.mxu0 0
      %9449 = vmatmul.mubr.bf16.gmra.mxu0 %v9301
      %v9450 = vpop.f32.mrf.mxu0
      %v9451 = vadd.f32 0.0, %v9450
      %v9452 = vpop.f32.mrf.mxu0
      %v9453 = vpop.f32.mrf.mxu0
      %v9454 = vadd.f32 0.0, %v9453
      %v9455 = vpop.f32.mrf.mxu0
      %9456 = vmatprep.mubr.bf16.mxu0 0
      %9457 = vmatmul.mubr.bf16.gmra.mxu0 %v9302
      %v9458 = vpop.f32.mrf.mxu0
      %v9459 = vadd.f32 0.0, %v9458
      %v9460 = vpop.f32.mrf.mxu0
      %v9461 = vpop.f32.mrf.mxu0
      %v9462 = vadd.f32 0.0, %v9461
      %v9463 = vpop.f32.mrf.mxu0
      %9464 = vmatprep.mubr.bf16.mxu0 0
      %9465 = vmatmul.mubr.bf16.gmra.mxu0 %v9303
      %v9466 = vpop.f32.mrf.mxu0
      %v9467 = vadd.f32 0.0, %v9466
      %v9468 = vpop.f32.mrf.mxu0
      %v9469 = vpop.f32.mrf.mxu0
      %v9470 = vadd.f32 0.0, %v9469
      %v9471 = vpop.f32.mrf.mxu0
      %9472 = vmatprep.mubr.bf16.mxu0 0
      %9473 = vmatmul.mubr.bf16.gmra.mxu0 %v9304
      %v9474 = vpop.f32.mrf.mxu0
      %v9475 = vadd.f32 0.0, %v9474
      %v9476 = vpop.f32.mrf.mxu0
      %v9477 = vpop.f32.mrf.mxu0
      %v9478 = vadd.f32 0.0, %v9477
      %v9479 = vpop.f32.mrf.mxu0
      %9480 = vmatprep.mubr.bf16.mxu0 0
      %9481 = vmatmul.mubr.bf16.gmra.mxu0 %v9305
      %v9482 = vpop.f32.mrf.mxu0
      %v9483 = vadd.f32 0.0, %v9482
      %v9484 = vpop.f32.mrf.mxu0
      %v9485 = vpop.f32.mrf.mxu0
      %v9486 = vadd.f32 0.0, %v9485
      %v9487 = vpop.f32.mrf.mxu0
      %9488 = vmatprep.mubr.bf16.mxu0 0
      %9489 = vmatmul.mubr.bf16.gmra.mxu0 %v9306
      %v9490 = vpop.f32.mrf.mxu0
      %v9491 = vadd.f32 0.0, %v9490
      %v9492 = vpop.f32.mrf.mxu0
      %v9493 = vpop.f32.mrf.mxu0
      %v9494 = vadd.f32 0.0, %v9493
      %v9495 = vpop.f32.mrf.mxu0
      %9496 = vmatprep.mubr.bf16.mxu0 0
      %9497 = vmatmul.mubr.bf16.gmra.mxu0 %v9307
      %v9498 = vpop.f32.mrf.mxu0
      %v9499 = vadd.f32 0.0, %v9498
      %v9500 = vpop.f32.mrf.mxu0
      %v9501 = vpop.f32.mrf.mxu0
      %v9502 = vadd.f32 0.0, %v9501
      %v9503 = vpop.f32.mrf.mxu0
      %9504 = vmatprep.mubr.bf16.mxu0 0
      %9505 = vmatmul.mubr.bf16.gmra.mxu0 %v9308
      %v9506 = vpop.f32.mrf.mxu0
      %v9507 = vadd.f32 0.0, %v9506
      %v9508 = vpop.f32.mrf.mxu0
      %v9509 = vpop.f32.mrf.mxu0
      %v9510 = vadd.f32 0.0, %v9509
      %v9511 = vpop.f32.mrf.mxu0
      %9512 = vmatprep.mubr.bf16.mxu0 0
      %9513 = vmatmul.mubr.bf16.gmra.mxu0 %v9309
      %v9514 = vpop.f32.mrf.mxu0
      %v9515 = vadd.f32 0.0, %v9514
      %v9516 = vpop.f32.mrf.mxu0
      %v9517 = vpop.f32.mrf.mxu0
      %v9518 = vadd.f32 0.0, %v9517
      %v9519 = vpop.f32.mrf.mxu0
      %9520 = vmatprep.mubr.bf16.mxu0 0
      %9521 = vmatmul.mubr.bf16.gmra.mxu0 %v9310
      %v9522 = vpop.f32.mrf.mxu0
      %v9523 = vadd.f32 0.0, %v9522
      %v9524 = vpop.f32.mrf.mxu0
      %v9525 = vpop.f32.mrf.mxu0
      %v9526 = vadd.f32 0.0, %v9525
      %v9527 = vpop.f32.mrf.mxu0
      %9528 = vmatprep.mubr.bf16.mxu0 0
      %9529 = vmatmul.mubr.bf16.gmra.mxu0 %v9311
      %v9530 = vpop.f32.mrf.mxu0
      %v9531 = vadd.f32 0.0, %v9530
      %v9532 = vpop.f32.mrf.mxu0
      %v9533 = vpop.f32.mrf.mxu0
      %v9534 = vadd.f32 0.0, %v9533
      %v9535 = vpop.f32.mrf.mxu0
      %9536 = vdwg.mxu0
      %v9537 = vadd.f32 %v8783, %v9411
      %v9538 = vadd.f32 %v8784, %v9414
      %v9539 = vadd.f32 %v8785, %v9419
      %v9540 = vadd.f32 %v8786, %v9422
      %v9541 = vadd.f32 %v8787, %v9427
      %v9542 = vadd.f32 %v8788, %v9430
      %v9543 = vadd.f32 %v8789, %v9435
      %v9544 = vadd.f32 %v8790, %v9438
      %v9545 = vadd.f32 %v8791, %v9443
      %v9546 = vadd.f32 %v8792, %v9446
      %v9547 = vadd.f32 %v8793, %v9451
      %v9548 = vadd.f32 %v8794, %v9454
      %v9549 = vadd.f32 %v8795, %v9459
      %v9550 = vadd.f32 %v8796, %v9462
      %v9551 = vadd.f32 %v8797, %v9467
      %v9552 = vadd.f32 %v8798, %v9470
      %v9553 = vadd.f32 %v8799, %v9475
      %v9554 = vadd.f32 %v8800, %v9478
      %v9555 = vadd.f32 %v8801, %v9483
      %v9556 = vadd.f32 %v8802, %v9486
      %v9557 = vadd.f32 %v8803, %v9491
      %v9558 = vadd.f32 %v8804, %v9494
      %v9559 = vadd.f32 %v8805, %v9499
      %v9560 = vadd.f32 %v8806, %v9502
      %v9561 = vadd.f32 %v8807, %v9507
      %v9562 = vadd.f32 %v8808, %v9510
      %v9563 = vadd.f32 %v8809, %v9515
      %v9564 = vadd.f32 %v8810, %v9518
      %v9565 = vadd.f32 %v8811, %v9523
      %v9566 = vadd.f32 %v8812, %v9526
      %v9567 = vadd.f32 %v8813, %v9531
      %v9568 = vadd.f32 %v8814, %v9534
      %v9569 = vld [vmem:[%s6789] sm:$0xe]
      %v9570 = vld [vmem:[%s6789 + $0xc] sm:$0xe]
      %v9571 = vld [vmem:[%s6789 + $0x18] sm:$0xe]
      %v9572 = vld [vmem:[%s6789 + $0x24] sm:$0xe]
      %v9573 = vld [vmem:[%s6789 + $0x30] sm:$0xe]
      %v9574 = vld [vmem:[%s6789 + $0x3c] sm:$0xe]
      %v9575 = vld [vmem:[%s6789 + $0x48] sm:$0xe]
      %v9576 = vld [vmem:[%s6789 + $0x54] sm:$0xe]
      %v9577 = vld [vmem:[%s6789 + $0x60] sm:$0xe]
      %v9578 = vld [vmem:[%s6789 + $0x6c] sm:$0xe]
      %v9579 = vld [vmem:[%s6789 + $0x78] sm:$0xe]
      %v9580 = vld [vmem:[%s6789 + $0x84] sm:$0xe]
      %v9581 = vld [vmem:[%s6789 + $0x90] sm:$0xe]
      %v9582 = vld [vmem:[%s6789 + $0x9c] sm:$0xe]
      %v9583 = vld [vmem:[%s6789 + $0xa8] sm:$0xe]
      %v9584 = vld [vmem:[%s6789 + $0xb4] sm:$0xe]
      %v9633 = vrot.slane %v9569, 5
      %v9634 = vrot.slane %v9633, 4
      %v9635 = vrot.slane %v8816, 5
      %v9636 = vsel %vm2140, %v9634, %v9635
      %v9637 = vrot.slane %v9635, 4
      %v9638 = vrot.slane %v8817, 5
      %v9639 = vsel %vm2140, %v9637, %v9638
      %v9640 = vrot.slane %v9570, 5
      %v9641 = vrot.slane %v9640, 4
      %v9642 = vrot.slane %v8819, 5
      %v9643 = vsel %vm2140, %v9641, %v9642
      %v9644 = vrot.slane %v9642, 4
      %v9645 = vrot.slane %v8820, 5
      %v9646 = vsel %vm2140, %v9644, %v9645
      %v9647 = vrot.slane %v9571, 5
      %v9648 = vrot.slane %v9647, 4
      %v9649 = vrot.slane %v8822, 5
      %v9650 = vsel %vm2140, %v9648, %v9649
      %v9651 = vrot.slane %v9649, 4
      %v9652 = vrot.slane %v8823, 5
      %v9653 = vsel %vm2140, %v9651, %v9652
      %v9654 = vrot.slane %v9572, 5
      %v9655 = vrot.slane %v9654, 4
      %v9656 = vrot.slane %v8825, 5
      %v9657 = vsel %vm2140, %v9655, %v9656
      %v9658 = vrot.slane %v9656, 4
      %v9659 = vrot.slane %v8826, 5
      %v9660 = vsel %vm2140, %v9658, %v9659
      %v9661 = vrot.slane %v9573, 5
      %v9662 = vrot.slane %v9661, 4
      %v9663 = vrot.slane %v8828, 5
      %v9664 = vsel %vm2140, %v9662, %v9663
      %v9665 = vrot.slane %v9663, 4
      %v9666 = vrot.slane %v8829, 5
      %v9667 = vsel %vm2140, %v9665, %v9666
      %v9668 = vrot.slane %v9574, 5
      %v9669 = vrot.slane %v9668, 4
      %v9670 = vrot.slane %v8831, 5
      %v9671 = vsel %vm2140, %v9669, %v9670
      %v9672 = vrot.slane %v9670, 4
      %v9673 = vrot.slane %v8832, 5
      %v9674 = vsel %vm2140, %v9672, %v9673
      %v9675 = vrot.slane %v9575, 5
      %v9676 = vrot.slane %v9675, 4
      %v9677 = vrot.slane %v8834, 5
      %v9678 = vsel %vm2140, %v9676, %v9677
      %v9679 = vrot.slane %v9677, 4
      %v9680 = vrot.slane %v8835, 5
      %v9681 = vsel %vm2140, %v9679, %v9680
      %v9682 = vrot.slane %v9576, 5
      %v9683 = vrot.slane %v9682, 4
      %v9684 = vrot.slane %v8837, 5
      %v9685 = vsel %vm2140, %v9683, %v9684
      %v9686 = vrot.slane %v9684, 4
      %v9687 = vrot.slane %v8838, 5
      %v9688 = vsel %vm2140, %v9686, %v9687
      %v9689 = vrot.slane %v9577, 5
      %v9690 = vrot.slane %v9689, 4
      %v9691 = vrot.slane %v8840, 5
      %v9692 = vsel %vm2140, %v9690, %v9691
      %v9693 = vrot.slane %v9691, 4
      %v9694 = vrot.slane %v8841, 5
      %v9695 = vsel %vm2140, %v9693, %v9694
      %v9696 = vrot.slane %v9578, 5
      %v9697 = vrot.slane %v9696, 4
      %v9698 = vrot.slane %v8843, 5
      %v9699 = vsel %vm2140, %v9697, %v9698
      %v9700 = vrot.slane %v9698, 4
      %v9701 = vrot.slane %v8844, 5
      %v9702 = vsel %vm2140, %v9700, %v9701
      %v9703 = vrot.slane %v9579, 5
      %v9704 = vrot.slane %v9703, 4
      %v9705 = vrot.slane %v8846, 5
      %v9706 = vsel %vm2140, %v9704, %v9705
      %v9707 = vrot.slane %v9705, 4
      %v9708 = vrot.slane %v8847, 5
      %v9709 = vsel %vm2140, %v9707, %v9708
      %v9710 = vrot.slane %v9580, 5
      %v9711 = vrot.slane %v9710, 4
      %v9712 = vrot.slane %v8849, 5
      %v9713 = vsel %vm2140, %v9711, %v9712
      %v9714 = vrot.slane %v9712, 4
      %v9715 = vrot.slane %v8850, 5
      %v9716 = vsel %vm2140, %v9714, %v9715
      %v9717 = vrot.slane %v9581, 5
      %v9718 = vrot.slane %v9717, 4
      %v9719 = vrot.slane %v8852, 5
      %v9720 = vsel %vm2140, %v9718, %v9719
      %v9721 = vrot.slane %v9719, 4
      %v9722 = vrot.slane %v8853, 5
      %v9723 = vsel %vm2140, %v9721, %v9722
      %v9724 = vrot.slane %v9582, 5
      %v9725 = vrot.slane %v9724, 4
      %v9726 = vrot.slane %v8855, 5
      %v9727 = vsel %vm2140, %v9725, %v9726
      %v9728 = vrot.slane %v9726, 4
      %v9729 = vrot.slane %v8856, 5
      %v9730 = vsel %vm2140, %v9728, %v9729
      %v9731 = vrot.slane %v9583, 5
      %v9732 = vrot.slane %v9731, 4
      %v9733 = vrot.slane %v8858, 5
      %v9734 = vsel %vm2140, %v9732, %v9733
      %v9735 = vrot.slane %v9733, 4
      %v9736 = vrot.slane %v8859, 5
      %v9737 = vsel %vm2140, %v9735, %v9736
      %v9738 = vrot.slane %v9584, 5
      %v9739 = vrot.slane %v9738, 4
      %v9740 = vrot.slane %v8861, 5
      %v9741 = vsel %vm2140, %v9739, %v9740
      %v9742 = vrot.slane %v9740, 4
      %v9743 = vrot.slane %v8862, 5
      %v9744 = vsel %vm2140, %v9742, %v9743
      %s9745 = scalar_lea.vmem %s6, 320
      %v9746 = vld [vmem:[%s9745] sm:$0xf]
      %v9747 = vld [vmem:[%s9745 + $0x4] sm:$0xf]
      %v9748 = vld [vmem:[%s9745 + $0x8] sm:$0xf]
      %v9749 = vld [vmem:[%s9745 + $0xc] sm:$0xf]
      %v9750 = vld [vmem:[%s9745 + $0x10] sm:$0xf]
      %v9751 = vld [vmem:[%s9745 + $0x14] sm:$0xf]
      %v9752 = vld [vmem:[%s9745 + $0x18] sm:$0xf]
      %v9753 = vld [vmem:[%s9745 + $0x1c] sm:$0xf]
      %v9754 = vld [vmem:[%s9745 + $0x20] sm:$0xf]
      %v9755 = vld [vmem:[%s9745 + $0x24] sm:$0xf]
      %v9756 = vld [vmem:[%s9745 + $0x28] sm:$0xf]
      %v9757 = vld [vmem:[%s9745 + $0x2c] sm:$0xf]
      %v9758 = vld [vmem:[%s9745 + $0x30] sm:$0xf]
      %v9759 = vld [vmem:[%s9745 + $0x34] sm:$0xf]
      %v9760 = vld [vmem:[%s9745 + $0x38] sm:$0xf]
      %v9761 = vld [vmem:[%s9745 + $0x3c] sm:$0xf]
      %v9762 = vunpack.c.l.b16 %v9636
      %v9763 = vunpack.c.l.b16 %v9639
      %v9764 = vunpack.c.l.b16 %v9643
      %v9765 = vunpack.c.l.b16 %v9646
      %v9766 = vunpack.c.l.b16 %v9650
      %v9767 = vunpack.c.l.b16 %v9653
      %v9768 = vunpack.c.l.b16 %v9657
      %v9769 = vunpack.c.l.b16 %v9660
      %v9770 = vunpack.c.l.b16 %v9664
      %v9771 = vunpack.c.l.b16 %v9667
      %v9772 = vunpack.c.l.b16 %v9671
      %v9773 = vunpack.c.l.b16 %v9674
      %v9774 = vunpack.c.l.b16 %v9678
      %v9775 = vunpack.c.l.b16 %v9681
      %v9776 = vunpack.c.l.b16 %v9685
      %v9777 = vunpack.c.l.b16 %v9688
      %v9778 = vunpack.c.l.b16 %v9692
      %v9779 = vunpack.c.l.b16 %v9695
      %v9780 = vunpack.c.l.b16 %v9699
      %v9781 = vunpack.c.l.b16 %v9702
      %v9782 = vunpack.c.l.b16 %v9706
      %v9783 = vunpack.c.l.b16 %v9709
      %v9784 = vunpack.c.l.b16 %v9713
      %v9785 = vunpack.c.l.b16 %v9716
      %v9786 = vunpack.c.l.b16 %v9720
      %v9787 = vunpack.c.l.b16 %v9723
      %v9788 = vunpack.c.l.b16 %v9727
      %v9789 = vunpack.c.l.b16 %v9730
      %v9790 = vunpack.c.l.b16 %v9734
      %v9791 = vunpack.c.l.b16 %v9737
      %v9792 = vunpack.c.l.b16 %v9741
      %v9793 = vunpack.c.l.b16 %v9744
      %v9794 = vpack.c.b16 %v9763, %v9762
      %v9795 = vpack.c.b16 %v9765, %v9764
      %v9796 = vpack.c.b16 %v9767, %v9766
      %v9797 = vpack.c.b16 %v9769, %v9768
      %v9798 = vpack.c.b16 %v9771, %v9770
      %v9799 = vpack.c.b16 %v9773, %v9772
      %v9800 = vpack.c.b16 %v9775, %v9774
      %v9801 = vpack.c.b16 %v9777, %v9776
      %v9802 = vpack.c.b16 %v9779, %v9778
      %v9803 = vpack.c.b16 %v9781, %v9780
      %v9804 = vpack.c.b16 %v9783, %v9782
      %v9805 = vpack.c.b16 %v9785, %v9784
      %v9806 = vpack.c.b16 %v9787, %v9786
      %v9807 = vpack.c.b16 %v9789, %v9788
      %v9808 = vpack.c.b16 %v9791, %v9790
      %v9809 = vpack.c.b16 %v9793, %v9792
      %v9842 = vunpack.c.l.b16 %v9746
      %v9843 = vunpack.c.l.b16 %v9747
      %v9844 = vunpack.c.l.b16 %v9748
      %v9845 = vunpack.c.l.b16 %v9749
      %v9846 = vunpack.c.l.b16 %v9750
      %v9847 = vunpack.c.l.b16 %v9751
      %v9848 = vunpack.c.l.b16 %v9752
      %v9849 = vunpack.c.l.b16 %v9753
      %v9850 = vunpack.c.l.b16 %v9754
      %v9851 = vunpack.c.l.b16 %v9755
      %v9852 = vunpack.c.l.b16 %v9756
      %v9853 = vunpack.c.l.b16 %v9757
      %v9854 = vunpack.c.l.b16 %v9758
      %v9855 = vunpack.c.l.b16 %v9759
      %v9856 = vunpack.c.l.b16 %v9760
      %v9857 = vunpack.c.l.b16 %v9761
      %v9858 = vpack.c.b16 %v9843, %v9842
      %v9859 = vpack.c.b16 %v9845, %v9844
      %v9860 = vpack.c.b16 %v9847, %v9846
      %v9861 = vpack.c.b16 %v9849, %v9848
      %v9862 = vpack.c.b16 %v9851, %v9850
      %v9863 = vpack.c.b16 %v9853, %v9852
      %v9864 = vpack.c.b16 %v9855, %v9854
      %v9865 = vpack.c.b16 %v9857, %v9856
      %9874 = vmatprep.subr.bf16.mxu0 0
      %9875 = vmatpush1.bf16.msra.mxu0 %v9865
      %9876 = vmatprep.subr.bf16.mxu0 0
      %9877 = vmatpush1.bf16.msra.mxu0 %v9864
      %9878 = vmatprep.subr.bf16.mxu0 0
      %9879 = vmatpush1.bf16.msra.mxu0 %v9863
      %9880 = vmatprep.subr.bf16.mxu0 0
      %9881 = vmatpush1.bf16.msra.mxu0 %v9862
      %9882 = vmatprep.subr.bf16.mxu0 0
      %9883 = vmatpush1.bf16.msra.mxu0 %v9861
      %9884 = vmatprep.subr.bf16.mxu0 0
      %9885 = vmatpush1.bf16.msra.mxu0 %v9860
      %9886 = vmatprep.subr.bf16.mxu0 0
      %9887 = vmatpush1.bf16.msra.mxu0 %v9859
      %9888 = vmatprep.subr.bf16.mxu0 0
      %9889 = vmatpush1.bf16.msra.mxu0 %v9858
      %9890 = vmatprep.subr.bf16.mxu0 0
      %9891 = vmatpush2.bf16.msra.mxu0 0
      %9892 = vmatprep.subr.bf16.mxu0 0
      %9893 = vmatpush2.bf16.msra.mxu0 0
      %9894 = vmatprep.subr.bf16.mxu0 0
      %9895 = vmatpush2.bf16.msra.mxu0 0
      %9896 = vmatprep.subr.bf16.mxu0 0
      %9897 = vmatpush2.bf16.msra.mxu0 0
      %9898 = vmatprep.subr.bf16.mxu0 0
      %9899 = vmatpush2.bf16.msra.mxu0 0
      %9900 = vmatprep.subr.bf16.mxu0 0
      %9901 = vmatpush2.bf16.msra.mxu0 0
      %9902 = vmatprep.subr.bf16.mxu0 0
      %9903 = vmatpush2.bf16.msra.mxu0 0
      %9904 = vmatprep.subr.bf16.mxu0 0
      %9905 = vmatpush2.bf16.msra.mxu0 0
      %9906 = vmatprep.mubr.bf16.mxu0 0
      %9907 = vmatmul.mubr.bf16.gmra.mxu0 %v9794
      %v9908 = vpop.f32.mrf.mxu0
      %v9909 = vadd.f32 0.0, %v9908
      %v9910 = vpop.f32.mrf.mxu0
      %v9911 = vpop.f32.mrf.mxu0
      %v9912 = vadd.f32 0.0, %v9911
      %v9913 = vpop.f32.mrf.mxu0
      %9914 = vmatprep.mubr.bf16.mxu0 0
      %9915 = vmatmul.mubr.bf16.gmra.mxu0 %v9795
      %v9916 = vpop.f32.mrf.mxu0
      %v9917 = vadd.f32 0.0, %v9916
      %v9918 = vpop.f32.mrf.mxu0
      %v9919 = vpop.f32.mrf.mxu0
      %v9920 = vadd.f32 0.0, %v9919
      %v9921 = vpop.f32.mrf.mxu0
      %9922 = vmatprep.mubr.bf16.mxu0 0
      %9923 = vmatmul.mubr.bf16.gmra.mxu0 %v9796
      %v9924 = vpop.f32.mrf.mxu0
      %v9925 = vadd.f32 0.0, %v9924
      %v9926 = vpop.f32.mrf.mxu0
      %v9927 = vpop.f32.mrf.mxu0
      %v9928 = vadd.f32 0.0, %v9927
      %v9929 = vpop.f32.mrf.mxu0
      %9930 = vmatprep.mubr.bf16.mxu0 0
      %9931 = vmatmul.mubr.bf16.gmra.mxu0 %v9797
      %v9932 = vpop.f32.mrf.mxu0
      %v9933 = vadd.f32 0.0, %v9932
      %v9934 = vpop.f32.mrf.mxu0
      %v9935 = vpop.f32.mrf.mxu0
      %v9936 = vadd.f32 0.0, %v9935
      %v9937 = vpop.f32.mrf.mxu0
      %9938 = vmatprep.mubr.bf16.mxu0 0
      %9939 = vmatmul.mubr.bf16.gmra.mxu0 %v9798
      %v9940 = vpop.f32.mrf.mxu0
      %v9941 = vadd.f32 0.0, %v9940
      %v9942 = vpop.f32.mrf.mxu0
      %v9943 = vpop.f32.mrf.mxu0
      %v9944 = vadd.f32 0.0, %v9943
      %v9945 = vpop.f32.mrf.mxu0
      %9946 = vmatprep.mubr.bf16.mxu0 0
      %9947 = vmatmul.mubr.bf16.gmra.mxu0 %v9799
      %v9948 = vpop.f32.mrf.mxu0
      %v9949 = vadd.f32 0.0, %v9948
      %v9950 = vpop.f32.mrf.mxu0
      %v9951 = vpop.f32.mrf.mxu0
      %v9952 = vadd.f32 0.0, %v9951
      %v9953 = vpop.f32.mrf.mxu0
      %9954 = vmatprep.mubr.bf16.mxu0 0
      %9955 = vmatmul.mubr.bf16.gmra.mxu0 %v9800
      %v9956 = vpop.f32.mrf.mxu0
      %v9957 = vadd.f32 0.0, %v9956
      %v9958 = vpop.f32.mrf.mxu0
      %v9959 = vpop.f32.mrf.mxu0
      %v9960 = vadd.f32 0.0, %v9959
      %v9961 = vpop.f32.mrf.mxu0
      %9962 = vmatprep.mubr.bf16.mxu0 0
      %9963 = vmatmul.mubr.bf16.gmra.mxu0 %v9801
      %v9964 = vpop.f32.mrf.mxu0
      %v9965 = vadd.f32 0.0, %v9964
      %v9966 = vpop.f32.mrf.mxu0
      %v9967 = vpop.f32.mrf.mxu0
      %v9968 = vadd.f32 0.0, %v9967
      %v9969 = vpop.f32.mrf.mxu0
      %9970 = vmatprep.mubr.bf16.mxu0 0
      %9971 = vmatmul.mubr.bf16.gmra.mxu0 %v9802
      %v9972 = vpop.f32.mrf.mxu0
      %v9973 = vadd.f32 0.0, %v9972
      %v9974 = vpop.f32.mrf.mxu0
      %v9975 = vpop.f32.mrf.mxu0
      %v9976 = vadd.f32 0.0, %v9975
      %v9977 = vpop.f32.mrf.mxu0
      %9978 = vmatprep.mubr.bf16.mxu0 0
      %9979 = vmatmul.mubr.bf16.gmra.mxu0 %v9803
      %v9980 = vpop.f32.mrf.mxu0
      %v9981 = vadd.f32 0.0, %v9980
      %v9982 = vpop.f32.mrf.mxu0
      %v9983 = vpop.f32.mrf.mxu0
      %v9984 = vadd.f32 0.0, %v9983
      %v9985 = vpop.f32.mrf.mxu0
      %9986 = vmatprep.mubr.bf16.mxu0 0
      %9987 = vmatmul.mubr.bf16.gmra.mxu0 %v9804
      %v9988 = vpop.f32.mrf.mxu0
      %v9989 = vadd.f32 0.0, %v9988
      %v9990 = vpop.f32.mrf.mxu0
      %v9991 = vpop.f32.mrf.mxu0
      %v9992 = vadd.f32 0.0, %v9991
      %v9993 = vpop.f32.mrf.mxu0
      %9994 = vmatprep.mubr.bf16.mxu0 0
      %9995 = vmatmul.mubr.bf16.gmra.mxu0 %v9805
      %v9996 = vpop.f32.mrf.mxu0
      %v9997 = vadd.f32 0.0, %v9996
      %v9998 = vpop.f32.mrf.mxu0
      %v9999 = vpop.f32.mrf.mxu0
      %v10000 = vadd.f32 0.0, %v9999
      %v10001 = vpop.f32.mrf.mxu0
      %10002 = vmatprep.mubr.bf16.mxu0 0
      %10003 = vmatmul.mubr.bf16.gmra.mxu0 %v9806
      %v10004 = vpop.f32.mrf.mxu0
      %v10005 = vadd.f32 0.0, %v10004
      %v10006 = vpop.f32.mrf.mxu0
      %v10007 = vpop.f32.mrf.mxu0
      %v10008 = vadd.f32 0.0, %v10007
      %v10009 = vpop.f32.mrf.mxu0
      %10010 = vmatprep.mubr.bf16.mxu0 0
      %10011 = vmatmul.mubr.bf16.gmra.mxu0 %v9807
      %v10012 = vpop.f32.mrf.mxu0
      %v10013 = vadd.f32 0.0, %v10012
      %v10014 = vpop.f32.mrf.mxu0
      %v10015 = vpop.f32.mrf.mxu0
      %v10016 = vadd.f32 0.0, %v10015
      %v10017 = vpop.f32.mrf.mxu0
      %10018 = vmatprep.mubr.bf16.mxu0 0
      %10019 = vmatmul.mubr.bf16.gmra.mxu0 %v9808
      %v10020 = vpop.f32.mrf.mxu0
      %v10021 = vadd.f32 0.0, %v10020
      %v10022 = vpop.f32.mrf.mxu0
      %v10023 = vpop.f32.mrf.mxu0
      %v10024 = vadd.f32 0.0, %v10023
      %v10025 = vpop.f32.mrf.mxu0
      %10026 = vmatprep.mubr.bf16.mxu0 0
      %10027 = vmatmul.mubr.bf16.gmra.mxu0 %v9809
      %v10028 = vpop.f32.mrf.mxu0
      %v10029 = vadd.f32 0.0, %v10028
      %v10030 = vpop.f32.mrf.mxu0
      %v10031 = vpop.f32.mrf.mxu0
      %v10032 = vadd.f32 0.0, %v10031
      %v10033 = vpop.f32.mrf.mxu0
      %10034 = vdwg.mxu0
      %v10035 = vadd.f32 %v9537, %v9909
      %v10036 = vadd.f32 %v9538, %v9912
      %v10037 = vadd.f32 %v9539, %v9917
      %v10038 = vadd.f32 %v9540, %v9920
      %v10039 = vadd.f32 %v9541, %v9925
      %v10040 = vadd.f32 %v9542, %v9928
      %v10041 = vadd.f32 %v9543, %v9933
      %v10042 = vadd.f32 %v9544, %v9936
      %v10043 = vadd.f32 %v9545, %v9941
      %v10044 = vadd.f32 %v9546, %v9944
      %v10045 = vadd.f32 %v9547, %v9949
      %v10046 = vadd.f32 %v9548, %v9952
      %v10047 = vadd.f32 %v9549, %v9957
      %v10048 = vadd.f32 %v9550, %v9960
      %v10049 = vadd.f32 %v9551, %v9965
      %v10050 = vadd.f32 %v9552, %v9968
      %v10051 = vadd.f32 %v9553, %v9973
      %v10052 = vadd.f32 %v9554, %v9976
      %v10053 = vadd.f32 %v9555, %v9981
      %v10054 = vadd.f32 %v9556, %v9984
      %v10055 = vadd.f32 %v9557, %v9989
      %v10056 = vadd.f32 %v9558, %v9992
      %v10057 = vadd.f32 %v9559, %v9997
      %v10058 = vadd.f32 %v9560, %v10000
      %v10059 = vadd.f32 %v9561, %v10005
      %v10060 = vadd.f32 %v9562, %v10008
      %v10061 = vadd.f32 %v9563, %v10013
      %v10062 = vadd.f32 %v9564, %v10016
      %v10063 = vadd.f32 %v9565, %v10021
      %v10064 = vadd.f32 %v9566, %v10024
      %v10065 = vadd.f32 %v9567, %v10029
      %v10066 = vadd.f32 %v9568, %v10032
      %s10067 = scalar_lea.vmem [#allocation3], 24
      %v10068 = vld [vmem:[%s10067] sm:$0xf]
      %v10069 = vld [vmem:[%s10067 + $0x4] sm:$0xf]
      %v10070 = vld [vmem:[%s10067 + $0xc] sm:$0xf]
      %v10071 = vld [vmem:[%s10067 + $0x10] sm:$0xf]
      %v10072 = vld [vmem:[%s10067 + $0x18] sm:$0xf]
      %v10073 = vld [vmem:[%s10067 + $0x1c] sm:$0xf]
      %v10074 = vld [vmem:[%s10067 + $0x24] sm:$0xf]
      %v10075 = vld [vmem:[%s10067 + $0x28] sm:$0xf]
      %v10076 = vld [vmem:[%s10067 + $0x30] sm:$0xf]
      %v10077 = vld [vmem:[%s10067 + $0x34] sm:$0xf]
      %v10078 = vld [vmem:[%s10067 + $0x3c] sm:$0xf]
      %v10079 = vld [vmem:[%s10067 + $0x40] sm:$0xf]
      %v10080 = vld [vmem:[%s10067 + $0x48] sm:$0xf]
      %v10081 = vld [vmem:[%s10067 + $0x4c] sm:$0xf]
      %v10082 = vld [vmem:[%s10067 + $0x54] sm:$0xf]
      %v10083 = vld [vmem:[%s10067 + $0x58] sm:$0xf]
      %v10084 = vld [vmem:[%s10067 + $0x60] sm:$0xf]
      %v10085 = vld [vmem:[%s10067 + $0x64] sm:$0xf]
      %v10086 = vld [vmem:[%s10067 + $0x6c] sm:$0xf]
      %v10087 = vld [vmem:[%s10067 + $0x70] sm:$0xf]
      %v10088 = vld [vmem:[%s10067 + $0x78] sm:$0xf]
      %v10089 = vld [vmem:[%s10067 + $0x7c] sm:$0xf]
      %v10090 = vld [vmem:[%s10067 + $0x84] sm:$0xf]
      %v10091 = vld [vmem:[%s10067 + $0x88] sm:$0xf]
      %v10092 = vld [vmem:[%s10067 + $0x90] sm:$0xf]
      %v10093 = vld [vmem:[%s10067 + $0x94] sm:$0xf]
      %v10094 = vld [vmem:[%s10067 + $0x9c] sm:$0xf]
      %v10095 = vld [vmem:[%s10067 + $0xa0] sm:$0xf]
      %v10096 = vld [vmem:[%s10067 + $0xa8] sm:$0xf]
      %v10097 = vld [vmem:[%s10067 + $0xac] sm:$0xf]
      %v10098 = vld [vmem:[%s10067 + $0xb4] sm:$0xf]
      %v10099 = vld [vmem:[%s10067 + $0xb8] sm:$0xf]
      %s10100 = scalar_lea.vmem %s6, 384
      %v10101 = vld [vmem:[%s10100] sm:$0xf]
      %v10102 = vld [vmem:[%s10100 + $0x4] sm:$0xf]
      %v10103 = vld [vmem:[%s10100 + $0x8] sm:$0xf]
      %v10104 = vld [vmem:[%s10100 + $0xc] sm:$0xf]
      %v10105 = vld [vmem:[%s10100 + $0x10] sm:$0xf]
      %v10106 = vld [vmem:[%s10100 + $0x14] sm:$0xf]
      %v10107 = vld [vmem:[%s10100 + $0x18] sm:$0xf]
      %v10108 = vld [vmem:[%s10100 + $0x1c] sm:$0xf]
      %v10109 = vld [vmem:[%s10100 + $0x20] sm:$0xf]
      %v10110 = vld [vmem:[%s10100 + $0x24] sm:$0xf]
      %v10111 = vld [vmem:[%s10100 + $0x28] sm:$0xf]
      %v10112 = vld [vmem:[%s10100 + $0x2c] sm:$0xf]
      %v10113 = vld [vmem:[%s10100 + $0x30] sm:$0xf]
      %v10114 = vld [vmem:[%s10100 + $0x34] sm:$0xf]
      %v10115 = vld [vmem:[%s10100 + $0x38] sm:$0xf]
      %v10116 = vld [vmem:[%s10100 + $0x3c] sm:$0xf]
      %v10149 = vunpack.c.l.b16 %v10068
      %v10150 = vunpack.c.l.b16 %v10069
      %v10151 = vunpack.c.l.b16 %v10070
      %v10152 = vunpack.c.l.b16 %v10071
      %v10153 = vunpack.c.l.b16 %v10072
      %v10154 = vunpack.c.l.b16 %v10073
      %v10155 = vunpack.c.l.b16 %v10074
      %v10156 = vunpack.c.l.b16 %v10075
      %v10157 = vunpack.c.l.b16 %v10076
      %v10158 = vunpack.c.l.b16 %v10077
      %v10159 = vunpack.c.l.b16 %v10078
      %v10160 = vunpack.c.l.b16 %v10079
      %v10161 = vunpack.c.l.b16 %v10080
      %v10162 = vunpack.c.l.b16 %v10081
      %v10163 = vunpack.c.l.b16 %v10082
      %v10164 = vunpack.c.l.b16 %v10083
      %v10165 = vunpack.c.l.b16 %v10084
      %v10166 = vunpack.c.l.b16 %v10085
      %v10167 = vunpack.c.l.b16 %v10086
      %v10168 = vunpack.c.l.b16 %v10087
      %v10169 = vunpack.c.l.b16 %v10088
      %v10170 = vunpack.c.l.b16 %v10089
      %v10171 = vunpack.c.l.b16 %v10090
      %v10172 = vunpack.c.l.b16 %v10091
      %v10173 = vunpack.c.l.b16 %v10092
      %v10174 = vunpack.c.l.b16 %v10093
      %v10175 = vunpack.c.l.b16 %v10094
      %v10176 = vunpack.c.l.b16 %v10095
      %v10177 = vunpack.c.l.b16 %v10096
      %v10178 = vunpack.c.l.b16 %v10097
      %v10179 = vunpack.c.l.b16 %v10098
      %v10180 = vunpack.c.l.b16 %v10099
      %v10181 = vpack.c.b16 %v10150, %v10149
      %v10182 = vpack.c.b16 %v10152, %v10151
      %v10183 = vpack.c.b16 %v10154, %v10153
      %v10184 = vpack.c.b16 %v10156, %v10155
      %v10185 = vpack.c.b16 %v10158, %v10157
      %v10186 = vpack.c.b16 %v10160, %v10159
      %v10187 = vpack.c.b16 %v10162, %v10161
      %v10188 = vpack.c.b16 %v10164, %v10163
      %v10189 = vpack.c.b16 %v10166, %v10165
      %v10190 = vpack.c.b16 %v10168, %v10167
      %v10191 = vpack.c.b16 %v10170, %v10169
      %v10192 = vpack.c.b16 %v10172, %v10171
      %v10193 = vpack.c.b16 %v10174, %v10173
      %v10194 = vpack.c.b16 %v10176, %v10175
      %v10195 = vpack.c.b16 %v10178, %v10177
      %v10196 = vpack.c.b16 %v10180, %v10179
      %v10229 = vunpack.c.l.b16 %v10101
      %v10230 = vunpack.c.l.b16 %v10102
      %v10231 = vunpack.c.l.b16 %v10103
      %v10232 = vunpack.c.l.b16 %v10104
      %v10233 = vunpack.c.l.b16 %v10105
      %v10234 = vunpack.c.l.b16 %v10106
      %v10235 = vunpack.c.l.b16 %v10107
      %v10236 = vunpack.c.l.b16 %v10108
      %v10237 = vunpack.c.l.b16 %v10109
      %v10238 = vunpack.c.l.b16 %v10110
      %v10239 = vunpack.c.l.b16 %v10111
      %v10240 = vunpack.c.l.b16 %v10112
      %v10241 = vunpack.c.l.b16 %v10113
      %v10242 = vunpack.c.l.b16 %v10114
      %v10243 = vunpack.c.l.b16 %v10115
      %v10244 = vunpack.c.l.b16 %v10116
      %v10245 = vpack.c.b16 %v10230, %v10229
      %v10246 = vpack.c.b16 %v10232, %v10231
      %v10247 = vpack.c.b16 %v10234, %v10233
      %v10248 = vpack.c.b16 %v10236, %v10235
      %v10249 = vpack.c.b16 %v10238, %v10237
      %v10250 = vpack.c.b16 %v10240, %v10239
      %v10251 = vpack.c.b16 %v10242, %v10241
      %v10252 = vpack.c.b16 %v10244, %v10243
      %10261 = vmatprep.subr.bf16.mxu0 0
      %10262 = vmatpush1.bf16.msra.mxu0 %v10252
      %10263 = vmatprep.subr.bf16.mxu0 0
      %10264 = vmatpush1.bf16.msra.mxu0 %v10251
      %10265 = vmatprep.subr.bf16.mxu0 0
      %10266 = vmatpush1.bf16.msra.mxu0 %v10250
      %10267 = vmatprep.subr.bf16.mxu0 0
      %10268 = vmatpush1.bf16.msra.mxu0 %v10249
      %10269 = vmatprep.subr.bf16.mxu0 0
      %10270 = vmatpush1.bf16.msra.mxu0 %v10248
      %10271 = vmatprep.subr.bf16.mxu0 0
      %10272 = vmatpush1.bf16.msra.mxu0 %v10247
      %10273 = vmatprep.subr.bf16.mxu0 0
      %10274 = vmatpush1.bf16.msra.mxu0 %v10246
      %10275 = vmatprep.subr.bf16.mxu0 0
      %10276 = vmatpush1.bf16.msra.mxu0 %v10245
      %10277 = vmatprep.subr.bf16.mxu0 0
      %10278 = vmatpush2.bf16.msra.mxu0 0
      %10279 = vmatprep.subr.bf16.mxu0 0
      %10280 = vmatpush2.bf16.msra.mxu0 0
      %10281 = vmatprep.subr.bf16.mxu0 0
      %10282 = vmatpush2.bf16.msra.mxu0 0
      %10283 = vmatprep.subr.bf16.mxu0 0
      %10284 = vmatpush2.bf16.msra.mxu0 0
      %10285 = vmatprep.subr.bf16.mxu0 0
      %10286 = vmatpush2.bf16.msra.mxu0 0
      %10287 = vmatprep.subr.bf16.mxu0 0
      %10288 = vmatpush2.bf16.msra.mxu0 0
      %10289 = vmatprep.subr.bf16.mxu0 0
      %10290 = vmatpush2.bf16.msra.mxu0 0
      %10291 = vmatprep.subr.bf16.mxu0 0
      %10292 = vmatpush2.bf16.msra.mxu0 0
      %10293 = vmatprep.mubr.bf16.mxu0 0
      %10294 = vmatmul.mubr.bf16.gmra.mxu0 %v10181
      %v10295 = vpop.f32.mrf.mxu0
      %v10296 = vadd.f32 0.0, %v10295
      %v10297 = vpop.f32.mrf.mxu0
      %v10298 = vpop.f32.mrf.mxu0
      %v10299 = vadd.f32 0.0, %v10298
      %v10300 = vpop.f32.mrf.mxu0
      %10301 = vmatprep.mubr.bf16.mxu0 0
      %10302 = vmatmul.mubr.bf16.gmra.mxu0 %v10182
      %v10303 = vpop.f32.mrf.mxu0
      %v10304 = vadd.f32 0.0, %v10303
      %v10305 = vpop.f32.mrf.mxu0
      %v10306 = vpop.f32.mrf.mxu0
      %v10307 = vadd.f32 0.0, %v10306
      %v10308 = vpop.f32.mrf.mxu0
      %10309 = vmatprep.mubr.bf16.mxu0 0
      %10310 = vmatmul.mubr.bf16.gmra.mxu0 %v10183
      %v10311 = vpop.f32.mrf.mxu0
      %v10312 = vadd.f32 0.0, %v10311
      %v10313 = vpop.f32.mrf.mxu0
      %v10314 = vpop.f32.mrf.mxu0
      %v10315 = vadd.f32 0.0, %v10314
      %v10316 = vpop.f32.mrf.mxu0
      %10317 = vmatprep.mubr.bf16.mxu0 0
      %10318 = vmatmul.mubr.bf16.gmra.mxu0 %v10184
      %v10319 = vpop.f32.mrf.mxu0
      %v10320 = vadd.f32 0.0, %v10319
      %v10321 = vpop.f32.mrf.mxu0
      %v10322 = vpop.f32.mrf.mxu0
      %v10323 = vadd.f32 0.0, %v10322
      %v10324 = vpop.f32.mrf.mxu0
      %10325 = vmatprep.mubr.bf16.mxu0 0
      %10326 = vmatmul.mubr.bf16.gmra.mxu0 %v10185
      %v10327 = vpop.f32.mrf.mxu0
      %v10328 = vadd.f32 0.0, %v10327
      %v10329 = vpop.f32.mrf.mxu0
      %v10330 = vpop.f32.mrf.mxu0
      %v10331 = vadd.f32 0.0, %v10330
      %v10332 = vpop.f32.mrf.mxu0
      %10333 = vmatprep.mubr.bf16.mxu0 0
      %10334 = vmatmul.mubr.bf16.gmra.mxu0 %v10186
      %v10335 = vpop.f32.mrf.mxu0
      %v10336 = vadd.f32 0.0, %v10335
      %v10337 = vpop.f32.mrf.mxu0
      %v10338 = vpop.f32.mrf.mxu0
      %v10339 = vadd.f32 0.0, %v10338
      %v10340 = vpop.f32.mrf.mxu0
      %10341 = vmatprep.mubr.bf16.mxu0 0
      %10342 = vmatmul.mubr.bf16.gmra.mxu0 %v10187
      %v10343 = vpop.f32.mrf.mxu0
      %v10344 = vadd.f32 0.0, %v10343
      %v10345 = vpop.f32.mrf.mxu0
      %v10346 = vpop.f32.mrf.mxu0
      %v10347 = vadd.f32 0.0, %v10346
      %v10348 = vpop.f32.mrf.mxu0
      %10349 = vmatprep.mubr.bf16.mxu0 0
      %10350 = vmatmul.mubr.bf16.gmra.mxu0 %v10188
      %v10351 = vpop.f32.mrf.mxu0
      %v10352 = vadd.f32 0.0, %v10351
      %v10353 = vpop.f32.mrf.mxu0
      %v10354 = vpop.f32.mrf.mxu0
      %v10355 = vadd.f32 0.0, %v10354
      %v10356 = vpop.f32.mrf.mxu0
      %10357 = vmatprep.mubr.bf16.mxu0 0
      %10358 = vmatmul.mubr.bf16.gmra.mxu0 %v10189
      %v10359 = vpop.f32.mrf.mxu0
      %v10360 = vadd.f32 0.0, %v10359
      %v10361 = vpop.f32.mrf.mxu0
      %v10362 = vpop.f32.mrf.mxu0
      %v10363 = vadd.f32 0.0, %v10362
      %v10364 = vpop.f32.mrf.mxu0
      %10365 = vmatprep.mubr.bf16.mxu0 0
      %10366 = vmatmul.mubr.bf16.gmra.mxu0 %v10190
      %v10367 = vpop.f32.mrf.mxu0
      %v10368 = vadd.f32 0.0, %v10367
      %v10369 = vpop.f32.mrf.mxu0
      %v10370 = vpop.f32.mrf.mxu0
      %v10371 = vadd.f32 0.0, %v10370
      %v10372 = vpop.f32.mrf.mxu0
      %10373 = vmatprep.mubr.bf16.mxu0 0
      %10374 = vmatmul.mubr.bf16.gmra.mxu0 %v10191
      %v10375 = vpop.f32.mrf.mxu0
      %v10376 = vadd.f32 0.0, %v10375
      %v10377 = vpop.f32.mrf.mxu0
      %v10378 = vpop.f32.mrf.mxu0
      %v10379 = vadd.f32 0.0, %v10378
      %v10380 = vpop.f32.mrf.mxu0
      %10381 = vmatprep.mubr.bf16.mxu0 0
      %10382 = vmatmul.mubr.bf16.gmra.mxu0 %v10192
      %v10383 = vpop.f32.mrf.mxu0
      %v10384 = vadd.f32 0.0, %v10383
      %v10385 = vpop.f32.mrf.mxu0
      %v10386 = vpop.f32.mrf.mxu0
      %v10387 = vadd.f32 0.0, %v10386
      %v10388 = vpop.f32.mrf.mxu0
      %10389 = vmatprep.mubr.bf16.mxu0 0
      %10390 = vmatmul.mubr.bf16.gmra.mxu0 %v10193
      %v10391 = vpop.f32.mrf.mxu0
      %v10392 = vadd.f32 0.0, %v10391
      %v10393 = vpop.f32.mrf.mxu0
      %v10394 = vpop.f32.mrf.mxu0
      %v10395 = vadd.f32 0.0, %v10394
      %v10396 = vpop.f32.mrf.mxu0
      %10397 = vmatprep.mubr.bf16.mxu0 0
      %10398 = vmatmul.mubr.bf16.gmra.mxu0 %v10194
      %v10399 = vpop.f32.mrf.mxu0
      %v10400 = vadd.f32 0.0, %v10399
      %v10401 = vpop.f32.mrf.mxu0
      %v10402 = vpop.f32.mrf.mxu0
      %v10403 = vadd.f32 0.0, %v10402
      %v10404 = vpop.f32.mrf.mxu0
      %10405 = vmatprep.mubr.bf16.mxu0 0
      %10406 = vmatmul.mubr.bf16.gmra.mxu0 %v10195
      %v10407 = vpop.f32.mrf.mxu0
      %v10408 = vadd.f32 0.0, %v10407
      %v10409 = vpop.f32.mrf.mxu0
      %v10410 = vpop.f32.mrf.mxu0
      %v10411 = vadd.f32 0.0, %v10410
      %v10412 = vpop.f32.mrf.mxu0
      %10413 = vmatprep.mubr.bf16.mxu0 0
      %10414 = vmatmul.mubr.bf16.gmra.mxu0 %v10196
      %v10415 = vpop.f32.mrf.mxu0
      %v10416 = vadd.f32 0.0, %v10415
      %v10417 = vpop.f32.mrf.mxu0
      %v10418 = vpop.f32.mrf.mxu0
      %v10419 = vadd.f32 0.0, %v10418
      %v10420 = vpop.f32.mrf.mxu0
      %10421 = vdwg.mxu0
      %v10422 = vadd.f32 %v10035, %v10296
      %v10423 = vadd.f32 %v10036, %v10299
      %v10424 = vadd.f32 %v10037, %v10304
      %v10425 = vadd.f32 %v10038, %v10307
      %v10426 = vadd.f32 %v10039, %v10312
      %v10427 = vadd.f32 %v10040, %v10315
      %v10428 = vadd.f32 %v10041, %v10320
      %v10429 = vadd.f32 %v10042, %v10323
      %v10430 = vadd.f32 %v10043, %v10328
      %v10431 = vadd.f32 %v10044, %v10331
      %v10432 = vadd.f32 %v10045, %v10336
      %v10433 = vadd.f32 %v10046, %v10339
      %v10434 = vadd.f32 %v10047, %v10344
      %v10435 = vadd.f32 %v10048, %v10347
      %v10436 = vadd.f32 %v10049, %v10352
      %v10437 = vadd.f32 %v10050, %v10355
      %v10438 = vadd.f32 %v10051, %v10360
      %v10439 = vadd.f32 %v10052, %v10363
      %v10440 = vadd.f32 %v10053, %v10368
      %v10441 = vadd.f32 %v10054, %v10371
      %v10442 = vadd.f32 %v10055, %v10376
      %v10443 = vadd.f32 %v10056, %v10379
      %v10444 = vadd.f32 %v10057, %v10384
      %v10445 = vadd.f32 %v10058, %v10387
      %v10446 = vadd.f32 %v10059, %v10392
      %v10447 = vadd.f32 %v10060, %v10395
      %v10448 = vadd.f32 %v10061, %v10400
      %v10449 = vadd.f32 %v10062, %v10403
      %v10450 = vadd.f32 %v10063, %v10408
      %v10451 = vadd.f32 %v10064, %v10411
      %v10452 = vadd.f32 %v10065, %v10416
      %v10453 = vadd.f32 %v10066, %v10419
      %v10454 = vld [vmem:[%s10067] sm:$0xf]
      %v10455 = vld [vmem:[%s10067 + $0x4] sm:$0xf]
      %v10456 = vld [vmem:[%s10067 + $0x8] sm:$0x1]
      %v10457 = vld [vmem:[%s10067 + $0xc] sm:$0xf]
      %v10458 = vld [vmem:[%s10067 + $0x10] sm:$0xf]
      %v10459 = vld [vmem:[%s10067 + $0x14] sm:$0x1]
      %v10460 = vld [vmem:[%s10067 + $0x18] sm:$0xf]
      %v10461 = vld [vmem:[%s10067 + $0x1c] sm:$0xf]
      %v10462 = vld [vmem:[%s10067 + $0x20] sm:$0x1]
      %v10463 = vld [vmem:[%s10067 + $0x24] sm:$0xf]
      %v10464 = vld [vmem:[%s10067 + $0x28] sm:$0xf]
      %v10465 = vld [vmem:[%s10067 + $0x2c] sm:$0x1]
      %v10466 = vld [vmem:[%s10067 + $0x30] sm:$0xf]
      %v10467 = vld [vmem:[%s10067 + $0x34] sm:$0xf]
      %v10468 = vld [vmem:[%s10067 + $0x38] sm:$0x1]
      %v10469 = vld [vmem:[%s10067 + $0x3c] sm:$0xf]
      %v10470 = vld [vmem:[%s10067 + $0x40] sm:$0xf]
      %v10471 = vld [vmem:[%s10067 + $0x44] sm:$0x1]
      %v10472 = vld [vmem:[%s10067 + $0x48] sm:$0xf]
      %v10473 = vld [vmem:[%s10067 + $0x4c] sm:$0xf]
      %v10474 = vld [vmem:[%s10067 + $0x50] sm:$0x1]
      %v10475 = vld [vmem:[%s10067 + $0x54] sm:$0xf]
      %v10476 = vld [vmem:[%s10067 + $0x58] sm:$0xf]
      %v10477 = vld [vmem:[%s10067 + $0x5c] sm:$0x1]
      %v10478 = vld [vmem:[%s10067 + $0x60] sm:$0xf]
      %v10479 = vld [vmem:[%s10067 + $0x64] sm:$0xf]
      %v10480 = vld [vmem:[%s10067 + $0x68] sm:$0x1]
      %v10481 = vld [vmem:[%s10067 + $0x6c] sm:$0xf]
      %v10482 = vld [vmem:[%s10067 + $0x70] sm:$0xf]
      %v10483 = vld [vmem:[%s10067 + $0x74] sm:$0x1]
      %v10484 = vld [vmem:[%s10067 + $0x78] sm:$0xf]
      %v10485 = vld [vmem:[%s10067 + $0x7c] sm:$0xf]
      %v10486 = vld [vmem:[%s10067 + $0x80] sm:$0x1]
      %v10487 = vld [vmem:[%s10067 + $0x84] sm:$0xf]
      %v10488 = vld [vmem:[%s10067 + $0x88] sm:$0xf]
      %v10489 = vld [vmem:[%s10067 + $0x8c] sm:$0x1]
      %v10490 = vld [vmem:[%s10067 + $0x90] sm:$0xf]
      %v10491 = vld [vmem:[%s10067 + $0x94] sm:$0xf]
      %v10492 = vld [vmem:[%s10067 + $0x98] sm:$0x1]
      %v10493 = vld [vmem:[%s10067 + $0x9c] sm:$0xf]
      %v10494 = vld [vmem:[%s10067 + $0xa0] sm:$0xf]
      %v10495 = vld [vmem:[%s10067 + $0xa4] sm:$0x1]
      %v10496 = vld [vmem:[%s10067 + $0xa8] sm:$0xf]
      %v10497 = vld [vmem:[%s10067 + $0xac] sm:$0xf]
      %v10498 = vld [vmem:[%s10067 + $0xb0] sm:$0x1]
      %v10499 = vld [vmem:[%s10067 + $0xb4] sm:$0xf]
      %v10500 = vld [vmem:[%s10067 + $0xb8] sm:$0xf]
      %v10501 = vld [vmem:[%s10067 + $0xbc] sm:$0x1]
      %v10503 = vshrl.u32 %v10454, 16
      %v10505 = vrot.slane %v10503, 4
      %v10506 = vshll.u32 %v10454, 16
      %v10508 = vrot.slane %v10506, 5
      %v10509 = vor.u32 %v10505, %v10508
      %v10510 = vrot.slane %v10509, 4
      %v10512 = vshll.u32 %v10455, 16
      %v10514 = vrot.slane %v10512, 5
      %v10515 = vsel %vm1129, %v10510, %v10514
      %v10516 = vshrl.u32 %v10455, 16
      %v10518 = vrot.slane %v10516, 4
      %v10519 = vor.u32 %v10518, %v10514
      %v10520 = vrot.slane %v10519, 4
      %v10522 = vshll.u32 %v10456, 16
      %v10524 = vrot.slane %v10522, 5
      %v10525 = vsel %vm1129, %v10520, %v10524
      %v10527 = vshrl.u32 %v10457, 16
      %v10529 = vrot.slane %v10527, 4
      %v10530 = vshll.u32 %v10457, 16
      %v10532 = vrot.slane %v10530, 5
      %v10533 = vor.u32 %v10529, %v10532
      %v10534 = vrot.slane %v10533, 4
      %v10536 = vshll.u32 %v10458, 16
      %v10538 = vrot.slane %v10536, 5
      %v10539 = vsel %vm1129, %v10534, %v10538
      %v10540 = vshrl.u32 %v10458, 16
      %v10542 = vrot.slane %v10540, 4
      %v10543 = vor.u32 %v10542, %v10538
      %v10544 = vrot.slane %v10543, 4
      %v10546 = vshll.u32 %v10459, 16
      %v10548 = vrot.slane %v10546, 5
      %v10549 = vsel %vm1129, %v10544, %v10548
      %v10551 = vshrl.u32 %v10460, 16
      %v10553 = vrot.slane %v10551, 4
      %v10554 = vshll.u32 %v10460, 16
      %v10556 = vrot.slane %v10554, 5
      %v10557 = vor.u32 %v10553, %v10556
      %v10558 = vrot.slane %v10557, 4
      %v10560 = vshll.u32 %v10461, 16
      %v10562 = vrot.slane %v10560, 5
      %v10563 = vsel %vm1129, %v10558, %v10562
      %v10564 = vshrl.u32 %v10461, 16
      %v10566 = vrot.slane %v10564, 4
      %v10567 = vor.u32 %v10566, %v10562
      %v10568 = vrot.slane %v10567, 4
      %v10570 = vshll.u32 %v10462, 16
      %v10572 = vrot.slane %v10570, 5
      %v10573 = vsel %vm1129, %v10568, %v10572
      %v10575 = vshrl.u32 %v10463, 16
      %v10577 = vrot.slane %v10575, 4
      %v10578 = vshll.u32 %v10463, 16
      %v10580 = vrot.slane %v10578, 5
      %v10581 = vor.u32 %v10577, %v10580
      %v10582 = vrot.slane %v10581, 4
      %v10584 = vshll.u32 %v10464, 16
      %v10586 = vrot.slane %v10584, 5
      %v10587 = vsel %vm1129, %v10582, %v10586
      %v10588 = vshrl.u32 %v10464, 16
      %v10590 = vrot.slane %v10588, 4
      %v10591 = vor.u32 %v10590, %v10586
      %v10592 = vrot.slane %v10591, 4
      %v10594 = vshll.u32 %v10465, 16
      %v10596 = vrot.slane %v10594, 5
      %v10597 = vsel %vm1129, %v10592, %v10596
      %v10599 = vshrl.u32 %v10466, 16
      %v10601 = vrot.slane %v10599, 4
      %v10602 = vshll.u32 %v10466, 16
      %v10604 = vrot.slane %v10602, 5
      %v10605 = vor.u32 %v10601, %v10604
      %v10606 = vrot.slane %v10605, 4
      %v10608 = vshll.u32 %v10467, 16
      %v10610 = vrot.slane %v10608, 5
      %v10611 = vsel %vm1129, %v10606, %v10610
      %v10612 = vshrl.u32 %v10467, 16
      %v10614 = vrot.slane %v10612, 4
      %v10615 = vor.u32 %v10614, %v10610
      %v10616 = vrot.slane %v10615, 4
      %v10618 = vshll.u32 %v10468, 16
      %v10620 = vrot.slane %v10618, 5
      %v10621 = vsel %vm1129, %v10616, %v10620
      %v10623 = vshrl.u32 %v10469, 16
      %v10625 = vrot.slane %v10623, 4
      %v10626 = vshll.u32 %v10469, 16
      %v10628 = vrot.slane %v10626, 5
      %v10629 = vor.u32 %v10625, %v10628
      %v10630 = vrot.slane %v10629, 4
      %v10632 = vshll.u32 %v10470, 16
      %v10634 = vrot.slane %v10632, 5
      %v10635 = vsel %vm1129, %v10630, %v10634
      %v10636 = vshrl.u32 %v10470, 16
      %v10638 = vrot.slane %v10636, 4
      %v10639 = vor.u32 %v10638, %v10634
      %v10640 = vrot.slane %v10639, 4
      %v10642 = vshll.u32 %v10471, 16
      %v10644 = vrot.slane %v10642, 5
      %v10645 = vsel %vm1129, %v10640, %v10644
      %v10647 = vshrl.u32 %v10472, 16
      %v10649 = vrot.slane %v10647, 4
      %v10650 = vshll.u32 %v10472, 16
      %v10652 = vrot.slane %v10650, 5
      %v10653 = vor.u32 %v10649, %v10652
      %v10654 = vrot.slane %v10653, 4
      %v10656 = vshll.u32 %v10473, 16
      %v10658 = vrot.slane %v10656, 5
      %v10659 = vsel %vm1129, %v10654, %v10658
      %v10660 = vshrl.u32 %v10473, 16
      %v10662 = vrot.slane %v10660, 4
      %v10663 = vor.u32 %v10662, %v10658
      %v10664 = vrot.slane %v10663, 4
      %v10666 = vshll.u32 %v10474, 16
      %v10668 = vrot.slane %v10666, 5
      %v10669 = vsel %vm1129, %v10664, %v10668
      %v10671 = vshrl.u32 %v10475, 16
      %v10673 = vrot.slane %v10671, 4
      %v10674 = vshll.u32 %v10475, 16
      %v10676 = vrot.slane %v10674, 5
      %v10677 = vor.u32 %v10673, %v10676
      %v10678 = vrot.slane %v10677, 4
      %v10680 = vshll.u32 %v10476, 16
      %v10682 = vrot.slane %v10680, 5
      %v10683 = vsel %vm1129, %v10678, %v10682
      %v10684 = vshrl.u32 %v10476, 16
      %v10686 = vrot.slane %v10684, 4
      %v10687 = vor.u32 %v10686, %v10682
      %v10688 = vrot.slane %v10687, 4
      %v10690 = vshll.u32 %v10477, 16
      %v10692 = vrot.slane %v10690, 5
      %v10693 = vsel %vm1129, %v10688, %v10692
      %v10695 = vshrl.u32 %v10478, 16
      %v10697 = vrot.slane %v10695, 4
      %v10698 = vshll.u32 %v10478, 16
      %v10700 = vrot.slane %v10698, 5
      %v10701 = vor.u32 %v10697, %v10700
      %v10702 = vrot.slane %v10701, 4
      %v10704 = vshll.u32 %v10479, 16
      %v10706 = vrot.slane %v10704, 5
      %v10707 = vsel %vm1129, %v10702, %v10706
      %v10708 = vshrl.u32 %v10479, 16
      %v10710 = vrot.slane %v10708, 4
      %v10711 = vor.u32 %v10710, %v10706
      %v10712 = vrot.slane %v10711, 4
      %v10714 = vshll.u32 %v10480, 16
      %v10716 = vrot.slane %v10714, 5
      %v10717 = vsel %vm1129, %v10712, %v10716
      %v10719 = vshrl.u32 %v10481, 16
      %v10721 = vrot.slane %v10719, 4
      %v10722 = vshll.u32 %v10481, 16
      %v10724 = vrot.slane %v10722, 5
      %v10725 = vor.u32 %v10721, %v10724
      %v10726 = vrot.slane %v10725, 4
      %v10728 = vshll.u32 %v10482, 16
      %v10730 = vrot.slane %v10728, 5
      %v10731 = vsel %vm1129, %v10726, %v10730
      %v10732 = vshrl.u32 %v10482, 16
      %v10734 = vrot.slane %v10732, 4
      %v10735 = vor.u32 %v10734, %v10730
      %v10736 = vrot.slane %v10735, 4
      %v10738 = vshll.u32 %v10483, 16
      %v10740 = vrot.slane %v10738, 5
      %v10741 = vsel %vm1129, %v10736, %v10740
      %v10743 = vshrl.u32 %v10484, 16
      %v10745 = vrot.slane %v10743, 4
      %v10746 = vshll.u32 %v10484, 16
      %v10748 = vrot.slane %v10746, 5
      %v10749 = vor.u32 %v10745, %v10748
      %v10750 = vrot.slane %v10749, 4
      %v10752 = vshll.u32 %v10485, 16
      %v10754 = vrot.slane %v10752, 5
      %v10755 = vsel %vm1129, %v10750, %v10754
      %v10756 = vshrl.u32 %v10485, 16
      %v10758 = vrot.slane %v10756, 4
      %v10759 = vor.u32 %v10758, %v10754
      %v10760 = vrot.slane %v10759, 4
      %v10762 = vshll.u32 %v10486, 16
      %v10764 = vrot.slane %v10762, 5
      %v10765 = vsel %vm1129, %v10760, %v10764
      %v10767 = vshrl.u32 %v10487, 16
      %v10769 = vrot.slane %v10767, 4
      %v10770 = vshll.u32 %v10487, 16
      %v10772 = vrot.slane %v10770, 5
      %v10773 = vor.u32 %v10769, %v10772
      %v10774 = vrot.slane %v10773, 4
      %v10776 = vshll.u32 %v10488, 16
      %v10778 = vrot.slane %v10776, 5
      %v10779 = vsel %vm1129, %v10774, %v10778
      %v10780 = vshrl.u32 %v10488, 16
      %v10782 = vrot.slane %v10780, 4
      %v10783 = vor.u32 %v10782, %v10778
      %v10784 = vrot.slane %v10783, 4
      %v10786 = vshll.u32 %v10489, 16
      %v10788 = vrot.slane %v10786, 5
      %v10789 = vsel %vm1129, %v10784, %v10788
      %v10791 = vshrl.u32 %v10490, 16
      %v10793 = vrot.slane %v10791, 4
      %v10794 = vshll.u32 %v10490, 16
      %v10796 = vrot.slane %v10794, 5
      %v10797 = vor.u32 %v10793, %v10796
      %v10798 = vrot.slane %v10797, 4
      %v10800 = vshll.u32 %v10491, 16
      %v10802 = vrot.slane %v10800, 5
      %v10803 = vsel %vm1129, %v10798, %v10802
      %v10804 = vshrl.u32 %v10491, 16
      %v10806 = vrot.slane %v10804, 4
      %v10807 = vor.u32 %v10806, %v10802
      %v10808 = vrot.slane %v10807, 4
      %v10810 = vshll.u32 %v10492, 16
      %v10812 = vrot.slane %v10810, 5
      %v10813 = vsel %vm1129, %v10808, %v10812
      %v10815 = vshrl.u32 %v10493, 16
      %v10817 = vrot.slane %v10815, 4
      %v10818 = vshll.u32 %v10493, 16
      %v10820 = vrot.slane %v10818, 5
      %v10821 = vor.u32 %v10817, %v10820
      %v10822 = vrot.slane %v10821, 4
      %v10824 = vshll.u32 %v10494, 16
      %v10826 = vrot.slane %v10824, 5
      %v10827 = vsel %vm1129, %v10822, %v10826
      %v10828 = vshrl.u32 %v10494, 16
      %v10830 = vrot.slane %v10828, 4
      %v10831 = vor.u32 %v10830, %v10826
      %v10832 = vrot.slane %v10831, 4
      %v10834 = vshll.u32 %v10495, 16
      %v10836 = vrot.slane %v10834, 5
      %v10837 = vsel %vm1129, %v10832, %v10836
      %v10839 = vshrl.u32 %v10496, 16
      %v10841 = vrot.slane %v10839, 4
      %v10842 = vshll.u32 %v10496, 16
      %v10844 = vrot.slane %v10842, 5
      %v10845 = vor.u32 %v10841, %v10844
      %v10846 = vrot.slane %v10845, 4
      %v10848 = vshll.u32 %v10497, 16
      %v10850 = vrot.slane %v10848, 5
      %v10851 = vsel %vm1129, %v10846, %v10850
      %v10852 = vshrl.u32 %v10497, 16
      %v10854 = vrot.slane %v10852, 4
      %v10855 = vor.u32 %v10854, %v10850
      %v10856 = vrot.slane %v10855, 4
      %v10858 = vshll.u32 %v10498, 16
      %v10860 = vrot.slane %v10858, 5
      %v10861 = vsel %vm1129, %v10856, %v10860
      %v10863 = vshrl.u32 %v10499, 16
      %v10865 = vrot.slane %v10863, 4
      %v10866 = vshll.u32 %v10499, 16
      %v10868 = vrot.slane %v10866, 5
      %v10869 = vor.u32 %v10865, %v10868
      %v10870 = vrot.slane %v10869, 4
      %v10872 = vshll.u32 %v10500, 16
      %v10874 = vrot.slane %v10872, 5
      %v10875 = vsel %vm1129, %v10870, %v10874
      %v10876 = vshrl.u32 %v10500, 16
      %v10878 = vrot.slane %v10876, 4
      %v10879 = vor.u32 %v10878, %v10874
      %v10880 = vrot.slane %v10879, 4
      %v10882 = vshll.u32 %v10501, 16
      %v10884 = vrot.slane %v10882, 5
      %v10885 = vsel %vm1129, %v10880, %v10884
      %s10886 = scalar_lea.vmem %s6, 448
      %v10887 = vld [vmem:[%s10886] sm:$0xf]
      %v10888 = vld [vmem:[%s10886 + $0x4] sm:$0xf]
      %v10889 = vld [vmem:[%s10886 + $0x8] sm:$0xf]
      %v10890 = vld [vmem:[%s10886 + $0xc] sm:$0xf]
      %v10891 = vld [vmem:[%s10886 + $0x10] sm:$0xf]
      %v10892 = vld [vmem:[%s10886 + $0x14] sm:$0xf]
      %v10893 = vld [vmem:[%s10886 + $0x18] sm:$0xf]
      %v10894 = vld [vmem:[%s10886 + $0x1c] sm:$0xf]
      %v10895 = vld [vmem:[%s10886 + $0x20] sm:$0xf]
      %v10896 = vld [vmem:[%s10886 + $0x24] sm:$0xf]
      %v10897 = vld [vmem:[%s10886 + $0x28] sm:$0xf]
      %v10898 = vld [vmem:[%s10886 + $0x2c] sm:$0xf]
      %v10899 = vld [vmem:[%s10886 + $0x30] sm:$0xf]
      %v10900 = vld [vmem:[%s10886 + $0x34] sm:$0xf]
      %v10901 = vld [vmem:[%s10886 + $0x38] sm:$0xf]
      %v10902 = vld [vmem:[%s10886 + $0x3c] sm:$0xf]
      %v10903 = vunpack.c.l.b16 %v10515
      %v10904 = vunpack.c.l.b16 %v10525
      %v10905 = vunpack.c.l.b16 %v10539
      %v10906 = vunpack.c.l.b16 %v10549
      %v10907 = vunpack.c.l.b16 %v10563
      %v10908 = vunpack.c.l.b16 %v10573
      %v10909 = vunpack.c.l.b16 %v10587
      %v10910 = vunpack.c.l.b16 %v10597
      %v10911 = vunpack.c.l.b16 %v10611
      %v10912 = vunpack.c.l.b16 %v10621
      %v10913 = vunpack.c.l.b16 %v10635
      %v10914 = vunpack.c.l.b16 %v10645
      %v10915 = vunpack.c.l.b16 %v10659
      %v10916 = vunpack.c.l.b16 %v10669
      %v10917 = vunpack.c.l.b16 %v10683
      %v10918 = vunpack.c.l.b16 %v10693
      %v10919 = vunpack.c.l.b16 %v10707
      %v10920 = vunpack.c.l.b16 %v10717
      %v10921 = vunpack.c.l.b16 %v10731
      %v10922 = vunpack.c.l.b16 %v10741
      %v10923 = vunpack.c.l.b16 %v10755
      %v10924 = vunpack.c.l.b16 %v10765
      %v10925 = vunpack.c.l.b16 %v10779
      %v10926 = vunpack.c.l.b16 %v10789
      %v10927 = vunpack.c.l.b16 %v10803
      %v10928 = vunpack.c.l.b16 %v10813
      %v10929 = vunpack.c.l.b16 %v10827
      %v10930 = vunpack.c.l.b16 %v10837
      %v10931 = vunpack.c.l.b16 %v10851
      %v10932 = vunpack.c.l.b16 %v10861
      %v10933 = vunpack.c.l.b16 %v10875
      %v10934 = vunpack.c.l.b16 %v10885
      %v10935 = vpack.c.b16 %v10904, %v10903
      %v10936 = vpack.c.b16 %v10906, %v10905
      %v10937 = vpack.c.b16 %v10908, %v10907
      %v10938 = vpack.c.b16 %v10910, %v10909
      %v10939 = vpack.c.b16 %v10912, %v10911
      %v10940 = vpack.c.b16 %v10914, %v10913
      %v10941 = vpack.c.b16 %v10916, %v10915
      %v10942 = vpack.c.b16 %v10918, %v10917
      %v10943 = vpack.c.b16 %v10920, %v10919
      %v10944 = vpack.c.b16 %v10922, %v10921
      %v10945 = vpack.c.b16 %v10924, %v10923
      %v10946 = vpack.c.b16 %v10926, %v10925
      %v10947 = vpack.c.b16 %v10928, %v10927
      %v10948 = vpack.c.b16 %v10930, %v10929
      %v10949 = vpack.c.b16 %v10932, %v10931
      %v10950 = vpack.c.b16 %v10934, %v10933
      %v10983 = vunpack.c.l.b16 %v10887
      %v10984 = vunpack.c.l.b16 %v10888
      %v10985 = vunpack.c.l.b16 %v10889
      %v10986 = vunpack.c.l.b16 %v10890
      %v10987 = vunpack.c.l.b16 %v10891
      %v10988 = vunpack.c.l.b16 %v10892
      %v10989 = vunpack.c.l.b16 %v10893
      %v10990 = vunpack.c.l.b16 %v10894
      %v10991 = vunpack.c.l.b16 %v10895
      %v10992 = vunpack.c.l.b16 %v10896
      %v10993 = vunpack.c.l.b16 %v10897
      %v10994 = vunpack.c.l.b16 %v10898
      %v10995 = vunpack.c.l.b16 %v10899
      %v10996 = vunpack.c.l.b16 %v10900
      %v10997 = vunpack.c.l.b16 %v10901
      %v10998 = vunpack.c.l.b16 %v10902
      %v10999 = vpack.c.b16 %v10984, %v10983
      %v11000 = vpack.c.b16 %v10986, %v10985
      %v11001 = vpack.c.b16 %v10988, %v10987
      %v11002 = vpack.c.b16 %v10990, %v10989
      %v11003 = vpack.c.b16 %v10992, %v10991
      %v11004 = vpack.c.b16 %v10994, %v10993
      %v11005 = vpack.c.b16 %v10996, %v10995
      %v11006 = vpack.c.b16 %v10998, %v10997
      %11015 = vmatprep.subr.bf16.mxu0 0
      %11016 = vmatpush1.bf16.msra.mxu0 %v11006
      %11017 = vmatprep.subr.bf16.mxu0 0
      %11018 = vmatpush1.bf16.msra.mxu0 %v11005
      %11019 = vmatprep.subr.bf16.mxu0 0
      %11020 = vmatpush1.bf16.msra.mxu0 %v11004
      %11021 = vmatprep.subr.bf16.mxu0 0
      %11022 = vmatpush1.bf16.msra.mxu0 %v11003
      %11023 = vmatprep.subr.bf16.mxu0 0
      %11024 = vmatpush1.bf16.msra.mxu0 %v11002
      %11025 = vmatprep.subr.bf16.mxu0 0
      %11026 = vmatpush1.bf16.msra.mxu0 %v11001
      %11027 = vmatprep.subr.bf16.mxu0 0
      %11028 = vmatpush1.bf16.msra.mxu0 %v11000
      %11029 = vmatprep.subr.bf16.mxu0 0
      %11030 = vmatpush1.bf16.msra.mxu0 %v10999
      %11031 = vmatprep.subr.bf16.mxu0 0
      %11032 = vmatpush2.bf16.msra.mxu0 0
      %11033 = vmatprep.subr.bf16.mxu0 0
      %11034 = vmatpush2.bf16.msra.mxu0 0
      %11035 = vmatprep.subr.bf16.mxu0 0
      %11036 = vmatpush2.bf16.msra.mxu0 0
      %11037 = vmatprep.subr.bf16.mxu0 0
      %11038 = vmatpush2.bf16.msra.mxu0 0
      %11039 = vmatprep.subr.bf16.mxu0 0
      %11040 = vmatpush2.bf16.msra.mxu0 0
      %11041 = vmatprep.subr.bf16.mxu0 0
      %11042 = vmatpush2.bf16.msra.mxu0 0
      %11043 = vmatprep.subr.bf16.mxu0 0
      %11044 = vmatpush2.bf16.msra.mxu0 0
      %11045 = vmatprep.subr.bf16.mxu0 0
      %11046 = vmatpush2.bf16.msra.mxu0 0
      %11047 = vmatprep.mubr.bf16.mxu0 0
      %11048 = vmatmul.mubr.bf16.gmra.mxu0 %v10935
      %v11049 = vpop.f32.mrf.mxu0
      %v11050 = vadd.f32 0.0, %v11049
      %v11051 = vpop.f32.mrf.mxu0
      %v11052 = vpop.f32.mrf.mxu0
      %v11053 = vadd.f32 0.0, %v11052
      %v11054 = vpop.f32.mrf.mxu0
      %11055 = vmatprep.mubr.bf16.mxu0 0
      %11056 = vmatmul.mubr.bf16.gmra.mxu0 %v10936
      %v11057 = vpop.f32.mrf.mxu0
      %v11058 = vadd.f32 0.0, %v11057
      %v11059 = vpop.f32.mrf.mxu0
      %v11060 = vpop.f32.mrf.mxu0
      %v11061 = vadd.f32 0.0, %v11060
      %v11062 = vpop.f32.mrf.mxu0
      %11063 = vmatprep.mubr.bf16.mxu0 0
      %11064 = vmatmul.mubr.bf16.gmra.mxu0 %v10937
      %v11065 = vpop.f32.mrf.mxu0
      %v11066 = vadd.f32 0.0, %v11065
      %v11067 = vpop.f32.mrf.mxu0
      %v11068 = vpop.f32.mrf.mxu0
      %v11069 = vadd.f32 0.0, %v11068
      %v11070 = vpop.f32.mrf.mxu0
      %11071 = vmatprep.mubr.bf16.mxu0 0
      %11072 = vmatmul.mubr.bf16.gmra.mxu0 %v10938
      %v11073 = vpop.f32.mrf.mxu0
      %v11074 = vadd.f32 0.0, %v11073
      %v11075 = vpop.f32.mrf.mxu0
      %v11076 = vpop.f32.mrf.mxu0
      %v11077 = vadd.f32 0.0, %v11076
      %v11078 = vpop.f32.mrf.mxu0
      %11079 = vmatprep.mubr.bf16.mxu0 0
      %11080 = vmatmul.mubr.bf16.gmra.mxu0 %v10939
      %v11081 = vpop.f32.mrf.mxu0
      %v11082 = vadd.f32 0.0, %v11081
      %v11083 = vpop.f32.mrf.mxu0
      %v11084 = vpop.f32.mrf.mxu0
      %v11085 = vadd.f32 0.0, %v11084
      %v11086 = vpop.f32.mrf.mxu0
      %11087 = vmatprep.mubr.bf16.mxu0 0
      %11088 = vmatmul.mubr.bf16.gmra.mxu0 %v10940
      %v11089 = vpop.f32.mrf.mxu0
      %v11090 = vadd.f32 0.0, %v11089
      %v11091 = vpop.f32.mrf.mxu0
      %v11092 = vpop.f32.mrf.mxu0
      %v11093 = vadd.f32 0.0, %v11092
      %v11094 = vpop.f32.mrf.mxu0
      %11095 = vmatprep.mubr.bf16.mxu0 0
      %11096 = vmatmul.mubr.bf16.gmra.mxu0 %v10941
      %v11097 = vpop.f32.mrf.mxu0
      %v11098 = vadd.f32 0.0, %v11097
      %v11099 = vpop.f32.mrf.mxu0
      %v11100 = vpop.f32.mrf.mxu0
      %v11101 = vadd.f32 0.0, %v11100
      %v11102 = vpop.f32.mrf.mxu0
      %11103 = vmatprep.mubr.bf16.mxu0 0
      %11104 = vmatmul.mubr.bf16.gmra.mxu0 %v10942
      %v11105 = vpop.f32.mrf.mxu0
      %v11106 = vadd.f32 0.0, %v11105
      %v11107 = vpop.f32.mrf.mxu0
      %v11108 = vpop.f32.mrf.mxu0
      %v11109 = vadd.f32 0.0, %v11108
      %v11110 = vpop.f32.mrf.mxu0
      %11111 = vmatprep.mubr.bf16.mxu0 0
      %11112 = vmatmul.mubr.bf16.gmra.mxu0 %v10943
      %v11113 = vpop.f32.mrf.mxu0
      %v11114 = vadd.f32 0.0, %v11113
      %v11115 = vpop.f32.mrf.mxu0
      %v11116 = vpop.f32.mrf.mxu0
      %v11117 = vadd.f32 0.0, %v11116
      %v11118 = vpop.f32.mrf.mxu0
      %11119 = vmatprep.mubr.bf16.mxu0 0
      %11120 = vmatmul.mubr.bf16.gmra.mxu0 %v10944
      %v11121 = vpop.f32.mrf.mxu0
      %v11122 = vadd.f32 0.0, %v11121
      %v11123 = vpop.f32.mrf.mxu0
      %v11124 = vpop.f32.mrf.mxu0
      %v11125 = vadd.f32 0.0, %v11124
      %v11126 = vpop.f32.mrf.mxu0
      %11127 = vmatprep.mubr.bf16.mxu0 0
      %11128 = vmatmul.mubr.bf16.gmra.mxu0 %v10945
      %v11129 = vpop.f32.mrf.mxu0
      %v11130 = vadd.f32 0.0, %v11129
      %v11131 = vpop.f32.mrf.mxu0
      %v11132 = vpop.f32.mrf.mxu0
      %v11133 = vadd.f32 0.0, %v11132
      %v11134 = vpop.f32.mrf.mxu0
      %11135 = vmatprep.mubr.bf16.mxu0 0
      %11136 = vmatmul.mubr.bf16.gmra.mxu0 %v10946
      %v11137 = vpop.f32.mrf.mxu0
      %v11138 = vadd.f32 0.0, %v11137
      %v11139 = vpop.f32.mrf.mxu0
      %v11140 = vpop.f32.mrf.mxu0
      %v11141 = vadd.f32 0.0, %v11140
      %v11142 = vpop.f32.mrf.mxu0
      %11143 = vmatprep.mubr.bf16.mxu0 0
      %11144 = vmatmul.mubr.bf16.gmra.mxu0 %v10947
      %v11145 = vpop.f32.mrf.mxu0
      %v11146 = vadd.f32 0.0, %v11145
      %v11147 = vpop.f32.mrf.mxu0
      %v11148 = vpop.f32.mrf.mxu0
      %v11149 = vadd.f32 0.0, %v11148
      %v11150 = vpop.f32.mrf.mxu0
      %11151 = vmatprep.mubr.bf16.mxu0 0
      %11152 = vmatmul.mubr.bf16.gmra.mxu0 %v10948
      %v11153 = vpop.f32.mrf.mxu0
      %v11154 = vadd.f32 0.0, %v11153
      %v11155 = vpop.f32.mrf.mxu0
      %v11156 = vpop.f32.mrf.mxu0
      %v11157 = vadd.f32 0.0, %v11156
      %v11158 = vpop.f32.mrf.mxu0
      %11159 = vmatprep.mubr.bf16.mxu0 0
      %11160 = vmatmul.mubr.bf16.gmra.mxu0 %v10949
      %v11161 = vpop.f32.mrf.mxu0
      %v11162 = vadd.f32 0.0, %v11161
      %v11163 = vpop.f32.mrf.mxu0
      %v11164 = vpop.f32.mrf.mxu0
      %v11165 = vadd.f32 0.0, %v11164
      %v11166 = vpop.f32.mrf.mxu0
      %11167 = vmatprep.mubr.bf16.mxu0 0
      %11168 = vmatmul.mubr.bf16.gmra.mxu0 %v10950
      %v11169 = vpop.f32.mrf.mxu0
      %v11170 = vadd.f32 0.0, %v11169
      %v11171 = vpop.f32.mrf.mxu0
      %v11172 = vpop.f32.mrf.mxu0
      %v11173 = vadd.f32 0.0, %v11172
      %v11174 = vpop.f32.mrf.mxu0
      %11175 = vdwg.mxu0
      %v11176 = vadd.f32 %v10422, %v11050
      %v11177 = vadd.f32 %v10423, %v11053
      %v11178 = vadd.f32 %v10424, %v11058
      %v11179 = vadd.f32 %v10425, %v11061
      %v11180 = vadd.f32 %v10426, %v11066
      %v11181 = vadd.f32 %v10427, %v11069
      %v11182 = vadd.f32 %v10428, %v11074
      %v11183 = vadd.f32 %v10429, %v11077
      %v11184 = vadd.f32 %v10430, %v11082
      %v11185 = vadd.f32 %v10431, %v11085
      %v11186 = vadd.f32 %v10432, %v11090
      %v11187 = vadd.f32 %v10433, %v11093
      %v11188 = vadd.f32 %v10434, %v11098
      %v11189 = vadd.f32 %v10435, %v11101
      %v11190 = vadd.f32 %v10436, %v11106
      %v11191 = vadd.f32 %v10437, %v11109
      %v11192 = vadd.f32 %v10438, %v11114
      %v11193 = vadd.f32 %v10439, %v11117
      %v11194 = vadd.f32 %v10440, %v11122
      %v11195 = vadd.f32 %v10441, %v11125
      %v11196 = vadd.f32 %v10442, %v11130
      %v11197 = vadd.f32 %v10443, %v11133
      %v11198 = vadd.f32 %v10444, %v11138
      %v11199 = vadd.f32 %v10445, %v11141
      %v11200 = vadd.f32 %v10446, %v11146
      %v11201 = vadd.f32 %v10447, %v11149
      %v11202 = vadd.f32 %v10448, %v11154
      %v11203 = vadd.f32 %v10449, %v11157
      %v11204 = vadd.f32 %v10450, %v11162
      %v11205 = vadd.f32 %v10451, %v11165
      %v11206 = vadd.f32 %v10452, %v11170
      %v11207 = vadd.f32 %v10453, %v11173
      %v11208 = vld [vmem:[%s10067] sm:$0xe]
      %v11209 = vld [vmem:[%s10067 + $0xc] sm:$0xe]
      %v11210 = vld [vmem:[%s10067 + $0x18] sm:$0xe]
      %v11211 = vld [vmem:[%s10067 + $0x24] sm:$0xe]
      %v11212 = vld [vmem:[%s10067 + $0x30] sm:$0xe]
      %v11213 = vld [vmem:[%s10067 + $0x3c] sm:$0xe]
      %v11214 = vld [vmem:[%s10067 + $0x48] sm:$0xe]
      %v11215 = vld [vmem:[%s10067 + $0x54] sm:$0xe]
      %v11216 = vld [vmem:[%s10067 + $0x60] sm:$0xe]
      %v11217 = vld [vmem:[%s10067 + $0x6c] sm:$0xe]
      %v11218 = vld [vmem:[%s10067 + $0x78] sm:$0xe]
      %v11219 = vld [vmem:[%s10067 + $0x84] sm:$0xe]
      %v11220 = vld [vmem:[%s10067 + $0x90] sm:$0xe]
      %v11221 = vld [vmem:[%s10067 + $0x9c] sm:$0xe]
      %v11222 = vld [vmem:[%s10067 + $0xa8] sm:$0xe]
      %v11223 = vld [vmem:[%s10067 + $0xb4] sm:$0xe]
      %v11272 = vrot.slane %v11208, 5
      %v11273 = vrot.slane %v11272, 4
      %v11274 = vrot.slane %v10455, 5
      %v11275 = vsel %vm2140, %v11273, %v11274
      %v11276 = vrot.slane %v11274, 4
      %v11277 = vrot.slane %v10456, 5
      %v11278 = vsel %vm2140, %v11276, %v11277
      %v11279 = vrot.slane %v11209, 5
      %v11280 = vrot.slane %v11279, 4
      %v11281 = vrot.slane %v10458, 5
      %v11282 = vsel %vm2140, %v11280, %v11281
      %v11283 = vrot.slane %v11281, 4
      %v11284 = vrot.slane %v10459, 5
      %v11285 = vsel %vm2140, %v11283, %v11284
      %v11286 = vrot.slane %v11210, 5
      %v11287 = vrot.slane %v11286, 4
      %v11288 = vrot.slane %v10461, 5
      %v11289 = vsel %vm2140, %v11287, %v11288
      %v11290 = vrot.slane %v11288, 4
      %v11291 = vrot.slane %v10462, 5
      %v11292 = vsel %vm2140, %v11290, %v11291
      %v11293 = vrot.slane %v11211, 5
      %v11294 = vrot.slane %v11293, 4
      %v11295 = vrot.slane %v10464, 5
      %v11296 = vsel %vm2140, %v11294, %v11295
      %v11297 = vrot.slane %v11295, 4
      %v11298 = vrot.slane %v10465, 5
      %v11299 = vsel %vm2140, %v11297, %v11298
      %v11300 = vrot.slane %v11212, 5
      %v11301 = vrot.slane %v11300, 4
      %v11302 = vrot.slane %v10467, 5
      %v11303 = vsel %vm2140, %v11301, %v11302
      %v11304 = vrot.slane %v11302, 4
      %v11305 = vrot.slane %v10468, 5
      %v11306 = vsel %vm2140, %v11304, %v11305
      %v11307 = vrot.slane %v11213, 5
      %v11308 = vrot.slane %v11307, 4
      %v11309 = vrot.slane %v10470, 5
      %v11310 = vsel %vm2140, %v11308, %v11309
      %v11311 = vrot.slane %v11309, 4
      %v11312 = vrot.slane %v10471, 5
      %v11313 = vsel %vm2140, %v11311, %v11312
      %v11314 = vrot.slane %v11214, 5
      %v11315 = vrot.slane %v11314, 4
      %v11316 = vrot.slane %v10473, 5
      %v11317 = vsel %vm2140, %v11315, %v11316
      %v11318 = vrot.slane %v11316, 4
      %v11319 = vrot.slane %v10474, 5
      %v11320 = vsel %vm2140, %v11318, %v11319
      %v11321 = vrot.slane %v11215, 5
      %v11322 = vrot.slane %v11321, 4
      %v11323 = vrot.slane %v10476, 5
      %v11324 = vsel %vm2140, %v11322, %v11323
      %v11325 = vrot.slane %v11323, 4
      %v11326 = vrot.slane %v10477, 5
      %v11327 = vsel %vm2140, %v11325, %v11326
      %v11328 = vrot.slane %v11216, 5
      %v11329 = vrot.slane %v11328, 4
      %v11330 = vrot.slane %v10479, 5
      %v11331 = vsel %vm2140, %v11329, %v11330
      %v11332 = vrot.slane %v11330, 4
      %v11333 = vrot.slane %v10480, 5
      %v11334 = vsel %vm2140, %v11332, %v11333
      %v11335 = vrot.slane %v11217, 5
      %v11336 = vrot.slane %v11335, 4
      %v11337 = vrot.slane %v10482, 5
      %v11338 = vsel %vm2140, %v11336, %v11337
      %v11339 = vrot.slane %v11337, 4
      %v11340 = vrot.slane %v10483, 5
      %v11341 = vsel %vm2140, %v11339, %v11340
      %v11342 = vrot.slane %v11218, 5
      %v11343 = vrot.slane %v11342, 4
      %v11344 = vrot.slane %v10485, 5
      %v11345 = vsel %vm2140, %v11343, %v11344
      %v11346 = vrot.slane %v11344, 4
      %v11347 = vrot.slane %v10486, 5
      %v11348 = vsel %vm2140, %v11346, %v11347
      %v11349 = vrot.slane %v11219, 5
      %v11350 = vrot.slane %v11349, 4
      %v11351 = vrot.slane %v10488, 5
      %v11352 = vsel %vm2140, %v11350, %v11351
      %v11353 = vrot.slane %v11351, 4
      %v11354 = vrot.slane %v10489, 5
      %v11355 = vsel %vm2140, %v11353, %v11354
      %v11356 = vrot.slane %v11220, 5
      %v11357 = vrot.slane %v11356, 4
      %v11358 = vrot.slane %v10491, 5
      %v11359 = vsel %vm2140, %v11357, %v11358
      %v11360 = vrot.slane %v11358, 4
      %v11361 = vrot.slane %v10492, 5
      %v11362 = vsel %vm2140, %v11360, %v11361
      %v11363 = vrot.slane %v11221, 5
      %v11364 = vrot.slane %v11363, 4
      %v11365 = vrot.slane %v10494, 5
      %v11366 = vsel %vm2140, %v11364, %v11365
      %v11367 = vrot.slane %v11365, 4
      %v11368 = vrot.slane %v10495, 5
      %v11369 = vsel %vm2140, %v11367, %v11368
      %v11370 = vrot.slane %v11222, 5
      %v11371 = vrot.slane %v11370, 4
      %v11372 = vrot.slane %v10497, 5
      %v11373 = vsel %vm2140, %v11371, %v11372
      %v11374 = vrot.slane %v11372, 4
      %v11375 = vrot.slane %v10498, 5
      %v11376 = vsel %vm2140, %v11374, %v11375
      %v11377 = vrot.slane %v11223, 5
      %v11378 = vrot.slane %v11377, 4
      %v11379 = vrot.slane %v10500, 5
      %v11380 = vsel %vm2140, %v11378, %v11379
      %v11381 = vrot.slane %v11379, 4
      %v11382 = vrot.slane %v10501, 5
      %v11383 = vsel %vm2140, %v11381, %v11382
      %s11384 = scalar_lea.vmem %s6, 512
      %v11385 = vld [vmem:[%s11384] sm:$0xf]
      %v11386 = vld [vmem:[%s11384 + $0x4] sm:$0xf]
      %v11387 = vld [vmem:[%s11384 + $0x8] sm:$0xf]
      %v11388 = vld [vmem:[%s11384 + $0xc] sm:$0xf]
      %v11389 = vld [vmem:[%s11384 + $0x10] sm:$0xf]
      %v11390 = vld [vmem:[%s11384 + $0x14] sm:$0xf]
      %v11391 = vld [vmem:[%s11384 + $0x18] sm:$0xf]
      %v11392 = vld [vmem:[%s11384 + $0x1c] sm:$0xf]
      %v11393 = vld [vmem:[%s11384 + $0x20] sm:$0xf]
      %v11394 = vld [vmem:[%s11384 + $0x24] sm:$0xf]
      %v11395 = vld [vmem:[%s11384 + $0x28] sm:$0xf]
      %v11396 = vld [vmem:[%s11384 + $0x2c] sm:$0xf]
      %v11397 = vld [vmem:[%s11384 + $0x30] sm:$0xf]
      %v11398 = vld [vmem:[%s11384 + $0x34] sm:$0xf]
      %v11399 = vld [vmem:[%s11384 + $0x38] sm:$0xf]
      %v11400 = vld [vmem:[%s11384 + $0x3c] sm:$0xf]
      %v11401 = vunpack.c.l.b16 %v11275
      %v11402 = vunpack.c.l.b16 %v11278
      %v11403 = vunpack.c.l.b16 %v11282
      %v11404 = vunpack.c.l.b16 %v11285
      %v11405 = vunpack.c.l.b16 %v11289
      %v11406 = vunpack.c.l.b16 %v11292
      %v11407 = vunpack.c.l.b16 %v11296
      %v11408 = vunpack.c.l.b16 %v11299
      %v11409 = vunpack.c.l.b16 %v11303
      %v11410 = vunpack.c.l.b16 %v11306
      %v11411 = vunpack.c.l.b16 %v11310
      %v11412 = vunpack.c.l.b16 %v11313
      %v11413 = vunpack.c.l.b16 %v11317
      %v11414 = vunpack.c.l.b16 %v11320
      %v11415 = vunpack.c.l.b16 %v11324
      %v11416 = vunpack.c.l.b16 %v11327
      %v11417 = vunpack.c.l.b16 %v11331
      %v11418 = vunpack.c.l.b16 %v11334
      %v11419 = vunpack.c.l.b16 %v11338
      %v11420 = vunpack.c.l.b16 %v11341
      %v11421 = vunpack.c.l.b16 %v11345
      %v11422 = vunpack.c.l.b16 %v11348
      %v11423 = vunpack.c.l.b16 %v11352
      %v11424 = vunpack.c.l.b16 %v11355
      %v11425 = vunpack.c.l.b16 %v11359
      %v11426 = vunpack.c.l.b16 %v11362
      %v11427 = vunpack.c.l.b16 %v11366
      %v11428 = vunpack.c.l.b16 %v11369
      %v11429 = vunpack.c.l.b16 %v11373
      %v11430 = vunpack.c.l.b16 %v11376
      %v11431 = vunpack.c.l.b16 %v11380
      %v11432 = vunpack.c.l.b16 %v11383
      %v11433 = vpack.c.b16 %v11402, %v11401
      %v11434 = vpack.c.b16 %v11404, %v11403
      %v11435 = vpack.c.b16 %v11406, %v11405
      %v11436 = vpack.c.b16 %v11408, %v11407
      %v11437 = vpack.c.b16 %v11410, %v11409
      %v11438 = vpack.c.b16 %v11412, %v11411
      %v11439 = vpack.c.b16 %v11414, %v11413
      %v11440 = vpack.c.b16 %v11416, %v11415
      %v11441 = vpack.c.b16 %v11418, %v11417
      %v11442 = vpack.c.b16 %v11420, %v11419
      %v11443 = vpack.c.b16 %v11422, %v11421
      %v11444 = vpack.c.b16 %v11424, %v11423
      %v11445 = vpack.c.b16 %v11426, %v11425
      %v11446 = vpack.c.b16 %v11428, %v11427
      %v11447 = vpack.c.b16 %v11430, %v11429
      %v11448 = vpack.c.b16 %v11432, %v11431
      %v11481 = vunpack.c.l.b16 %v11385
      %v11482 = vunpack.c.l.b16 %v11386
      %v11483 = vunpack.c.l.b16 %v11387
      %v11484 = vunpack.c.l.b16 %v11388
      %v11485 = vunpack.c.l.b16 %v11389
      %v11486 = vunpack.c.l.b16 %v11390
      %v11487 = vunpack.c.l.b16 %v11391
      %v11488 = vunpack.c.l.b16 %v11392
      %v11489 = vunpack.c.l.b16 %v11393
      %v11490 = vunpack.c.l.b16 %v11394
      %v11491 = vunpack.c.l.b16 %v11395
      %v11492 = vunpack.c.l.b16 %v11396
      %v11493 = vunpack.c.l.b16 %v11397
      %v11494 = vunpack.c.l.b16 %v11398
      %v11495 = vunpack.c.l.b16 %v11399
      %v11496 = vunpack.c.l.b16 %v11400
      %v11497 = vpack.c.b16 %v11482, %v11481
      %v11498 = vpack.c.b16 %v11484, %v11483
      %v11499 = vpack.c.b16 %v11486, %v11485
      %v11500 = vpack.c.b16 %v11488, %v11487
      %v11501 = vpack.c.b16 %v11490, %v11489
      %v11502 = vpack.c.b16 %v11492, %v11491
      %v11503 = vpack.c.b16 %v11494, %v11493
      %v11504 = vpack.c.b16 %v11496, %v11495
      %11513 = vmatprep.subr.bf16.mxu0 0
      %11514 = vmatpush1.bf16.msra.mxu0 %v11504
      %11515 = vmatprep.subr.bf16.mxu0 0
      %11516 = vmatpush1.bf16.msra.mxu0 %v11503
      %11517 = vmatprep.subr.bf16.mxu0 0
      %11518 = vmatpush1.bf16.msra.mxu0 %v11502
      %11519 = vmatprep.subr.bf16.mxu0 0
      %11520 = vmatpush1.bf16.msra.mxu0 %v11501
      %11521 = vmatprep.subr.bf16.mxu0 0
      %11522 = vmatpush1.bf16.msra.mxu0 %v11500
      %11523 = vmatprep.subr.bf16.mxu0 0
      %11524 = vmatpush1.bf16.msra.mxu0 %v11499
      %11525 = vmatprep.subr.bf16.mxu0 0
      %11526 = vmatpush1.bf16.msra.mxu0 %v11498
      %11527 = vmatprep.subr.bf16.mxu0 0
      %11528 = vmatpush1.bf16.msra.mxu0 %v11497
      %11529 = vmatprep.subr.bf16.mxu0 0
      %11530 = vmatpush2.bf16.msra.mxu0 0
      %11531 = vmatprep.subr.bf16.mxu0 0
      %11532 = vmatpush2.bf16.msra.mxu0 0
      %11533 = vmatprep.subr.bf16.mxu0 0
      %11534 = vmatpush2.bf16.msra.mxu0 0
      %11535 = vmatprep.subr.bf16.mxu0 0
      %11536 = vmatpush2.bf16.msra.mxu0 0
      %11537 = vmatprep.subr.bf16.mxu0 0
      %11538 = vmatpush2.bf16.msra.mxu0 0
      %11539 = vmatprep.subr.bf16.mxu0 0
      %11540 = vmatpush2.bf16.msra.mxu0 0
      %11541 = vmatprep.subr.bf16.mxu0 0
      %11542 = vmatpush2.bf16.msra.mxu0 0
      %11543 = vmatprep.subr.bf16.mxu0 0
      %11544 = vmatpush2.bf16.msra.mxu0 0
      %11545 = vmatprep.mubr.bf16.mxu0 0
      %11546 = vmatmul.mubr.bf16.gmra.mxu0 %v11433
      %v11547 = vpop.f32.mrf.mxu0
      %v11548 = vadd.f32 0.0, %v11547
      %v11549 = vpop.f32.mrf.mxu0
      %v11550 = vpop.f32.mrf.mxu0
      %v11551 = vadd.f32 0.0, %v11550
      %v11552 = vpop.f32.mrf.mxu0
      %11553 = vmatprep.mubr.bf16.mxu0 0
      %11554 = vmatmul.mubr.bf16.gmra.mxu0 %v11434
      %v11555 = vpop.f32.mrf.mxu0
      %v11556 = vadd.f32 0.0, %v11555
      %v11557 = vpop.f32.mrf.mxu0
      %v11558 = vpop.f32.mrf.mxu0
      %v11559 = vadd.f32 0.0, %v11558
      %v11560 = vpop.f32.mrf.mxu0
      %11561 = vmatprep.mubr.bf16.mxu0 0
      %11562 = vmatmul.mubr.bf16.gmra.mxu0 %v11435
      %v11563 = vpop.f32.mrf.mxu0
      %v11564 = vadd.f32 0.0, %v11563
      %v11565 = vpop.f32.mrf.mxu0
      %v11566 = vpop.f32.mrf.mxu0
      %v11567 = vadd.f32 0.0, %v11566
      %v11568 = vpop.f32.mrf.mxu0
      %11569 = vmatprep.mubr.bf16.mxu0 0
      %11570 = vmatmul.mubr.bf16.gmra.mxu0 %v11436
      %v11571 = vpop.f32.mrf.mxu0
      %v11572 = vadd.f32 0.0, %v11571
      %v11573 = vpop.f32.mrf.mxu0
      %v11574 = vpop.f32.mrf.mxu0
      %v11575 = vadd.f32 0.0, %v11574
      %v11576 = vpop.f32.mrf.mxu0
      %11577 = vmatprep.mubr.bf16.mxu0 0
      %11578 = vmatmul.mubr.bf16.gmra.mxu0 %v11437
      %v11579 = vpop.f32.mrf.mxu0
      %v11580 = vadd.f32 0.0, %v11579
      %v11581 = vpop.f32.mrf.mxu0
      %v11582 = vpop.f32.mrf.mxu0
      %v11583 = vadd.f32 0.0, %v11582
      %v11584 = vpop.f32.mrf.mxu0
      %11585 = vmatprep.mubr.bf16.mxu0 0
      %11586 = vmatmul.mubr.bf16.gmra.mxu0 %v11438
      %v11587 = vpop.f32.mrf.mxu0
      %v11588 = vadd.f32 0.0, %v11587
      %v11589 = vpop.f32.mrf.mxu0
      %v11590 = vpop.f32.mrf.mxu0
      %v11591 = vadd.f32 0.0, %v11590
      %v11592 = vpop.f32.mrf.mxu0
      %11593 = vmatprep.mubr.bf16.mxu0 0
      %11594 = vmatmul.mubr.bf16.gmra.mxu0 %v11439
      %v11595 = vpop.f32.mrf.mxu0
      %v11596 = vadd.f32 0.0, %v11595
      %v11597 = vpop.f32.mrf.mxu0
      %v11598 = vpop.f32.mrf.mxu0
      %v11599 = vadd.f32 0.0, %v11598
      %v11600 = vpop.f32.mrf.mxu0
      %11601 = vmatprep.mubr.bf16.mxu0 0
      %11602 = vmatmul.mubr.bf16.gmra.mxu0 %v11440
      %v11603 = vpop.f32.mrf.mxu0
      %v11604 = vadd.f32 0.0, %v11603
      %v11605 = vpop.f32.mrf.mxu0
      %v11606 = vpop.f32.mrf.mxu0
      %v11607 = vadd.f32 0.0, %v11606
      %v11608 = vpop.f32.mrf.mxu0
      %11609 = vmatprep.mubr.bf16.mxu0 0
      %11610 = vmatmul.mubr.bf16.gmra.mxu0 %v11441
      %v11611 = vpop.f32.mrf.mxu0
      %v11612 = vadd.f32 0.0, %v11611
      %v11613 = vpop.f32.mrf.mxu0
      %v11614 = vpop.f32.mrf.mxu0
      %v11615 = vadd.f32 0.0, %v11614
      %v11616 = vpop.f32.mrf.mxu0
      %11617 = vmatprep.mubr.bf16.mxu0 0
      %11618 = vmatmul.mubr.bf16.gmra.mxu0 %v11442
      %v11619 = vpop.f32.mrf.mxu0
      %v11620 = vadd.f32 0.0, %v11619
      %v11621 = vpop.f32.mrf.mxu0
      %v11622 = vpop.f32.mrf.mxu0
      %v11623 = vadd.f32 0.0, %v11622
      %v11624 = vpop.f32.mrf.mxu0
      %11625 = vmatprep.mubr.bf16.mxu0 0
      %11626 = vmatmul.mubr.bf16.gmra.mxu0 %v11443
      %v11627 = vpop.f32.mrf.mxu0
      %v11628 = vadd.f32 0.0, %v11627
      %v11629 = vpop.f32.mrf.mxu0
      %v11630 = vpop.f32.mrf.mxu0
      %v11631 = vadd.f32 0.0, %v11630
      %v11632 = vpop.f32.mrf.mxu0
      %11633 = vmatprep.mubr.bf16.mxu0 0
      %11634 = vmatmul.mubr.bf16.gmra.mxu0 %v11444
      %v11635 = vpop.f32.mrf.mxu0
      %v11636 = vadd.f32 0.0, %v11635
      %v11637 = vpop.f32.mrf.mxu0
      %v11638 = vpop.f32.mrf.mxu0
      %v11639 = vadd.f32 0.0, %v11638
      %v11640 = vpop.f32.mrf.mxu0
      %11641 = vmatprep.mubr.bf16.mxu0 0
      %11642 = vmatmul.mubr.bf16.gmra.mxu0 %v11445
      %v11643 = vpop.f32.mrf.mxu0
      %v11644 = vadd.f32 0.0, %v11643
      %v11645 = vpop.f32.mrf.mxu0
      %v11646 = vpop.f32.mrf.mxu0
      %v11647 = vadd.f32 0.0, %v11646
      %v11648 = vpop.f32.mrf.mxu0
      %11649 = vmatprep.mubr.bf16.mxu0 0
      %11650 = vmatmul.mubr.bf16.gmra.mxu0 %v11446
      %v11651 = vpop.f32.mrf.mxu0
      %v11652 = vadd.f32 0.0, %v11651
      %v11653 = vpop.f32.mrf.mxu0
      %v11654 = vpop.f32.mrf.mxu0
      %v11655 = vadd.f32 0.0, %v11654
      %v11656 = vpop.f32.mrf.mxu0
      %11657 = vmatprep.mubr.bf16.mxu0 0
      %11658 = vmatmul.mubr.bf16.gmra.mxu0 %v11447
      %v11659 = vpop.f32.mrf.mxu0
      %v11660 = vadd.f32 0.0, %v11659
      %v11661 = vpop.f32.mrf.mxu0
      %v11662 = vpop.f32.mrf.mxu0
      %v11663 = vadd.f32 0.0, %v11662
      %v11664 = vpop.f32.mrf.mxu0
      %11665 = vmatprep.mubr.bf16.mxu0 0
      %11666 = vmatmul.mubr.bf16.gmra.mxu0 %v11448
      %v11667 = vpop.f32.mrf.mxu0
      %v11668 = vadd.f32 0.0, %v11667
      %v11669 = vpop.f32.mrf.mxu0
      %v11670 = vpop.f32.mrf.mxu0
      %v11671 = vadd.f32 0.0, %v11670
      %v11672 = vpop.f32.mrf.mxu0
      %11673 = vdwg.mxu0
      %v11674 = vadd.f32 %v11176, %v11548
      %v11675 = vadd.f32 %v11177, %v11551
      %v11676 = vadd.f32 %v11178, %v11556
      %v11677 = vadd.f32 %v11179, %v11559
      %v11678 = vadd.f32 %v11180, %v11564
      %v11679 = vadd.f32 %v11181, %v11567
      %v11680 = vadd.f32 %v11182, %v11572
      %v11681 = vadd.f32 %v11183, %v11575
      %v11682 = vadd.f32 %v11184, %v11580
      %v11683 = vadd.f32 %v11185, %v11583
      %v11684 = vadd.f32 %v11186, %v11588
      %v11685 = vadd.f32 %v11187, %v11591
      %v11686 = vadd.f32 %v11188, %v11596
      %v11687 = vadd.f32 %v11189, %v11599
      %v11688 = vadd.f32 %v11190, %v11604
      %v11689 = vadd.f32 %v11191, %v11607
      %v11690 = vadd.f32 %v11192, %v11612
      %v11691 = vadd.f32 %v11193, %v11615
      %v11692 = vadd.f32 %v11194, %v11620
      %v11693 = vadd.f32 %v11195, %v11623
      %v11694 = vadd.f32 %v11196, %v11628
      %v11695 = vadd.f32 %v11197, %v11631
      %v11696 = vadd.f32 %v11198, %v11636
      %v11697 = vadd.f32 %v11199, %v11639
      %v11698 = vadd.f32 %v11200, %v11644
      %v11699 = vadd.f32 %v11201, %v11647
      %v11700 = vadd.f32 %v11202, %v11652
      %v11701 = vadd.f32 %v11203, %v11655
      %v11702 = vadd.f32 %v11204, %v11660
      %v11703 = vadd.f32 %v11205, %v11663
      %v11704 = vadd.f32 %v11206, %v11668
      %v11705 = vadd.f32 %v11207, %v11671
      %v11706 = vld [vmem:[%s7] sm:$0x1]
      %v11708 = vlaneseq
      %v11709 = vshrl.u32 %v11708, 7
      %v11710 = vsub.s32 0, %v11709
      %v11711 = vrot.slane %v11706, %v11710
      %v11713 = vadd.f32 %v11674, %v11711
      %v11714 = vadd.f32 %v11675, %v11711
      %v11715 = vadd.f32 %v11676, %v11711
      %v11716 = vadd.f32 %v11677, %v11711
      %v11717 = vadd.f32 %v11678, %v11711
      %v11718 = vadd.f32 %v11679, %v11711
      %v11719 = vadd.f32 %v11680, %v11711
      %v11720 = vadd.f32 %v11681, %v11711
      %v11721 = vadd.f32 %v11682, %v11711
      %v11722 = vadd.f32 %v11683, %v11711
      %v11723 = vadd.f32 %v11684, %v11711
      %v11724 = vadd.f32 %v11685, %v11711
      %v11725 = vadd.f32 %v11686, %v11711
      %v11726 = vadd.f32 %v11687, %v11711
      %v11727 = vadd.f32 %v11688, %v11711
      %v11728 = vadd.f32 %v11689, %v11711
      %v11729 = vadd.f32 %v11690, %v11711
      %v11730 = vadd.f32 %v11691, %v11711
      %v11731 = vadd.f32 %v11692, %v11711
      %v11732 = vadd.f32 %v11693, %v11711
      %v11733 = vadd.f32 %v11694, %v11711
      %v11734 = vadd.f32 %v11695, %v11711
      %v11735 = vadd.f32 %v11696, %v11711
      %v11736 = vadd.f32 %v11697, %v11711
      %v11737 = vadd.f32 %v11698, %v11711
      %v11738 = vadd.f32 %v11699, %v11711
      %v11739 = vadd.f32 %v11700, %v11711
      %v11740 = vadd.f32 %v11701, %v11711
      %v11741 = vadd.f32 %v11702, %v11711
      %v11742 = vadd.f32 %v11703, %v11711
      %v11743 = vadd.f32 %v11704, %v11711
      %v11744 = vadd.f32 %v11705, %v11711
      %v11745 = vld [vmem:[%s8] sm:$0x1]
      %v11746 = vld [vmem:[%s9] sm:$0x1]
      %v11747 = vld [vmem:[%s10] sm:$0xff]
      %v11748 = vld [vmem:[%s10 + $0x8] sm:$0xff]
      %v11749 = vld [vmem:[%s10 + $0x10] sm:$0xff]
      %v11750 = vld [vmem:[%s10 + $0x18] sm:$0xff]
      %v11751 = vsel %vm1579, %v11713, 0.0
      %v11752 = vsel %vm1579, %v11714, 0.0
      %v11753 = vadd.f32 %v11751, %v11752
      %v11754 = vsel %vm1579, %v11715, 0.0
      %v11755 = vadd.f32 %v11753, %v11754
      %v11756 = vsel %vm1579, %v11716, 0.0
      %v11757 = vadd.f32 %v11755, %v11756
      %v11758 = vsel %vm1579, %v11717, 0.0
      %v11759 = vadd.f32 %v11757, %v11758
      %v11760 = vsel %vm1579, %v11718, 0.0
      %v11761 = vadd.f32 %v11759, %v11760
      %v11762 = vsel %vm1579, %v11719, 0.0
      %v11763 = vadd.f32 %v11761, %v11762
      %v11764 = vsel %vm1579, %v11720, 0.0
      %v11765 = vadd.f32 %v11763, %v11764
      %v11766 = vsel %vm1579, %v11721, 0.0
      %v11767 = vadd.f32 %v11765, %v11766
      %v11768 = vsel %vm1579, %v11722, 0.0
      %v11769 = vadd.f32 %v11767, %v11768
      %v11770 = vsel %vm1579, %v11723, 0.0
      %v11771 = vadd.f32 %v11769, %v11770
      %v11772 = vsel %vm1579, %v11724, 0.0
      %v11773 = vadd.f32 %v11771, %v11772
      %v11774 = vsel %vm1579, %v11725, 0.0
      %v11775 = vadd.f32 %v11773, %v11774
      %v11776 = vsel %vm1579, %v11726, 0.0
      %v11777 = vadd.f32 %v11775, %v11776
      %v11778 = vsel %vm1579, %v11727, 0.0
      %v11779 = vadd.f32 %v11777, %v11778
      %v11780 = vsel %vm1579, %v11728, 0.0
      %v11781 = vadd.f32 %v11779, %v11780
      %v11782 = vsel %vm1579, %v11729, 0.0
      %v11783 = vadd.f32 %v11781, %v11782
      %v11784 = vsel %vm1579, %v11730, 0.0
      %v11785 = vadd.f32 %v11783, %v11784
      %v11786 = vsel %vm1579, %v11731, 0.0
      %v11787 = vadd.f32 %v11785, %v11786
      %v11788 = vsel %vm1579, %v11732, 0.0
      %v11789 = vadd.f32 %v11787, %v11788
      %v11790 = vsel %vm1579, %v11733, 0.0
      %v11791 = vadd.f32 %v11789, %v11790
      %v11792 = vsel %vm1579, %v11734, 0.0
      %v11793 = vadd.f32 %v11791, %v11792
      %v11794 = vsel %vm1579, %v11735, 0.0
      %v11795 = vadd.f32 %v11793, %v11794
      %v11796 = vsel %vm1579, %v11736, 0.0
      %v11797 = vadd.f32 %v11795, %v11796
      %v11798 = vsel %vm1579, %v11737, 0.0
      %v11799 = vadd.f32 %v11797, %v11798
      %v11800 = vsel %vm1579, %v11738, 0.0
      %v11801 = vadd.f32 %v11799, %v11800
      %v11802 = vsel %vm1579, %v11739, 0.0
      %v11803 = vadd.f32 %v11801, %v11802
      %v11804 = vsel %vm1579, %v11740, 0.0
      %v11805 = vadd.f32 %v11803, %v11804
      %v11806 = vsel %vm1579, %v11741, 0.0
      %v11807 = vadd.f32 %v11805, %v11806
      %v11808 = vsel %vm1579, %v11742, 0.0
      %v11809 = vadd.f32 %v11807, %v11808
      %v11810 = vsel %vm1579, %v11743, 0.0
      %v11811 = vadd.f32 %v11809, %v11810
      %v11812 = vsel %vm1579, %v11744, 0.0
      %v11813 = vadd.f32 %v11811, %v11812
      %v11814 = vrot.slane %v11813, 4
      %v11815 = vadd.f32 %v11813, %v11814
      %v11816 = vrot.slane %v11815, 2
      %v11817 = vadd.f32 %v11815, %v11816
      %v11818 = vrot.slane %v11817, 1
      %v11819 = vadd.f32 %v11817, %v11818
      %v11820 = vmul.f32 %v11713, %v11713
      %v11821 = vmul.f32 %v11714, %v11714
      %v11822 = vmul.f32 %v11715, %v11715
      %v11823 = vmul.f32 %v11716, %v11716
      %v11824 = vmul.f32 %v11717, %v11717
      %v11825 = vmul.f32 %v11718, %v11718
      %v11826 = vmul.f32 %v11719, %v11719
      %v11827 = vmul.f32 %v11720, %v11720
      %v11828 = vmul.f32 %v11721, %v11721
      %v11829 = vmul.f32 %v11722, %v11722
      %v11830 = vmul.f32 %v11723, %v11723
      %v11831 = vmul.f32 %v11724, %v11724
      %v11832 = vmul.f32 %v11725, %v11725
      %v11833 = vmul.f32 %v11726, %v11726
      %v11834 = vmul.f32 %v11727, %v11727
      %v11835 = vmul.f32 %v11728, %v11728
      %v11836 = vmul.f32 %v11729, %v11729
      %v11837 = vmul.f32 %v11730, %v11730
      %v11838 = vmul.f32 %v11731, %v11731
      %v11839 = vmul.f32 %v11732, %v11732
      %v11840 = vmul.f32 %v11733, %v11733
      %v11841 = vmul.f32 %v11734, %v11734
      %v11842 = vmul.f32 %v11735, %v11735
      %v11843 = vmul.f32 %v11736, %v11736
      %v11844 = vmul.f32 %v11737, %v11737
      %v11845 = vmul.f32 %v11738, %v11738
      %v11846 = vmul.f32 %v11739, %v11739
      %v11847 = vmul.f32 %v11740, %v11740
      %v11848 = vmul.f32 %v11741, %v11741
      %v11849 = vmul.f32 %v11742, %v11742
      %v11850 = vmul.f32 %v11743, %v11743
      %v11851 = vmul.f32 %v11744, %v11744
      %v11852 = vsel %vm1579, %v11820, 0.0
      %v11853 = vsel %vm1579, %v11821, 0.0
      %v11854 = vadd.f32 %v11852, %v11853
      %v11855 = vsel %vm1579, %v11822, 0.0
      %v11856 = vadd.f32 %v11854, %v11855
      %v11857 = vsel %vm1579, %v11823, 0.0
      %v11858 = vadd.f32 %v11856, %v11857
      %v11859 = vsel %vm1579, %v11824, 0.0
      %v11860 = vadd.f32 %v11858, %v11859
      %v11861 = vsel %vm1579, %v11825, 0.0
      %v11862 = vadd.f32 %v11860, %v11861
      %v11863 = vsel %vm1579, %v11826, 0.0
      %v11864 = vadd.f32 %v11862, %v11863
      %v11865 = vsel %vm1579, %v11827, 0.0
      %v11866 = vadd.f32 %v11864, %v11865
      %v11867 = vsel %vm1579, %v11828, 0.0
      %v11868 = vadd.f32 %v11866, %v11867
      %v11869 = vsel %vm1579, %v11829, 0.0
      %v11870 = vadd.f32 %v11868, %v11869
      %v11871 = vsel %vm1579, %v11830, 0.0
      %v11872 = vadd.f32 %v11870, %v11871
      %v11873 = vsel %vm1579, %v11831, 0.0
      %v11874 = vadd.f32 %v11872, %v11873
      %v11875 = vsel %vm1579, %v11832, 0.0
      %v11876 = vadd.f32 %v11874, %v11875
      %v11877 = vsel %vm1579, %v11833, 0.0
      %v11878 = vadd.f32 %v11876, %v11877
      %v11879 = vsel %vm1579, %v11834, 0.0
      %v11880 = vadd.f32 %v11878, %v11879
      %v11881 = vsel %vm1579, %v11835, 0.0
      %v11882 = vadd.f32 %v11880, %v11881
      %v11883 = vsel %vm1579, %v11836, 0.0
      %v11884 = vadd.f32 %v11882, %v11883
      %v11885 = vsel %vm1579, %v11837, 0.0
      %v11886 = vadd.f32 %v11884, %v11885
      %v11887 = vsel %vm1579, %v11838, 0.0
      %v11888 = vadd.f32 %v11886, %v11887
      %v11889 = vsel %vm1579, %v11839, 0.0
      %v11890 = vadd.f32 %v11888, %v11889
      %v11891 = vsel %vm1579, %v11840, 0.0
      %v11892 = vadd.f32 %v11890, %v11891
      %v11893 = vsel %vm1579, %v11841, 0.0
      %v11894 = vadd.f32 %v11892, %v11893
      %v11895 = vsel %vm1579, %v11842, 0.0
      %v11896 = vadd.f32 %v11894, %v11895
      %v11897 = vsel %vm1579, %v11843, 0.0
      %v11898 = vadd.f32 %v11896, %v11897
      %v11899 = vsel %vm1579, %v11844, 0.0
      %v11900 = vadd.f32 %v11898, %v11899
      %v11901 = vsel %vm1579, %v11845, 0.0
      %v11902 = vadd.f32 %v11900, %v11901
      %v11903 = vsel %vm1579, %v11846, 0.0
      %v11904 = vadd.f32 %v11902, %v11903
      %v11905 = vsel %vm1579, %v11847, 0.0
      %v11906 = vadd.f32 %v11904, %v11905
      %v11907 = vsel %vm1579, %v11848, 0.0
      %v11908 = vadd.f32 %v11906, %v11907
      %v11909 = vsel %vm1579, %v11849, 0.0
      %v11910 = vadd.f32 %v11908, %v11909
      %v11911 = vsel %vm1579, %v11850, 0.0
      %v11912 = vadd.f32 %v11910, %v11911
      %v11913 = vsel %vm1579, %v11851, 0.0
      %v11914 = vadd.f32 %v11912, %v11913
      %v11915 = vrot.slane %v11914, 4
      %v11916 = vadd.f32 %v11914, %v11915
      %v11917 = vrot.slane %v11916, 2
      %v11918 = vadd.f32 %v11916, %v11917
      %v11919 = vrot.slane %v11918, 1
      %v11920 = vadd.f32 %v11918, %v11919
      %v11922 = vsel %vm1579, %v11819, 0
      %11924 = vmatprep.subr.mxu0 0.0
      %11925 = vmatpush1.msra.mxu0 0.0
      %11926 = vmatprep.subr.mxu0 0.0
      %11927 = vmatpush1.msra.mxu0 0.0
      %11928 = vmatprep.subr.mxu0 0.0
      %11929 = vmatpush1.msra.mxu0 0.0
      %11930 = vmatprep.subr.mxu0 0.0
      %11931 = vmatpush1.msra.mxu0 0.0
      %11932 = vmatprep.subr.mxu0 0.0
      %11933 = vmatpush1.msra.mxu0 0.0
      %11934 = vmatprep.subr.mxu0 0.0
      %11935 = vmatpush1.msra.mxu0 0.0
      %11936 = vmatprep.subr.mxu0 0.0
      %11937 = vmatpush1.msra.mxu0 0.0
      %11938 = vmatprep.subr.mxu0 0.0
      %11939 = vmatpush1.msra.mxu0 0.0
      %11940 = vmatprep.subr.mxu0 0.0
      %11941 = vmatpush1.msra.mxu0 0.0
      %11942 = vmatprep.subr.mxu0 0.0
      %11943 = vmatpush1.msra.mxu0 0.0
      %11944 = vmatprep.subr.mxu0 0.0
      %11945 = vmatpush1.msra.mxu0 0.0
      %11946 = vmatprep.subr.mxu0 0.0
      %11947 = vmatpush1.msra.mxu0 0.0
      %11948 = vmatprep.subr.mxu0 0.0
      %11949 = vmatpush1.msra.mxu0 %v11750
      %11950 = vmatprep.subr.mxu0 0.0
      %11951 = vmatpush1.msra.mxu0 %v11749
      %11952 = vmatprep.subr.mxu0 0.0
      %11953 = vmatpush1.msra.mxu0 %v11748
      %11954 = vmatprep.subr.mxu0 0.0
      %11955 = vmatpush1.msra.mxu0 %v11747
      %11956 = vmatprep.subr.mxu0 0.0
      %11957 = vmatpush2.msra.mxu0 0.0
      %11958 = vmatprep.subr.mxu0 0.0
      %11959 = vmatpush2.msra.mxu0 0.0
      %11960 = vmatprep.subr.mxu0 0.0
      %11961 = vmatpush2.msra.mxu0 0.0
      %11962 = vmatprep.subr.mxu0 0.0
      %11963 = vmatpush2.msra.mxu0 0.0
      %11964 = vmatprep.subr.mxu0 0.0
      %11965 = vmatpush2.msra.mxu0 0.0
      %11966 = vmatprep.subr.mxu0 0.0
      %11967 = vmatpush2.msra.mxu0 0.0
      %11968 = vmatprep.subr.mxu0 0.0
      %11969 = vmatpush2.msra.mxu0 0.0
      %11970 = vmatprep.subr.mxu0 0.0
      %11971 = vmatpush2.msra.mxu0 0.0
      %11972 = vmatprep.subr.mxu0 0.0
      %11973 = vmatpush2.msra.mxu0 0.0
      %11974 = vmatprep.subr.mxu0 0.0
      %11975 = vmatpush2.msra.mxu0 0.0
      %11976 = vmatprep.subr.mxu0 0.0
      %11977 = vmatpush2.msra.mxu0 0.0
      %11978 = vmatprep.subr.mxu0 0.0
      %11979 = vmatpush2.msra.mxu0 0.0
      %11980 = vmatprep.subr.mxu0 0.0
      %11981 = vmatpush2.msra.mxu0 0.0
      %11982 = vmatprep.subr.mxu0 0.0
      %11983 = vmatpush2.msra.mxu0 0.0
      %11984 = vmatprep.subr.mxu0 0.0
      %11985 = vmatpush2.msra.mxu0 0.0
      %11986 = vmatprep.subr.mxu0 0.0
      %11987 = vmatpush2.msra.mxu0 0.0
      %11988 = vmatprep.mubr.f32.mxu0 0.0
      %11989 = vmatmul.mubr.f32.gmra.mxu0 %v11922
      %v11990 = vpop.f32.mrf.mxu0
      %v11991 = vadd.f32 0.0, %v11990
      %v11992 = vpop.f32.mrf.mxu0
      %11993 = vdwg.mxu0
      %v11995 = vsel %vm1579, %v11920, 0
      %11997 = vmatprep.subr.mxu0 0.0
      %11998 = vmatpush1.msra.mxu0 0.0
      %11999 = vmatprep.subr.mxu0 0.0
      %12000 = vmatpush1.msra.mxu0 0.0
      %12001 = vmatprep.subr.mxu0 0.0
      %12002 = vmatpush1.msra.mxu0 0.0
      %12003 = vmatprep.subr.mxu0 0.0
      %12004 = vmatpush1.msra.mxu0 0.0
      %12005 = vmatprep.subr.mxu0 0.0
      %12006 = vmatpush1.msra.mxu0 0.0
      %12007 = vmatprep.subr.mxu0 0.0
      %12008 = vmatpush1.msra.mxu0 0.0
      %12009 = vmatprep.subr.mxu0 0.0
      %12010 = vmatpush1.msra.mxu0 0.0
      %12011 = vmatprep.subr.mxu0 0.0
      %12012 = vmatpush1.msra.mxu0 0.0
      %12013 = vmatprep.subr.mxu0 0.0
      %12014 = vmatpush1.msra.mxu0 0.0
      %12015 = vmatprep.subr.mxu0 0.0
      %12016 = vmatpush1.msra.mxu0 0.0
      %12017 = vmatprep.subr.mxu0 0.0
      %12018 = vmatpush1.msra.mxu0 0.0
      %12019 = vmatprep.subr.mxu0 0.0
      %12020 = vmatpush1.msra.mxu0 0.0
      %12021 = vmatprep.subr.mxu0 0.0
      %12022 = vmatpush1.msra.mxu0 %v11750
      %12023 = vmatprep.subr.mxu0 0.0
      %12024 = vmatpush1.msra.mxu0 %v11749
      %12025 = vmatprep.subr.mxu0 0.0
      %12026 = vmatpush1.msra.mxu0 %v11748
      %12027 = vmatprep.subr.mxu0 0.0
      %12028 = vmatpush1.msra.mxu0 %v11747
      %12029 = vmatprep.subr.mxu0 0.0
      %12030 = vmatpush2.msra.mxu0 0.0
      %12031 = vmatprep.subr.mxu0 0.0
      %12032 = vmatpush2.msra.mxu0 0.0
      %12033 = vmatprep.subr.mxu0 0.0
      %12034 = vmatpush2.msra.mxu0 0.0
      %12035 = vmatprep.subr.mxu0 0.0
      %12036 = vmatpush2.msra.mxu0 0.0
      %12037 = vmatprep.subr.mxu0 0.0
      %12038 = vmatpush2.msra.mxu0 0.0
      %12039 = vmatprep.subr.mxu0 0.0
      %12040 = vmatpush2.msra.mxu0 0.0
      %12041 = vmatprep.subr.mxu0 0.0
      %12042 = vmatpush2.msra.mxu0 0.0
      %12043 = vmatprep.subr.mxu0 0.0
      %12044 = vmatpush2.msra.mxu0 0.0
      %12045 = vmatprep.subr.mxu0 0.0
      %12046 = vmatpush2.msra.mxu0 0.0
      %12047 = vmatprep.subr.mxu0 0.0
      %12048 = vmatpush2.msra.mxu0 0.0
      %12049 = vmatprep.subr.mxu0 0.0
      %12050 = vmatpush2.msra.mxu0 0.0
      %12051 = vmatprep.subr.mxu0 0.0
      %12052 = vmatpush2.msra.mxu0 0.0
      %12053 = vmatprep.subr.mxu0 0.0
      %12054 = vmatpush2.msra.mxu0 0.0
      %12055 = vmatprep.subr.mxu0 0.0
      %12056 = vmatpush2.msra.mxu0 0.0
      %12057 = vmatprep.subr.mxu0 0.0
      %12058 = vmatpush2.msra.mxu0 0.0
      %12059 = vmatprep.subr.mxu0 0.0
      %12060 = vmatpush2.msra.mxu0 0.0
      %12061 = vmatprep.mubr.f32.mxu0 0.0
      %12062 = vmatmul.mubr.f32.gmra.mxu0 %v11995
      %v12063 = vpop.f32.mrf.mxu0
      %v12064 = vadd.f32 0.0, %v12063
      %v12065 = vpop.f32.mrf.mxu0
      %12066 = vdwg.mxu0
      %v12067 = vmul.f32 %v11991, %v11991
      %v12068 = vsub.f32 %v12064, %v12067
      %v12069 = vmax.f32 %v12068, 0.0
      %v12070 = vadd.f32 %v12069, 1e-05
      %v12071 = vrsqrt.pop %v12070
      %v12072 = vlaneseq
      %v12073 = vshrl.u32 %v12072, 7
      %v12074 = vsub.s32 0, %v12073
      %v12075 = vrot.slane %v11991, %v12074
      %v12076 = vsub.f32 %v11713, %v12075
      %v12077 = vsub.f32 %v11714, %v12075
      %v12078 = vsub.f32 %v11715, %v12075
      %v12079 = vsub.f32 %v11716, %v12075
      %v12080 = vsub.f32 %v11717, %v12075
      %v12081 = vsub.f32 %v11718, %v12075
      %v12082 = vsub.f32 %v11719, %v12075
      %v12083 = vsub.f32 %v11720, %v12075
      %v12084 = vsub.f32 %v11721, %v12075
      %v12085 = vsub.f32 %v11722, %v12075
      %v12086 = vsub.f32 %v11723, %v12075
      %v12087 = vsub.f32 %v11724, %v12075
      %v12088 = vsub.f32 %v11725, %v12075
      %v12089 = vsub.f32 %v11726, %v12075
      %v12090 = vsub.f32 %v11727, %v12075
      %v12091 = vsub.f32 %v11728, %v12075
      %v12092 = vsub.f32 %v11729, %v12075
      %v12093 = vsub.f32 %v11730, %v12075
      %v12094 = vsub.f32 %v11731, %v12075
      %v12095 = vsub.f32 %v11732, %v12075
      %v12096 = vsub.f32 %v11733, %v12075
      %v12097 = vsub.f32 %v11734, %v12075
      %v12098 = vsub.f32 %v11735, %v12075
      %v12099 = vsub.f32 %v11736, %v12075
      %v12100 = vsub.f32 %v11737, %v12075
      %v12101 = vsub.f32 %v11738, %v12075
      %v12102 = vsub.f32 %v11739, %v12075
      %v12103 = vsub.f32 %v11740, %v12075
      %v12104 = vsub.f32 %v11741, %v12075
      %v12105 = vsub.f32 %v11742, %v12075
      %v12106 = vsub.f32 %v11743, %v12075
      %v12107 = vsub.f32 %v11744, %v12075
      %v12108 = vmul.f32 %v12071, %v11745
      %v12109 = vlaneseq
      %v12110 = vshrl.u32 %v12109, 7
      %v12111 = vsub.s32 0, %v12110
      %v12112 = vrot.slane %v12108, %v12111
      %v12113 = vmul.f32 %v12076, %v12112
      %v12114 = vmul.f32 %v12077, %v12112
      %v12115 = vmul.f32 %v12078, %v12112
      %v12116 = vmul.f32 %v12079, %v12112
      %v12117 = vmul.f32 %v12080, %v12112
      %v12118 = vmul.f32 %v12081, %v12112
      %v12119 = vmul.f32 %v12082, %v12112
      %v12120 = vmul.f32 %v12083, %v12112
      %v12121 = vmul.f32 %v12084, %v12112
      %v12122 = vmul.f32 %v12085, %v12112
      %v12123 = vmul.f32 %v12086, %v12112
      %v12124 = vmul.f32 %v12087, %v12112
      %v12125 = vmul.f32 %v12088, %v12112
      %v12126 = vmul.f32 %v12089, %v12112
      %v12127 = vmul.f32 %v12090, %v12112
      %v12128 = vmul.f32 %v12091, %v12112
      %v12129 = vmul.f32 %v12092, %v12112
      %v12130 = vmul.f32 %v12093, %v12112
      %v12131 = vmul.f32 %v12094, %v12112
      %v12132 = vmul.f32 %v12095, %v12112
      %v12133 = vmul.f32 %v12096, %v12112
      %v12134 = vmul.f32 %v12097, %v12112
      %v12135 = vmul.f32 %v12098, %v12112
      %v12136 = vmul.f32 %v12099, %v12112
      %v12137 = vmul.f32 %v12100, %v12112
      %v12138 = vmul.f32 %v12101, %v12112
      %v12139 = vmul.f32 %v12102, %v12112
      %v12140 = vmul.f32 %v12103, %v12112
      %v12141 = vmul.f32 %v12104, %v12112
      %v12142 = vmul.f32 %v12105, %v12112
      %v12143 = vmul.f32 %v12106, %v12112
      %v12144 = vmul.f32 %v12107, %v12112
      %v12146 = vlaneseq
      %v12147 = vshrl.u32 %v12146, 7
      %v12148 = vsub.s32 0, %v12147
      %v12149 = vrot.slane %v11746, %v12148
      %v12151 = vadd.f32 %v12113, %v12149
      %v12152 = vadd.f32 %v12114, %v12149
      %v12153 = vadd.f32 %v12115, %v12149
      %v12154 = vadd.f32 %v12116, %v12149
      %v12155 = vadd.f32 %v12117, %v12149
      %v12156 = vadd.f32 %v12118, %v12149
      %v12157 = vadd.f32 %v12119, %v12149
      %v12158 = vadd.f32 %v12120, %v12149
      %v12159 = vadd.f32 %v12121, %v12149
      %v12160 = vadd.f32 %v12122, %v12149
      %v12161 = vadd.f32 %v12123, %v12149
      %v12162 = vadd.f32 %v12124, %v12149
      %v12163 = vadd.f32 %v12125, %v12149
      %v12164 = vadd.f32 %v12126, %v12149
      %v12165 = vadd.f32 %v12127, %v12149
      %v12166 = vadd.f32 %v12128, %v12149
      %v12167 = vadd.f32 %v12129, %v12149
      %v12168 = vadd.f32 %v12130, %v12149
      %v12169 = vadd.f32 %v12131, %v12149
      %v12170 = vadd.f32 %v12132, %v12149
      %v12171 = vadd.f32 %v12133, %v12149
      %v12172 = vadd.f32 %v12134, %v12149
      %v12173 = vadd.f32 %v12135, %v12149
      %v12174 = vadd.f32 %v12136, %v12149
      %v12175 = vadd.f32 %v12137, %v12149
      %v12176 = vadd.f32 %v12138, %v12149
      %v12177 = vadd.f32 %v12139, %v12149
      %v12178 = vadd.f32 %v12140, %v12149
      %v12179 = vadd.f32 %v12141, %v12149
      %v12180 = vadd.f32 %v12142, %v12149
      %v12181 = vadd.f32 %v12143, %v12149
      %v12182 = vadd.f32 %v12144, %v12149
      %vm12183 = vcmp.ge.f32.partialorder %v12151, 0.0
      %vm12184 = vcmp.ge.f32.partialorder %v12152, 0.0
      %vm12185 = vcmp.ge.f32.partialorder %v12153, 0.0
      %vm12186 = vcmp.ge.f32.partialorder %v12154, 0.0
      %vm12187 = vcmp.ge.f32.partialorder %v12155, 0.0
      %vm12188 = vcmp.ge.f32.partialorder %v12156, 0.0
      %vm12189 = vcmp.ge.f32.partialorder %v12157, 0.0
      %vm12190 = vcmp.ge.f32.partialorder %v12158, 0.0
      %vm12191 = vcmp.ge.f32.partialorder %v12159, 0.0
      %vm12192 = vcmp.ge.f32.partialorder %v12160, 0.0
      %vm12193 = vcmp.ge.f32.partialorder %v12161, 0.0
      %vm12194 = vcmp.ge.f32.partialorder %v12162, 0.0
      %vm12195 = vcmp.ge.f32.partialorder %v12163, 0.0
      %vm12196 = vcmp.ge.f32.partialorder %v12164, 0.0
      %vm12197 = vcmp.ge.f32.partialorder %v12165, 0.0
      %vm12198 = vcmp.ge.f32.partialorder %v12166, 0.0
      %vm12199 = vcmp.ge.f32.partialorder %v12167, 0.0
      %vm12200 = vcmp.ge.f32.partialorder %v12168, 0.0
      %vm12201 = vcmp.ge.f32.partialorder %v12169, 0.0
      %vm12202 = vcmp.ge.f32.partialorder %v12170, 0.0
      %vm12203 = vcmp.ge.f32.partialorder %v12171, 0.0
      %vm12204 = vcmp.ge.f32.partialorder %v12172, 0.0
      %vm12205 = vcmp.ge.f32.partialorder %v12173, 0.0
      %vm12206 = vcmp.ge.f32.partialorder %v12174, 0.0
      %vm12207 = vcmp.ge.f32.partialorder %v12175, 0.0
      %vm12208 = vcmp.ge.f32.partialorder %v12176, 0.0
      %vm12209 = vcmp.ge.f32.partialorder %v12177, 0.0
      %vm12210 = vcmp.ge.f32.partialorder %v12178, 0.0
      %vm12211 = vcmp.ge.f32.partialorder %v12179, 0.0
      %vm12212 = vcmp.ge.f32.partialorder %v12180, 0.0
      %vm12213 = vcmp.ge.f32.partialorder %v12181, 0.0
      %vm12214 = vcmp.ge.f32.partialorder %v12182, 0.0
      %v12215 = vmul.f32 %v12151, 0.2
      %v12216 = vmul.f32 %v12152, 0.2
      %v12217 = vmul.f32 %v12153, 0.2
      %v12218 = vmul.f32 %v12154, 0.2
      %v12219 = vmul.f32 %v12155, 0.2
      %v12220 = vmul.f32 %v12156, 0.2
      %v12221 = vmul.f32 %v12157, 0.2
      %v12222 = vmul.f32 %v12158, 0.2
      %v12223 = vmul.f32 %v12159, 0.2
      %v12224 = vmul.f32 %v12160, 0.2
      %v12225 = vmul.f32 %v12161, 0.2
      %v12226 = vmul.f32 %v12162, 0.2
      %v12227 = vmul.f32 %v12163, 0.2
      %v12228 = vmul.f32 %v12164, 0.2
      %v12229 = vmul.f32 %v12165, 0.2
      %v12230 = vmul.f32 %v12166, 0.2
      %v12231 = vmul.f32 %v12167, 0.2
      %v12232 = vmul.f32 %v12168, 0.2
      %v12233 = vmul.f32 %v12169, 0.2
      %v12234 = vmul.f32 %v12170, 0.2
      %v12235 = vmul.f32 %v12171, 0.2
      %v12236 = vmul.f32 %v12172, 0.2
      %v12237 = vmul.f32 %v12173, 0.2
      %v12238 = vmul.f32 %v12174, 0.2
      %v12239 = vmul.f32 %v12175, 0.2
      %v12240 = vmul.f32 %v12176, 0.2
      %v12241 = vmul.f32 %v12177, 0.2
      %v12242 = vmul.f32 %v12178, 0.2
      %v12243 = vmul.f32 %v12179, 0.2
      %v12244 = vmul.f32 %v12180, 0.2
      %v12245 = vmul.f32 %v12181, 0.2
      %v12246 = vmul.f32 %v12182, 0.2
      %v12247 = vsel %vm12183, %v12151, %v12215
      %v12248 = vsel %vm12184, %v12152, %v12216
      %v12249 = vsel %vm12185, %v12153, %v12217
      %v12250 = vsel %vm12186, %v12154, %v12218
      %v12251 = vsel %vm12187, %v12155, %v12219
      %v12252 = vsel %vm12188, %v12156, %v12220
      %v12253 = vsel %vm12189, %v12157, %v12221
      %v12254 = vsel %vm12190, %v12158, %v12222
      %v12255 = vsel %vm12191, %v12159, %v12223
      %v12256 = vsel %vm12192, %v12160, %v12224
      %v12257 = vsel %vm12193, %v12161, %v12225
      %v12258 = vsel %vm12194, %v12162, %v12226
      %v12259 = vsel %vm12195, %v12163, %v12227
      %v12260 = vsel %vm12196, %v12164, %v12228
      %v12261 = vsel %vm12197, %v12165, %v12229
      %v12262 = vsel %vm12198, %v12166, %v12230
      %v12263 = vsel %vm12199, %v12167, %v12231
      %v12264 = vsel %vm12200, %v12168, %v12232
      %v12265 = vsel %vm12201, %v12169, %v12233
      %v12266 = vsel %vm12202, %v12170, %v12234
      %v12267 = vsel %vm12203, %v12171, %v12235
      %v12268 = vsel %vm12204, %v12172, %v12236
      %v12269 = vsel %vm12205, %v12173, %v12237
      %v12270 = vsel %vm12206, %v12174, %v12238
      %v12271 = vsel %vm12207, %v12175, %v12239
      %v12272 = vsel %vm12208, %v12176, %v12240
      %v12273 = vsel %vm12209, %v12177, %v12241
      %v12274 = vsel %vm12210, %v12178, %v12242
      %v12275 = vsel %vm12211, %v12179, %v12243
      %v12276 = vsel %vm12212, %v12180, %v12244
      %v12277 = vsel %vm12213, %v12181, %v12245
      %v12278 = vsel %vm12214, %v12182, %v12246
      %12311 = vrot.lane.b32.xlu0 %v12247, 32
      %v12312 = vpop.permute.xlu0 %12311
      %12313 = vrot.lane.b32.xlu0 %v12248, 32
      %v12314 = vpop.permute.xlu0 %12313
      %12315 = vrot.lane.b32.xlu0 %v12249, 32
      %v12316 = vpop.permute.xlu0 %12315
      %12317 = vrot.lane.b32.xlu0 %v12250, 32
      %v12318 = vpop.permute.xlu0 %12317
      %12319 = vrot.lane.b32.xlu0 %v12251, 32
      %v12320 = vpop.permute.xlu0 %12319
      %12321 = vrot.lane.b32.xlu0 %v12252, 32
      %v12322 = vpop.permute.xlu0 %12321
      %12323 = vrot.lane.b32.xlu0 %v12253, 32
      %v12324 = vpop.permute.xlu0 %12323
      %12325 = vrot.lane.b32.xlu0 %v12254, 32
      %v12326 = vpop.permute.xlu0 %12325
      %12327 = vrot.lane.b32.xlu0 %v12255, 32
      %v12328 = vpop.permute.xlu0 %12327
      %12329 = vrot.lane.b32.xlu0 %v12256, 32
      %v12330 = vpop.permute.xlu0 %12329
      %12331 = vrot.lane.b32.xlu0 %v12257, 32
      %v12332 = vpop.permute.xlu0 %12331
      %12333 = vrot.lane.b32.xlu0 %v12258, 32
      %v12334 = vpop.permute.xlu0 %12333
      %12335 = vrot.lane.b32.xlu0 %v12259, 32
      %v12336 = vpop.permute.xlu0 %12335
      %12337 = vrot.lane.b32.xlu0 %v12260, 32
      %v12338 = vpop.permute.xlu0 %12337
      %12339 = vrot.lane.b32.xlu0 %v12261, 32
      %v12340 = vpop.permute.xlu0 %12339
      %12341 = vrot.lane.b32.xlu0 %v12262, 32
      %v12342 = vpop.permute.xlu0 %12341
      %12343 = vrot.lane.b32.xlu0 %v12263, 32
      %v12344 = vpop.permute.xlu0 %12343
      %12345 = vrot.lane.b32.xlu0 %v12264, 32
      %v12346 = vpop.permute.xlu0 %12345
      %12347 = vrot.lane.b32.xlu0 %v12265, 32
      %v12348 = vpop.permute.xlu0 %12347
      %12349 = vrot.lane.b32.xlu0 %v12266, 32
      %v12350 = vpop.permute.xlu0 %12349
      %12351 = vrot.lane.b32.xlu0 %v12267, 32
      %v12352 = vpop.permute.xlu0 %12351
      %12353 = vrot.lane.b32.xlu0 %v12268, 32
      %v12354 = vpop.permute.xlu0 %12353
      %12355 = vrot.lane.b32.xlu0 %v12269, 32
      %v12356 = vpop.permute.xlu0 %12355
      %12357 = vrot.lane.b32.xlu0 %v12270, 32
      %v12358 = vpop.permute.xlu0 %12357
      %12359 = vrot.lane.b32.xlu0 %v12271, 32
      %v12360 = vpop.permute.xlu0 %12359
      %12361 = vrot.lane.b32.xlu0 %v12272, 32
      %v12362 = vpop.permute.xlu0 %12361
      %12363 = vrot.lane.b32.xlu0 %v12273, 32
      %v12364 = vpop.permute.xlu0 %12363
      %12365 = vrot.lane.b32.xlu0 %v12274, 32
      %v12366 = vpop.permute.xlu0 %12365
      %12367 = vrot.lane.b32.xlu0 %v12275, 32
      %v12368 = vpop.permute.xlu0 %12367
      %12369 = vrot.lane.b32.xlu0 %v12276, 32
      %v12370 = vpop.permute.xlu0 %12369
      %12371 = vrot.lane.b32.xlu0 %v12277, 32
      %v12372 = vpop.permute.xlu0 %12371
      %12373 = vrot.lane.b32.xlu0 %v12278, 32
      %v12374 = vpop.permute.xlu0 %12373
      %v12407 = vsel %vm1579, %v510, %v12312
      %v12408 = vsel %vm1579, %v511, %v12314
      %v12409 = vsel %vm1579, %v512, %v12316
      %v12410 = vsel %vm1579, %v513, %v12318
      %v12411 = vsel %vm1579, %v514, %v12320
      %v12412 = vsel %vm1579, %v515, %v12322
      %v12413 = vsel %vm1579, %v516, %v12324
      %v12414 = vsel %vm1579, %v517, %v12326
      %v12415 = vsel %vm1579, %v518, %v12328
      %v12416 = vsel %vm1579, %v519, %v12330
      %v12417 = vsel %vm1579, %v520, %v12332
      %v12418 = vsel %vm1579, %v521, %v12334
      %v12419 = vsel %vm1579, %v522, %v12336
      %v12420 = vsel %vm1579, %v523, %v12338
      %v12421 = vsel %vm1579, %v524, %v12340
      %v12422 = vsel %vm1579, %v525, %v12342
      %v12423 = vsel %vm1579, %v526, %v12344
      %v12424 = vsel %vm1579, %v527, %v12346
      %v12425 = vsel %vm1579, %v528, %v12348
      %v12426 = vsel %vm1579, %v529, %v12350
      %v12427 = vsel %vm1579, %v530, %v12352
      %v12428 = vsel %vm1579, %v531, %v12354
      %v12429 = vsel %vm1579, %v532, %v12356
      %v12430 = vsel %vm1579, %v533, %v12358
      %v12431 = vsel %vm1579, %v534, %v12360
      %v12432 = vsel %vm1579, %v535, %v12362
      %v12433 = vsel %vm1579, %v536, %v12364
      %v12434 = vsel %vm1579, %v537, %v12366
      %v12435 = vsel %vm1579, %v538, %v12368
      %v12436 = vsel %vm1579, %v539, %v12370
      %v12437 = vsel %vm1579, %v540, %v12372
      %v12438 = vsel %vm1579, %v541, %v12374
      %v12439 = vcombine.low %v12407, %v12411
      %v12440 = vcombine.high %v12407, %v12411
      %v12442 = vunpack.c.l.s4 1983009808
      %v12443 = vunpack.c.0.s8 %v12442
      %v12444 = vlaneseq
      %v12445 = vshrl.u32 %v12444, 7
      %v12446 = vsub.s32 %v12443, %v12445
      %v12447 = vrot.slane %v12439, %v12446
      %v12449 = vunpack.c.l.s4 1983009808
      %v12450 = vunpack.c.0.s8 %v12449
      %v12451 = vlaneseq
      %v12452 = vshrl.u32 %v12451, 7
      %v12453 = vsub.s32 %v12450, %v12452
      %v12454 = vrot.slane %v12440, %v12453
      %v12455 = vcombine.low %v12409, %v12413
      %v12456 = vcombine.high %v12409, %v12413
      %v12458 = vunpack.c.l.s4 1983009808
      %v12459 = vunpack.c.0.s8 %v12458
      %v12460 = vlaneseq
      %v12461 = vshrl.u32 %v12460, 7
      %v12462 = vsub.s32 %v12459, %v12461
      %v12463 = vrot.slane %v12455, %v12462
      %v12465 = vunpack.c.l.s4 1983009808
      %v12466 = vunpack.c.0.s8 %v12465
      %v12467 = vlaneseq
      %v12468 = vshrl.u32 %v12467, 7
      %v12469 = vsub.s32 %v12466, %v12468
      %v12470 = vrot.slane %v12456, %v12469
      %v12471 = vcombine.low %v12415, %v12419
      %v12472 = vcombine.high %v12415, %v12419
      %v12474 = vunpack.c.l.s4 1983009808
      %v12475 = vunpack.c.0.s8 %v12474
      %v12476 = vlaneseq
      %v12477 = vshrl.u32 %v12476, 7
      %v12478 = vsub.s32 %v12475, %v12477
      %v12479 = vrot.slane %v12471, %v12478
      %v12481 = vunpack.c.l.s4 1983009808
      %v12482 = vunpack.c.0.s8 %v12481
      %v12483 = vlaneseq
      %v12484 = vshrl.u32 %v12483, 7
      %v12485 = vsub.s32 %v12482, %v12484
      %v12486 = vrot.slane %v12472, %v12485
      %v12487 = vcombine.low %v12417, %v12421
      %v12488 = vcombine.high %v12417, %v12421
      %v12490 = vunpack.c.l.s4 1983009808
      %v12491 = vunpack.c.0.s8 %v12490
      %v12492 = vlaneseq
      %v12493 = vshrl.u32 %v12492, 7
      %v12494 = vsub.s32 %v12491, %v12493
      %v12495 = vrot.slane %v12487, %v12494
      %v12497 = vunpack.c.l.s4 1983009808
      %v12498 = vunpack.c.0.s8 %v12497
      %v12499 = vlaneseq
      %v12500 = vshrl.u32 %v12499, 7
      %v12501 = vsub.s32 %v12498, %v12500
      %v12502 = vrot.slane %v12488, %v12501
      %v12503 = vcombine.low %v12447, %v12463
      %v12504 = vcombine.high %v12447, %v12463
      %v12506 = vunpack.c.l.s4 1934713408
      %v12507 = vunpack.c.0.s8 %v12506
      %v12508 = vlaneseq
      %v12509 = vshrl.u32 %v12508, 7
      %v12510 = vsub.s32 %v12507, %v12509
      %v12511 = vrot.slane %v12503, %v12510
      %v12513 = vunpack.c.l.s4 1934713408
      %v12514 = vunpack.c.0.s8 %v12513
      %v12515 = vlaneseq
      %v12516 = vshrl.u32 %v12515, 7
      %v12517 = vsub.s32 %v12514, %v12516
      %v12518 = vrot.slane %v12504, %v12517
      %v12519 = vcombine.low %v12454, %v12470
      %v12520 = vcombine.high %v12454, %v12470
      %v12522 = vunpack.c.l.s4 1934713408
      %v12523 = vunpack.c.0.s8 %v12522
      %v12524 = vlaneseq
      %v12525 = vshrl.u32 %v12524, 7
      %v12526 = vsub.s32 %v12523, %v12525
      %v12527 = vrot.slane %v12519, %v12526
      %v12529 = vunpack.c.l.s4 1934713408
      %v12530 = vunpack.c.0.s8 %v12529
      %v12531 = vlaneseq
      %v12532 = vshrl.u32 %v12531, 7
      %v12533 = vsub.s32 %v12530, %v12532
      %v12534 = vrot.slane %v12520, %v12533
      %v12535 = vcombine.low %v12479, %v12495
      %v12536 = vcombine.high %v12479, %v12495
      %v12538 = vunpack.c.l.s4 1934713408
      %v12539 = vunpack.c.0.s8 %v12538
      %v12540 = vlaneseq
      %v12541 = vshrl.u32 %v12540, 7
      %v12542 = vsub.s32 %v12539, %v12541
      %v12543 = vrot.slane %v12535, %v12542
      %v12545 = vunpack.c.l.s4 1934713408
      %v12546 = vunpack.c.0.s8 %v12545
      %v12547 = vlaneseq
      %v12548 = vshrl.u32 %v12547, 7
      %v12549 = vsub.s32 %v12546, %v12548
      %v12550 = vrot.slane %v12536, %v12549
      %v12551 = vcombine.low %v12486, %v12502
      %v12552 = vcombine.high %v12486, %v12502
      %v12554 = vunpack.c.l.s4 1934713408
      %v12555 = vunpack.c.0.s8 %v12554
      %v12556 = vlaneseq
      %v12557 = vshrl.u32 %v12556, 7
      %v12558 = vsub.s32 %v12555, %v12557
      %v12559 = vrot.slane %v12551, %v12558
      %v12561 = vunpack.c.l.s4 1934713408
      %v12562 = vunpack.c.0.s8 %v12561
      %v12563 = vlaneseq
      %v12564 = vshrl.u32 %v12563, 7
      %v12565 = vsub.s32 %v12562, %v12564
      %v12566 = vrot.slane %v12552, %v12565
      %v12567 = vcombine.low %v12511, %v12543
      %v12568 = vcombine.high %v12511, %v12543
      %v12569 = vcombine.low %v12518, %v12550
      %v12570 = vcombine.high %v12518, %v12550
      %v12571 = vcombine.low %v12527, %v12559
      %v12572 = vcombine.high %v12527, %v12559
      %v12573 = vcombine.low %v12534, %v12566
      %v12574 = vcombine.high %v12534, %v12566
      %v12575 = vcombine.low %v12423, %v12427
      %v12576 = vcombine.high %v12423, %v12427
      %v12578 = vunpack.c.l.s4 1983009808
      %v12579 = vunpack.c.0.s8 %v12578
      %v12580 = vlaneseq
      %v12581 = vshrl.u32 %v12580, 7
      %v12582 = vsub.s32 %v12579, %v12581
      %v12583 = vrot.slane %v12575, %v12582
      %v12585 = vunpack.c.l.s4 1983009808
      %v12586 = vunpack.c.0.s8 %v12585
      %v12587 = vlaneseq
      %v12588 = vshrl.u32 %v12587, 7
      %v12589 = vsub.s32 %v12586, %v12588
      %v12590 = vrot.slane %v12576, %v12589
      %v12591 = vcombine.low %v12425, %v12429
      %v12592 = vcombine.high %v12425, %v12429
      %v12594 = vunpack.c.l.s4 1983009808
      %v12595 = vunpack.c.0.s8 %v12594
      %v12596 = vlaneseq
      %v12597 = vshrl.u32 %v12596, 7
      %v12598 = vsub.s32 %v12595, %v12597
      %v12599 = vrot.slane %v12591, %v12598
      %v12601 = vunpack.c.l.s4 1983009808
      %v12602 = vunpack.c.0.s8 %v12601
      %v12603 = vlaneseq
      %v12604 = vshrl.u32 %v12603, 7
      %v12605 = vsub.s32 %v12602, %v12604
      %v12606 = vrot.slane %v12592, %v12605
      %v12607 = vcombine.low %v12431, %v12435
      %v12608 = vcombine.high %v12431, %v12435
      %v12610 = vunpack.c.l.s4 1983009808
      %v12611 = vunpack.c.0.s8 %v12610
      %v12612 = vlaneseq
      %v12613 = vshrl.u32 %v12612, 7
      %v12614 = vsub.s32 %v12611, %v12613
      %v12615 = vrot.slane %v12607, %v12614
      %v12617 = vunpack.c.l.s4 1983009808
      %v12618 = vunpack.c.0.s8 %v12617
      %v12619 = vlaneseq
      %v12620 = vshrl.u32 %v12619, 7
      %v12621 = vsub.s32 %v12618, %v12620
      %v12622 = vrot.slane %v12608, %v12621
      %v12623 = vcombine.low %v12433, %v12437
      %v12624 = vcombine.high %v12433, %v12437
      %v12626 = vunpack.c.l.s4 1983009808
      %v12627 = vunpack.c.0.s8 %v12626
      %v12628 = vlaneseq
      %v12629 = vshrl.u32 %v12628, 7
      %v12630 = vsub.s32 %v12627, %v12629
      %v12631 = vrot.slane %v12623, %v12630
      %v12633 = vunpack.c.l.s4 1983009808
      %v12634 = vunpack.c.0.s8 %v12633
      %v12635 = vlaneseq
      %v12636 = vshrl.u32 %v12635, 7
      %v12637 = vsub.s32 %v12634, %v12636
      %v12638 = vrot.slane %v12624, %v12637
      %v12639 = vcombine.low %v12583, %v12599
      %v12640 = vcombine.high %v12583, %v12599
      %v12642 = vunpack.c.l.s4 1934713408
      %v12643 = vunpack.c.0.s8 %v12642
      %v12644 = vlaneseq
      %v12645 = vshrl.u32 %v12644, 7
      %v12646 = vsub.s32 %v12643, %v12645
      %v12647 = vrot.slane %v12639, %v12646
      %v12649 = vunpack.c.l.s4 1934713408
      %v12650 = vunpack.c.0.s8 %v12649
      %v12651 = vlaneseq
      %v12652 = vshrl.u32 %v12651, 7
      %v12653 = vsub.s32 %v12650, %v12652
      %v12654 = vrot.slane %v12640, %v12653
      %v12655 = vcombine.low %v12590, %v12606
      %v12656 = vcombine.high %v12590, %v12606
      %v12658 = vunpack.c.l.s4 1934713408
      %v12659 = vunpack.c.0.s8 %v12658
      %v12660 = vlaneseq
      %v12661 = vshrl.u32 %v12660, 7
      %v12662 = vsub.s32 %v12659, %v12661
      %v12663 = vrot.slane %v12655, %v12662
      %v12665 = vunpack.c.l.s4 1934713408
      %v12666 = vunpack.c.0.s8 %v12665
      %v12667 = vlaneseq
      %v12668 = vshrl.u32 %v12667, 7
      %v12669 = vsub.s32 %v12666, %v12668
      %v12670 = vrot.slane %v12656, %v12669
      %v12671 = vcombine.low %v12615, %v12631
      %v12672 = vcombine.high %v12615, %v12631
      %v12674 = vunpack.c.l.s4 1934713408
      %v12675 = vunpack.c.0.s8 %v12674
      %v12676 = vlaneseq
      %v12677 = vshrl.u32 %v12676, 7
      %v12678 = vsub.s32 %v12675, %v12677
      %v12679 = vrot.slane %v12671, %v12678
      %v12681 = vunpack.c.l.s4 1934713408
      %v12682 = vunpack.c.0.s8 %v12681
      %v12683 = vlaneseq
      %v12684 = vshrl.u32 %v12683, 7
      %v12685 = vsub.s32 %v12682, %v12684
      %v12686 = vrot.slane %v12672, %v12685
      %v12687 = vcombine.low %v12622, %v12638
      %v12688 = vcombine.high %v12622, %v12638
      %v12690 = vunpack.c.l.s4 1934713408
      %v12691 = vunpack.c.0.s8 %v12690
      %v12692 = vlaneseq
      %v12693 = vshrl.u32 %v12692, 7
      %v12694 = vsub.s32 %v12691, %v12693
      %v12695 = vrot.slane %v12687, %v12694
      %v12697 = vunpack.c.l.s4 1934713408
      %v12698 = vunpack.c.0.s8 %v12697
      %v12699 = vlaneseq
      %v12700 = vshrl.u32 %v12699, 7
      %v12701 = vsub.s32 %v12698, %v12700
      %v12702 = vrot.slane %v12688, %v12701
      %v12703 = vcombine.low %v12647, %v12679
      %v12704 = vcombine.high %v12647, %v12679
      %v12705 = vcombine.low %v12654, %v12686
      %v12706 = vcombine.high %v12654, %v12686
      %v12707 = vcombine.low %v12663, %v12695
      %v12708 = vcombine.high %v12663, %v12695
      %v12709 = vcombine.low %v12670, %v12702
      %v12710 = vcombine.high %v12670, %v12702
      %v12711 = vcombine.low %v12408, %v12412
      %v12712 = vcombine.high %v12408, %v12412
      %v12714 = vunpack.c.l.s4 1983009808
      %v12715 = vunpack.c.0.s8 %v12714
      %v12716 = vlaneseq
      %v12717 = vshrl.u32 %v12716, 7
      %v12718 = vsub.s32 %v12715, %v12717
      %v12719 = vrot.slane %v12711, %v12718
      %v12721 = vunpack.c.l.s4 1983009808
      %v12722 = vunpack.c.0.s8 %v12721
      %v12723 = vlaneseq
      %v12724 = vshrl.u32 %v12723, 7
      %v12725 = vsub.s32 %v12722, %v12724
      %v12726 = vrot.slane %v12712, %v12725
      %v12727 = vcombine.low %v12410, %v12414
      %v12728 = vcombine.high %v12410, %v12414
      %v12730 = vunpack.c.l.s4 1983009808
      %v12731 = vunpack.c.0.s8 %v12730
      %v12732 = vlaneseq
      %v12733 = vshrl.u32 %v12732, 7
      %v12734 = vsub.s32 %v12731, %v12733
      %v12735 = vrot.slane %v12727, %v12734
      %v12737 = vunpack.c.l.s4 1983009808
      %v12738 = vunpack.c.0.s8 %v12737
      %v12739 = vlaneseq
      %v12740 = vshrl.u32 %v12739, 7
      %v12741 = vsub.s32 %v12738, %v12740
      %v12742 = vrot.slane %v12728, %v12741
      %v12743 = vcombine.low %v12416, %v12420
      %v12744 = vcombine.high %v12416, %v12420
      %v12746 = vunpack.c.l.s4 1983009808
      %v12747 = vunpack.c.0.s8 %v12746
      %v12748 = vlaneseq
      %v12749 = vshrl.u32 %v12748, 7
      %v12750 = vsub.s32 %v12747, %v12749
      %v12751 = vrot.slane %v12743, %v12750
      %v12753 = vunpack.c.l.s4 1983009808
      %v12754 = vunpack.c.0.s8 %v12753
      %v12755 = vlaneseq
      %v12756 = vshrl.u32 %v12755, 7
      %v12757 = vsub.s32 %v12754, %v12756
      %v12758 = vrot.slane %v12744, %v12757
      %v12759 = vcombine.low %v12418, %v12422
      %v12760 = vcombine.high %v12418, %v12422
      %v12762 = vunpack.c.l.s4 1983009808
      %v12763 = vunpack.c.0.s8 %v12762
      %v12764 = vlaneseq
      %v12765 = vshrl.u32 %v12764, 7
      %v12766 = vsub.s32 %v12763, %v12765
      %v12767 = vrot.slane %v12759, %v12766
      %v12769 = vunpack.c.l.s4 1983009808
      %v12770 = vunpack.c.0.s8 %v12769
      %v12771 = vlaneseq
      %v12772 = vshrl.u32 %v12771, 7
      %v12773 = vsub.s32 %v12770, %v12772
      %v12774 = vrot.slane %v12760, %v12773
      %v12775 = vcombine.low %v12719, %v12735
      %v12776 = vcombine.high %v12719, %v12735
      %v12778 = vunpack.c.l.s4 1934713408
      %v12779 = vunpack.c.0.s8 %v12778
      %v12780 = vlaneseq
      %v12781 = vshrl.u32 %v12780, 7
      %v12782 = vsub.s32 %v12779, %v12781
      %v12783 = vrot.slane %v12775, %v12782
      %v12785 = vunpack.c.l.s4 1934713408
      %v12786 = vunpack.c.0.s8 %v12785
      %v12787 = vlaneseq
      %v12788 = vshrl.u32 %v12787, 7
      %v12789 = vsub.s32 %v12786, %v12788
      %v12790 = vrot.slane %v12776, %v12789
      %v12791 = vcombine.low %v12726, %v12742
      %v12792 = vcombine.high %v12726, %v12742
      %v12794 = vunpack.c.l.s4 1934713408
      %v12795 = vunpack.c.0.s8 %v12794
      %v12796 = vlaneseq
      %v12797 = vshrl.u32 %v12796, 7
      %v12798 = vsub.s32 %v12795, %v12797
      %v12799 = vrot.slane %v12791, %v12798
      %v12801 = vunpack.c.l.s4 1934713408
      %v12802 = vunpack.c.0.s8 %v12801
      %v12803 = vlaneseq
      %v12804 = vshrl.u32 %v12803, 7
      %v12805 = vsub.s32 %v12802, %v12804
      %v12806 = vrot.slane %v12792, %v12805
      %v12807 = vcombine.low %v12751, %v12767
      %v12808 = vcombine.high %v12751, %v12767
      %v12810 = vunpack.c.l.s4 1934713408
      %v12811 = vunpack.c.0.s8 %v12810
      %v12812 = vlaneseq
      %v12813 = vshrl.u32 %v12812, 7
      %v12814 = vsub.s32 %v12811, %v12813
      %v12815 = vrot.slane %v12807, %v12814
      %v12817 = vunpack.c.l.s4 1934713408
      %v12818 = vunpack.c.0.s8 %v12817
      %v12819 = vlaneseq
      %v12820 = vshrl.u32 %v12819, 7
      %v12821 = vsub.s32 %v12818, %v12820
      %v12822 = vrot.slane %v12808, %v12821
      %v12823 = vcombine.low %v12758, %v12774
      %v12824 = vcombine.high %v12758, %v12774
      %v12826 = vunpack.c.l.s4 1934713408
      %v12827 = vunpack.c.0.s8 %v12826
      %v12828 = vlaneseq
      %v12829 = vshrl.u32 %v12828, 7
      %v12830 = vsub.s32 %v12827, %v12829
      %v12831 = vrot.slane %v12823, %v12830
      %v12833 = vunpack.c.l.s4 1934713408
      %v12834 = vunpack.c.0.s8 %v12833
      %v12835 = vlaneseq
      %v12836 = vshrl.u32 %v12835, 7
      %v12837 = vsub.s32 %v12834, %v12836
      %v12838 = vrot.slane %v12824, %v12837
      %v12839 = vcombine.low %v12783, %v12815
      %v12840 = vcombine.high %v12783, %v12815
      %v12841 = vcombine.low %v12790, %v12822
      %v12842 = vcombine.high %v12790, %v12822
      %v12843 = vcombine.low %v12799, %v12831
      %v12844 = vcombine.high %v12799, %v12831
      %v12845 = vcombine.low %v12806, %v12838
      %v12846 = vcombine.high %v12806, %v12838
      %v12847 = vcombine.low %v12424, %v12428
      %v12848 = vcombine.high %v12424, %v12428
      %v12850 = vunpack.c.l.s4 1983009808
      %v12851 = vunpack.c.0.s8 %v12850
      %v12852 = vlaneseq
      %v12853 = vshrl.u32 %v12852, 7
      %v12854 = vsub.s32 %v12851, %v12853
      %v12855 = vrot.slane %v12847, %v12854
      %v12857 = vunpack.c.l.s4 1983009808
      %v12858 = vunpack.c.0.s8 %v12857
      %v12859 = vlaneseq
      %v12860 = vshrl.u32 %v12859, 7
      %v12861 = vsub.s32 %v12858, %v12860
      %v12862 = vrot.slane %v12848, %v12861
      %v12863 = vcombine.low %v12426, %v12430
      %v12864 = vcombine.high %v12426, %v12430
      %v12866 = vunpack.c.l.s4 1983009808
      %v12867 = vunpack.c.0.s8 %v12866
      %v12868 = vlaneseq
      %v12869 = vshrl.u32 %v12868, 7
      %v12870 = vsub.s32 %v12867, %v12869
      %v12871 = vrot.slane %v12863, %v12870
      %v12873 = vunpack.c.l.s4 1983009808
      %v12874 = vunpack.c.0.s8 %v12873
      %v12875 = vlaneseq
      %v12876 = vshrl.u32 %v12875, 7
      %v12877 = vsub.s32 %v12874, %v12876
      %v12878 = vrot.slane %v12864, %v12877
      %v12879 = vcombine.low %v12432, %v12436
      %v12880 = vcombine.high %v12432, %v12436
      %v12882 = vunpack.c.l.s4 1983009808
      %v12883 = vunpack.c.0.s8 %v12882
      %v12884 = vlaneseq
      %v12885 = vshrl.u32 %v12884, 7
      %v12886 = vsub.s32 %v12883, %v12885
      %v12887 = vrot.slane %v12879, %v12886
      %v12889 = vunpack.c.l.s4 1983009808
      %v12890 = vunpack.c.0.s8 %v12889
      %v12891 = vlaneseq
      %v12892 = vshrl.u32 %v12891, 7
      %v12893 = vsub.s32 %v12890, %v12892
      %v12894 = vrot.slane %v12880, %v12893
      %v12895 = vcombine.low %v12434, %v12438
      %v12896 = vcombine.high %v12434, %v12438
      %v12898 = vunpack.c.l.s4 1983009808
      %v12899 = vunpack.c.0.s8 %v12898
      %v12900 = vlaneseq
      %v12901 = vshrl.u32 %v12900, 7
      %v12902 = vsub.s32 %v12899, %v12901
      %v12903 = vrot.slane %v12895, %v12902
      %v12905 = vunpack.c.l.s4 1983009808
      %v12906 = vunpack.c.0.s8 %v12905
      %v12907 = vlaneseq
      %v12908 = vshrl.u32 %v12907, 7
      %v12909 = vsub.s32 %v12906, %v12908
      %v12910 = vrot.slane %v12896, %v12909
      %v12911 = vcombine.low %v12855, %v12871
      %v12912 = vcombine.high %v12855, %v12871
      %v12914 = vunpack.c.l.s4 1934713408
      %v12915 = vunpack.c.0.s8 %v12914
      %v12916 = vlaneseq
      %v12917 = vshrl.u32 %v12916, 7
      %v12918 = vsub.s32 %v12915, %v12917
      %v12919 = vrot.slane %v12911, %v12918
      %v12921 = vunpack.c.l.s4 1934713408
      %v12922 = vunpack.c.0.s8 %v12921
      %v12923 = vlaneseq
      %v12924 = vshrl.u32 %v12923, 7
      %v12925 = vsub.s32 %v12922, %v12924
      %v12926 = vrot.slane %v12912, %v12925
      %v12927 = vcombine.low %v12862, %v12878
      %v12928 = vcombine.high %v12862, %v12878
      %v12930 = vunpack.c.l.s4 1934713408
      %v12931 = vunpack.c.0.s8 %v12930
      %v12932 = vlaneseq
      %v12933 = vshrl.u32 %v12932, 7
      %v12934 = vsub.s32 %v12931, %v12933
      %v12935 = vrot.slane %v12927, %v12934
      %v12937 = vunpack.c.l.s4 1934713408
      %v12938 = vunpack.c.0.s8 %v12937
      %v12939 = vlaneseq
      %v12940 = vshrl.u32 %v12939, 7
      %v12941 = vsub.s32 %v12938, %v12940
      %v12942 = vrot.slane %v12928, %v12941
      %v12943 = vcombine.low %v12887, %v12903
      %v12944 = vcombine.high %v12887, %v12903
      %v12946 = vunpack.c.l.s4 1934713408
      %v12947 = vunpack.c.0.s8 %v12946
      %v12948 = vlaneseq
      %v12949 = vshrl.u32 %v12948, 7
      %v12950 = vsub.s32 %v12947, %v12949
      %v12951 = vrot.slane %v12943, %v12950
      %v12953 = vunpack.c.l.s4 1934713408
      %v12954 = vunpack.c.0.s8 %v12953
      %v12955 = vlaneseq
      %v12956 = vshrl.u32 %v12955, 7
      %v12957 = vsub.s32 %v12954, %v12956
      %v12958 = vrot.slane %v12944, %v12957
      %v12959 = vcombine.low %v12894, %v12910
      %v12960 = vcombine.high %v12894, %v12910
      %v12962 = vunpack.c.l.s4 1934713408
      %v12963 = vunpack.c.0.s8 %v12962
      %v12964 = vlaneseq
      %v12965 = vshrl.u32 %v12964, 7
      %v12966 = vsub.s32 %v12963, %v12965
      %v12967 = vrot.slane %v12959, %v12966
      %v12969 = vunpack.c.l.s4 1934713408
      %v12970 = vunpack.c.0.s8 %v12969
      %v12971 = vlaneseq
      %v12972 = vshrl.u32 %v12971, 7
      %v12973 = vsub.s32 %v12970, %v12972
      %v12974 = vrot.slane %v12960, %v12973
      %v12975 = vcombine.low %v12919, %v12951
      %v12976 = vcombine.high %v12919, %v12951
      %v12977 = vcombine.low %v12926, %v12958
      %v12978 = vcombine.high %v12926, %v12958
      %v12979 = vcombine.low %v12935, %v12967
      %v12980 = vcombine.high %v12935, %v12967
      %v12981 = vcombine.low %v12942, %v12974
      %v12982 = vcombine.high %v12942, %v12974
      %12985 = vrot.lane.b32.xlu0 %v12568, 64
      %v12986 = vpop.permute.xlu0 %12985
      %12987 = vrot.lane.b32.xlu0 %v12704, 64
      %v12988 = vpop.permute.xlu0 %12987
      %12993 = vrot.lane.b32.xlu0 %v12570, 64
      %v12994 = vpop.permute.xlu0 %12993
      %12995 = vrot.lane.b32.xlu0 %v12706, 64
      %v12996 = vpop.permute.xlu0 %12995
      %13001 = vrot.lane.b32.xlu0 %v12572, 64
      %v13002 = vpop.permute.xlu0 %13001
      %13003 = vrot.lane.b32.xlu0 %v12708, 64
      %v13004 = vpop.permute.xlu0 %13003
      %13009 = vrot.lane.b32.xlu0 %v12574, 64
      %v13010 = vpop.permute.xlu0 %13009
      %13011 = vrot.lane.b32.xlu0 %v12710, 64
      %v13012 = vpop.permute.xlu0 %13011
      %13017 = vrot.lane.b32.xlu0 %v12840, 64
      %v13018 = vpop.permute.xlu0 %13017
      %13019 = vrot.lane.b32.xlu0 %v12976, 64
      %v13020 = vpop.permute.xlu0 %13019
      %13025 = vrot.lane.b32.xlu0 %v12842, 64
      %v13026 = vpop.permute.xlu0 %13025
      %13027 = vrot.lane.b32.xlu0 %v12978, 64
      %v13028 = vpop.permute.xlu0 %13027
      %13033 = vrot.lane.b32.xlu0 %v12844, 64
      %v13034 = vpop.permute.xlu0 %13033
      %13035 = vrot.lane.b32.xlu0 %v12980, 64
      %v13036 = vpop.permute.xlu0 %13035
      %13041 = vrot.lane.b32.xlu0 %v12846, 64
      %v13042 = vpop.permute.xlu0 %13041
      %13043 = vrot.lane.b32.xlu0 %v12982, 64
      %v13044 = vpop.permute.xlu0 %13043
      %vm13047 = vcmask 523264
      %v13048 = vsel %vm13047, %v12567, %v12986
      %v13049 = vsel %vm13047, %v12703, %v12988
      %v13050 = vsel %vm13047, %v12569, %v12994
      %v13051 = vsel %vm13047, %v12705, %v12996
      %v13052 = vsel %vm13047, %v12571, %v13002
      %v13053 = vsel %vm13047, %v12707, %v13004
      %v13054 = vsel %vm13047, %v12573, %v13010
      %v13055 = vsel %vm13047, %v12709, %v13012
      %v13056 = vsel %vm13047, %v12839, %v13018
      %v13057 = vsel %vm13047, %v12975, %v13020
      %v13058 = vsel %vm13047, %v12841, %v13026
      %v13059 = vsel %vm13047, %v12977, %v13028
      %v13060 = vsel %vm13047, %v12843, %v13034
      %v13061 = vsel %vm13047, %v12979, %v13036
      %v13062 = vsel %vm13047, %v12845, %v13042
      %v13063 = vsel %vm13047, %v12981, %v13044
      %13064 = vst [vmem:[%s386] sm:$0xff] %v13048
      %13065 = vst [vmem:[%s386 + $0x8] sm:$0xff] %v13050
      %13066 = vst [vmem:[%s386 + $0x10] sm:$0xff] %v13052
      %13067 = vst [vmem:[%s386 + $0x18] sm:$0xff] %v13054
      %13068 = vst [vmem:[%s386 + $0x20] sm:$0xff] %v13056
      %13069 = vst [vmem:[%s386 + $0x28] sm:$0xff] %v13058
      %13070 = vst [vmem:[%s386 + $0x30] sm:$0xff] %v13060
      %13071 = vst [vmem:[%s386 + $0x38] sm:$0xff] %v13062
      %13072 = vst [vmem:[%s386 + $0x40] sm:$0xff] %v13049
      %13073 = vst [vmem:[%s386 + $0x48] sm:$0xff] %v13051
      %13074 = vst [vmem:[%s386 + $0x50] sm:$0xff] %v13053
      %13075 = vst [vmem:[%s386 + $0x58] sm:$0xff] %v13055
      %13076 = vst [vmem:[%s386 + $0x60] sm:$0xff] %v13057
      %13077 = vst [vmem:[%s386 + $0x68] sm:$0xff] %v13059
      %13078 = vst [vmem:[%s386 + $0x70] sm:$0xff] %v13061
      %13079 = vst [vmem:[%s386 + $0x78] sm:$0xff] %v13063
      %p13080 = scmp.lt.s32.totalorder %s22, 1
      %s13081 = scalar_select %p13080, %s22, 1
      %s13082 = smul.addr %s13081, 16
      %s13083 = smul.addr %s13082, 8
      %s13084 = scalar_lea.vmem %s11, %s13083
      // Predicated region
      $region65: #{_bottleneck_call.1} parent=63 // pred_check
        %p13085 = pneg %p276
      $region66: #{_bottleneck_call.1} parent=63 // pred_check_branch
        %13087 = sbr.rel (%p13085) target = $region68
      $region67: #{_bottleneck_call.1} parent=63 // pred_region
        _
      $region68: #{_bottleneck_call.1} parent=63 // pred_fallthru
        _
    $region64: #{_bottleneck_call.1} parent=5 // pred_fallthru
      _
    %p13088 = scmp.le.s32.totalorder 2, %s17
    // Predicated region
    $region69: #{_bottleneck_call.1} parent=5 // pred_check
      %p13089 = pneg %p13088
    $region70: #{_bottleneck_call.1} parent=5 // pred_check_branch
      %13091 = sbr.rel (%p13089) target = $region72
    $region71: #{_bottleneck_call.1} parent=5 // pred_region
      %s13092 = ssub.s32 %s17, 2
      // Predicated region
      $region73: #{_bottleneck_call.1} parent=71 // pred_check
        %p13093 = pneg %p282
      $region74: #{_bottleneck_call.1} parent=71 // pred_check_branch
        %13095 = sbr.rel (%p13093) target = $region76
      $region75: #{_bottleneck_call.1} parent=71 // pred_region
        %p13096 = scmp.lt.s32.totalorder %s23, 1
        %s13097 = scalar_select %p13096, %s23, 1
        %s13098 = smul.addr %s13097, 16
        %s13099 = smul.addr %s13098, 8
        %s13100 = scalar_lea.vmem %s11, %s13099
      $region76: #{_bottleneck_call.1} parent=71 // pred_fallthru
        _
    $region72: #{_bottleneck_call.1} parent=5 // pred_fallthru
      _
  $region6: #{_bottleneck_call.1} parent=0 // loop_footer
    %s21 = sadd.s32 1, %s17
  $region7: #{_bottleneck_call.1} parent=0 // loop_footer_branch
    %16 = sbr.rel target = $region3
  $region8: #{_bottleneck_call.1} parent=0 // loop_exit
    _

</llo_original>
